<compile_context>
chip_gen: v7x
topology: tpu7x:2x2x1
jax: 0.10.0
libtpu: 0.0.40
codegen_flags: <defaults>
</compile_context>

<pallas_src>
import math
import functools

import jax
import jax.numpy as jnp
from jax.experimental import pallas as pl
from jax.experimental.pallas import tpu as pltpu


# ----------------------------- kernel helpers ------------------------------

def _layernorm(x, gamma, beta, eps=1e-5):
    # x: (N, E), gamma/beta: (1, E)
    mean = jnp.mean(x, axis=-1, keepdims=True)
    var = jnp.mean((x - mean) ** 2, axis=-1, keepdims=True)
    return (x - mean) * jax.lax.rsqrt(var + eps) * gamma + beta


def _mha(xn2d, tb, s, w_in, b_in, w_out_t, b_out, num_heads, mm_dtype):
    """Multi-head self attention on a flattened (tb*s, E) slab.

    w_in:    (E, 3E)  pre-transposed in_proj weight   (qkv = x @ w_in + b_in)
    w_out_t: (E, E)   pre-transposed out_proj weight  (y = attn @ w_out_t + b_out)
    """
    e = xn2d.shape[-1]
    dh = e // num_heads
    scale = 1.0 / math.sqrt(dh)

    qkv = jnp.dot(xn2d.astype(mm_dtype), w_in.astype(mm_dtype),
                  preferred_element_type=jnp.float32) + b_in          # (tb*s, 3E)
    qkv = qkv.reshape(tb, s, 3 * e)                                   # (tb, s, 3E)

    out = jnp.zeros((tb * s, e), jnp.float32)
    for h in range(num_heads):  # static unroll (num_heads is small, e.g. 4)
        qh = qkv[:, :, h * dh:(h + 1) * dh] * scale                   # (tb, s, dh)
        kh = qkv[:, :, e + h * dh:e + (h + 1) * dh]
        vh = qkv[:, :, 2 * e + h * dh:2 * e + (h + 1) * dh]

        sc = jnp.einsum('bqd,bkd->bqk', qh.astype(mm_dtype), kh.astype(mm_dtype),
                        preferred_element_type=jnp.float32)           # (tb, s, s)
        sc = sc - jnp.max(sc, axis=-1, keepdims=True)
        p = jnp.exp(sc)
        p = p * pl.reciprocal(jnp.sum(p, axis=-1, keepdims=True), approx=True)

        oh = jnp.einsum('bqk,bkd->bqd', p.astype(mm_dtype), vh.astype(mm_dtype),
                        preferred_element_type=jnp.float32)           # (tb, s, dh)

        # Fold the output projection per head (no concat of head outputs):
        # attn @ W_out_T == sum_h O_h @ W_out_T[h*dh:(h+1)*dh, :]
        out = out + jnp.dot(oh.reshape(tb * s, dh).astype(mm_dtype),
                            w_out_t[h * dh:(h + 1) * dh, :].astype(mm_dtype),
                            preferred_element_type=jnp.float32)
    return out + b_out


# --------------------------------- kernel ----------------------------------

def light_omega_kernel(
    x_ref,
    ln1_g, ln1_b, a1_w_in, a1_b_in, a1_w_out, a1_b_out,
    ln2_g, ln2_b, a2_w_in, a2_b_in, a2_w_out, a2_b_out,
    ln3_g, ln3_b, f_w1, f_b1, f_w2, f_b2,
    o_ref,
    *, num_heads, mm_dtype,
):
    tb, s, e = x_ref.shape
    x = x_ref[...].reshape(tb * s, e).astype(jnp.float32)             # (tb*s, E)

    # block 1: pre-norm self attention + residual
    xn = _layernorm(x, ln1_g[...], ln1_b[...])
    x = x + _mha(xn, tb, s, a1_w_in[...], a1_b_in[...], a1_w_out[...], a1_b_out[...],
                 num_heads, mm_dtype)

    # block 2: pre-norm self attention + residual
    xn = _layernorm(x, ln2_g[...], ln2_b[...])
    x = x + _mha(xn, tb, s, a2_w_in[...], a2_b_in[...], a2_w_out[...], a2_b_out[...],
                 num_heads, mm_dtype)

    # block 3: pre-norm FFN + residual (weights already pre-transposed)
    xn = _layernorm(x, ln3_g[...], ln3_b[...])
    h = jnp.dot(xn.astype(mm_dtype), f_w1[...].astype(mm_dtype),
                preferred_element_type=jnp.float32) + f_b1[...]
    h = jnp.maximum(h, 0.0)
    ffn = jnp.dot(h.astype(mm_dtype), f_w2[...].astype(mm_dtype),
                  preferred_element_type=jnp.float32) + f_b2[...]
    x = x + ffn

    o_ref[...] = x.reshape(tb, s, e).astype(o_ref.dtype)


# -------------------------------- wrapper -----------------------------------

def _const_index_map(ndim):
    return lambda b: (0,) * ndim


def light_omega_block(x, params, num_heads, tb=None, use_bf16_matmul=False):
    """params follow the PyTorch layout; weights are pre-transposed here."""
    B, S, E = x.shape
    (ln1_g, ln1_b, a1_inw, a1_inb, a1_ow, a1_ob,
     ln2_g, ln2_b, a2_inw, a2_inb, a2_ow, a2_ob,
     ln3_g, ln3_b, f_w1, f_b1, f_w2, f_b2) = params

    # One-time wrapper-side transposes so every in-kernel matmul takes its RHS
    # in stored layout (x @ W_T is computed as x @ pre_transposed_W).
    kparams = [
        ln1_g, ln1_b, a1_inw.T, a1_inb, a1_ow.T, a1_ob,
        ln2_g, ln2_b, a2_inw.T, a2_inb, a2_ow.T, a2_ob,
        ln3_g, ln3_b, f_w1.T, f_b1, f_w2.T, f_b2,
    ]

    # Batch-tile size: amortize per-grid-step overhead, but keep grid >= 2 so
    # both TensorCores get work on v7x.
    if tb is None:
        tb = 1
        for cand in (8, 4, 2):
            if B % cand == 0 and B // cand >= 2:
                tb = cand
                break
    assert B % tb == 0, (B, tb)
    grid = (B // tb,)

    mm_dtype = jnp.bfloat16 if use_bf16_matmul else jnp.float32
    kernel = functools.partial(light_omega_kernel,
                               num_heads=num_heads, mm_dtype=mm_dtype)

    x_spec = pl.BlockSpec((tb, S, E), lambda b: (b, 0, 0))
    o_spec = pl.BlockSpec((tb, S, E), lambda b: (b, 0, 0))

    def _weight_spec(p, single_buffer):
        im = _const_index_map(p.ndim)
        if single_buffer:
            # Constant index_map -> never re-fetched; single-buffer to halve
            # the VMEM footprint of resident weights.
            return pl.BlockSpec(p.shape, im, pipeline_mode=pl.Buffered(1))
        return pl.BlockSpec(p.shape, im)

    def _call(single_buffer_weights):
        weight_specs = [_weight_spec(p, single_buffer_weights) for p in kparams]
        out = pl.pallas_call(
            kernel,
            out_shape=jax.ShapeDtypeStruct((B, S, E), x.dtype),
            grid_spec=pltpu.PrefetchScalarGridSpec(
                num_scalar_prefetch=0,
                grid=grid,
                in_specs=[x_spec] + weight_specs,
                out_specs=o_spec,
            ),
            compiler_params=pltpu.CompilerParams(
                dimension_semantics=("parallel",),
                vmem_limit_bytes=48 * 1024 * 1024,
            ),
        )(x, *kparams)
        return jax.block_until_ready(out)

    try:
        return _call(single_buffer_weights=True)
    except Exception:
        # Fallback if this JAX build rejects pl.Buffered(1) on pallas_call specs.
        return _call(single_buffer_weights=False)


# --------------------------- pure-JAX reference ------------------------------

def reference(x, params, num_heads):
    (ln1_g, ln1_b, a1_inw, a1_inb, a1_ow, a1_ob,
     ln2_g, ln2_b, a2_inw, a2_inb, a2_ow, a2_ob,
     ln3_g, ln3_b, f_w1, f_b1, f_w2, f_b2) = params

    def ln(x, g, b, eps=1e-5):
        m = jnp.mean(x, -1, keepdims=True)
        v = jnp.mean((x - m) ** 2, -1, keepdims=True)
        return (x - m) / jnp.sqrt(v + eps) * g + b

    def mha(xn, in_w, in_b, out_w, out_b):
        B, S, E = xn.shape
        dh = E // num_heads
        qkv = xn @ in_w.T + in_b
        q, k, v = jnp.split(qkv, 3, axis=-1)
        q = q.reshape(B, S, num_heads, dh).transpose(0, 2, 1, 3) / math.sqrt(dh)
        k = k.reshape(B, S, num_heads, dh).transpose(0, 2, 1, 3)
        v = v.reshape(B, S, num_heads, dh).transpose(0, 2, 1, 3)
        s = q @ jnp.swapaxes(k, -1, -2)
        p = jax.nn.softmax(s, axis=-1)
        o = (p @ v).transpose(0, 2, 1, 3).reshape(B, S, E)
        return o @ out_w.T + out_b

    x = x + mha(ln(x, ln1_g, ln1_b), a1_inw, a1_inb, a1_ow, a1_ob)
    x = x + mha(ln(x, ln2_g, ln2_b), a2_inw, a2_inb, a2_ow, a2_ob)
    xn = ln(x, ln3_g, ln3_b)
    h = jnp.maximum(xn @ f_w1.T + f_b1, 0.0)
    x = x + (h @ f_w2.T + f_b2)
    return x


# ----------------------------------- main ------------------------------------

if __name__ == "__main__":
    # small, shape-consistent config: embed_dim=32, num_heads=4, hidden_dim=64
    B, S, E, H, HID = 4, 8, 32, 4, 64

    key = jax.random.PRNGKey(0)
    ks = jax.random.split(key, 16)

    def nrm(k, shape, scale=0.05):
        return jax.random.normal(k, shape, dtype=jnp.float32) * scale

    params = [
        jnp.ones((1, E), jnp.float32),            # ln1 gamma
        jnp.zeros((1, E), jnp.float32),           # ln1 beta
        nrm(ks[0], (3 * E, E)),                   # attn1 in_proj_weight
        nrm(ks[1], (1, 3 * E)),                   # attn1 in_proj_bias
        nrm(ks[2], (E, E)),                       # attn1 out_proj.weight
        nrm(ks[3], (1, E)),                       # attn1 out_proj.bias
        jnp.ones((1, E), jnp.float32),            # ln2 gamma
        jnp.zeros((1, E), jnp.float32),           # ln2 beta
        nrm(ks[4], (3 * E, E)),                   # attn2 in_proj_weight
        nrm(ks[5], (1, 3 * E)),                   # attn2 in_proj_bias
        nrm(ks[6], (E, E)),                       # attn2 out_proj.weight
        nrm(ks[7], (1, E)),                       # attn2 out_proj.bias
        jnp.ones((1, E), jnp.float32),            # ln3 gamma
        jnp.zeros((1, E), jnp.float32),           # ln3 beta
        nrm(ks[8], (HID, E)),                     # ffn linear1 weight
        nrm(ks[9], (1, HID)),                     # ffn linear1 bias
        nrm(ks[10], (E, HID)),                    # ffn linear2 weight
        nrm(ks[11], (1, E)),                      # ffn linear2 bias
    ]

    x = jax.random.normal(ks[12], (B, S, E), dtype=jnp.float32)

    out = light_omega_block(x, params, num_heads=H, tb=2)
    out = jax.block_until_ready(out)

    ref = reference(x, params, num_heads=H)
    assert out.shape == (B, S, E)
    # Tolerance accounts for approx-reciprocal softmax normalization (EUP) and
    # MXU accumulation-order differences vs the plain-XLA reference.
    assert jnp.allclose(out, ref, rtol=1e-3, atol=1e-3), (
        float(jnp.max(jnp.abs(out - ref))))

    print("KERNEL_OK")
</pallas_src>

<mosaic_0001>
module attributes {stable_mosaic.version = 11 : i64} {
  func.func @light_omega_kernel(%arg0: i32, %arg1: memref<2x8x32xf32, #tpu.memory_space<vmem>>, %arg2: memref<1x32xf32, #tpu.memory_space<vmem>>, %arg3: memref<1x32xf32, #tpu.memory_space<vmem>>, %arg4: memref<32x96xf32, #tpu.memory_space<vmem>>, %arg5: memref<1x96xf32, #tpu.memory_space<vmem>>, %arg6: memref<32x32xf32, #tpu.memory_space<vmem>>, %arg7: memref<1x32xf32, #tpu.memory_space<vmem>>, %arg8: memref<1x32xf32, #tpu.memory_space<vmem>>, %arg9: memref<1x32xf32, #tpu.memory_space<vmem>>, %arg10: memref<32x96xf32, #tpu.memory_space<vmem>>, %arg11: memref<1x96xf32, #tpu.memory_space<vmem>>, %arg12: memref<32x32xf32, #tpu.memory_space<vmem>>, %arg13: memref<1x32xf32, #tpu.memory_space<vmem>>, %arg14: memref<1x32xf32, #tpu.memory_space<vmem>>, %arg15: memref<1x32xf32, #tpu.memory_space<vmem>>, %arg16: memref<32x64xf32, #tpu.memory_space<vmem>>, %arg17: memref<1x64xf32, #tpu.memory_space<vmem>>, %arg18: memref<64x32xf32, #tpu.memory_space<vmem>>, %arg19: memref<1x32xf32, #tpu.memory_space<vmem>>, %arg20: memref<2x8x32xf32, #tpu.memory_space<vmem>>) attributes {dimension_semantics = [#tpu.dimension_semantics<parallel>], iteration_bounds = array<i64: 2>, scalar_prefetch = 0 : i64, scratch_operands = 0 : i64, tpu.core_type = #tpu.core_type<tc>, window_params = [{transform_indices = @transform_0, window_bounds = array<i64: 2, 8, 32>}, {pipeline_mode = #tpu.pipeline_mode<synchronous>, transform_indices = @transform_1, window_bounds = array<i64: 1, 32>}, {pipeline_mode = #tpu.pipeline_mode<synchronous>, transform_indices = @transform_2, window_bounds = array<i64: 1, 32>}, {pipeline_mode = #tpu.pipeline_mode<synchronous>, transform_indices = @transform_3, window_bounds = array<i64: 32, 96>}, {pipeline_mode = #tpu.pipeline_mode<synchronous>, transform_indices = @transform_4, window_bounds = array<i64: 1, 96>}, {pipeline_mode = #tpu.pipeline_mode<synchronous>, transform_indices = @transform_5, window_bounds = array<i64: 32, 32>}, {pipeline_mode = #tpu.pipeline_mode<synchronous>, transform_indices = @transform_6, window_bounds = array<i64: 1, 32>}, {pipeline_mode = #tpu.pipeline_mode<synchronous>, transform_indices = @transform_7, window_bounds = array<i64: 1, 32>}, {pipeline_mode = #tpu.pipeline_mode<synchronous>, transform_indices = @transform_8, window_bounds = array<i64: 1, 32>}, {pipeline_mode = #tpu.pipeline_mode<synchronous>, transform_indices = @transform_9, window_bounds = array<i64: 32, 96>}, {pipeline_mode = #tpu.pipeline_mode<synchronous>, transform_indices = @transform_10, window_bounds = array<i64: 1, 96>}, {pipeline_mode = #tpu.pipeline_mode<synchronous>, transform_indices = @transform_11, window_bounds = array<i64: 32, 32>}, {pipeline_mode = #tpu.pipeline_mode<synchronous>, transform_indices = @transform_12, window_bounds = array<i64: 1, 32>}, {pipeline_mode = #tpu.pipeline_mode<synchronous>, transform_indices = @transform_13, window_bounds = array<i64: 1, 32>}, {pipeline_mode = #tpu.pipeline_mode<synchronous>, transform_indices = @transform_14, window_bounds = array<i64: 1, 32>}, {pipeline_mode = #tpu.pipeline_mode<synchronous>, transform_indices = @transform_15, window_bounds = array<i64: 32, 64>}, {pipeline_mode = #tpu.pipeline_mode<synchronous>, transform_indices = @transform_16, window_bounds = array<i64: 1, 64>}, {pipeline_mode = #tpu.pipeline_mode<synchronous>, transform_indices = @transform_17, window_bounds = array<i64: 64, 32>}, {pipeline_mode = #tpu.pipeline_mode<synchronous>, transform_indices = @transform_18, window_bounds = array<i64: 1, 32>}, {transform_indices = @transform_19, window_bounds = array<i64: 2, 8, 32>}]} {
    %c0 = arith.constant 0 : index
    %c0_0 = arith.constant 0 : index
    %c0_1 = arith.constant 0 : index
    %0 = vector.load %arg1[%c0, %c0_0, %c0_1] : memref<2x8x32xf32, #tpu.memory_space<vmem>>, vector<2x8x32xf32>
    %1 = vector.shape_cast %0 : vector<2x8x32xf32> to vector<16x32xf32>
    %c0_2 = arith.constant 0 : index
    %c0_3 = arith.constant 0 : index
    %2 = vector.load %arg2[%c0_2, %c0_3] : memref<1x32xf32, #tpu.memory_space<vmem>>, vector<1x32xf32>
    %c0_4 = arith.constant 0 : index
    %c0_5 = arith.constant 0 : index
    %3 = vector.load %arg3[%c0_4, %c0_5] : memref<1x32xf32, #tpu.memory_space<vmem>>, vector<1x32xf32>
    %cst = arith.constant dense<0.000000e+00> : vector<16xf32>
    %4 = vector.multi_reduction <add>, %1, %cst [1] : vector<16x32xf32> to vector<16xf32>
    %5 = vector.shape_cast %4 : vector<16xf32> to vector<16x1xf32>
    %cst_6 = arith.constant 3.200000e+01 : f32
    %6 = vector.broadcast %cst_6 : f32 to vector<16x1xf32>
    %7 = arith.divf %5, %6 : vector<16x1xf32>
    %8 = vector.broadcast %7 : vector<16x1xf32> to vector<16x32xf32>
    %9 = arith.subf %1, %8 : vector<16x32xf32>
    %10 = arith.mulf %9, %9 : vector<16x32xf32>
    %cst_7 = arith.constant dense<0.000000e+00> : vector<16xf32>
    %11 = vector.multi_reduction <add>, %10, %cst_7 [1] : vector<16x32xf32> to vector<16xf32>
    %12 = vector.shape_cast %11 : vector<16xf32> to vector<16x1xf32>
    %cst_8 = arith.constant 3.200000e+01 : f32
    %13 = vector.broadcast %cst_8 : f32 to vector<16x1xf32>
    %14 = arith.divf %12, %13 : vector<16x1xf32>
    %15 = vector.broadcast %7 : vector<16x1xf32> to vector<16x32xf32>
    %16 = arith.subf %1, %15 : vector<16x32xf32>
    %cst_9 = arith.constant 9.99999974E-6 : f32
    %17 = vector.broadcast %cst_9 : f32 to vector<16x1xf32>
    %18 = arith.addf %14, %17 : vector<16x1xf32>
    %19 = math.rsqrt %18 : vector<16x1xf32>
    %20 = vector.broadcast %19 : vector<16x1xf32> to vector<16x32xf32>
    %21 = arith.mulf %16, %20 : vector<16x32xf32>
    %22 = vector.broadcast %2 : vector<1x32xf32> to vector<16x32xf32>
    %23 = arith.mulf %21, %22 : vector<16x32xf32>
    %24 = vector.broadcast %3 : vector<1x32xf32> to vector<16x32xf32>
    %25 = arith.addf %23, %24 : vector<16x32xf32>
    %c0_10 = arith.constant 0 : index
    %c0_11 = arith.constant 0 : index
    %26 = vector.load %arg4[%c0_10, %c0_11] : memref<32x96xf32, #tpu.memory_space<vmem>>, vector<32x96xf32>
    %c0_12 = arith.constant 0 : index
    %c0_13 = arith.constant 0 : index
    %27 = vector.load %arg5[%c0_12, %c0_13] : memref<1x96xf32, #tpu.memory_space<vmem>>, vector<1x96xf32>
    %c0_14 = arith.constant 0 : index
    %c0_15 = arith.constant 0 : index
    %28 = vector.load %arg6[%c0_14, %c0_15] : memref<32x32xf32, #tpu.memory_space<vmem>>, vector<32x32xf32>
    %c0_16 = arith.constant 0 : index
    %c0_17 = arith.constant 0 : index
    %29 = vector.load %arg7[%c0_16, %c0_17] : memref<1x32xf32, #tpu.memory_space<vmem>>, vector<1x32xf32>
    %cst_18 = arith.constant dense<0.000000e+00> : vector<16x96xf32>
    %30 = tpu.matmul %25, %26, %cst_18 {dimension_numbers = #tpu.dot_dimension_numbers<[1], [0], [0], [1], [0, 0, 1, 1], [], []>} : vector<16x32xf32>, vector<32x96xf32>, vector<16x96xf32> -> vector<16x96xf32>
    %31 = vector.broadcast %27 : vector<1x96xf32> to vector<16x96xf32>
    %32 = arith.addf %30, %31 : vector<16x96xf32>
    %33 = vector.shape_cast %32 : vector<16x96xf32> to vector<2x8x96xf32>
    %cst_19 = arith.constant 0.000000e+00 : f32
    %34 = vector.broadcast %cst_19 : f32 to vector<16x32xf32>
    %35 = vector.extract_strided_slice %33 {offsets = [0, 0, 0], sizes = [2, 8, 8], strides = [1, 1, 1]} : vector<2x8x96xf32> to vector<2x8x8xf32>
    %cst_20 = arith.constant 0.353553385 : f32
    %36 = vector.broadcast %cst_20 : f32 to vector<2x8x8xf32>
    %37 = arith.mulf %35, %36 : vector<2x8x8xf32>
    %38 = vector.extract_strided_slice %33 {offsets = [0, 0, 32], sizes = [2, 8, 8], strides = [1, 1, 1]} : vector<2x8x96xf32> to vector<2x8x8xf32>
    %39 = vector.extract_strided_slice %33 {offsets = [0, 0, 64], sizes = [2, 8, 8], strides = [1, 1, 1]} : vector<2x8x96xf32> to vector<2x8x8xf32>
    "tpu.trace_start"() <{level = 10 : i32, message = "bqd,bkd->bqk"}> : () -> ()
    %cst_21 = arith.constant dense<0.000000e+00> : vector<2x8x8xf32>
    %40 = tpu.matmul %37, %38, %cst_21 {dimension_numbers = #tpu.dot_dimension_numbers<[2], [2], [1], [1], [0, 0, 0, 1, 1, 1], [0], [0]>} : vector<2x8x8xf32>, vector<2x8x8xf32>, vector<2x8x8xf32> -> vector<2x8x8xf32>
    "tpu.trace_stop"() : () -> ()
    %cst_22 = arith.constant dense<0xFF800000> : vector<2x8xf32>
    %41 = vector.multi_reduction <maximumf>, %40, %cst_22 [2] : vector<2x8x8xf32> to vector<2x8xf32>
    %42 = vector.shape_cast %41 : vector<2x8xf32> to vector<2x8x1xf32>
    %43 = vector.broadcast %42 : vector<2x8x1xf32> to vector<2x8x8xf32>
    %44 = arith.subf %40, %43 : vector<2x8x8xf32>
    %45 = math.exp %44 : vector<2x8x8xf32>
    %cst_23 = arith.constant dense<0.000000e+00> : vector<2x8xf32>
    %46 = vector.multi_reduction <add>, %45, %cst_23 [2] : vector<2x8x8xf32> to vector<2x8xf32>
    %47 = vector.shape_cast %46 : vector<2x8xf32> to vector<2x8x1xf32>
    %48 = tpu.reciprocal %47 {approx = true} : vector<2x8x1xf32> -> vector<2x8x1xf32>
    %49 = vector.broadcast %48 : vector<2x8x1xf32> to vector<2x8x8xf32>
    %50 = arith.mulf %45, %49 : vector<2x8x8xf32>
    "tpu.trace_start"() <{level = 10 : i32, message = "bqk,bkd->bqd"}> : () -> ()
    %cst_24 = arith.constant dense<0.000000e+00> : vector<2x8x8xf32>
    %51 = tpu.matmul %50, %39, %cst_24 {dimension_numbers = #tpu.dot_dimension_numbers<[2], [1], [1], [2], [0, 0, 0, 1, 1, 2], [0], [0]>} : vector<2x8x8xf32>, vector<2x8x8xf32>, vector<2x8x8xf32> -> vector<2x8x8xf32>
    "tpu.trace_stop"() : () -> ()
    %52 = vector.shape_cast %51 : vector<2x8x8xf32> to vector<16x8xf32>
    %53 = vector.extract_strided_slice %28 {offsets = [0, 0], sizes = [8, 32], strides = [1, 1]} : vector<32x32xf32> to vector<8x32xf32>
    %cst_25 = arith.constant dense<0.000000e+00> : vector<16x32xf32>
    %54 = tpu.matmul %52, %53, %cst_25 {dimension_numbers = #tpu.dot_dimension_numbers<[1], [0], [0], [1], [0, 0, 1, 1], [], []>} : vector<16x8xf32>, vector<8x32xf32>, vector<16x32xf32> -> vector<16x32xf32>
    %55 = arith.addf %34, %54 : vector<16x32xf32>
    %56 = vector.extract_strided_slice %33 {offsets = [0, 0, 8], sizes = [2, 8, 8], strides = [1, 1, 1]} : vector<2x8x96xf32> to vector<2x8x8xf32>
    %cst_26 = arith.constant 0.353553385 : f32
    %57 = vector.broadcast %cst_26 : f32 to vector<2x8x8xf32>
    %58 = arith.mulf %56, %57 : vector<2x8x8xf32>
    %59 = vector.extract_strided_slice %33 {offsets = [0, 0, 40], sizes = [2, 8, 8], strides = [1, 1, 1]} : vector<2x8x96xf32> to vector<2x8x8xf32>
    %60 = vector.extract_strided_slice %33 {offsets = [0, 0, 72], sizes = [2, 8, 8], strides = [1, 1, 1]} : vector<2x8x96xf32> to vector<2x8x8xf32>
    "tpu.trace_start"() <{level = 10 : i32, message = "bqd,bkd->bqk"}> : () -> ()
    %cst_27 = arith.constant dense<0.000000e+00> : vector<2x8x8xf32>
    %61 = tpu.matmul %58, %59, %cst_27 {dimension_numbers = #tpu.dot_dimension_numbers<[2], [2], [1], [1], [0, 0, 0, 1, 1, 1], [0], [0]>} : vector<2x8x8xf32>, vector<2x8x8xf32>, vector<2x8x8xf32> -> vector<2x8x8xf32>
    "tpu.trace_stop"() : () -> ()
    %cst_28 = arith.constant dense<0xFF800000> : vector<2x8xf32>
    %62 = vector.multi_reduction <maximumf>, %61, %cst_28 [2] : vector<2x8x8xf32> to vector<2x8xf32>
    %63 = vector.shape_cast %62 : vector<2x8xf32> to vector<2x8x1xf32>
    %64 = vector.broadcast %63 : vector<2x8x1xf32> to vector<2x8x8xf32>
    %65 = arith.subf %61, %64 : vector<2x8x8xf32>
    %66 = math.exp %65 : vector<2x8x8xf32>
    %cst_29 = arith.constant dense<0.000000e+00> : vector<2x8xf32>
    %67 = vector.multi_reduction <add>, %66, %cst_29 [2] : vector<2x8x8xf32> to vector<2x8xf32>
    %68 = vector.shape_cast %67 : vector<2x8xf32> to vector<2x8x1xf32>
    %69 = tpu.reciprocal %68 {approx = true} : vector<2x8x1xf32> -> vector<2x8x1xf32>
    %70 = vector.broadcast %69 : vector<2x8x1xf32> to vector<2x8x8xf32>
    %71 = arith.mulf %66, %70 : vector<2x8x8xf32>
    "tpu.trace_start"() <{level = 10 : i32, message = "bqk,bkd->bqd"}> : () -> ()
    %cst_30 = arith.constant dense<0.000000e+00> : vector<2x8x8xf32>
    %72 = tpu.matmul %71, %60, %cst_30 {dimension_numbers = #tpu.dot_dimension_numbers<[2], [1], [1], [2], [0, 0, 0, 1, 1, 2], [0], [0]>} : vector<2x8x8xf32>, vector<2x8x8xf32>, vector<2x8x8xf32> -> vector<2x8x8xf32>
    "tpu.trace_stop"() : () -> ()
    %73 = vector.shape_cast %72 : vector<2x8x8xf32> to vector<16x8xf32>
    %74 = vector.extract_strided_slice %28 {offsets = [8, 0], sizes = [8, 32], strides = [1, 1]} : vector<32x32xf32> to vector<8x32xf32>
    %cst_31 = arith.constant dense<0.000000e+00> : vector<16x32xf32>
    %75 = tpu.matmul %73, %74, %cst_31 {dimension_numbers = #tpu.dot_dimension_numbers<[1], [0], [0], [1], [0, 0, 1, 1], [], []>} : vector<16x8xf32>, vector<8x32xf32>, vector<16x32xf32> -> vector<16x32xf32>
    %76 = arith.addf %55, %75 : vector<16x32xf32>
    %77 = vector.extract_strided_slice %33 {offsets = [0, 0, 16], sizes = [2, 8, 8], strides = [1, 1, 1]} : vector<2x8x96xf32> to vector<2x8x8xf32>
    %cst_32 = arith.constant 0.353553385 : f32
    %78 = vector.broadcast %cst_32 : f32 to vector<2x8x8xf32>
    %79 = arith.mulf %77, %78 : vector<2x8x8xf32>
    %80 = vector.extract_strided_slice %33 {offsets = [0, 0, 48], sizes = [2, 8, 8], strides = [1, 1, 1]} : vector<2x8x96xf32> to vector<2x8x8xf32>
    %81 = vector.extract_strided_slice %33 {offsets = [0, 0, 80], sizes = [2, 8, 8], strides = [1, 1, 1]} : vector<2x8x96xf32> to vector<2x8x8xf32>
    "tpu.trace_start"() <{level = 10 : i32, message = "bqd,bkd->bqk"}> : () -> ()
    %cst_33 = arith.constant dense<0.000000e+00> : vector<2x8x8xf32>
    %82 = tpu.matmul %79, %80, %cst_33 {dimension_numbers = #tpu.dot_dimension_numbers<[2], [2], [1], [1], [0, 0, 0, 1, 1, 1], [0], [0]>} : vector<2x8x8xf32>, vector<2x8x8xf32>, vector<2x8x8xf32> -> vector<2x8x8xf32>
    "tpu.trace_stop"() : () -> ()
    %cst_34 = arith.constant dense<0xFF800000> : vector<2x8xf32>
    %83 = vector.multi_reduction <maximumf>, %82, %cst_34 [2] : vector<2x8x8xf32> to vector<2x8xf32>
    %84 = vector.shape_cast %83 : vector<2x8xf32> to vector<2x8x1xf32>
    %85 = vector.broadcast %84 : vector<2x8x1xf32> to vector<2x8x8xf32>
    %86 = arith.subf %82, %85 : vector<2x8x8xf32>
    %87 = math.exp %86 : vector<2x8x8xf32>
    %cst_35 = arith.constant dense<0.000000e+00> : vector<2x8xf32>
    %88 = vector.multi_reduction <add>, %87, %cst_35 [2] : vector<2x8x8xf32> to vector<2x8xf32>
    %89 = vector.shape_cast %88 : vector<2x8xf32> to vector<2x8x1xf32>
    %90 = tpu.reciprocal %89 {approx = true} : vector<2x8x1xf32> -> vector<2x8x1xf32>
    %91 = vector.broadcast %90 : vector<2x8x1xf32> to vector<2x8x8xf32>
    %92 = arith.mulf %87, %91 : vector<2x8x8xf32>
    "tpu.trace_start"() <{level = 10 : i32, message = "bqk,bkd->bqd"}> : () -> ()
    %cst_36 = arith.constant dense<0.000000e+00> : vector<2x8x8xf32>
    %93 = tpu.matmul %92, %81, %cst_36 {dimension_numbers = #tpu.dot_dimension_numbers<[2], [1], [1], [2], [0, 0, 0, 1, 1, 2], [0], [0]>} : vector<2x8x8xf32>, vector<2x8x8xf32>, vector<2x8x8xf32> -> vector<2x8x8xf32>
    "tpu.trace_stop"() : () -> ()
    %94 = vector.shape_cast %93 : vector<2x8x8xf32> to vector<16x8xf32>
    %95 = vector.extract_strided_slice %28 {offsets = [16, 0], sizes = [8, 32], strides = [1, 1]} : vector<32x32xf32> to vector<8x32xf32>
    %cst_37 = arith.constant dense<0.000000e+00> : vector<16x32xf32>
    %96 = tpu.matmul %94, %95, %cst_37 {dimension_numbers = #tpu.dot_dimension_numbers<[1], [0], [0], [1], [0, 0, 1, 1], [], []>} : vector<16x8xf32>, vector<8x32xf32>, vector<16x32xf32> -> vector<16x32xf32>
    %97 = arith.addf %76, %96 : vector<16x32xf32>
    %98 = vector.extract_strided_slice %33 {offsets = [0, 0, 24], sizes = [2, 8, 8], strides = [1, 1, 1]} : vector<2x8x96xf32> to vector<2x8x8xf32>
    %cst_38 = arith.constant 0.353553385 : f32
    %99 = vector.broadcast %cst_38 : f32 to vector<2x8x8xf32>
    %100 = arith.mulf %98, %99 : vector<2x8x8xf32>
    %101 = vector.extract_strided_slice %33 {offsets = [0, 0, 56], sizes = [2, 8, 8], strides = [1, 1, 1]} : vector<2x8x96xf32> to vector<2x8x8xf32>
    %102 = vector.extract_strided_slice %33 {offsets = [0, 0, 88], sizes = [2, 8, 8], strides = [1, 1, 1]} : vector<2x8x96xf32> to vector<2x8x8xf32>
    "tpu.trace_start"() <{level = 10 : i32, message = "bqd,bkd->bqk"}> : () -> ()
    %cst_39 = arith.constant dense<0.000000e+00> : vector<2x8x8xf32>
    %103 = tpu.matmul %100, %101, %cst_39 {dimension_numbers = #tpu.dot_dimension_numbers<[2], [2], [1], [1], [0, 0, 0, 1, 1, 1], [0], [0]>} : vector<2x8x8xf32>, vector<2x8x8xf32>, vector<2x8x8xf32> -> vector<2x8x8xf32>
    "tpu.trace_stop"() : () -> ()
    %cst_40 = arith.constant dense<0xFF800000> : vector<2x8xf32>
    %104 = vector.multi_reduction <maximumf>, %103, %cst_40 [2] : vector<2x8x8xf32> to vector<2x8xf32>
    %105 = vector.shape_cast %104 : vector<2x8xf32> to vector<2x8x1xf32>
    %106 = vector.broadcast %105 : vector<2x8x1xf32> to vector<2x8x8xf32>
    %107 = arith.subf %103, %106 : vector<2x8x8xf32>
    %108 = math.exp %107 : vector<2x8x8xf32>
    %cst_41 = arith.constant dense<0.000000e+00> : vector<2x8xf32>
    %109 = vector.multi_reduction <add>, %108, %cst_41 [2] : vector<2x8x8xf32> to vector<2x8xf32>
    %110 = vector.shape_cast %109 : vector<2x8xf32> to vector<2x8x1xf32>
    %111 = tpu.reciprocal %110 {approx = true} : vector<2x8x1xf32> -> vector<2x8x1xf32>
    %112 = vector.broadcast %111 : vector<2x8x1xf32> to vector<2x8x8xf32>
    %113 = arith.mulf %108, %112 : vector<2x8x8xf32>
    "tpu.trace_start"() <{level = 10 : i32, message = "bqk,bkd->bqd"}> : () -> ()
    %cst_42 = arith.constant dense<0.000000e+00> : vector<2x8x8xf32>
    %114 = tpu.matmul %113, %102, %cst_42 {dimension_numbers = #tpu.dot_dimension_numbers<[2], [1], [1], [2], [0, 0, 0, 1, 1, 2], [0], [0]>} : vector<2x8x8xf32>, vector<2x8x8xf32>, vector<2x8x8xf32> -> vector<2x8x8xf32>
    "tpu.trace_stop"() : () -> ()
    %115 = vector.shape_cast %114 : vector<2x8x8xf32> to vector<16x8xf32>
    %116 = vector.extract_strided_slice %28 {offsets = [24, 0], sizes = [8, 32], strides = [1, 1]} : vector<32x32xf32> to vector<8x32xf32>
    %cst_43 = arith.constant dense<0.000000e+00> : vector<16x32xf32>
    %117 = tpu.matmul %115, %116, %cst_43 {dimension_numbers = #tpu.dot_dimension_numbers<[1], [0], [0], [1], [0, 0, 1, 1], [], []>} : vector<16x8xf32>, vector<8x32xf32>, vector<16x32xf32> -> vector<16x32xf32>
    %118 = arith.addf %97, %117 : vector<16x32xf32>
    %119 = vector.broadcast %29 : vector<1x32xf32> to vector<16x32xf32>
    %120 = arith.addf %118, %119 : vector<16x32xf32>
    %121 = arith.addf %1, %120 : vector<16x32xf32>
    %c0_44 = arith.constant 0 : index
    %c0_45 = arith.constant 0 : index
    %122 = vector.load %arg8[%c0_44, %c0_45] : memref<1x32xf32, #tpu.memory_space<vmem>>, vector<1x32xf32>
    %c0_46 = arith.constant 0 : index
    %c0_47 = arith.constant 0 : index
    %123 = vector.load %arg9[%c0_46, %c0_47] : memref<1x32xf32, #tpu.memory_space<vmem>>, vector<1x32xf32>
    %cst_48 = arith.constant dense<0.000000e+00> : vector<16xf32>
    %124 = vector.multi_reduction <add>, %121, %cst_48 [1] : vector<16x32xf32> to vector<16xf32>
    %125 = vector.shape_cast %124 : vector<16xf32> to vector<16x1xf32>
    %cst_49 = arith.constant 3.200000e+01 : f32
    %126 = vector.broadcast %cst_49 : f32 to vector<16x1xf32>
    %127 = arith.divf %125, %126 : vector<16x1xf32>
    %128 = vector.broadcast %127 : vector<16x1xf32> to vector<16x32xf32>
    %129 = arith.subf %121, %128 : vector<16x32xf32>
    %130 = arith.mulf %129, %129 : vector<16x32xf32>
    %cst_50 = arith.constant dense<0.000000e+00> : vector<16xf32>
    %131 = vector.multi_reduction <add>, %130, %cst_50 [1] : vector<16x32xf32> to vector<16xf32>
    %132 = vector.shape_cast %131 : vector<16xf32> to vector<16x1xf32>
    %cst_51 = arith.constant 3.200000e+01 : f32
    %133 = vector.broadcast %cst_51 : f32 to vector<16x1xf32>
    %134 = arith.divf %132, %133 : vector<16x1xf32>
    %135 = vector.broadcast %127 : vector<16x1xf32> to vector<16x32xf32>
    %136 = arith.subf %121, %135 : vector<16x32xf32>
    %cst_52 = arith.constant 9.99999974E-6 : f32
    %137 = vector.broadcast %cst_52 : f32 to vector<16x1xf32>
    %138 = arith.addf %134, %137 : vector<16x1xf32>
    %139 = math.rsqrt %138 : vector<16x1xf32>
    %140 = vector.broadcast %139 : vector<16x1xf32> to vector<16x32xf32>
    %141 = arith.mulf %136, %140 : vector<16x32xf32>
    %142 = vector.broadcast %122 : vector<1x32xf32> to vector<16x32xf32>
    %143 = arith.mulf %141, %142 : vector<16x32xf32>
    %144 = vector.broadcast %123 : vector<1x32xf32> to vector<16x32xf32>
    %145 = arith.addf %143, %144 : vector<16x32xf32>
    %c0_53 = arith.constant 0 : index
    %c0_54 = arith.constant 0 : index
    %146 = vector.load %arg10[%c0_53, %c0_54] : memref<32x96xf32, #tpu.memory_space<vmem>>, vector<32x96xf32>
    %c0_55 = arith.constant 0 : index
    %c0_56 = arith.constant 0 : index
    %147 = vector.load %arg11[%c0_55, %c0_56] : memref<1x96xf32, #tpu.memory_space<vmem>>, vector<1x96xf32>
    %c0_57 = arith.constant 0 : index
    %c0_58 = arith.constant 0 : index
    %148 = vector.load %arg12[%c0_57, %c0_58] : memref<32x32xf32, #tpu.memory_space<vmem>>, vector<32x32xf32>
    %c0_59 = arith.constant 0 : index
    %c0_60 = arith.constant 0 : index
    %149 = vector.load %arg13[%c0_59, %c0_60] : memref<1x32xf32, #tpu.memory_space<vmem>>, vector<1x32xf32>
    %cst_61 = arith.constant dense<0.000000e+00> : vector<16x96xf32>
    %150 = tpu.matmul %145, %146, %cst_61 {dimension_numbers = #tpu.dot_dimension_numbers<[1], [0], [0], [1], [0, 0, 1, 1], [], []>} : vector<16x32xf32>, vector<32x96xf32>, vector<16x96xf32> -> vector<16x96xf32>
    %151 = vector.broadcast %147 : vector<1x96xf32> to vector<16x96xf32>
    %152 = arith.addf %150, %151 : vector<16x96xf32>
    %153 = vector.shape_cast %152 : vector<16x96xf32> to vector<2x8x96xf32>
    %cst_62 = arith.constant 0.000000e+00 : f32
    %154 = vector.broadcast %cst_62 : f32 to vector<16x32xf32>
    %155 = vector.extract_strided_slice %153 {offsets = [0, 0, 0], sizes = [2, 8, 8], strides = [1, 1, 1]} : vector<2x8x96xf32> to vector<2x8x8xf32>
    %cst_63 = arith.constant 0.353553385 : f32
    %156 = vector.broadcast %cst_63 : f32 to vector<2x8x8xf32>
    %157 = arith.mulf %155, %156 : vector<2x8x8xf32>
    %158 = vector.extract_strided_slice %153 {offsets = [0, 0, 32], sizes = [2, 8, 8], strides = [1, 1, 1]} : vector<2x8x96xf32> to vector<2x8x8xf32>
    %159 = vector.extract_strided_slice %153 {offsets = [0, 0, 64], sizes = [2, 8, 8], strides = [1, 1, 1]} : vector<2x8x96xf32> to vector<2x8x8xf32>
    "tpu.trace_start"() <{level = 10 : i32, message = "bqd,bkd->bqk"}> : () -> ()
    %cst_64 = arith.constant dense<0.000000e+00> : vector<2x8x8xf32>
    %160 = tpu.matmul %157, %158, %cst_64 {dimension_numbers = #tpu.dot_dimension_numbers<[2], [2], [1], [1], [0, 0, 0, 1, 1, 1], [0], [0]>} : vector<2x8x8xf32>, vector<2x8x8xf32>, vector<2x8x8xf32> -> vector<2x8x8xf32>
    "tpu.trace_stop"() : () -> ()
    %cst_65 = arith.constant dense<0xFF800000> : vector<2x8xf32>
    %161 = vector.multi_reduction <maximumf>, %160, %cst_65 [2] : vector<2x8x8xf32> to vector<2x8xf32>
    %162 = vector.shape_cast %161 : vector<2x8xf32> to vector<2x8x1xf32>
    %163 = vector.broadcast %162 : vector<2x8x1xf32> to vector<2x8x8xf32>
    %164 = arith.subf %160, %163 : vector<2x8x8xf32>
    %165 = math.exp %164 : vector<2x8x8xf32>
    %cst_66 = arith.constant dense<0.000000e+00> : vector<2x8xf32>
    %166 = vector.multi_reduction <add>, %165, %cst_66 [2] : vector<2x8x8xf32> to vector<2x8xf32>
    %167 = vector.shape_cast %166 : vector<2x8xf32> to vector<2x8x1xf32>
    %168 = tpu.reciprocal %167 {approx = true} : vector<2x8x1xf32> -> vector<2x8x1xf32>
    %169 = vector.broadcast %168 : vector<2x8x1xf32> to vector<2x8x8xf32>
    %170 = arith.mulf %165, %169 : vector<2x8x8xf32>
    "tpu.trace_start"() <{level = 10 : i32, message = "bqk,bkd->bqd"}> : () -> ()
    %cst_67 = arith.constant dense<0.000000e+00> : vector<2x8x8xf32>
    %171 = tpu.matmul %170, %159, %cst_67 {dimension_numbers = #tpu.dot_dimension_numbers<[2], [1], [1], [2], [0, 0, 0, 1, 1, 2], [0], [0]>} : vector<2x8x8xf32>, vector<2x8x8xf32>, vector<2x8x8xf32> -> vector<2x8x8xf32>
    "tpu.trace_stop"() : () -> ()
    %172 = vector.shape_cast %171 : vector<2x8x8xf32> to vector<16x8xf32>
    %173 = vector.extract_strided_slice %148 {offsets = [0, 0], sizes = [8, 32], strides = [1, 1]} : vector<32x32xf32> to vector<8x32xf32>
    %cst_68 = arith.constant dense<0.000000e+00> : vector<16x32xf32>
    %174 = tpu.matmul %172, %173, %cst_68 {dimension_numbers = #tpu.dot_dimension_numbers<[1], [0], [0], [1], [0, 0, 1, 1], [], []>} : vector<16x8xf32>, vector<8x32xf32>, vector<16x32xf32> -> vector<16x32xf32>
    %175 = arith.addf %154, %174 : vector<16x32xf32>
    %176 = vector.extract_strided_slice %153 {offsets = [0, 0, 8], sizes = [2, 8, 8], strides = [1, 1, 1]} : vector<2x8x96xf32> to vector<2x8x8xf32>
    %cst_69 = arith.constant 0.353553385 : f32
    %177 = vector.broadcast %cst_69 : f32 to vector<2x8x8xf32>
    %178 = arith.mulf %176, %177 : vector<2x8x8xf32>
    %179 = vector.extract_strided_slice %153 {offsets = [0, 0, 40], sizes = [2, 8, 8], strides = [1, 1, 1]} : vector<2x8x96xf32> to vector<2x8x8xf32>
    %180 = vector.extract_strided_slice %153 {offsets = [0, 0, 72], sizes = [2, 8, 8], strides = [1, 1, 1]} : vector<2x8x96xf32> to vector<2x8x8xf32>
    "tpu.trace_start"() <{level = 10 : i32, message = "bqd,bkd->bqk"}> : () -> ()
    %cst_70 = arith.constant dense<0.000000e+00> : vector<2x8x8xf32>
    %181 = tpu.matmul %178, %179, %cst_70 {dimension_numbers = #tpu.dot_dimension_numbers<[2], [2], [1], [1], [0, 0, 0, 1, 1, 1], [0], [0]>} : vector<2x8x8xf32>, vector<2x8x8xf32>, vector<2x8x8xf32> -> vector<2x8x8xf32>
    "tpu.trace_stop"() : () -> ()
    %cst_71 = arith.constant dense<0xFF800000> : vector<2x8xf32>
    %182 = vector.multi_reduction <maximumf>, %181, %cst_71 [2] : vector<2x8x8xf32> to vector<2x8xf32>
    %183 = vector.shape_cast %182 : vector<2x8xf32> to vector<2x8x1xf32>
    %184 = vector.broadcast %183 : vector<2x8x1xf32> to vector<2x8x8xf32>
    %185 = arith.subf %181, %184 : vector<2x8x8xf32>
    %186 = math.exp %185 : vector<2x8x8xf32>
    %cst_72 = arith.constant dense<0.000000e+00> : vector<2x8xf32>
    %187 = vector.multi_reduction <add>, %186, %cst_72 [2] : vector<2x8x8xf32> to vector<2x8xf32>
    %188 = vector.shape_cast %187 : vector<2x8xf32> to vector<2x8x1xf32>
    %189 = tpu.reciprocal %188 {approx = true} : vector<2x8x1xf32> -> vector<2x8x1xf32>
    %190 = vector.broadcast %189 : vector<2x8x1xf32> to vector<2x8x8xf32>
    %191 = arith.mulf %186, %190 : vector<2x8x8xf32>
    "tpu.trace_start"() <{level = 10 : i32, message = "bqk,bkd->bqd"}> : () -> ()
    %cst_73 = arith.constant dense<0.000000e+00> : vector<2x8x8xf32>
    %192 = tpu.matmul %191, %180, %cst_73 {dimension_numbers = #tpu.dot_dimension_numbers<[2], [1], [1], [2], [0, 0, 0, 1, 1, 2], [0], [0]>} : vector<2x8x8xf32>, vector<2x8x8xf32>, vector<2x8x8xf32> -> vector<2x8x8xf32>
    "tpu.trace_stop"() : () -> ()
    %193 = vector.shape_cast %192 : vector<2x8x8xf32> to vector<16x8xf32>
    %194 = vector.extract_strided_slice %148 {offsets = [8, 0], sizes = [8, 32], strides = [1, 1]} : vector<32x32xf32> to vector<8x32xf32>
    %cst_74 = arith.constant dense<0.000000e+00> : vector<16x32xf32>
    %195 = tpu.matmul %193, %194, %cst_74 {dimension_numbers = #tpu.dot_dimension_numbers<[1], [0], [0], [1], [0, 0, 1, 1], [], []>} : vector<16x8xf32>, vector<8x32xf32>, vector<16x32xf32> -> vector<16x32xf32>
    %196 = arith.addf %175, %195 : vector<16x32xf32>
    %197 = vector.extract_strided_slice %153 {offsets = [0, 0, 16], sizes = [2, 8, 8], strides = [1, 1, 1]} : vector<2x8x96xf32> to vector<2x8x8xf32>
    %cst_75 = arith.constant 0.353553385 : f32
    %198 = vector.broadcast %cst_75 : f32 to vector<2x8x8xf32>
    %199 = arith.mulf %197, %198 : vector<2x8x8xf32>
    %200 = vector.extract_strided_slice %153 {offsets = [0, 0, 48], sizes = [2, 8, 8], strides = [1, 1, 1]} : vector<2x8x96xf32> to vector<2x8x8xf32>
    %201 = vector.extract_strided_slice %153 {offsets = [0, 0, 80], sizes = [2, 8, 8], strides = [1, 1, 1]} : vector<2x8x96xf32> to vector<2x8x8xf32>
    "tpu.trace_start"() <{level = 10 : i32, message = "bqd,bkd->bqk"}> : () -> ()
    %cst_76 = arith.constant dense<0.000000e+00> : vector<2x8x8xf32>
    %202 = tpu.matmul %199, %200, %cst_76 {dimension_numbers = #tpu.dot_dimension_numbers<[2], [2], [1], [1], [0, 0, 0, 1, 1, 1], [0], [0]>} : vector<2x8x8xf32>, vector<2x8x8xf32>, vector<2x8x8xf32> -> vector<2x8x8xf32>
    "tpu.trace_stop"() : () -> ()
    %cst_77 = arith.constant dense<0xFF800000> : vector<2x8xf32>
    %203 = vector.multi_reduction <maximumf>, %202, %cst_77 [2] : vector<2x8x8xf32> to vector<2x8xf32>
    %204 = vector.shape_cast %203 : vector<2x8xf32> to vector<2x8x1xf32>
    %205 = vector.broadcast %204 : vector<2x8x1xf32> to vector<2x8x8xf32>
    %206 = arith.subf %202, %205 : vector<2x8x8xf32>
    %207 = math.exp %206 : vector<2x8x8xf32>
    %cst_78 = arith.constant dense<0.000000e+00> : vector<2x8xf32>
    %208 = vector.multi_reduction <add>, %207, %cst_78 [2] : vector<2x8x8xf32> to vector<2x8xf32>
    %209 = vector.shape_cast %208 : vector<2x8xf32> to vector<2x8x1xf32>
    %210 = tpu.reciprocal %209 {approx = true} : vector<2x8x1xf32> -> vector<2x8x1xf32>
    %211 = vector.broadcast %210 : vector<2x8x1xf32> to vector<2x8x8xf32>
    %212 = arith.mulf %207, %211 : vector<2x8x8xf32>
    "tpu.trace_start"() <{level = 10 : i32, message = "bqk,bkd->bqd"}> : () -> ()
    %cst_79 = arith.constant dense<0.000000e+00> : vector<2x8x8xf32>
    %213 = tpu.matmul %212, %201, %cst_79 {dimension_numbers = #tpu.dot_dimension_numbers<[2], [1], [1], [2], [0, 0, 0, 1, 1, 2], [0], [0]>} : vector<2x8x8xf32>, vector<2x8x8xf32>, vector<2x8x8xf32> -> vector<2x8x8xf32>
    "tpu.trace_stop"() : () -> ()
    %214 = vector.shape_cast %213 : vector<2x8x8xf32> to vector<16x8xf32>
    %215 = vector.extract_strided_slice %148 {offsets = [16, 0], sizes = [8, 32], strides = [1, 1]} : vector<32x32xf32> to vector<8x32xf32>
    %cst_80 = arith.constant dense<0.000000e+00> : vector<16x32xf32>
    %216 = tpu.matmul %214, %215, %cst_80 {dimension_numbers = #tpu.dot_dimension_numbers<[1], [0], [0], [1], [0, 0, 1, 1], [], []>} : vector<16x8xf32>, vector<8x32xf32>, vector<16x32xf32> -> vector<16x32xf32>
    %217 = arith.addf %196, %216 : vector<16x32xf32>
    %218 = vector.extract_strided_slice %153 {offsets = [0, 0, 24], sizes = [2, 8, 8], strides = [1, 1, 1]} : vector<2x8x96xf32> to vector<2x8x8xf32>
    %cst_81 = arith.constant 0.353553385 : f32
    %219 = vector.broadcast %cst_81 : f32 to vector<2x8x8xf32>
    %220 = arith.mulf %218, %219 : vector<2x8x8xf32>
    %221 = vector.extract_strided_slice %153 {offsets = [0, 0, 56], sizes = [2, 8, 8], strides = [1, 1, 1]} : vector<2x8x96xf32> to vector<2x8x8xf32>
    %222 = vector.extract_strided_slice %153 {offsets = [0, 0, 88], sizes = [2, 8, 8], strides = [1, 1, 1]} : vector<2x8x96xf32> to vector<2x8x8xf32>
    "tpu.trace_start"() <{level = 10 : i32, message = "bqd,bkd->bqk"}> : () -> ()
    %cst_82 = arith.constant dense<0.000000e+00> : vector<2x8x8xf32>
    %223 = tpu.matmul %220, %221, %cst_82 {dimension_numbers = #tpu.dot_dimension_numbers<[2], [2], [1], [1], [0, 0, 0, 1, 1, 1], [0], [0]>} : vector<2x8x8xf32>, vector<2x8x8xf32>, vector<2x8x8xf32> -> vector<2x8x8xf32>
    "tpu.trace_stop"() : () -> ()
    %cst_83 = arith.constant dense<0xFF800000> : vector<2x8xf32>
    %224 = vector.multi_reduction <maximumf>, %223, %cst_83 [2] : vector<2x8x8xf32> to vector<2x8xf32>
    %225 = vector.shape_cast %224 : vector<2x8xf32> to vector<2x8x1xf32>
    %226 = vector.broadcast %225 : vector<2x8x1xf32> to vector<2x8x8xf32>
    %227 = arith.subf %223, %226 : vector<2x8x8xf32>
    %228 = math.exp %227 : vector<2x8x8xf32>
    %cst_84 = arith.constant dense<0.000000e+00> : vector<2x8xf32>
    %229 = vector.multi_reduction <add>, %228, %cst_84 [2] : vector<2x8x8xf32> to vector<2x8xf32>
    %230 = vector.shape_cast %229 : vector<2x8xf32> to vector<2x8x1xf32>
    %231 = tpu.reciprocal %230 {approx = true} : vector<2x8x1xf32> -> vector<2x8x1xf32>
    %232 = vector.broadcast %231 : vector<2x8x1xf32> to vector<2x8x8xf32>
    %233 = arith.mulf %228, %232 : vector<2x8x8xf32>
    "tpu.trace_start"() <{level = 10 : i32, message = "bqk,bkd->bqd"}> : () -> ()
    %cst_85 = arith.constant dense<0.000000e+00> : vector<2x8x8xf32>
    %234 = tpu.matmul %233, %222, %cst_85 {dimension_numbers = #tpu.dot_dimension_numbers<[2], [1], [1], [2], [0, 0, 0, 1, 1, 2], [0], [0]>} : vector<2x8x8xf32>, vector<2x8x8xf32>, vector<2x8x8xf32> -> vector<2x8x8xf32>
    "tpu.trace_stop"() : () -> ()
    %235 = vector.shape_cast %234 : vector<2x8x8xf32> to vector<16x8xf32>
    %236 = vector.extract_strided_slice %148 {offsets = [24, 0], sizes = [8, 32], strides = [1, 1]} : vector<32x32xf32> to vector<8x32xf32>
    %cst_86 = arith.constant dense<0.000000e+00> : vector<16x32xf32>
    %237 = tpu.matmul %235, %236, %cst_86 {dimension_numbers = #tpu.dot_dimension_numbers<[1], [0], [0], [1], [0, 0, 1, 1], [], []>} : vector<16x8xf32>, vector<8x32xf32>, vector<16x32xf32> -> vector<16x32xf32>
    %238 = arith.addf %217, %237 : vector<16x32xf32>
    %239 = vector.broadcast %149 : vector<1x32xf32> to vector<16x32xf32>
    %240 = arith.addf %238, %239 : vector<16x32xf32>
    %241 = arith.addf %121, %240 : vector<16x32xf32>
    %c0_87 = arith.constant 0 : index
    %c0_88 = arith.constant 0 : index
    %242 = vector.load %arg14[%c0_87, %c0_88] : memref<1x32xf32, #tpu.memory_space<vmem>>, vector<1x32xf32>
    %c0_89 = arith.constant 0 : index
    %c0_90 = arith.constant 0 : index
    %243 = vector.load %arg15[%c0_89, %c0_90] : memref<1x32xf32, #tpu.memory_space<vmem>>, vector<1x32xf32>
    %cst_91 = arith.constant dense<0.000000e+00> : vector<16xf32>
    %244 = vector.multi_reduction <add>, %241, %cst_91 [1] : vector<16x32xf32> to vector<16xf32>
    %245 = vector.shape_cast %244 : vector<16xf32> to vector<16x1xf32>
    %cst_92 = arith.constant 3.200000e+01 : f32
    %246 = vector.broadcast %cst_92 : f32 to vector<16x1xf32>
    %247 = arith.divf %245, %246 : vector<16x1xf32>
    %248 = vector.broadcast %247 : vector<16x1xf32> to vector<16x32xf32>
    %249 = arith.subf %241, %248 : vector<16x32xf32>
    %250 = arith.mulf %249, %249 : vector<16x32xf32>
    %cst_93 = arith.constant dense<0.000000e+00> : vector<16xf32>
    %251 = vector.multi_reduction <add>, %250, %cst_93 [1] : vector<16x32xf32> to vector<16xf32>
    %252 = vector.shape_cast %251 : vector<16xf32> to vector<16x1xf32>
    %cst_94 = arith.constant 3.200000e+01 : f32
    %253 = vector.broadcast %cst_94 : f32 to vector<16x1xf32>
    %254 = arith.divf %252, %253 : vector<16x1xf32>
    %255 = vector.broadcast %247 : vector<16x1xf32> to vector<16x32xf32>
    %256 = arith.subf %241, %255 : vector<16x32xf32>
    %cst_95 = arith.constant 9.99999974E-6 : f32
    %257 = vector.broadcast %cst_95 : f32 to vector<16x1xf32>
    %258 = arith.addf %254, %257 : vector<16x1xf32>
    %259 = math.rsqrt %258 : vector<16x1xf32>
    %260 = vector.broadcast %259 : vector<16x1xf32> to vector<16x32xf32>
    %261 = arith.mulf %256, %260 : vector<16x32xf32>
    %262 = vector.broadcast %242 : vector<1x32xf32> to vector<16x32xf32>
    %263 = arith.mulf %261, %262 : vector<16x32xf32>
    %264 = vector.broadcast %243 : vector<1x32xf32> to vector<16x32xf32>
    %265 = arith.addf %263, %264 : vector<16x32xf32>
    %c0_96 = arith.constant 0 : index
    %c0_97 = arith.constant 0 : index
    %266 = vector.load %arg16[%c0_96, %c0_97] : memref<32x64xf32, #tpu.memory_space<vmem>>, vector<32x64xf32>
    %cst_98 = arith.constant dense<0.000000e+00> : vector<16x64xf32>
    %267 = tpu.matmul %265, %266, %cst_98 {dimension_numbers = #tpu.dot_dimension_numbers<[1], [0], [0], [1], [0, 0, 1, 1], [], []>} : vector<16x32xf32>, vector<32x64xf32>, vector<16x64xf32> -> vector<16x64xf32>
    %c0_99 = arith.constant 0 : index
    %c0_100 = arith.constant 0 : index
    %268 = vector.load %arg17[%c0_99, %c0_100] : memref<1x64xf32, #tpu.memory_space<vmem>>, vector<1x64xf32>
    %269 = vector.broadcast %268 : vector<1x64xf32> to vector<16x64xf32>
    %270 = arith.addf %267, %269 : vector<16x64xf32>
    %cst_101 = arith.constant 0.000000e+00 : f32
    %271 = vector.broadcast %cst_101 : f32 to vector<16x64xf32>
    %272 = arith.maximumf %270, %271 : vector<16x64xf32>
    %c0_102 = arith.constant 0 : index
    %c0_103 = arith.constant 0 : index
    %273 = vector.load %arg18[%c0_102, %c0_103] : memref<64x32xf32, #tpu.memory_space<vmem>>, vector<64x32xf32>
    %cst_104 = arith.constant dense<0.000000e+00> : vector<16x32xf32>
    %274 = tpu.matmul %272, %273, %cst_104 {dimension_numbers = #tpu.dot_dimension_numbers<[1], [0], [0], [1], [0, 0, 1, 1], [], []>} : vector<16x64xf32>, vector<64x32xf32>, vector<16x32xf32> -> vector<16x32xf32>
    %c0_105 = arith.constant 0 : index
    %c0_106 = arith.constant 0 : index
    %275 = vector.load %arg19[%c0_105, %c0_106] : memref<1x32xf32, #tpu.memory_space<vmem>>, vector<1x32xf32>
    %276 = vector.broadcast %275 : vector<1x32xf32> to vector<16x32xf32>
    %277 = arith.addf %274, %276 : vector<16x32xf32>
    %278 = arith.addf %241, %277 : vector<16x32xf32>
    %279 = vector.shape_cast %278 : vector<16x32xf32> to vector<2x8x32xf32>
    %c0_107 = arith.constant 0 : index
    %c0_108 = arith.constant 0 : index
    %c0_109 = arith.constant 0 : index
    %280 = vector.load %arg20[%c0_107, %c0_108, %c0_109] : memref<2x8x32xf32, #tpu.memory_space<vmem>>, vector<2x8x32xf32>
    tpu.vector_store %arg20[%c0_107, %c0_108, %c0_109], %279 {strides = array<i32>} : memref<2x8x32xf32, #tpu.memory_space<vmem>>, vector<2x8x32xf32>,
    return
  }
  func.func @transform_0(%arg0: i32) -> (i32, i32, i32) {
    %c0_i32 = arith.constant 0 : i32
    %c0_i32_0 = arith.constant 0 : i32
    %c0_i32_1 = arith.constant 0 : i32
    return %arg0, %c0_i32, %c0_i32_0 : i32, i32, i32
  }
  func.func @transform_1(%arg0: i32) -> (i32, i32) {
    %c0_i32 = arith.constant 0 : i32
    %c0_i32_0 = arith.constant 0 : i32
    %c0_i32_1 = arith.constant 0 : i32
    return %c0_i32, %c0_i32_0 : i32, i32
  }
  func.func @transform_2(%arg0: i32) -> (i32, i32) {
    %c0_i32 = arith.constant 0 : i32
    %c0_i32_0 = arith.constant 0 : i32
    %c0_i32_1 = arith.constant 0 : i32
    return %c0_i32, %c0_i32_0 : i32, i32
  }
  func.func @transform_3(%arg0: i32) -> (i32, i32) {
    %c0_i32 = arith.constant 0 : i32
    %c0_i32_0 = arith.constant 0 : i32
    %c0_i32_1 = arith.constant 0 : i32
    return %c0_i32, %c0_i32_0 : i32, i32
  }
  func.func @transform_4(%arg0: i32) -> (i32, i32) {
    %c0_i32 = arith.constant 0 : i32
    %c0_i32_0 = arith.constant 0 : i32
    %c0_i32_1 = arith.constant 0 : i32
    return %c0_i32, %c0_i32_0 : i32, i32
  }
  func.func @transform_5(%arg0: i32) -> (i32, i32) {
    %c0_i32 = arith.constant 0 : i32
    %c0_i32_0 = arith.constant 0 : i32
    %c0_i32_1 = arith.constant 0 : i32
    return %c0_i32, %c0_i32_0 : i32, i32
  }
  func.func @transform_6(%arg0: i32) -> (i32, i32) {
    %c0_i32 = arith.constant 0 : i32
    %c0_i32_0 = arith.constant 0 : i32
    %c0_i32_1 = arith.constant 0 : i32
    return %c0_i32, %c0_i32_0 : i32, i32
  }
  func.func @transform_7(%arg0: i32) -> (i32, i32) {
    %c0_i32 = arith.constant 0 : i32
    %c0_i32_0 = arith.constant 0 : i32
    %c0_i32_1 = arith.constant 0 : i32
    return %c0_i32, %c0_i32_0 : i32, i32
  }
  func.func @transform_8(%arg0: i32) -> (i32, i32) {
    %c0_i32 = arith.constant 0 : i32
    %c0_i32_0 = arith.constant 0 : i32
    %c0_i32_1 = arith.constant 0 : i32
    return %c0_i32, %c0_i32_0 : i32, i32
  }
  func.func @transform_9(%arg0: i32) -> (i32, i32) {
    %c0_i32 = arith.constant 0 : i32
    %c0_i32_0 = arith.constant 0 : i32
    %c0_i32_1 = arith.constant 0 : i32
    return %c0_i32, %c0_i32_0 : i32, i32
  }
  func.func @transform_10(%arg0: i32) -> (i32, i32) {
    %c0_i32 = arith.constant 0 : i32
    %c0_i32_0 = arith.constant 0 : i32
    %c0_i32_1 = arith.constant 0 : i32
    return %c0_i32, %c0_i32_0 : i32, i32
  }
  func.func @transform_11(%arg0: i32) -> (i32, i32) {
    %c0_i32 = arith.constant 0 : i32
    %c0_i32_0 = arith.constant 0 : i32
    %c0_i32_1 = arith.constant 0 : i32
    return %c0_i32, %c0_i32_0 : i32, i32
  }
  func.func @transform_12(%arg0: i32) -> (i32, i32) {
    %c0_i32 = arith.constant 0 : i32
    %c0_i32_0 = arith.constant 0 : i32
    %c0_i32_1 = arith.constant 0 : i32
    return %c0_i32, %c0_i32_0 : i32, i32
  }
  func.func @transform_13(%arg0: i32) -> (i32, i32) {
    %c0_i32 = arith.constant 0 : i32
    %c0_i32_0 = arith.constant 0 : i32
    %c0_i32_1 = arith.constant 0 : i32
    return %c0_i32, %c0_i32_0 : i32, i32
  }
  func.func @transform_14(%arg0: i32) -> (i32, i32) {
    %c0_i32 = arith.constant 0 : i32
    %c0_i32_0 = arith.constant 0 : i32
    %c0_i32_1 = arith.constant 0 : i32
    return %c0_i32, %c0_i32_0 : i32, i32
  }
  func.func @transform_15(%arg0: i32) -> (i32, i32) {
    %c0_i32 = arith.constant 0 : i32
    %c0_i32_0 = arith.constant 0 : i32
    %c0_i32_1 = arith.constant 0 : i32
    return %c0_i32, %c0_i32_0 : i32, i32
  }
  func.func @transform_16(%arg0: i32) -> (i32, i32) {
    %c0_i32 = arith.constant 0 : i32
    %c0_i32_0 = arith.constant 0 : i32
    %c0_i32_1 = arith.constant 0 : i32
    return %c0_i32, %c0_i32_0 : i32, i32
  }
  func.func @transform_17(%arg0: i32) -> (i32, i32) {
    %c0_i32 = arith.constant 0 : i32
    %c0_i32_0 = arith.constant 0 : i32
    %c0_i32_1 = arith.constant 0 : i32
    return %c0_i32, %c0_i32_0 : i32, i32
  }
  func.func @transform_18(%arg0: i32) -> (i32, i32) {
    %c0_i32 = arith.constant 0 : i32
    %c0_i32_0 = arith.constant 0 : i32
    %c0_i32_1 = arith.constant 0 : i32
    return %c0_i32, %c0_i32_0 : i32, i32
  }
  func.func @transform_19(%arg0: i32) -> (i32, i32, i32) {
    %c0_i32 = arith.constant 0 : i32
    %c0_i32_0 = arith.constant 0 : i32
    %c0_i32_1 = arith.constant 0 : i32
    return %arg0, %c0_i32, %c0_i32_0 : i32, i32, i32
  }
}

module attributes {stable_mosaic.version = 11 : i64} {
  func.func @light_omega_kernel(%arg0: i32, %arg1: memref<2x8x32xf32, #tpu.memory_space<vmem>>, %arg2: memref<1x32xf32, #tpu.memory_space<vmem>>, %arg3: memref<1x32xf32, #tpu.memory_space<vmem>>, %arg4: memref<32x96xf32, #tpu.memory_space<vmem>>, %arg5: memref<1x96xf32, #tpu.memory_space<vmem>>, %arg6: memref<32x32xf32, #tpu.memory_space<vmem>>, %arg7: memref<1x32xf32, #tpu.memory_space<vmem>>, %arg8: memref<1x32xf32, #tpu.memory_space<vmem>>, %arg9: memref<1x32xf32, #tpu.memory_space<vmem>>, %arg10: memref<32x96xf32, #tpu.memory_space<vmem>>, %arg11: memref<1x96xf32, #tpu.memory_space<vmem>>, %arg12: memref<32x32xf32, #tpu.memory_space<vmem>>, %arg13: memref<1x32xf32, #tpu.memory_space<vmem>>, %arg14: memref<1x32xf32, #tpu.memory_space<vmem>>, %arg15: memref<1x32xf32, #tpu.memory_space<vmem>>, %arg16: memref<32x64xf32, #tpu.memory_space<vmem>>, %arg17: memref<1x64xf32, #tpu.memory_space<vmem>>, %arg18: memref<64x32xf32, #tpu.memory_space<vmem>>, %arg19: memref<1x32xf32, #tpu.memory_space<vmem>>, %arg20: memref<2x8x32xf32, #tpu.memory_space<vmem>>) attributes {dimension_semantics = [#tpu.dimension_semantics<parallel>], iteration_bounds = array<i64: 2>, scalar_prefetch = 0 : i64, scratch_operands = 0 : i64, tpu.core_type = #tpu.core_type<tc>, window_params = [{transform_indices = @transform_0, window_bounds = array<i64: 2, 8, 32>}, {pipeline_mode = #tpu.pipeline_mode<synchronous>, transform_indices = @transform_1, window_bounds = array<i64: 1, 32>}, {pipeline_mode = #tpu.pipeline_mode<synchronous>, transform_indices = @transform_2, window_bounds = array<i64: 1, 32>}, {pipeline_mode = #tpu.pipeline_mode<synchronous>, transform_indices = @transform_3, window_bounds = array<i64: 32, 96>}, {pipeline_mode = #tpu.pipeline_mode<synchronous>, transform_indices = @transform_4, window_bounds = array<i64: 1, 96>}, {pipeline_mode = #tpu.pipeline_mode<synchronous>, transform_indices = @transform_5, window_bounds = array<i64: 32, 32>}, {pipeline_mode = #tpu.pipeline_mode<synchronous>, transform_indices = @transform_6, window_bounds = array<i64: 1, 32>}, {pipeline_mode = #tpu.pipeline_mode<synchronous>, transform_indices = @transform_7, window_bounds = array<i64: 1, 32>}, {pipeline_mode = #tpu.pipeline_mode<synchronous>, transform_indices = @transform_8, window_bounds = array<i64: 1, 32>}, {pipeline_mode = #tpu.pipeline_mode<synchronous>, transform_indices = @transform_9, window_bounds = array<i64: 32, 96>}, {pipeline_mode = #tpu.pipeline_mode<synchronous>, transform_indices = @transform_10, window_bounds = array<i64: 1, 96>}, {pipeline_mode = #tpu.pipeline_mode<synchronous>, transform_indices = @transform_11, window_bounds = array<i64: 32, 32>}, {pipeline_mode = #tpu.pipeline_mode<synchronous>, transform_indices = @transform_12, window_bounds = array<i64: 1, 32>}, {pipeline_mode = #tpu.pipeline_mode<synchronous>, transform_indices = @transform_13, window_bounds = array<i64: 1, 32>}, {pipeline_mode = #tpu.pipeline_mode<synchronous>, transform_indices = @transform_14, window_bounds = array<i64: 1, 32>}, {pipeline_mode = #tpu.pipeline_mode<synchronous>, transform_indices = @transform_15, window_bounds = array<i64: 32, 64>}, {pipeline_mode = #tpu.pipeline_mode<synchronous>, transform_indices = @transform_16, window_bounds = array<i64: 1, 64>}, {pipeline_mode = #tpu.pipeline_mode<synchronous>, transform_indices = @transform_17, window_bounds = array<i64: 64, 32>}, {pipeline_mode = #tpu.pipeline_mode<synchronous>, transform_indices = @transform_18, window_bounds = array<i64: 1, 32>}, {transform_indices = @transform_19, window_bounds = array<i64: 2, 8, 32>}]} {
    %c0 = arith.constant 0 : index
    %c0_0 = arith.constant 0 : index
    %c0_1 = arith.constant 0 : index
    %0 = vector.load %arg1[%c0, %c0_0, %c0_1] : memref<2x8x32xf32, #tpu.memory_space<vmem>>, vector<2x8x32xf32>
    %1 = vector.shape_cast %0 : vector<2x8x32xf32> to vector<16x32xf32>
    %c0_2 = arith.constant 0 : index
    %c0_3 = arith.constant 0 : index
    %2 = vector.load %arg2[%c0_2, %c0_3] : memref<1x32xf32, #tpu.memory_space<vmem>>, vector<1x32xf32>
    %c0_4 = arith.constant 0 : index
    %c0_5 = arith.constant 0 : index
    %3 = vector.load %arg3[%c0_4, %c0_5] : memref<1x32xf32, #tpu.memory_space<vmem>>, vector<1x32xf32>
    %cst = arith.constant dense<0.000000e+00> : vector<16xf32>
    %4 = vector.multi_reduction <add>, %1, %cst [1] : vector<16x32xf32> to vector<16xf32>
    %5 = vector.shape_cast %4 : vector<16xf32> to vector<16x1xf32>
    %cst_6 = arith.constant 3.200000e+01 : f32
    %6 = vector.broadcast %cst_6 : f32 to vector<16x1xf32>
    %7 = arith.divf %5, %6 : vector<16x1xf32>
    %8 = vector.broadcast %7 : vector<16x1xf32> to vector<16x32xf32>
    %9 = arith.subf %1, %8 : vector<16x32xf32>
    %10 = arith.mulf %9, %9 : vector<16x32xf32>
    %cst_7 = arith.constant dense<0.000000e+00> : vector<16xf32>
    %11 = vector.multi_reduction <add>, %10, %cst_7 [1] : vector<16x32xf32> to vector<16xf32>
    %12 = vector.shape_cast %11 : vector<16xf32> to vector<16x1xf32>
    %cst_8 = arith.constant 3.200000e+01 : f32
    %13 = vector.broadcast %cst_8 : f32 to vector<16x1xf32>
    %14 = arith.divf %12, %13 : vector<16x1xf32>
    %15 = vector.broadcast %7 : vector<16x1xf32> to vector<16x32xf32>
    %16 = arith.subf %1, %15 : vector<16x32xf32>
    %cst_9 = arith.constant 9.99999974E-6 : f32
    %17 = vector.broadcast %cst_9 : f32 to vector<16x1xf32>
    %18 = arith.addf %14, %17 : vector<16x1xf32>
    %19 = math.rsqrt %18 : vector<16x1xf32>
    %20 = vector.broadcast %19 : vector<16x1xf32> to vector<16x32xf32>
    %21 = arith.mulf %16, %20 : vector<16x32xf32>
    %22 = vector.broadcast %2 : vector<1x32xf32> to vector<16x32xf32>
    %23 = arith.mulf %21, %22 : vector<16x32xf32>
    %24 = vector.broadcast %3 : vector<1x32xf32> to vector<16x32xf32>
    %25 = arith.addf %23, %24 : vector<16x32xf32>
    %c0_10 = arith.constant 0 : index
    %c0_11 = arith.constant 0 : index
    %26 = vector.load %arg4[%c0_10, %c0_11] : memref<32x96xf32, #tpu.memory_space<vmem>>, vector<32x96xf32>
    %c0_12 = arith.constant 0 : index
    %c0_13 = arith.constant 0 : index
    %27 = vector.load %arg5[%c0_12, %c0_13] : memref<1x96xf32, #tpu.memory_space<vmem>>, vector<1x96xf32>
    %c0_14 = arith.constant 0 : index
    %c0_15 = arith.constant 0 : index
    %28 = vector.load %arg6[%c0_14, %c0_15] : memref<32x32xf32, #tpu.memory_space<vmem>>, vector<32x32xf32>
    %c0_16 = arith.constant 0 : index
    %c0_17 = arith.constant 0 : index
    %29 = vector.load %arg7[%c0_16, %c0_17] : memref<1x32xf32, #tpu.memory_space<vmem>>, vector<1x32xf32>
    %cst_18 = arith.constant dense<0.000000e+00> : vector<16x96xf32>
    %30 = tpu.matmul %25, %26, %cst_18 {dimension_numbers = #tpu.dot_dimension_numbers<[1], [0], [0], [1], [0, 0, 1, 1], [], []>} : vector<16x32xf32>, vector<32x96xf32>, vector<16x96xf32> -> vector<16x96xf32>
    %31 = vector.broadcast %27 : vector<1x96xf32> to vector<16x96xf32>
    %32 = arith.addf %30, %31 : vector<16x96xf32>
    %33 = vector.shape_cast %32 : vector<16x96xf32> to vector<2x8x96xf32>
    %cst_19 = arith.constant 0.000000e+00 : f32
    %34 = vector.broadcast %cst_19 : f32 to vector<16x32xf32>
    %35 = vector.extract_strided_slice %33 {offsets = [0, 0, 0], sizes = [2, 8, 8], strides = [1, 1, 1]} : vector<2x8x96xf32> to vector<2x8x8xf32>
    %cst_20 = arith.constant 0.353553385 : f32
    %36 = vector.broadcast %cst_20 : f32 to vector<2x8x8xf32>
    %37 = arith.mulf %35, %36 : vector<2x8x8xf32>
    %38 = vector.extract_strided_slice %33 {offsets = [0, 0, 32], sizes = [2, 8, 8], strides = [1, 1, 1]} : vector<2x8x96xf32> to vector<2x8x8xf32>
    %39 = vector.extract_strided_slice %33 {offsets = [0, 0, 64], sizes = [2, 8, 8], strides = [1, 1, 1]} : vector<2x8x96xf32> to vector<2x8x8xf32>
    "tpu.trace_start"() <{level = 10 : i32, message = "bqd,bkd->bqk"}> : () -> ()
    %cst_21 = arith.constant dense<0.000000e+00> : vector<2x8x8xf32>
    %40 = tpu.matmul %37, %38, %cst_21 {dimension_numbers = #tpu.dot_dimension_numbers<[2], [2], [1], [1], [0, 0, 0, 1, 1, 1], [0], [0]>} : vector<2x8x8xf32>, vector<2x8x8xf32>, vector<2x8x8xf32> -> vector<2x8x8xf32>
    "tpu.trace_stop"() : () -> ()
    %cst_22 = arith.constant dense<0xFF800000> : vector<2x8xf32>
    %41 = vector.multi_reduction <maximumf>, %40, %cst_22 [2] : vector<2x8x8xf32> to vector<2x8xf32>
    %42 = vector.shape_cast %41 : vector<2x8xf32> to vector<2x8x1xf32>
    %43 = vector.broadcast %42 : vector<2x8x1xf32> to vector<2x8x8xf32>
    %44 = arith.subf %40, %43 : vector<2x8x8xf32>
    %45 = math.exp %44 : vector<2x8x8xf32>
    %cst_23 = arith.constant dense<0.000000e+00> : vector<2x8xf32>
    %46 = vector.multi_reduction <add>, %45, %cst_23 [2] : vector<2x8x8xf32> to vector<2x8xf32>
    %47 = vector.shape_cast %46 : vector<2x8xf32> to vector<2x8x1xf32>
    %48 = tpu.reciprocal %47 {approx = true} : vector<2x8x1xf32> -> vector<2x8x1xf32>
    %49 = vector.broadcast %48 : vector<2x8x1xf32> to vector<2x8x8xf32>
    %50 = arith.mulf %45, %49 : vector<2x8x8xf32>
    "tpu.trace_start"() <{level = 10 : i32, message = "bqk,bkd->bqd"}> : () -> ()
    %cst_24 = arith.constant dense<0.000000e+00> : vector<2x8x8xf32>
    %51 = tpu.matmul %50, %39, %cst_24 {dimension_numbers = #tpu.dot_dimension_numbers<[2], [1], [1], [2], [0, 0, 0, 1, 1, 2], [0], [0]>} : vector<2x8x8xf32>, vector<2x8x8xf32>, vector<2x8x8xf32> -> vector<2x8x8xf32>
    "tpu.trace_stop"() : () -> ()
    %52 = vector.shape_cast %51 : vector<2x8x8xf32> to vector<16x8xf32>
    %53 = vector.extract_strided_slice %28 {offsets = [0, 0], sizes = [8, 32], strides = [1, 1]} : vector<32x32xf32> to vector<8x32xf32>
    %cst_25 = arith.constant dense<0.000000e+00> : vector<16x32xf32>
    %54 = tpu.matmul %52, %53, %cst_25 {dimension_numbers = #tpu.dot_dimension_numbers<[1], [0], [0], [1], [0, 0, 1, 1], [], []>} : vector<16x8xf32>, vector<8x32xf32>, vector<16x32xf32> -> vector<16x32xf32>
    %55 = arith.addf %34, %54 : vector<16x32xf32>
    %56 = vector.extract_strided_slice %33 {offsets = [0, 0, 8], sizes = [2, 8, 8], strides = [1, 1, 1]} : vector<2x8x96xf32> to vector<2x8x8xf32>
    %cst_26 = arith.constant 0.353553385 : f32
    %57 = vector.broadcast %cst_26 : f32 to vector<2x8x8xf32>
    %58 = arith.mulf %56, %57 : vector<2x8x8xf32>
    %59 = vector.extract_strided_slice %33 {offsets = [0, 0, 40], sizes = [2, 8, 8], strides = [1, 1, 1]} : vector<2x8x96xf32> to vector<2x8x8xf32>
    %60 = vector.extract_strided_slice %33 {offsets = [0, 0, 72], sizes = [2, 8, 8], strides = [1, 1, 1]} : vector<2x8x96xf32> to vector<2x8x8xf32>
    "tpu.trace_start"() <{level = 10 : i32, message = "bqd,bkd->bqk"}> : () -> ()
    %cst_27 = arith.constant dense<0.000000e+00> : vector<2x8x8xf32>
    %61 = tpu.matmul %58, %59, %cst_27 {dimension_numbers = #tpu.dot_dimension_numbers<[2], [2], [1], [1], [0, 0, 0, 1, 1, 1], [0], [0]>} : vector<2x8x8xf32>, vector<2x8x8xf32>, vector<2x8x8xf32> -> vector<2x8x8xf32>
    "tpu.trace_stop"() : () -> ()
    %cst_28 = arith.constant dense<0xFF800000> : vector<2x8xf32>
    %62 = vector.multi_reduction <maximumf>, %61, %cst_28 [2] : vector<2x8x8xf32> to vector<2x8xf32>
    %63 = vector.shape_cast %62 : vector<2x8xf32> to vector<2x8x1xf32>
    %64 = vector.broadcast %63 : vector<2x8x1xf32> to vector<2x8x8xf32>
    %65 = arith.subf %61, %64 : vector<2x8x8xf32>
    %66 = math.exp %65 : vector<2x8x8xf32>
    %cst_29 = arith.constant dense<0.000000e+00> : vector<2x8xf32>
    %67 = vector.multi_reduction <add>, %66, %cst_29 [2] : vector<2x8x8xf32> to vector<2x8xf32>
    %68 = vector.shape_cast %67 : vector<2x8xf32> to vector<2x8x1xf32>
    %69 = tpu.reciprocal %68 {approx = true} : vector<2x8x1xf32> -> vector<2x8x1xf32>
    %70 = vector.broadcast %69 : vector<2x8x1xf32> to vector<2x8x8xf32>
    %71 = arith.mulf %66, %70 : vector<2x8x8xf32>
    "tpu.trace_start"() <{level = 10 : i32, message = "bqk,bkd->bqd"}> : () -> ()
    %cst_30 = arith.constant dense<0.000000e+00> : vector<2x8x8xf32>
    %72 = tpu.matmul %71, %60, %cst_30 {dimension_numbers = #tpu.dot_dimension_numbers<[2], [1], [1], [2], [0, 0, 0, 1, 1, 2], [0], [0]>} : vector<2x8x8xf32>, vector<2x8x8xf32>, vector<2x8x8xf32> -> vector<2x8x8xf32>
    "tpu.trace_stop"() : () -> ()
    %73 = vector.shape_cast %72 : vector<2x8x8xf32> to vector<16x8xf32>
    %74 = vector.extract_strided_slice %28 {offsets = [8, 0], sizes = [8, 32], strides = [1, 1]} : vector<32x32xf32> to vector<8x32xf32>
    %cst_31 = arith.constant dense<0.000000e+00> : vector<16x32xf32>
    %75 = tpu.matmul %73, %74, %cst_31 {dimension_numbers = #tpu.dot_dimension_numbers<[1], [0], [0], [1], [0, 0, 1, 1], [], []>} : vector<16x8xf32>, vector<8x32xf32>, vector<16x32xf32> -> vector<16x32xf32>
    %76 = arith.addf %55, %75 : vector<16x32xf32>
    %77 = vector.extract_strided_slice %33 {offsets = [0, 0, 16], sizes = [2, 8, 8], strides = [1, 1, 1]} : vector<2x8x96xf32> to vector<2x8x8xf32>
    %cst_32 = arith.constant 0.353553385 : f32
    %78 = vector.broadcast %cst_32 : f32 to vector<2x8x8xf32>
    %79 = arith.mulf %77, %78 : vector<2x8x8xf32>
    %80 = vector.extract_strided_slice %33 {offsets = [0, 0, 48], sizes = [2, 8, 8], strides = [1, 1, 1]} : vector<2x8x96xf32> to vector<2x8x8xf32>
    %81 = vector.extract_strided_slice %33 {offsets = [0, 0, 80], sizes = [2, 8, 8], strides = [1, 1, 1]} : vector<2x8x96xf32> to vector<2x8x8xf32>
    "tpu.trace_start"() <{level = 10 : i32, message = "bqd,bkd->bqk"}> : () -> ()
    %cst_33 = arith.constant dense<0.000000e+00> : vector<2x8x8xf32>
    %82 = tpu.matmul %79, %80, %cst_33 {dimension_numbers = #tpu.dot_dimension_numbers<[2], [2], [1], [1], [0, 0, 0, 1, 1, 1], [0], [0]>} : vector<2x8x8xf32>, vector<2x8x8xf32>, vector<2x8x8xf32> -> vector<2x8x8xf32>
    "tpu.trace_stop"() : () -> ()
    %cst_34 = arith.constant dense<0xFF800000> : vector<2x8xf32>
    %83 = vector.multi_reduction <maximumf>, %82, %cst_34 [2] : vector<2x8x8xf32> to vector<2x8xf32>
    %84 = vector.shape_cast %83 : vector<2x8xf32> to vector<2x8x1xf32>
    %85 = vector.broadcast %84 : vector<2x8x1xf32> to vector<2x8x8xf32>
    %86 = arith.subf %82, %85 : vector<2x8x8xf32>
    %87 = math.exp %86 : vector<2x8x8xf32>
    %cst_35 = arith.constant dense<0.000000e+00> : vector<2x8xf32>
    %88 = vector.multi_reduction <add>, %87, %cst_35 [2] : vector<2x8x8xf32> to vector<2x8xf32>
    %89 = vector.shape_cast %88 : vector<2x8xf32> to vector<2x8x1xf32>
    %90 = tpu.reciprocal %89 {approx = true} : vector<2x8x1xf32> -> vector<2x8x1xf32>
    %91 = vector.broadcast %90 : vector<2x8x1xf32> to vector<2x8x8xf32>
    %92 = arith.mulf %87, %91 : vector<2x8x8xf32>
    "tpu.trace_start"() <{level = 10 : i32, message = "bqk,bkd->bqd"}> : () -> ()
    %cst_36 = arith.constant dense<0.000000e+00> : vector<2x8x8xf32>
    %93 = tpu.matmul %92, %81, %cst_36 {dimension_numbers = #tpu.dot_dimension_numbers<[2], [1], [1], [2], [0, 0, 0, 1, 1, 2], [0], [0]>} : vector<2x8x8xf32>, vector<2x8x8xf32>, vector<2x8x8xf32> -> vector<2x8x8xf32>
    "tpu.trace_stop"() : () -> ()
    %94 = vector.shape_cast %93 : vector<2x8x8xf32> to vector<16x8xf32>
    %95 = vector.extract_strided_slice %28 {offsets = [16, 0], sizes = [8, 32], strides = [1, 1]} : vector<32x32xf32> to vector<8x32xf32>
    %cst_37 = arith.constant dense<0.000000e+00> : vector<16x32xf32>
    %96 = tpu.matmul %94, %95, %cst_37 {dimension_numbers = #tpu.dot_dimension_numbers<[1], [0], [0], [1], [0, 0, 1, 1], [], []>} : vector<16x8xf32>, vector<8x32xf32>, vector<16x32xf32> -> vector<16x32xf32>
    %97 = arith.addf %76, %96 : vector<16x32xf32>
    %98 = vector.extract_strided_slice %33 {offsets = [0, 0, 24], sizes = [2, 8, 8], strides = [1, 1, 1]} : vector<2x8x96xf32> to vector<2x8x8xf32>
    %cst_38 = arith.constant 0.353553385 : f32
    %99 = vector.broadcast %cst_38 : f32 to vector<2x8x8xf32>
    %100 = arith.mulf %98, %99 : vector<2x8x8xf32>
    %101 = vector.extract_strided_slice %33 {offsets = [0, 0, 56], sizes = [2, 8, 8], strides = [1, 1, 1]} : vector<2x8x96xf32> to vector<2x8x8xf32>
    %102 = vector.extract_strided_slice %33 {offsets = [0, 0, 88], sizes = [2, 8, 8], strides = [1, 1, 1]} : vector<2x8x96xf32> to vector<2x8x8xf32>
    "tpu.trace_start"() <{level = 10 : i32, message = "bqd,bkd->bqk"}> : () -> ()
    %cst_39 = arith.constant dense<0.000000e+00> : vector<2x8x8xf32>
    %103 = tpu.matmul %100, %101, %cst_39 {dimension_numbers = #tpu.dot_dimension_numbers<[2], [2], [1], [1], [0, 0, 0, 1, 1, 1], [0], [0]>} : vector<2x8x8xf32>, vector<2x8x8xf32>, vector<2x8x8xf32> -> vector<2x8x8xf32>
    "tpu.trace_stop"() : () -> ()
    %cst_40 = arith.constant dense<0xFF800000> : vector<2x8xf32>
    %104 = vector.multi_reduction <maximumf>, %103, %cst_40 [2] : vector<2x8x8xf32> to vector<2x8xf32>
    %105 = vector.shape_cast %104 : vector<2x8xf32> to vector<2x8x1xf32>
    %106 = vector.broadcast %105 : vector<2x8x1xf32> to vector<2x8x8xf32>
    %107 = arith.subf %103, %106 : vector<2x8x8xf32>
    %108 = math.exp %107 : vector<2x8x8xf32>
    %cst_41 = arith.constant dense<0.000000e+00> : vector<2x8xf32>
    %109 = vector.multi_reduction <add>, %108, %cst_41 [2] : vector<2x8x8xf32> to vector<2x8xf32>
    %110 = vector.shape_cast %109 : vector<2x8xf32> to vector<2x8x1xf32>
    %111 = tpu.reciprocal %110 {approx = true} : vector<2x8x1xf32> -> vector<2x8x1xf32>
    %112 = vector.broadcast %111 : vector<2x8x1xf32> to vector<2x8x8xf32>
    %113 = arith.mulf %108, %112 : vector<2x8x8xf32>
    "tpu.trace_start"() <{level = 10 : i32, message = "bqk,bkd->bqd"}> : () -> ()
    %cst_42 = arith.constant dense<0.000000e+00> : vector<2x8x8xf32>
    %114 = tpu.matmul %113, %102, %cst_42 {dimension_numbers = #tpu.dot_dimension_numbers<[2], [1], [1], [2], [0, 0, 0, 1, 1, 2], [0], [0]>} : vector<2x8x8xf32>, vector<2x8x8xf32>, vector<2x8x8xf32> -> vector<2x8x8xf32>
    "tpu.trace_stop"() : () -> ()
    %115 = vector.shape_cast %114 : vector<2x8x8xf32> to vector<16x8xf32>
    %116 = vector.extract_strided_slice %28 {offsets = [24, 0], sizes = [8, 32], strides = [1, 1]} : vector<32x32xf32> to vector<8x32xf32>
    %cst_43 = arith.constant dense<0.000000e+00> : vector<16x32xf32>
    %117 = tpu.matmul %115, %116, %cst_43 {dimension_numbers = #tpu.dot_dimension_numbers<[1], [0], [0], [1], [0, 0, 1, 1], [], []>} : vector<16x8xf32>, vector<8x32xf32>, vector<16x32xf32> -> vector<16x32xf32>
    %118 = arith.addf %97, %117 : vector<16x32xf32>
    %119 = vector.broadcast %29 : vector<1x32xf32> to vector<16x32xf32>
    %120 = arith.addf %118, %119 : vector<16x32xf32>
    %121 = arith.addf %1, %120 : vector<16x32xf32>
    %c0_44 = arith.constant 0 : index
    %c0_45 = arith.constant 0 : index
    %122 = vector.load %arg8[%c0_44, %c0_45] : memref<1x32xf32, #tpu.memory_space<vmem>>, vector<1x32xf32>
    %c0_46 = arith.constant 0 : index
    %c0_47 = arith.constant 0 : index
    %123 = vector.load %arg9[%c0_46, %c0_47] : memref<1x32xf32, #tpu.memory_space<vmem>>, vector<1x32xf32>
    %cst_48 = arith.constant dense<0.000000e+00> : vector<16xf32>
    %124 = vector.multi_reduction <add>, %121, %cst_48 [1] : vector<16x32xf32> to vector<16xf32>
    %125 = vector.shape_cast %124 : vector<16xf32> to vector<16x1xf32>
    %cst_49 = arith.constant 3.200000e+01 : f32
    %126 = vector.broadcast %cst_49 : f32 to vector<16x1xf32>
    %127 = arith.divf %125, %126 : vector<16x1xf32>
    %128 = vector.broadcast %127 : vector<16x1xf32> to vector<16x32xf32>
    %129 = arith.subf %121, %128 : vector<16x32xf32>
    %130 = arith.mulf %129, %129 : vector<16x32xf32>
    %cst_50 = arith.constant dense<0.000000e+00> : vector<16xf32>
    %131 = vector.multi_reduction <add>, %130, %cst_50 [1] : vector<16x32xf32> to vector<16xf32>
    %132 = vector.shape_cast %131 : vector<16xf32> to vector<16x1xf32>
    %cst_51 = arith.constant 3.200000e+01 : f32
    %133 = vector.broadcast %cst_51 : f32 to vector<16x1xf32>
    %134 = arith.divf %132, %133 : vector<16x1xf32>
    %135 = vector.broadcast %127 : vector<16x1xf32> to vector<16x32xf32>
    %136 = arith.subf %121, %135 : vector<16x32xf32>
    %cst_52 = arith.constant 9.99999974E-6 : f32
    %137 = vector.broadcast %cst_52 : f32 to vector<16x1xf32>
    %138 = arith.addf %134, %137 : vector<16x1xf32>
    %139 = math.rsqrt %138 : vector<16x1xf32>
    %140 = vector.broadcast %139 : vector<16x1xf32> to vector<16x32xf32>
    %141 = arith.mulf %136, %140 : vector<16x32xf32>
    %142 = vector.broadcast %122 : vector<1x32xf32> to vector<16x32xf32>
    %143 = arith.mulf %141, %142 : vector<16x32xf32>
    %144 = vector.broadcast %123 : vector<1x32xf32> to vector<16x32xf32>
    %145 = arith.addf %143, %144 : vector<16x32xf32>
    %c0_53 = arith.constant 0 : index
    %c0_54 = arith.constant 0 : index
    %146 = vector.load %arg10[%c0_53, %c0_54] : memref<32x96xf32, #tpu.memory_space<vmem>>, vector<32x96xf32>
    %c0_55 = arith.constant 0 : index
    %c0_56 = arith.constant 0 : index
    %147 = vector.load %arg11[%c0_55, %c0_56] : memref<1x96xf32, #tpu.memory_space<vmem>>, vector<1x96xf32>
    %c0_57 = arith.constant 0 : index
    %c0_58 = arith.constant 0 : index
    %148 = vector.load %arg12[%c0_57, %c0_58] : memref<32x32xf32, #tpu.memory_space<vmem>>, vector<32x32xf32>
    %c0_59 = arith.constant 0 : index
    %c0_60 = arith.constant 0 : index
    %149 = vector.load %arg13[%c0_59, %c0_60] : memref<1x32xf32, #tpu.memory_space<vmem>>, vector<1x32xf32>
    %cst_61 = arith.constant dense<0.000000e+00> : vector<16x96xf32>
    %150 = tpu.matmul %145, %146, %cst_61 {dimension_numbers = #tpu.dot_dimension_numbers<[1], [0], [0], [1], [0, 0, 1, 1], [], []>} : vector<16x32xf32>, vector<32x96xf32>, vector<16x96xf32> -> vector<16x96xf32>
    %151 = vector.broadcast %147 : vector<1x96xf32> to vector<16x96xf32>
    %152 = arith.addf %150, %151 : vector<16x96xf32>
    %153 = vector.shape_cast %152 : vector<16x96xf32> to vector<2x8x96xf32>
    %cst_62 = arith.constant 0.000000e+00 : f32
    %154 = vector.broadcast %cst_62 : f32 to vector<16x32xf32>
    %155 = vector.extract_strided_slice %153 {offsets = [0, 0, 0], sizes = [2, 8, 8], strides = [1, 1, 1]} : vector<2x8x96xf32> to vector<2x8x8xf32>
    %cst_63 = arith.constant 0.353553385 : f32
    %156 = vector.broadcast %cst_63 : f32 to vector<2x8x8xf32>
    %157 = arith.mulf %155, %156 : vector<2x8x8xf32>
    %158 = vector.extract_strided_slice %153 {offsets = [0, 0, 32], sizes = [2, 8, 8], strides = [1, 1, 1]} : vector<2x8x96xf32> to vector<2x8x8xf32>
    %159 = vector.extract_strided_slice %153 {offsets = [0, 0, 64], sizes = [2, 8, 8], strides = [1, 1, 1]} : vector<2x8x96xf32> to vector<2x8x8xf32>
    "tpu.trace_start"() <{level = 10 : i32, message = "bqd,bkd->bqk"}> : () -> ()
    %cst_64 = arith.constant dense<0.000000e+00> : vector<2x8x8xf32>
    %160 = tpu.matmul %157, %158, %cst_64 {dimension_numbers = #tpu.dot_dimension_numbers<[2], [2], [1], [1], [0, 0, 0, 1, 1, 1], [0], [0]>} : vector<2x8x8xf32>, vector<2x8x8xf32>, vector<2x8x8xf32> -> vector<2x8x8xf32>
    "tpu.trace_stop"() : () -> ()
    %cst_65 = arith.constant dense<0xFF800000> : vector<2x8xf32>
    %161 = vector.multi_reduction <maximumf>, %160, %cst_65 [2] : vector<2x8x8xf32> to vector<2x8xf32>
    %162 = vector.shape_cast %161 : vector<2x8xf32> to vector<2x8x1xf32>
    %163 = vector.broadcast %162 : vector<2x8x1xf32> to vector<2x8x8xf32>
    %164 = arith.subf %160, %163 : vector<2x8x8xf32>
    %165 = math.exp %164 : vector<2x8x8xf32>
    %cst_66 = arith.constant dense<0.000000e+00> : vector<2x8xf32>
    %166 = vector.multi_reduction <add>, %165, %cst_66 [2] : vector<2x8x8xf32> to vector<2x8xf32>
    %167 = vector.shape_cast %166 : vector<2x8xf32> to vector<2x8x1xf32>
    %168 = tpu.reciprocal %167 {approx = true} : vector<2x8x1xf32> -> vector<2x8x1xf32>
    %169 = vector.broadcast %168 : vector<2x8x1xf32> to vector<2x8x8xf32>
    %170 = arith.mulf %165, %169 : vector<2x8x8xf32>
    "tpu.trace_start"() <{level = 10 : i32, message = "bqk,bkd->bqd"}> : () -> ()
    %cst_67 = arith.constant dense<0.000000e+00> : vector<2x8x8xf32>
    %171 = tpu.matmul %170, %159, %cst_67 {dimension_numbers = #tpu.dot_dimension_numbers<[2], [1], [1], [2], [0, 0, 0, 1, 1, 2], [0], [0]>} : vector<2x8x8xf32>, vector<2x8x8xf32>, vector<2x8x8xf32> -> vector<2x8x8xf32>
    "tpu.trace_stop"() : () -> ()
    %172 = vector.shape_cast %171 : vector<2x8x8xf32> to vector<16x8xf32>
    %173 = vector.extract_strided_slice %148 {offsets = [0, 0], sizes = [8, 32], strides = [1, 1]} : vector<32x32xf32> to vector<8x32xf32>
    %cst_68 = arith.constant dense<0.000000e+00> : vector<16x32xf32>
    %174 = tpu.matmul %172, %173, %cst_68 {dimension_numbers = #tpu.dot_dimension_numbers<[1], [0], [0], [1], [0, 0, 1, 1], [], []>} : vector<16x8xf32>, vector<8x32xf32>, vector<16x32xf32> -> vector<16x32xf32>
    %175 = arith.addf %154, %174 : vector<16x32xf32>
    %176 = vector.extract_strided_slice %153 {offsets = [0, 0, 8], sizes = [2, 8, 8], strides = [1, 1, 1]} : vector<2x8x96xf32> to vector<2x8x8xf32>
    %cst_69 = arith.constant 0.353553385 : f32
    %177 = vector.broadcast %cst_69 : f32 to vector<2x8x8xf32>
    %178 = arith.mulf %176, %177 : vector<2x8x8xf32>
    %179 = vector.extract_strided_slice %153 {offsets = [0, 0, 40], sizes = [2, 8, 8], strides = [1, 1, 1]} : vector<2x8x96xf32> to vector<2x8x8xf32>
    %180 = vector.extract_strided_slice %153 {offsets = [0, 0, 72], sizes = [2, 8, 8], strides = [1, 1, 1]} : vector<2x8x96xf32> to vector<2x8x8xf32>
    "tpu.trace_start"() <{level = 10 : i32, message = "bqd,bkd->bqk"}> : () -> ()
    %cst_70 = arith.constant dense<0.000000e+00> : vector<2x8x8xf32>
    %181 = tpu.matmul %178, %179, %cst_70 {dimension_numbers = #tpu.dot_dimension_numbers<[2], [2], [1], [1], [0, 0, 0, 1, 1, 1], [0], [0]>} : vector<2x8x8xf32>, vector<2x8x8xf32>, vector<2x8x8xf32> -> vector<2x8x8xf32>
    "tpu.trace_stop"() : () -> ()
    %cst_71 = arith.constant dense<0xFF800000> : vector<2x8xf32>
    %182 = vector.multi_reduction <maximumf>, %181, %cst_71 [2] : vector<2x8x8xf32> to vector<2x8xf32>
    %183 = vector.shape_cast %182 : vector<2x8xf32> to vector<2x8x1xf32>
    %184 = vector.broadcast %183 : vector<2x8x1xf32> to vector<2x8x8xf32>
    %185 = arith.subf %181, %184 : vector<2x8x8xf32>
    %186 = math.exp %185 : vector<2x8x8xf32>
    %cst_72 = arith.constant dense<0.000000e+00> : vector<2x8xf32>
    %187 = vector.multi_reduction <add>, %186, %cst_72 [2] : vector<2x8x8xf32> to vector<2x8xf32>
    %188 = vector.shape_cast %187 : vector<2x8xf32> to vector<2x8x1xf32>
    %189 = tpu.reciprocal %188 {approx = true} : vector<2x8x1xf32> -> vector<2x8x1xf32>
    %190 = vector.broadcast %189 : vector<2x8x1xf32> to vector<2x8x8xf32>
    %191 = arith.mulf %186, %190 : vector<2x8x8xf32>
    "tpu.trace_start"() <{level = 10 : i32, message = "bqk,bkd->bqd"}> : () -> ()
    %cst_73 = arith.constant dense<0.000000e+00> : vector<2x8x8xf32>
    %192 = tpu.matmul %191, %180, %cst_73 {dimension_numbers = #tpu.dot_dimension_numbers<[2], [1], [1], [2], [0, 0, 0, 1, 1, 2], [0], [0]>} : vector<2x8x8xf32>, vector<2x8x8xf32>, vector<2x8x8xf32> -> vector<2x8x8xf32>
    "tpu.trace_stop"() : () -> ()
    %193 = vector.shape_cast %192 : vector<2x8x8xf32> to vector<16x8xf32>
    %194 = vector.extract_strided_slice %148 {offsets = [8, 0], sizes = [8, 32], strides = [1, 1]} : vector<32x32xf32> to vector<8x32xf32>
    %cst_74 = arith.constant dense<0.000000e+00> : vector<16x32xf32>
    %195 = tpu.matmul %193, %194, %cst_74 {dimension_numbers = #tpu.dot_dimension_numbers<[1], [0], [0], [1], [0, 0, 1, 1], [], []>} : vector<16x8xf32>, vector<8x32xf32>, vector<16x32xf32> -> vector<16x32xf32>
    %196 = arith.addf %175, %195 : vector<16x32xf32>
    %197 = vector.extract_strided_slice %153 {offsets = [0, 0, 16], sizes = [2, 8, 8], strides = [1, 1, 1]} : vector<2x8x96xf32> to vector<2x8x8xf32>
    %cst_75 = arith.constant 0.353553385 : f32
    %198 = vector.broadcast %cst_75 : f32 to vector<2x8x8xf32>
    %199 = arith.mulf %197, %198 : vector<2x8x8xf32>
    %200 = vector.extract_strided_slice %153 {offsets = [0, 0, 48], sizes = [2, 8, 8], strides = [1, 1, 1]} : vector<2x8x96xf32> to vector<2x8x8xf32>
    %201 = vector.extract_strided_slice %153 {offsets = [0, 0, 80], sizes = [2, 8, 8], strides = [1, 1, 1]} : vector<2x8x96xf32> to vector<2x8x8xf32>
    "tpu.trace_start"() <{level = 10 : i32, message = "bqd,bkd->bqk"}> : () -> ()
    %cst_76 = arith.constant dense<0.000000e+00> : vector<2x8x8xf32>
    %202 = tpu.matmul %199, %200, %cst_76 {dimension_numbers = #tpu.dot_dimension_numbers<[2], [2], [1], [1], [0, 0, 0, 1, 1, 1], [0], [0]>} : vector<2x8x8xf32>, vector<2x8x8xf32>, vector<2x8x8xf32> -> vector<2x8x8xf32>
    "tpu.trace_stop"() : () -> ()
    %cst_77 = arith.constant dense<0xFF800000> : vector<2x8xf32>
    %203 = vector.multi_reduction <maximumf>, %202, %cst_77 [2] : vector<2x8x8xf32> to vector<2x8xf32>
    %204 = vector.shape_cast %203 : vector<2x8xf32> to vector<2x8x1xf32>
    %205 = vector.broadcast %204 : vector<2x8x1xf32> to vector<2x8x8xf32>
    %206 = arith.subf %202, %205 : vector<2x8x8xf32>
    %207 = math.exp %206 : vector<2x8x8xf32>
    %cst_78 = arith.constant dense<0.000000e+00> : vector<2x8xf32>
    %208 = vector.multi_reduction <add>, %207, %cst_78 [2] : vector<2x8x8xf32> to vector<2x8xf32>
    %209 = vector.shape_cast %208 : vector<2x8xf32> to vector<2x8x1xf32>
    %210 = tpu.reciprocal %209 {approx = true} : vector<2x8x1xf32> -> vector<2x8x1xf32>
    %211 = vector.broadcast %210 : vector<2x8x1xf32> to vector<2x8x8xf32>
    %212 = arith.mulf %207, %211 : vector<2x8x8xf32>
    "tpu.trace_start"() <{level = 10 : i32, message = "bqk,bkd->bqd"}> : () -> ()
    %cst_79 = arith.constant dense<0.000000e+00> : vector<2x8x8xf32>
    %213 = tpu.matmul %212, %201, %cst_79 {dimension_numbers = #tpu.dot_dimension_numbers<[2], [1], [1], [2], [0, 0, 0, 1, 1, 2], [0], [0]>} : vector<2x8x8xf32>, vector<2x8x8xf32>, vector<2x8x8xf32> -> vector<2x8x8xf32>
    "tpu.trace_stop"() : () -> ()
    %214 = vector.shape_cast %213 : vector<2x8x8xf32> to vector<16x8xf32>
    %215 = vector.extract_strided_slice %148 {offsets = [16, 0], sizes = [8, 32], strides = [1, 1]} : vector<32x32xf32> to vector<8x32xf32>
    %cst_80 = arith.constant dense<0.000000e+00> : vector<16x32xf32>
    %216 = tpu.matmul %214, %215, %cst_80 {dimension_numbers = #tpu.dot_dimension_numbers<[1], [0], [0], [1], [0, 0, 1, 1], [], []>} : vector<16x8xf32>, vector<8x32xf32>, vector<16x32xf32> -> vector<16x32xf32>
    %217 = arith.addf %196, %216 : vector<16x32xf32>
    %218 = vector.extract_strided_slice %153 {offsets = [0, 0, 24], sizes = [2, 8, 8], strides = [1, 1, 1]} : vector<2x8x96xf32> to vector<2x8x8xf32>
    %cst_81 = arith.constant 0.353553385 : f32
    %219 = vector.broadcast %cst_81 : f32 to vector<2x8x8xf32>
    %220 = arith.mulf %218, %219 : vector<2x8x8xf32>
    %221 = vector.extract_strided_slice %153 {offsets = [0, 0, 56], sizes = [2, 8, 8], strides = [1, 1, 1]} : vector<2x8x96xf32> to vector<2x8x8xf32>
    %222 = vector.extract_strided_slice %153 {offsets = [0, 0, 88], sizes = [2, 8, 8], strides = [1, 1, 1]} : vector<2x8x96xf32> to vector<2x8x8xf32>
    "tpu.trace_start"() <{level = 10 : i32, message = "bqd,bkd->bqk"}> : () -> ()
    %cst_82 = arith.constant dense<0.000000e+00> : vector<2x8x8xf32>
    %223 = tpu.matmul %220, %221, %cst_82 {dimension_numbers = #tpu.dot_dimension_numbers<[2], [2], [1], [1], [0, 0, 0, 1, 1, 1], [0], [0]>} : vector<2x8x8xf32>, vector<2x8x8xf32>, vector<2x8x8xf32> -> vector<2x8x8xf32>
    "tpu.trace_stop"() : () -> ()
    %cst_83 = arith.constant dense<0xFF800000> : vector<2x8xf32>
    %224 = vector.multi_reduction <maximumf>, %223, %cst_83 [2] : vector<2x8x8xf32> to vector<2x8xf32>
    %225 = vector.shape_cast %224 : vector<2x8xf32> to vector<2x8x1xf32>
    %226 = vector.broadcast %225 : vector<2x8x1xf32> to vector<2x8x8xf32>
    %227 = arith.subf %223, %226 : vector<2x8x8xf32>
    %228 = math.exp %227 : vector<2x8x8xf32>
    %cst_84 = arith.constant dense<0.000000e+00> : vector<2x8xf32>
    %229 = vector.multi_reduction <add>, %228, %cst_84 [2] : vector<2x8x8xf32> to vector<2x8xf32>
    %230 = vector.shape_cast %229 : vector<2x8xf32> to vector<2x8x1xf32>
    %231 = tpu.reciprocal %230 {approx = true} : vector<2x8x1xf32> -> vector<2x8x1xf32>
    %232 = vector.broadcast %231 : vector<2x8x1xf32> to vector<2x8x8xf32>
    %233 = arith.mulf %228, %232 : vector<2x8x8xf32>
    "tpu.trace_start"() <{level = 10 : i32, message = "bqk,bkd->bqd"}> : () -> ()
    %cst_85 = arith.constant dense<0.000000e+00> : vector<2x8x8xf32>
    %234 = tpu.matmul %233, %222, %cst_85 {dimension_numbers = #tpu.dot_dimension_numbers<[2], [1], [1], [2], [0, 0, 0, 1, 1, 2], [0], [0]>} : vector<2x8x8xf32>, vector<2x8x8xf32>, vector<2x8x8xf32> -> vector<2x8x8xf32>
    "tpu.trace_stop"() : () -> ()
    %235 = vector.shape_cast %234 : vector<2x8x8xf32> to vector<16x8xf32>
    %236 = vector.extract_strided_slice %148 {offsets = [24, 0], sizes = [8, 32], strides = [1, 1]} : vector<32x32xf32> to vector<8x32xf32>
    %cst_86 = arith.constant dense<0.000000e+00> : vector<16x32xf32>
    %237 = tpu.matmul %235, %236, %cst_86 {dimension_numbers = #tpu.dot_dimension_numbers<[1], [0], [0], [1], [0, 0, 1, 1], [], []>} : vector<16x8xf32>, vector<8x32xf32>, vector<16x32xf32> -> vector<16x32xf32>
    %238 = arith.addf %217, %237 : vector<16x32xf32>
    %239 = vector.broadcast %149 : vector<1x32xf32> to vector<16x32xf32>
    %240 = arith.addf %238, %239 : vector<16x32xf32>
    %241 = arith.addf %121, %240 : vector<16x32xf32>
    %c0_87 = arith.constant 0 : index
    %c0_88 = arith.constant 0 : index
    %242 = vector.load %arg14[%c0_87, %c0_88] : memref<1x32xf32, #tpu.memory_space<vmem>>, vector<1x32xf32>
    %c0_89 = arith.constant 0 : index
    %c0_90 = arith.constant 0 : index
    %243 = vector.load %arg15[%c0_89, %c0_90] : memref<1x32xf32, #tpu.memory_space<vmem>>, vector<1x32xf32>
    %cst_91 = arith.constant dense<0.000000e+00> : vector<16xf32>
    %244 = vector.multi_reduction <add>, %241, %cst_91 [1] : vector<16x32xf32> to vector<16xf32>
    %245 = vector.shape_cast %244 : vector<16xf32> to vector<16x1xf32>
    %cst_92 = arith.constant 3.200000e+01 : f32
    %246 = vector.broadcast %cst_92 : f32 to vector<16x1xf32>
    %247 = arith.divf %245, %246 : vector<16x1xf32>
    %248 = vector.broadcast %247 : vector<16x1xf32> to vector<16x32xf32>
    %249 = arith.subf %241, %248 : vector<16x32xf32>
    %250 = arith.mulf %249, %249 : vector<16x32xf32>
    %cst_93 = arith.constant dense<0.000000e+00> : vector<16xf32>
    %251 = vector.multi_reduction <add>, %250, %cst_93 [1] : vector<16x32xf32> to vector<16xf32>
    %252 = vector.shape_cast %251 : vector<16xf32> to vector<16x1xf32>
    %cst_94 = arith.constant 3.200000e+01 : f32
    %253 = vector.broadcast %cst_94 : f32 to vector<16x1xf32>
    %254 = arith.divf %252, %253 : vector<16x1xf32>
    %255 = vector.broadcast %247 : vector<16x1xf32> to vector<16x32xf32>
    %256 = arith.subf %241, %255 : vector<16x32xf32>
    %cst_95 = arith.constant 9.99999974E-6 : f32
    %257 = vector.broadcast %cst_95 : f32 to vector<16x1xf32>
    %258 = arith.addf %254, %257 : vector<16x1xf32>
    %259 = math.rsqrt %258 : vector<16x1xf32>
    %260 = vector.broadcast %259 : vector<16x1xf32> to vector<16x32xf32>
    %261 = arith.mulf %256, %260 : vector<16x32xf32>
    %262 = vector.broadcast %242 : vector<1x32xf32> to vector<16x32xf32>
    %263 = arith.mulf %261, %262 : vector<16x32xf32>
    %264 = vector.broadcast %243 : vector<1x32xf32> to vector<16x32xf32>
    %265 = arith.addf %263, %264 : vector<16x32xf32>
    %c0_96 = arith.constant 0 : index
    %c0_97 = arith.constant 0 : index
    %266 = vector.load %arg16[%c0_96, %c0_97] : memref<32x64xf32, #tpu.memory_space<vmem>>, vector<32x64xf32>
    %cst_98 = arith.constant dense<0.000000e+00> : vector<16x64xf32>
    %267 = tpu.matmul %265, %266, %cst_98 {dimension_numbers = #tpu.dot_dimension_numbers<[1], [0], [0], [1], [0, 0, 1, 1], [], []>} : vector<16x32xf32>, vector<32x64xf32>, vector<16x64xf32> -> vector<16x64xf32>
    %c0_99 = arith.constant 0 : index
    %c0_100 = arith.constant 0 : index
    %268 = vector.load %arg17[%c0_99, %c0_100] : memref<1x64xf32, #tpu.memory_space<vmem>>, vector<1x64xf32>
    %269 = vector.broadcast %268 : vector<1x64xf32> to vector<16x64xf32>
    %270 = arith.addf %267, %269 : vector<16x64xf32>
    %cst_101 = arith.constant 0.000000e+00 : f32
    %271 = vector.broadcast %cst_101 : f32 to vector<16x64xf32>
    %272 = arith.maximumf %270, %271 : vector<16x64xf32>
    %c0_102 = arith.constant 0 : index
    %c0_103 = arith.constant 0 : index
    %273 = vector.load %arg18[%c0_102, %c0_103] : memref<64x32xf32, #tpu.memory_space<vmem>>, vector<64x32xf32>
    %cst_104 = arith.constant dense<0.000000e+00> : vector<16x32xf32>
    %274 = tpu.matmul %272, %273, %cst_104 {dimension_numbers = #tpu.dot_dimension_numbers<[1], [0], [0], [1], [0, 0, 1, 1], [], []>} : vector<16x64xf32>, vector<64x32xf32>, vector<16x32xf32> -> vector<16x32xf32>
    %c0_105 = arith.constant 0 : index
    %c0_106 = arith.constant 0 : index
    %275 = vector.load %arg19[%c0_105, %c0_106] : memref<1x32xf32, #tpu.memory_space<vmem>>, vector<1x32xf32>
    %276 = vector.broadcast %275 : vector<1x32xf32> to vector<16x32xf32>
    %277 = arith.addf %274, %276 : vector<16x32xf32>
    %278 = arith.addf %241, %277 : vector<16x32xf32>
    %279 = vector.shape_cast %278 : vector<16x32xf32> to vector<2x8x32xf32>
    %c0_107 = arith.constant 0 : index
    %c0_108 = arith.constant 0 : index
    %c0_109 = arith.constant 0 : index
    %280 = vector.load %arg20[%c0_107, %c0_108, %c0_109] : memref<2x8x32xf32, #tpu.memory_space<vmem>>, vector<2x8x32xf32>
    tpu.vector_store %arg20[%c0_107, %c0_108, %c0_109], %279 {strides = array<i32>} : memref<2x8x32xf32, #tpu.memory_space<vmem>>, vector<2x8x32xf32>,
    return
  }
  func.func @transform_0(%arg0: i32) -> (i32, i32, i32) {
    %c0_i32 = arith.constant 0 : i32
    %c0_i32_0 = arith.constant 0 : i32
    %c0_i32_1 = arith.constant 0 : i32
    return %arg0, %c0_i32, %c0_i32_0 : i32, i32, i32
  }
  func.func @transform_1(%arg0: i32) -> (i32, i32) {
    %c0_i32 = arith.constant 0 : i32
    %c0_i32_0 = arith.constant 0 : i32
    %c0_i32_1 = arith.constant 0 : i32
    return %c0_i32, %c0_i32_0 : i32, i32
  }
  func.func @transform_2(%arg0: i32) -> (i32, i32) {
    %c0_i32 = arith.constant 0 : i32
    %c0_i32_0 = arith.constant 0 : i32
    %c0_i32_1 = arith.constant 0 : i32
    return %c0_i32, %c0_i32_0 : i32, i32
  }
  func.func @transform_3(%arg0: i32) -> (i32, i32) {
    %c0_i32 = arith.constant 0 : i32
    %c0_i32_0 = arith.constant 0 : i32
    %c0_i32_1 = arith.constant 0 : i32
    return %c0_i32, %c0_i32_0 : i32, i32
  }
  func.func @transform_4(%arg0: i32) -> (i32, i32) {
    %c0_i32 = arith.constant 0 : i32
    %c0_i32_0 = arith.constant 0 : i32
    %c0_i32_1 = arith.constant 0 : i32
    return %c0_i32, %c0_i32_0 : i32, i32
  }
  func.func @transform_5(%arg0: i32) -> (i32, i32) {
    %c0_i32 = arith.constant 0 : i32
    %c0_i32_0 = arith.constant 0 : i32
    %c0_i32_1 = arith.constant 0 : i32
    return %c0_i32, %c0_i32_0 : i32, i32
  }
  func.func @transform_6(%arg0: i32) -> (i32, i32) {
    %c0_i32 = arith.constant 0 : i32
    %c0_i32_0 = arith.constant 0 : i32
    %c0_i32_1 = arith.constant 0 : i32
    return %c0_i32, %c0_i32_0 : i32, i32
  }
  func.func @transform_7(%arg0: i32) -> (i32, i32) {
    %c0_i32 = arith.constant 0 : i32
    %c0_i32_0 = arith.constant 0 : i32
    %c0_i32_1 = arith.constant 0 : i32
    return %c0_i32, %c0_i32_0 : i32, i32
  }
  func.func @transform_8(%arg0: i32) -> (i32, i32) {
    %c0_i32 = arith.constant 0 : i32
    %c0_i32_0 = arith.constant 0 : i32
    %c0_i32_1 = arith.constant 0 : i32
    return %c0_i32, %c0_i32_0 : i32, i32
  }
  func.func @transform_9(%arg0: i32) -> (i32, i32) {
    %c0_i32 = arith.constant 0 : i32
    %c0_i32_0 = arith.constant 0 : i32
    %c0_i32_1 = arith.constant 0 : i32
    return %c0_i32, %c0_i32_0 : i32, i32
  }
  func.func @transform_10(%arg0: i32) -> (i32, i32) {
    %c0_i32 = arith.constant 0 : i32
    %c0_i32_0 = arith.constant 0 : i32
    %c0_i32_1 = arith.constant 0 : i32
    return %c0_i32, %c0_i32_0 : i32, i32
  }
  func.func @transform_11(%arg0: i32) -> (i32, i32) {
    %c0_i32 = arith.constant 0 : i32
    %c0_i32_0 = arith.constant 0 : i32
    %c0_i32_1 = arith.constant 0 : i32
    return %c0_i32, %c0_i32_0 : i32, i32
  }
  func.func @transform_12(%arg0: i32) -> (i32, i32) {
    %c0_i32 = arith.constant 0 : i32
    %c0_i32_0 = arith.constant 0 : i32
    %c0_i32_1 = arith.constant 0 : i32
    return %c0_i32, %c0_i32_0 : i32, i32
  }
  func.func @transform_13(%arg0: i32) -> (i32, i32) {
    %c0_i32 = arith.constant 0 : i32
    %c0_i32_0 = arith.constant 0 : i32
    %c0_i32_1 = arith.constant 0 : i32
    return %c0_i32, %c0_i32_0 : i32, i32
  }
  func.func @transform_14(%arg0: i32) -> (i32, i32) {
    %c0_i32 = arith.constant 0 : i32
    %c0_i32_0 = arith.constant 0 : i32
    %c0_i32_1 = arith.constant 0 : i32
    return %c0_i32, %c0_i32_0 : i32, i32
  }
  func.func @transform_15(%arg0: i32) -> (i32, i32) {
    %c0_i32 = arith.constant 0 : i32
    %c0_i32_0 = arith.constant 0 : i32
    %c0_i32_1 = arith.constant 0 : i32
    return %c0_i32, %c0_i32_0 : i32, i32
  }
  func.func @transform_16(%arg0: i32) -> (i32, i32) {
    %c0_i32 = arith.constant 0 : i32
    %c0_i32_0 = arith.constant 0 : i32
    %c0_i32_1 = arith.constant 0 : i32
    return %c0_i32, %c0_i32_0 : i32, i32
  }
  func.func @transform_17(%arg0: i32) -> (i32, i32) {
    %c0_i32 = arith.constant 0 : i32
    %c0_i32_0 = arith.constant 0 : i32
    %c0_i32_1 = arith.constant 0 : i32
    return %c0_i32, %c0_i32_0 : i32, i32
  }
  func.func @transform_18(%arg0: i32) -> (i32, i32) {
    %c0_i32 = arith.constant 0 : i32
    %c0_i32_0 = arith.constant 0 : i32
    %c0_i32_1 = arith.constant 0 : i32
    return %c0_i32, %c0_i32_0 : i32, i32
  }
  func.func @transform_19(%arg0: i32) -> (i32, i32, i32) {
    %c0_i32 = arith.constant 0 : i32
    %c0_i32_0 = arith.constant 0 : i32
    %c0_i32_1 = arith.constant 0 : i32
    return %arg0, %c0_i32, %c0_i32_0 : i32, i32, i32
  }
}

</mosaic_0001>

<llo_original>
// kernel: tpu_custom_call.1
$region0: #{tpu_custom_call.1}
  #allocation0 [shape = 'u32[]', space=smem, size = 0x4, offset = 0x4, fixed_abs, tag = 'smem constant byte address 0x4 - core index']
  #allocation1 [shape = 'u32[144,128]{1,0:T(1,128)}', space=vmem, size = 0x12000, scoped, tag = 'internal scratch']
  %s0 = inlined_call_operand.vmem [shape: f32[4,8,32], index: 0, kind: input, shape index: {}]
  %s1 = inlined_call_operand.hbm [shape: f32[1,32], index: 1, kind: input, shape index: {}]
  %s2 = inlined_call_operand.hbm [shape: f32[1,32], index: 2, kind: input, shape index: {}]
  %s3 = inlined_call_operand.vmem [shape: f32[32,96], index: 3, kind: input, shape index: {}]
  %s4 = inlined_call_operand.hbm [shape: f32[1,96], index: 4, kind: input, shape index: {}]
  %s5 = inlined_call_operand.vmem [shape: f32[32,32], index: 5, kind: input, shape index: {}]
  %s6 = inlined_call_operand.hbm [shape: f32[1,32], index: 6, kind: input, shape index: {}]
  %s7 = inlined_call_operand.hbm [shape: f32[1,32], index: 7, kind: input, shape index: {}]
  %s8 = inlined_call_operand.hbm [shape: f32[1,32], index: 8, kind: input, shape index: {}]
  %s9 = inlined_call_operand.vmem [shape: f32[32,96], index: 9, kind: input, shape index: {}]
  %s10 = inlined_call_operand.hbm [shape: f32[1,96], index: 10, kind: input, shape index: {}]
  %s11 = inlined_call_operand.hbm [shape: f32[32,32], index: 11, kind: input, shape index: {}]
  %s12 = inlined_call_operand.hbm [shape: f32[1,32], index: 12, kind: input, shape index: {}]
  %s13 = inlined_call_operand.hbm [shape: f32[1,32], index: 13, kind: input, shape index: {}]
  %s14 = inlined_call_operand.hbm [shape: f32[1,32], index: 14, kind: input, shape index: {}]
  %s15 = inlined_call_operand.hbm [shape: f32[32,64], index: 15, kind: input, shape index: {}]
  %s16 = inlined_call_operand.hbm [shape: f32[1,64], index: 16, kind: input, shape index: {}]
  %s17 = inlined_call_operand.vmem [shape: f32[64,32], index: 17, kind: input, shape index: {}]
  %s18 = inlined_call_operand.vmem [shape: f32[1,32], index: 18, kind: input, shape index: {}]
  %s19 = inlined_call_operand.hbm [shape: f32[4,8,32], index: 19, kind: output, shape index: {}]
  %s20 = sld [smem:[#allocation0]]
  $region161: #{tpu_custom_call.1} parent=0
    _
  %s22 = ssub.s32 1, %s20
  %s23 = scalar_select 0, %s22, %s20
  $region1: #{tpu_custom_call.1} parent=0
    #allocation2 [shape = 'u8[512]{0}', space=vmem, size = 0x400, scoped, tag = 'input window, operand 1, single buffered']
    #allocation3 [shape = 's32[2]{0}', space=sflag, size = 0x8, scoped, tag = 'scoped memory for tpu_custom_call.1']
    #allocation4 [shape = 's32[2]{0}', space=sflag, size = 0x8, scoped, tag = 'scoped memory for tpu_custom_call.1']
    #allocation5 [shape = 'u8[512]{0}', space=vmem, size = 0x400, scoped, tag = 'input window, operand 2, single buffered']
    #allocation6 [shape = 's32[1]{0}', space=sflag, size = 0x4, scoped, tag = 'scoped memory for tpu_custom_call.1']
    #allocation7 [shape = 'u8[512]{0}', space=vmem, size = 0x400, scoped, tag = 'input window, operand 4, single buffered']
    #allocation8 [shape = 'u8[512]{0}', space=vmem, size = 0x400, scoped, tag = 'input window, operand 6, single buffered']
    #allocation9 [shape = 's32[1]{0}', space=sflag, size = 0x4, scoped, tag = 'scoped memory for tpu_custom_call.1']
    #allocation10 [shape = 'u8[512]{0}', space=vmem, size = 0x400, scoped, tag = 'input window, operand 7, single buffered']
    #allocation11 [shape = 'u8[512]{0}', space=vmem, size = 0x400, scoped, tag = 'input window, operand 8, single buffered']
    #allocation12 [shape = 's32[1]{0}', space=sflag, size = 0x4, scoped, tag = 'scoped memory for tpu_custom_call.1']
    #allocation13 [shape = 'u8[512]{0}', space=vmem, size = 0x400, scoped, tag = 'input window, operand 10, single buffered']
    #allocation14 [shape = 'u8[16384]{0}', space=vmem, size = 0x4000, scoped, tag = 'input window, operand 11, single buffered']
    #allocation15 [shape = 's32[1]{0}', space=sflag, size = 0x4, scoped, tag = 'scoped memory for tpu_custom_call.1']
    #allocation16 [shape = 'u8[512]{0}', space=vmem, size = 0x400, scoped, tag = 'input window, operand 12, single buffered']
    #allocation17 [shape = 'u8[512]{0}', space=vmem, size = 0x400, scoped, tag = 'input window, operand 13, single buffered']
    #allocation18 [shape = 's32[1]{0}', space=sflag, size = 0x4, scoped, tag = 'scoped memory for tpu_custom_call.1']
    #allocation19 [shape = 'u8[512]{0}', space=vmem, size = 0x400, scoped, tag = 'input window, operand 14, single buffered']
    #allocation20 [shape = 'u8[16384]{0}', space=vmem, size = 0x4000, scoped, tag = 'input window, operand 15, single buffered']
    #allocation21 [shape = 's32[1]{0}', space=sflag, size = 0x4, scoped, tag = 'scoped memory for tpu_custom_call.1']
    #allocation22 [shape = 'u8[512]{0}', space=vmem, size = 0x400, scoped, tag = 'input window, operand 16, single buffered']
    #allocation23 [shape = 'u8[16384]{0}', space=vmem, size = 0x4000, scoped, tag = 'output window, operand 0']
    %24 = vsyncpa [#allocation3], 0
    %25 = vsyncpa [#allocation6], 0
    %26 = vsyncpa [#allocation9], 0
    %27 = vsyncpa [#allocation12], 0
    %28 = vsyncpa [#allocation15], 0
    %29 = vsyncpa [#allocation18], 0
    %30 = vsyncpa [#allocation21], 0
    %31 = vsyncpa [#allocation4], 0
    %s32 = scalar_lea.sflag [#allocation4], 1
    %33 = vsyncpa %s32, 0
    loop: start=0, step=1, limit=4
    $region2: #{tpu_custom_call.1} parent=1 // loop_pre_header
      _
    $region3: #{tpu_custom_call.1} parent=1 // loop_header
      %s35 = sphi 0, %s39
      %p36 = scmp.ge.s32.totalorder %s35, 4
      %s45 = sphi 0, %s47
      %s48 = sphi 0, %s45
      %s49 = sphi 0, %s48
      %s65 = sphi 0, %s49
      %s69 = sphi 0, %s69
      %s71 = sphi 0, %s69
      %s72 = sphi 0, %s71
      %s86 = sphi 0, %s72
      %s90 = sphi 0, %s90
      %s92 = sphi 0, %s90
      %s93 = sphi 0, %s92
      %s107 = sphi 0, %s93
      %s111 = sphi 0, %s111
      %s113 = sphi 0, %s111
      %s114 = sphi 0, %s113
      %s128 = sphi 0, %s114
      %s132 = sphi 0, %s132
      %s134 = sphi 0, %s132
      %s135 = sphi 0, %s134
      %s149 = sphi 0, %s135
      %s153 = sphi 0, %s153
      %s155 = sphi 0, %s153
      %s156 = sphi 0, %s155
      %s170 = sphi 0, %s156
      %s174 = sphi 0, %s174
      %s176 = sphi 0, %s174
      %s177 = sphi 0, %s176
      %s191 = sphi 0, %s177
      %s195 = sphi 0, %s195
      %s197 = sphi 0, %s195
      %s198 = sphi 0, %s197
      %s212 = sphi 0, %s198
      %s216 = sphi 0, %s216
      %s218 = sphi 0, %s216
      %s219 = sphi 0, %s218
      %s233 = sphi 0, %s219
      %s237 = sphi 0, %s237
      %s239 = sphi 0, %s237
      %s240 = sphi 0, %s239
      %s254 = sphi 0, %s240
      %s258 = sphi 0, %s258
      %s260 = sphi 0, %s258
      %s261 = sphi 0, %s260
      %s275 = sphi 0, %s261
      %s279 = sphi 0, %s279
      %s281 = sphi 0, %s279
      %s282 = sphi 0, %s281
      %s296 = sphi 0, %s282
      %s300 = sphi 0, %s300
      %s302 = sphi 0, %s300
      %s303 = sphi 0, %s302
      %s317 = sphi 0, %s303
      %s321 = sphi 0, %s321
      %s323 = sphi 0, %s321
      %s324 = sphi 0, %s323
      %s338 = sphi 0, %s324
      %s342 = sphi 0, %s342
      %s344 = sphi 0, %s342
      %s345 = sphi 0, %s344
      %s359 = sphi 0, %s345
      %s363 = sphi 0, %s363
      %s365 = sphi 0, %s363
      %s366 = sphi 0, %s365
      %s380 = sphi 0, %s366
      %s384 = sphi 0, %s384
      %s386 = sphi 0, %s384
      %s387 = sphi 0, %s386
      %s401 = sphi 0, %s387
      %s405 = sphi 0, %s405
      %s407 = sphi 0, %s405
      %s408 = sphi 0, %s407
      %s422 = sphi 0, %s408
      %s426 = sphi 0, %s426
      %s428 = sphi 0, %s426
      %s429 = sphi 0, %s428
      %s443 = sphi 0, %s429
      %s449 = sphi 0, %s451
      %s452 = sphi 0, %s449
      %s453 = sphi 0, %s452
      %s469 = sphi 0, %s453
    $region4: #{tpu_custom_call.1} parent=1 // loop_header_branch
      %38 = sbr.rel (%p36) target = $region8
    $region5: #{tpu_custom_call.1} parent=1 // loop_body
      %s40 = ssub.s32 %s35, 1
      %s41 = ssub.s32 %s35, 2
      %s42 = sadd.s32 %s35, 1
      %s43 = ssub.s32 %s35, %s42
      %p44 = scmp.eq.s32.totalorder %s43, 0
      %s46 = sadd.s32 %s45, 1
      %s47 = scalar_select %p44, %s45, %s46
      %p50 = pneg %p44
      %p51 = scmp.eq.s32.totalorder %s35, 1
      %p52 = por %p50, %p51
      %p53 = scmp.ne.s32.totalorder %s45, %s48
      %p54 = scmp.eq.s32.totalorder %s35, 0
      %p55 = por %p53, %p54
      %p56 = scmp.ne.s32.totalorder %s45, %s48
      %p57 = scmp.eq.s32.totalorder %s40, 1
      %p58 = por %p56, %p57
      %p59 = scmp.ne.s32.totalorder %s48, %s49
      %p60 = scmp.eq.s32.totalorder %s40, 0
      %p61 = por %p59, %p60
      %p62 = scmp.ne.s32.totalorder %s48, %s49
      %p63 = scmp.eq.s32.totalorder %s41, 1
      %p64 = por %p62, %p63
      %p66 = scmp.ne.s32.totalorder %s49, %s65
      %p67 = scmp.eq.s32.totalorder %s41, 0
      %p68 = por %p66, %p67
      %s70 = sadd.s32 %s69, 1
      %p73 = scmp.eq.s32.totalorder %s35, 1
      %p74 = scmp.ne.s32.totalorder %s69, %s71
      %p75 = scmp.eq.s32.totalorder %s35, 0
      %p76 = por %p74, %p75
      %p77 = scmp.ne.s32.totalorder %s69, %s71
      %p78 = scmp.eq.s32.totalorder %s40, 1
      %p79 = por %p77, %p78
      %p80 = scmp.ne.s32.totalorder %s71, %s72
      %p81 = scmp.eq.s32.totalorder %s40, 0
      %p82 = por %p80, %p81
      %p83 = scmp.ne.s32.totalorder %s71, %s72
      %p84 = scmp.eq.s32.totalorder %s41, 1
      %p85 = por %p83, %p84
      %p87 = scmp.ne.s32.totalorder %s72, %s86
      %p88 = scmp.eq.s32.totalorder %s41, 0
      %p89 = por %p87, %p88
      %s91 = sadd.s32 %s90, 1
      %p94 = scmp.eq.s32.totalorder %s35, 1
      %p95 = scmp.ne.s32.totalorder %s90, %s92
      %p96 = scmp.eq.s32.totalorder %s35, 0
      %p97 = por %p95, %p96
      %p98 = scmp.ne.s32.totalorder %s90, %s92
      %p99 = scmp.eq.s32.totalorder %s40, 1
      %p100 = por %p98, %p99
      %p101 = scmp.ne.s32.totalorder %s92, %s93
      %p102 = scmp.eq.s32.totalorder %s40, 0
      %p103 = por %p101, %p102
      %p104 = scmp.ne.s32.totalorder %s92, %s93
      %p105 = scmp.eq.s32.totalorder %s41, 1
      %p106 = por %p104, %p105
      %p108 = scmp.ne.s32.totalorder %s93, %s107
      %p109 = scmp.eq.s32.totalorder %s41, 0
      %p110 = por %p108, %p109
      %s112 = sadd.s32 %s111, 1
      %p115 = scmp.eq.s32.totalorder %s35, 1
      %p116 = scmp.ne.s32.totalorder %s111, %s113
      %p117 = scmp.eq.s32.totalorder %s35, 0
      %p118 = por %p116, %p117
      %p119 = scmp.ne.s32.totalorder %s111, %s113
      %p120 = scmp.eq.s32.totalorder %s40, 1
      %p121 = por %p119, %p120
      %p122 = scmp.ne.s32.totalorder %s113, %s114
      %p123 = scmp.eq.s32.totalorder %s40, 0
      %p124 = por %p122, %p123
      %p125 = scmp.ne.s32.totalorder %s113, %s114
      %p126 = scmp.eq.s32.totalorder %s41, 1
      %p127 = por %p125, %p126
      %p129 = scmp.ne.s32.totalorder %s114, %s128
      %p130 = scmp.eq.s32.totalorder %s41, 0
      %p131 = por %p129, %p130
      %s133 = sadd.s32 %s132, 1
      %p136 = scmp.eq.s32.totalorder %s35, 1
      %p137 = scmp.ne.s32.totalorder %s132, %s134
      %p138 = scmp.eq.s32.totalorder %s35, 0
      %p139 = por %p137, %p138
      %p140 = scmp.ne.s32.totalorder %s132, %s134
      %p141 = scmp.eq.s32.totalorder %s40, 1
      %p142 = por %p140, %p141
      %p143 = scmp.ne.s32.totalorder %s134, %s135
      %p144 = scmp.eq.s32.totalorder %s40, 0
      %p145 = por %p143, %p144
      %p146 = scmp.ne.s32.totalorder %s134, %s135
      %p147 = scmp.eq.s32.totalorder %s41, 1
      %p148 = por %p146, %p147
      %p150 = scmp.ne.s32.totalorder %s135, %s149
      %p151 = scmp.eq.s32.totalorder %s41, 0
      %p152 = por %p150, %p151
      %s154 = sadd.s32 %s153, 1
      %p157 = scmp.eq.s32.totalorder %s35, 1
      %p158 = scmp.ne.s32.totalorder %s153, %s155
      %p159 = scmp.eq.s32.totalorder %s35, 0
      %p160 = por %p158, %p159
      %p161 = scmp.ne.s32.totalorder %s153, %s155
      %p162 = scmp.eq.s32.totalorder %s40, 1
      %p163 = por %p161, %p162
      %p164 = scmp.ne.s32.totalorder %s155, %s156
      %p165 = scmp.eq.s32.totalorder %s40, 0
      %p166 = por %p164, %p165
      %p167 = scmp.ne.s32.totalorder %s155, %s156
      %p168 = scmp.eq.s32.totalorder %s41, 1
      %p169 = por %p167, %p168
      %p171 = scmp.ne.s32.totalorder %s156, %s170
      %p172 = scmp.eq.s32.totalorder %s41, 0
      %p173 = por %p171, %p172
      %s175 = sadd.s32 %s174, 1
      %p178 = scmp.eq.s32.totalorder %s35, 1
      %p179 = scmp.ne.s32.totalorder %s174, %s176
      %p180 = scmp.eq.s32.totalorder %s35, 0
      %p181 = por %p179, %p180
      %p182 = scmp.ne.s32.totalorder %s174, %s176
      %p183 = scmp.eq.s32.totalorder %s40, 1
      %p184 = por %p182, %p183
      %p185 = scmp.ne.s32.totalorder %s176, %s177
      %p186 = scmp.eq.s32.totalorder %s40, 0
      %p187 = por %p185, %p186
      %p188 = scmp.ne.s32.totalorder %s176, %s177
      %p189 = scmp.eq.s32.totalorder %s41, 1
      %p190 = por %p188, %p189
      %p192 = scmp.ne.s32.totalorder %s177, %s191
      %p193 = scmp.eq.s32.totalorder %s41, 0
      %p194 = por %p192, %p193
      %s196 = sadd.s32 %s195, 1
      %p199 = scmp.eq.s32.totalorder %s35, 1
      %p200 = scmp.ne.s32.totalorder %s195, %s197
      %p201 = scmp.eq.s32.totalorder %s35, 0
      %p202 = por %p200, %p201
      %p203 = scmp.ne.s32.totalorder %s195, %s197
      %p204 = scmp.eq.s32.totalorder %s40, 1
      %p205 = por %p203, %p204
      %p206 = scmp.ne.s32.totalorder %s197, %s198
      %p207 = scmp.eq.s32.totalorder %s40, 0
      %p208 = por %p206, %p207
      %p209 = scmp.ne.s32.totalorder %s197, %s198
      %p210 = scmp.eq.s32.totalorder %s41, 1
      %p211 = por %p209, %p210
      %p213 = scmp.ne.s32.totalorder %s198, %s212
      %p214 = scmp.eq.s32.totalorder %s41, 0
      %p215 = por %p213, %p214
      %s217 = sadd.s32 %s216, 1
      %p220 = scmp.eq.s32.totalorder %s35, 1
      %p221 = scmp.ne.s32.totalorder %s216, %s218
      %p222 = scmp.eq.s32.totalorder %s35, 0
      %p223 = por %p221, %p222
      %p224 = scmp.ne.s32.totalorder %s216, %s218
      %p225 = scmp.eq.s32.totalorder %s40, 1
      %p226 = por %p224, %p225
      %p227 = scmp.ne.s32.totalorder %s218, %s219
      %p228 = scmp.eq.s32.totalorder %s40, 0
      %p229 = por %p227, %p228
      %p230 = scmp.ne.s32.totalorder %s218, %s219
      %p231 = scmp.eq.s32.totalorder %s41, 1
      %p232 = por %p230, %p231
      %p234 = scmp.ne.s32.totalorder %s219, %s233
      %p235 = scmp.eq.s32.totalorder %s41, 0
      %p236 = por %p234, %p235
      %s238 = sadd.s32 %s237, 1
      %p241 = scmp.eq.s32.totalorder %s35, 1
      %p242 = scmp.ne.s32.totalorder %s237, %s239
      %p243 = scmp.eq.s32.totalorder %s35, 0
      %p244 = por %p242, %p243
      %p245 = scmp.ne.s32.totalorder %s237, %s239
      %p246 = scmp.eq.s32.totalorder %s40, 1
      %p247 = por %p245, %p246
      %p248 = scmp.ne.s32.totalorder %s239, %s240
      %p249 = scmp.eq.s32.totalorder %s40, 0
      %p250 = por %p248, %p249
      %p251 = scmp.ne.s32.totalorder %s239, %s240
      %p252 = scmp.eq.s32.totalorder %s41, 1
      %p253 = por %p251, %p252
      %p255 = scmp.ne.s32.totalorder %s240, %s254
      %p256 = scmp.eq.s32.totalorder %s41, 0
      %p257 = por %p255, %p256
      %s259 = sadd.s32 %s258, 1
      %p262 = scmp.eq.s32.totalorder %s35, 1
      %p263 = scmp.ne.s32.totalorder %s258, %s260
      %p264 = scmp.eq.s32.totalorder %s35, 0
      %p265 = por %p263, %p264
      %p266 = scmp.ne.s32.totalorder %s258, %s260
      %p267 = scmp.eq.s32.totalorder %s40, 1
      %p268 = por %p266, %p267
      %p269 = scmp.ne.s32.totalorder %s260, %s261
      %p270 = scmp.eq.s32.totalorder %s40, 0
      %p271 = por %p269, %p270
      %p272 = scmp.ne.s32.totalorder %s260, %s261
      %p273 = scmp.eq.s32.totalorder %s41, 1
      %p274 = por %p272, %p273
      %p276 = scmp.ne.s32.totalorder %s261, %s275
      %p277 = scmp.eq.s32.totalorder %s41, 0
      %p278 = por %p276, %p277
      %s280 = sadd.s32 %s279, 1
      %p283 = scmp.eq.s32.totalorder %s35, 1
      %p284 = scmp.ne.s32.totalorder %s279, %s281
      %p285 = scmp.eq.s32.totalorder %s35, 0
      %p286 = por %p284, %p285
      %p287 = scmp.ne.s32.totalorder %s279, %s281
      %p288 = scmp.eq.s32.totalorder %s40, 1
      %p289 = por %p287, %p288
      %p290 = scmp.ne.s32.totalorder %s281, %s282
      %p291 = scmp.eq.s32.totalorder %s40, 0
      %p292 = por %p290, %p291
      %p293 = scmp.ne.s32.totalorder %s281, %s282
      %p294 = scmp.eq.s32.totalorder %s41, 1
      %p295 = por %p293, %p294
      %p297 = scmp.ne.s32.totalorder %s282, %s296
      %p298 = scmp.eq.s32.totalorder %s41, 0
      %p299 = por %p297, %p298
      %s301 = sadd.s32 %s300, 1
      %p304 = scmp.eq.s32.totalorder %s35, 1
      %p305 = scmp.ne.s32.totalorder %s300, %s302
      %p306 = scmp.eq.s32.totalorder %s35, 0
      %p307 = por %p305, %p306
      %p308 = scmp.ne.s32.totalorder %s300, %s302
      %p309 = scmp.eq.s32.totalorder %s40, 1
      %p310 = por %p308, %p309
      %p311 = scmp.ne.s32.totalorder %s302, %s303
      %p312 = scmp.eq.s32.totalorder %s40, 0
      %p313 = por %p311, %p312
      %p314 = scmp.ne.s32.totalorder %s302, %s303
      %p315 = scmp.eq.s32.totalorder %s41, 1
      %p316 = por %p314, %p315
      %p318 = scmp.ne.s32.totalorder %s303, %s317
      %p319 = scmp.eq.s32.totalorder %s41, 0
      %p320 = por %p318, %p319
      %s322 = sadd.s32 %s321, 1
      %p325 = scmp.eq.s32.totalorder %s35, 1
      %p326 = scmp.ne.s32.totalorder %s321, %s323
      %p327 = scmp.eq.s32.totalorder %s35, 0
      %p328 = por %p326, %p327
      %p329 = scmp.ne.s32.totalorder %s321, %s323
      %p330 = scmp.eq.s32.totalorder %s40, 1
      %p331 = por %p329, %p330
      %p332 = scmp.ne.s32.totalorder %s323, %s324
      %p333 = scmp.eq.s32.totalorder %s40, 0
      %p334 = por %p332, %p333
      %p335 = scmp.ne.s32.totalorder %s323, %s324
      %p336 = scmp.eq.s32.totalorder %s41, 1
      %p337 = por %p335, %p336
      %p339 = scmp.ne.s32.totalorder %s324, %s338
      %p340 = scmp.eq.s32.totalorder %s41, 0
      %p341 = por %p339, %p340
      %s343 = sadd.s32 %s342, 1
      %p346 = scmp.eq.s32.totalorder %s35, 1
      %p347 = scmp.ne.s32.totalorder %s342, %s344
      %p348 = scmp.eq.s32.totalorder %s35, 0
      %p349 = por %p347, %p348
      %p350 = scmp.ne.s32.totalorder %s342, %s344
      %p351 = scmp.eq.s32.totalorder %s40, 1
      %p352 = por %p350, %p351
      %p353 = scmp.ne.s32.totalorder %s344, %s345
      %p354 = scmp.eq.s32.totalorder %s40, 0
      %p355 = por %p353, %p354
      %p356 = scmp.ne.s32.totalorder %s344, %s345
      %p357 = scmp.eq.s32.totalorder %s41, 1
      %p358 = por %p356, %p357
      %p360 = scmp.ne.s32.totalorder %s345, %s359
      %p361 = scmp.eq.s32.totalorder %s41, 0
      %p362 = por %p360, %p361
      %s364 = sadd.s32 %s363, 1
      %p367 = scmp.eq.s32.totalorder %s35, 1
      %p368 = scmp.ne.s32.totalorder %s363, %s365
      %p369 = scmp.eq.s32.totalorder %s35, 0
      %p370 = por %p368, %p369
      %p371 = scmp.ne.s32.totalorder %s363, %s365
      %p372 = scmp.eq.s32.totalorder %s40, 1
      %p373 = por %p371, %p372
      %p374 = scmp.ne.s32.totalorder %s365, %s366
      %p375 = scmp.eq.s32.totalorder %s40, 0
      %p376 = por %p374, %p375
      %p377 = scmp.ne.s32.totalorder %s365, %s366
      %p378 = scmp.eq.s32.totalorder %s41, 1
      %p379 = por %p377, %p378
      %p381 = scmp.ne.s32.totalorder %s366, %s380
      %p382 = scmp.eq.s32.totalorder %s41, 0
      %p383 = por %p381, %p382
      %s385 = sadd.s32 %s384, 1
      %p388 = scmp.eq.s32.totalorder %s35, 1
      %p389 = scmp.ne.s32.totalorder %s384, %s386
      %p390 = scmp.eq.s32.totalorder %s35, 0
      %p391 = por %p389, %p390
      %p392 = scmp.ne.s32.totalorder %s384, %s386
      %p393 = scmp.eq.s32.totalorder %s40, 1
      %p394 = por %p392, %p393
      %p395 = scmp.ne.s32.totalorder %s386, %s387
      %p396 = scmp.eq.s32.totalorder %s40, 0
      %p397 = por %p395, %p396
      %p398 = scmp.ne.s32.totalorder %s386, %s387
      %p399 = scmp.eq.s32.totalorder %s41, 1
      %p400 = por %p398, %p399
      %p402 = scmp.ne.s32.totalorder %s387, %s401
      %p403 = scmp.eq.s32.totalorder %s41, 0
      %p404 = por %p402, %p403
      %s406 = sadd.s32 %s405, 1
      %p409 = scmp.eq.s32.totalorder %s35, 1
      %p410 = scmp.ne.s32.totalorder %s405, %s407
      %p411 = scmp.eq.s32.totalorder %s35, 0
      %p412 = por %p410, %p411
      %p413 = scmp.ne.s32.totalorder %s405, %s407
      %p414 = scmp.eq.s32.totalorder %s40, 1
      %p415 = por %p413, %p414
      %p416 = scmp.ne.s32.totalorder %s407, %s408
      %p417 = scmp.eq.s32.totalorder %s40, 0
      %p418 = por %p416, %p417
      %p419 = scmp.ne.s32.totalorder %s407, %s408
      %p420 = scmp.eq.s32.totalorder %s41, 1
      %p421 = por %p419, %p420
      %p423 = scmp.ne.s32.totalorder %s408, %s422
      %p424 = scmp.eq.s32.totalorder %s41, 0
      %p425 = por %p423, %p424
      %s427 = sadd.s32 %s426, 1
      %p430 = scmp.eq.s32.totalorder %s35, 1
      %p431 = scmp.ne.s32.totalorder %s426, %s428
      %p432 = scmp.eq.s32.totalorder %s35, 0
      %p433 = por %p431, %p432
      %p434 = scmp.ne.s32.totalorder %s426, %s428
      %p435 = scmp.eq.s32.totalorder %s40, 1
      %p436 = por %p434, %p435
      %p437 = scmp.ne.s32.totalorder %s428, %s429
      %p438 = scmp.eq.s32.totalorder %s40, 0
      %p439 = por %p437, %p438
      %p440 = scmp.ne.s32.totalorder %s428, %s429
      %p441 = scmp.eq.s32.totalorder %s41, 1
      %p442 = por %p440, %p441
      %p444 = scmp.ne.s32.totalorder %s429, %s443
      %p445 = scmp.eq.s32.totalorder %s41, 0
      %p446 = por %p444, %p445
      %s447 = ssub.s32 %s35, %s42
      %p448 = scmp.eq.s32.totalorder %s447, 0
      %s450 = sadd.s32 %s449, 1
      %s451 = scalar_select %p448, %s449, %s450
      %p454 = pneg %p448
      %p455 = scmp.eq.s32.totalorder %s35, 1
      %p456 = por %p454, %p455
      %p457 = scmp.ne.s32.totalorder %s449, %s452
      %p458 = scmp.eq.s32.totalorder %s35, 0
      %p459 = por %p457, %p458
      %p460 = scmp.ne.s32.totalorder %s449, %s452
      %p461 = scmp.eq.s32.totalorder %s40, 1
      %p462 = por %p460, %p461
      %p463 = scmp.ne.s32.totalorder %s452, %s453
      %p464 = scmp.eq.s32.totalorder %s40, 0
      %p465 = por %p463, %p464
      %p466 = scmp.ne.s32.totalorder %s452, %s453
      %p467 = scmp.eq.s32.totalorder %s41, 1
      %p468 = por %p466, %p467
      %p470 = scmp.ne.s32.totalorder %s453, %s469
      %p471 = scmp.eq.s32.totalorder %s41, 0
      %p472 = por %p470, %p471
      %p473 = scmp.le.s32.totalorder 1, %s35
      %p474 = scmp.lt.s32.totalorder %s35, 3
      %p475 = pnand %p473, %p474
      %p476 = pneg %p475
      // Predicated region
      $region9: #{tpu_custom_call.1} parent=5 // pred_check
        _
      $region10: #{tpu_custom_call.1} parent=5 // pred_check_branch
        %478 = sbr.rel (%p475) target = $region12
      $region11: #{tpu_custom_call.1} parent=5 // pred_region
        %s479 = ssub.s32 %s35, 1
        // Predicated region
        $region13: #{tpu_custom_call.1} parent=11 // pred_check
          %p480 = pneg %p82
        $region14: #{tpu_custom_call.1} parent=11 // pred_check_branch
          %482 = sbr.rel (%p480) target = $region16
        $region15: #{tpu_custom_call.1} parent=11 // pred_region
          %s484 = ssub.s32 16, 16
          %485 = vsyncadd [#allocation3], %s484
          %s487 = sshll.u32 [#allocation2], 4
          %s488 = int_to_ptr.vmem [resolvable:$true] %s487
          %490 = dma.hbm_to_vmem [thread:$0]  %s1, 16, %s488, [#allocation3]
        $region16: #{tpu_custom_call.1} parent=11 // pred_fallthru
          _
        // Predicated region
        $region17: #{tpu_custom_call.1} parent=11 // pred_check
          %p491 = pneg %p103
        $region18: #{tpu_custom_call.1} parent=11 // pred_check_branch
          %493 = sbr.rel (%p491) target = $region20
        $region19: #{tpu_custom_call.1} parent=11 // pred_region
          %s495 = ssub.s32 16, 16
          %496 = vsyncadd [#allocation6], %s495
          %s498 = sshll.u32 [#allocation5], 4
          %s499 = int_to_ptr.vmem [resolvable:$true] %s498
          %501 = dma.hbm_to_vmem [thread:$0]  %s2, 16, %s499, [#allocation6]
        $region20: #{tpu_custom_call.1} parent=11 // pred_fallthru
          _
        // Predicated region
        $region21: #{tpu_custom_call.1} parent=11 // pred_check
          %p502 = pneg %p124
        $region22: #{tpu_custom_call.1} parent=11 // pred_check_branch
          %504 = sbr.rel (%p502) target = $region24
        $region23: #{tpu_custom_call.1} parent=11 // pred_region
          _
        $region24: #{tpu_custom_call.1} parent=11 // pred_fallthru
          _
        // Predicated region
        $region25: #{tpu_custom_call.1} parent=11 // pred_check
          %p505 = pneg %p145
        $region26: #{tpu_custom_call.1} parent=11 // pred_check_branch
          %507 = sbr.rel (%p505) target = $region28
        $region27: #{tpu_custom_call.1} parent=11 // pred_region
          %s509 = ssub.s32 16, 16
          %510 = vsyncadd [#allocation6], %s509
          %s512 = sshll.u32 [#allocation7], 4
          %s513 = int_to_ptr.vmem [resolvable:$true] %s512
          %515 = dma.hbm_to_vmem [thread:$0]  %s4, 16, %s513, [#allocation6]
        $region28: #{tpu_custom_call.1} parent=11 // pred_fallthru
          _
        // Predicated region
        $region29: #{tpu_custom_call.1} parent=11 // pred_check
          %p516 = pneg %p166
        $region30: #{tpu_custom_call.1} parent=11 // pred_check_branch
          %518 = sbr.rel (%p516) target = $region32
        $region31: #{tpu_custom_call.1} parent=11 // pred_region
          _
        $region32: #{tpu_custom_call.1} parent=11 // pred_fallthru
          _
        // Predicated region
        $region33: #{tpu_custom_call.1} parent=11 // pred_check
          %p519 = pneg %p187
        $region34: #{tpu_custom_call.1} parent=11 // pred_check_branch
          %521 = sbr.rel (%p519) target = $region36
        $region35: #{tpu_custom_call.1} parent=11 // pred_region
          %s523 = ssub.s32 16, 16
          %524 = vsyncadd [#allocation9], %s523
          %s526 = sshll.u32 [#allocation8], 4
          %s527 = int_to_ptr.vmem [resolvable:$true] %s526
          %529 = dma.hbm_to_vmem [thread:$0]  %s6, 16, %s527, [#allocation9]
        $region36: #{tpu_custom_call.1} parent=11 // pred_fallthru
          _
        // Predicated region
        $region37: #{tpu_custom_call.1} parent=11 // pred_check
          %p530 = pneg %p208
        $region38: #{tpu_custom_call.1} parent=11 // pred_check_branch
          %532 = sbr.rel (%p530) target = $region40
        $region39: #{tpu_custom_call.1} parent=11 // pred_region
          %s534 = ssub.s32 16, 16
          %535 = vsyncadd [#allocation9], %s534
          %s537 = sshll.u32 [#allocation10], 4
          %s538 = int_to_ptr.vmem [resolvable:$true] %s537
          %540 = dma.hbm_to_vmem [thread:$0]  %s7, 16, %s538, [#allocation9]
        $region40: #{tpu_custom_call.1} parent=11 // pred_fallthru
          _
        // Predicated region
        $region41: #{tpu_custom_call.1} parent=11 // pred_check
          %p541 = pneg %p229
        $region42: #{tpu_custom_call.1} parent=11 // pred_check_branch
          %543 = sbr.rel (%p541) target = $region44
        $region43: #{tpu_custom_call.1} parent=11 // pred_region
          %s545 = ssub.s32 16, 16
          %546 = vsyncadd [#allocation12], %s545
          %s548 = sshll.u32 [#allocation11], 4
          %s549 = int_to_ptr.vmem [resolvable:$true] %s548
          %551 = dma.hbm_to_vmem [thread:$0]  %s8, 16, %s549, [#allocation12]
        $region44: #{tpu_custom_call.1} parent=11 // pred_fallthru
          _
        // Predicated region
        $region45: #{tpu_custom_call.1} parent=11 // pred_check
          %p552 = pneg %p250
        $region46: #{tpu_custom_call.1} parent=11 // pred_check_branch
          %554 = sbr.rel (%p552) target = $region48
        $region47: #{tpu_custom_call.1} parent=11 // pred_region
          _
        $region48: #{tpu_custom_call.1} parent=11 // pred_fallthru
          _
        // Predicated region
        $region49: #{tpu_custom_call.1} parent=11 // pred_check
          %p555 = pneg %p271
        $region50: #{tpu_custom_call.1} parent=11 // pred_check_branch
          %557 = sbr.rel (%p555) target = $region52
        $region51: #{tpu_custom_call.1} parent=11 // pred_region
          %s559 = ssub.s32 16, 16
          %560 = vsyncadd [#allocation12], %s559
          %s562 = sshll.u32 [#allocation13], 4
          %s563 = int_to_ptr.vmem [resolvable:$true] %s562
          %565 = dma.hbm_to_vmem [thread:$0]  %s10, 16, %s563, [#allocation12]
        $region52: #{tpu_custom_call.1} parent=11 // pred_fallthru
          _
        // Predicated region
        $region53: #{tpu_custom_call.1} parent=11 // pred_check
          %p566 = pneg %p292
        $region54: #{tpu_custom_call.1} parent=11 // pred_check_branch
          %568 = sbr.rel (%p566) target = $region56
        $region55: #{tpu_custom_call.1} parent=11 // pred_region
          %s570 = ssub.s32 512, 512
          %571 = vsyncadd [#allocation15], %s570
          %s572 = sshll.u32 [#allocation14], 4
          %s573 = int_to_ptr.vmem [resolvable:$true] %s572
          %578 = dma.hbm_to_vmem [thread:$0]  %s11, 512, %s573, [#allocation15], 128, 128, 8
        $region56: #{tpu_custom_call.1} parent=11 // pred_fallthru
          _
        // Predicated region
        $region57: #{tpu_custom_call.1} parent=11 // pred_check
          %p579 = pneg %p313
        $region58: #{tpu_custom_call.1} parent=11 // pred_check_branch
          %581 = sbr.rel (%p579) target = $region60
        $region59: #{tpu_custom_call.1} parent=11 // pred_region
          %s583 = ssub.s32 16, 16
          %584 = vsyncadd [#allocation15], %s583
          %s586 = sshll.u32 [#allocation16], 4
          %s587 = int_to_ptr.vmem [resolvable:$true] %s586
          %589 = dma.hbm_to_vmem [thread:$0]  %s12, 16, %s587, [#allocation15]
        $region60: #{tpu_custom_call.1} parent=11 // pred_fallthru
          _
        // Predicated region
        $region61: #{tpu_custom_call.1} parent=11 // pred_check
          %p590 = pneg %p334
        $region62: #{tpu_custom_call.1} parent=11 // pred_check_branch
          %592 = sbr.rel (%p590) target = $region64
        $region63: #{tpu_custom_call.1} parent=11 // pred_region
          %s594 = ssub.s32 16, 16
          %595 = vsyncadd [#allocation18], %s594
          %s597 = sshll.u32 [#allocation17], 4
          %s598 = int_to_ptr.vmem [resolvable:$true] %s597
          %600 = dma.hbm_to_vmem [thread:$0]  %s13, 16, %s598, [#allocation18]
        $region64: #{tpu_custom_call.1} parent=11 // pred_fallthru
          _
        // Predicated region
        $region65: #{tpu_custom_call.1} parent=11 // pred_check
          %p601 = pneg %p355
        $region66: #{tpu_custom_call.1} parent=11 // pred_check_branch
          %603 = sbr.rel (%p601) target = $region68
        $region67: #{tpu_custom_call.1} parent=11 // pred_region
          %s605 = ssub.s32 16, 16
          %606 = vsyncadd [#allocation18], %s605
          %s608 = sshll.u32 [#allocation19], 4
          %s609 = int_to_ptr.vmem [resolvable:$true] %s608
          %611 = dma.hbm_to_vmem [thread:$0]  %s14, 16, %s609, [#allocation18]
        $region68: #{tpu_custom_call.1} parent=11 // pred_fallthru
          _
        // Predicated region
        $region69: #{tpu_custom_call.1} parent=11 // pred_check
          %p612 = pneg %p376
        $region70: #{tpu_custom_call.1} parent=11 // pred_check_branch
          %614 = sbr.rel (%p612) target = $region72
        $region71: #{tpu_custom_call.1} parent=11 // pred_region
          %s616 = ssub.s32 512, 512
          %617 = vsyncadd [#allocation21], %s616
          %s618 = sshll.u32 [#allocation20], 4
          %s619 = int_to_ptr.vmem [resolvable:$true] %s618
          %624 = dma.hbm_to_vmem [thread:$0]  %s15, 512, %s619, [#allocation21], 128, 128, 8
        $region72: #{tpu_custom_call.1} parent=11 // pred_fallthru
          _
        // Predicated region
        $region73: #{tpu_custom_call.1} parent=11 // pred_check
          %p625 = pneg %p397
        $region74: #{tpu_custom_call.1} parent=11 // pred_check_branch
          %627 = sbr.rel (%p625) target = $region76
        $region75: #{tpu_custom_call.1} parent=11 // pred_region
          %s629 = ssub.s32 16, 16
          %630 = vsyncadd [#allocation21], %s629
          %s632 = sshll.u32 [#allocation22], 4
          %s633 = int_to_ptr.vmem [resolvable:$true] %s632
          %635 = dma.hbm_to_vmem [thread:$0]  %s16, 16, %s633, [#allocation21]
        $region76: #{tpu_custom_call.1} parent=11 // pred_fallthru
          _
        // Predicated region
        $region77: #{tpu_custom_call.1} parent=11 // pred_check
          %p636 = pneg %p418
        $region78: #{tpu_custom_call.1} parent=11 // pred_check_branch
          %638 = sbr.rel (%p636) target = $region80
        $region79: #{tpu_custom_call.1} parent=11 // pred_region
          _
        $region80: #{tpu_custom_call.1} parent=11 // pred_fallthru
          _
        // Predicated region
        $region81: #{tpu_custom_call.1} parent=11 // pred_check
          %p639 = pneg %p439
        $region82: #{tpu_custom_call.1} parent=11 // pred_check_branch
          %641 = sbr.rel (%p639) target = $region84
        $region83: #{tpu_custom_call.1} parent=11 // pred_region
          _
        $region84: #{tpu_custom_call.1} parent=11 // pred_fallthru
          _
      $region12: #{tpu_custom_call.1} parent=5 // pred_fallthru
        _
      %p642 = scmp.lt.s32.totalorder %s35, 2
      // Predicated region
      $region85: #{tpu_custom_call.1} parent=5 // pred_check
        %p643 = pneg %p642
      $region86: #{tpu_custom_call.1} parent=5 // pred_check_branch
        %645 = sbr.rel (%p643) target = $region88
      $region87: #{tpu_custom_call.1} parent=5 // pred_region
        // Predicated region
        $region89: #{tpu_custom_call.1} parent=87 // pred_check
          %p646 = pneg %p55
        $region90: #{tpu_custom_call.1} parent=87 // pred_check_branch
          %648 = sbr.rel (%p646) target = $region92
        $region91: #{tpu_custom_call.1} parent=87 // pred_region
          %s649 = smul.u32 2, %s35
          %p650 = scmp.lt.s32.totalorder %s649, 3
          %s651 = scalar_select %p650, %s649, 3
          %s652 = smul.addr %s651, 8
          %s653 = scalar_lea.vmem %s0, %s652
          %s654 = smul.u32 2, %s35
        $region92: #{tpu_custom_call.1} parent=87 // pred_fallthru
          _
      $region88: #{tpu_custom_call.1} parent=5 // pred_fallthru
        _
      %p655 = scmp.le.s32.totalorder 1, %s35
      %p656 = scmp.lt.s32.totalorder %s35, 3
      %p657 = pnand %p655, %p656
      %p658 = pneg %p657
      // Predicated region
      $region93: #{tpu_custom_call.1} parent=5 // pred_check
        _
      $region94: #{tpu_custom_call.1} parent=5 // pred_check_branch
        %660 = sbr.rel (%p657) target = $region96
      $region95: #{tpu_custom_call.1} parent=5 // pred_region
        %s661 = ssub.s32 %s35, 1
        // Predicated region
        $region97: #{tpu_custom_call.1} parent=95 // pred_check
          %p662 = pneg %p82
        $region98: #{tpu_custom_call.1} parent=95 // pred_check_branch
          %664 = sbr.rel (%p662) target = $region100
        $region99: #{tpu_custom_call.1} parent=95 // pred_region
          %665 = dma.done [#allocation3], 16
        $region100: #{tpu_custom_call.1} parent=95 // pred_fallthru
          _
        // Predicated region
        $region101: #{tpu_custom_call.1} parent=95 // pred_check
          %p666 = pneg %p103
        $region102: #{tpu_custom_call.1} parent=95 // pred_check_branch
          %668 = sbr.rel (%p666) target = $region104
        $region103: #{tpu_custom_call.1} parent=95 // pred_region
          %669 = dma.done [#allocation6], 16
        $region104: #{tpu_custom_call.1} parent=95 // pred_fallthru
          _
        // Predicated region
        $region105: #{tpu_custom_call.1} parent=95 // pred_check
          %p670 = pneg %p145
        $region106: #{tpu_custom_call.1} parent=95 // pred_check_branch
          %672 = sbr.rel (%p670) target = $region108
        $region107: #{tpu_custom_call.1} parent=95 // pred_region
          %673 = dma.done [#allocation6], 16
        $region108: #{tpu_custom_call.1} parent=95 // pred_fallthru
          _
        // Predicated region
        $region109: #{tpu_custom_call.1} parent=95 // pred_check
          %p674 = pneg %p187
        $region110: #{tpu_custom_call.1} parent=95 // pred_check_branch
          %676 = sbr.rel (%p674) target = $region112
        $region111: #{tpu_custom_call.1} parent=95 // pred_region
          %677 = dma.done [#allocation9], 16
        $region112: #{tpu_custom_call.1} parent=95 // pred_fallthru
          _
        // Predicated region
        $region113: #{tpu_custom_call.1} parent=95 // pred_check
          %p678 = pneg %p208
        $region114: #{tpu_custom_call.1} parent=95 // pred_check_branch
          %680 = sbr.rel (%p678) target = $region116
        $region115: #{tpu_custom_call.1} parent=95 // pred_region
          %681 = dma.done [#allocation9], 16
        $region116: #{tpu_custom_call.1} parent=95 // pred_fallthru
          _
        // Predicated region
        $region117: #{tpu_custom_call.1} parent=95 // pred_check
          %p682 = pneg %p229
        $region118: #{tpu_custom_call.1} parent=95 // pred_check_branch
          %684 = sbr.rel (%p682) target = $region120
        $region119: #{tpu_custom_call.1} parent=95 // pred_region
          %685 = dma.done [#allocation12], 16
        $region120: #{tpu_custom_call.1} parent=95 // pred_fallthru
          _
        // Predicated region
        $region121: #{tpu_custom_call.1} parent=95 // pred_check
          %p686 = pneg %p271
        $region122: #{tpu_custom_call.1} parent=95 // pred_check_branch
          %688 = sbr.rel (%p686) target = $region124
        $region123: #{tpu_custom_call.1} parent=95 // pred_region
          %689 = dma.done [#allocation12], 16
        $region124: #{tpu_custom_call.1} parent=95 // pred_fallthru
          _
        // Predicated region
        $region125: #{tpu_custom_call.1} parent=95 // pred_check
          %p690 = pneg %p292
        $region126: #{tpu_custom_call.1} parent=95 // pred_check_branch
          %692 = sbr.rel (%p690) target = $region128
        $region127: #{tpu_custom_call.1} parent=95 // pred_region
          %693 = dma.done [#allocation15], 512
        $region128: #{tpu_custom_call.1} parent=95 // pred_fallthru
          _
        // Predicated region
        $region129: #{tpu_custom_call.1} parent=95 // pred_check
          %p694 = pneg %p313
        $region130: #{tpu_custom_call.1} parent=95 // pred_check_branch
          %696 = sbr.rel (%p694) target = $region132
        $region131: #{tpu_custom_call.1} parent=95 // pred_region
          %697 = dma.done [#allocation15], 16
        $region132: #{tpu_custom_call.1} parent=95 // pred_fallthru
          _
        // Predicated region
        $region133: #{tpu_custom_call.1} parent=95 // pred_check
          %p698 = pneg %p334
        $region134: #{tpu_custom_call.1} parent=95 // pred_check_branch
          %700 = sbr.rel (%p698) target = $region136
        $region135: #{tpu_custom_call.1} parent=95 // pred_region
          %701 = dma.done [#allocation18], 16
        $region136: #{tpu_custom_call.1} parent=95 // pred_fallthru
          _
        // Predicated region
        $region137: #{tpu_custom_call.1} parent=95 // pred_check
          %p702 = pneg %p355
        $region138: #{tpu_custom_call.1} parent=95 // pred_check_branch
          %704 = sbr.rel (%p702) target = $region140
        $region139: #{tpu_custom_call.1} parent=95 // pred_region
          %705 = dma.done [#allocation18], 16
        $region140: #{tpu_custom_call.1} parent=95 // pred_fallthru
          _
        // Predicated region
        $region141: #{tpu_custom_call.1} parent=95 // pred_check
          %p706 = pneg %p376
        $region142: #{tpu_custom_call.1} parent=95 // pred_check_branch
          %708 = sbr.rel (%p706) target = $region144
        $region143: #{tpu_custom_call.1} parent=95 // pred_region
          %709 = dma.done [#allocation21], 512
        $region144: #{tpu_custom_call.1} parent=95 // pred_fallthru
          _
        // Predicated region
        $region145: #{tpu_custom_call.1} parent=95 // pred_check
          %p710 = pneg %p397
        $region146: #{tpu_custom_call.1} parent=95 // pred_check_branch
          %712 = sbr.rel (%p710) target = $region148
        $region147: #{tpu_custom_call.1} parent=95 // pred_region
          %713 = dma.done [#allocation21], 16
        $region148: #{tpu_custom_call.1} parent=95 // pred_fallthru
          _
        %s714 = smul.u32 2, %s40
        %p715 = scmp.lt.s32.totalorder %s714, 3
        %s716 = scalar_select %p715, %s714, 3
        %s717 = smul.addr %s716, 8
        %s718 = scalar_lea.vmem %s0, %s717
        %p719 = pneg %p61
        %p720 = pneg %p58
        %p721 = pneg %p82
        %p722 = pneg %p79
        %p723 = pneg %p103
        %p724 = pneg %p100
        %p725 = pneg %p124
        %p726 = pneg %p121
        %p727 = pneg %p145
        %p728 = pneg %p142
        %p729 = pneg %p166
        %p730 = pneg %p163
        %p731 = pneg %p187
        %p732 = pneg %p184
        %p733 = pneg %p208
        %p734 = pneg %p205
        %p735 = pneg %p229
        %p736 = pneg %p226
        %p737 = pneg %p250
        %p738 = pneg %p247
        %p739 = pneg %p271
        %p740 = pneg %p268
        %p741 = pneg %p292
        %p742 = pneg %p289
        %p743 = pneg %p313
        %p744 = pneg %p310
        %p745 = pneg %p334
        %p746 = pneg %p331
        %p747 = pneg %p355
        %p748 = pneg %p352
        %p749 = pneg %p376
        %p750 = pneg %p373
        %p751 = pneg %p397
        %p752 = pneg %p394
        %p753 = pneg %p418
        %p754 = pneg %p415
        %p755 = pneg %p439
        %p756 = pneg %p436
        %p757 = pneg %p465
        %p758 = pneg %p462
        %s759 = sand.u32 %s452, 1
        %s760 = scalar_lea.sflag [#allocation4], %s759
        %s761 = sand.u32 %s452, 1
        %s762 = smul.addr %s761, 16
        %s763 = scalar_lea.vmem [#allocation23], %s762
        %s764 = smul.u32 2, %s40
        %p765 = scmp.lt.s32.totalorder %s764, 3
        %s766 = scalar_select %p765, %s764, 3
        %s767 = smul.addr %s766, 8
        %s768 = scalar_lea.vmem %s0, %s767
        %s769 = smul.u32 2, %s40
        %s770 = smul.u32 2, %s40
        %v771 = vld [vmem:[%s768] sm:$0xff]
        %v772 = vld [vmem:[%s768 + $0x8] sm:$0xff]
        %v773 = vld [vmem:[#allocation2] sm:$0x1]
        %v774 = vld [vmem:[#allocation5] sm:$0x1]
        %vm775 = vcmask 261120
        %v776 = vsel %vm775, %v771, 0.0
        %777 = vadd.xlane.f32.xlu0 %v776
        %v778 = vpop.xlane.xlu0 %777
        %v779 = vsel %vm775, %v772, 0.0
        %780 = vadd.xlane.f32.xlu0 %v779
        %v781 = vpop.xlane.xlu0 %780
        %v782 = vrcp.pop 32.0
        %v783 = vmul.f32 %v778, %v782
        %v784 = vmul.f32 %v781, %v782
        %v785 = vsub.f32 %v771, %v783
        %v786 = vsub.f32 %v772, %v784
        %v787 = vmul.f32 %v785, %v785
        %v788 = vmul.f32 %v786, %v786
        %v789 = vsel %vm775, %v787, 0.0
        %790 = vadd.xlane.f32.xlu0 %v789
        %v791 = vpop.xlane.xlu0 %790
        %v792 = vsel %vm775, %v788, 0.0
        %793 = vadd.xlane.f32.xlu0 %v792
        %v794 = vpop.xlane.xlu0 %793
        %v795 = vmul.f32 %v791, %v782
        %v796 = vmul.f32 %v794, %v782
        %v797 = vadd.f32 %v795, 1e-05
        %v798 = vadd.f32 %v796, 1e-05
        %v799 = vrsqrt.pop %v797
        %v800 = vrsqrt.pop %v798
        %v801 = vmul.f32 %v785, %v799
        %v802 = vmul.f32 %v786, %v800
        %v804 = vlaneseq
        %v805 = vshrl.u32 %v804, 7
        %v806 = vsub.s32 0, %v805
        %v807 = vrot.slane %v773, %v806
        %v809 = vmul.f32 %v801, %v807
        %v810 = vmul.f32 %v802, %v807
        %v812 = vlaneseq
        %v813 = vshrl.u32 %v812, 7
        %v814 = vsub.s32 0, %v813
        %v815 = vrot.slane %v774, %v814
        %v817 = vadd.f32 %v809, %v815
        %v818 = vadd.f32 %v810, %v815
        %v819 = vld [vmem:[%s3] sm:$0xff]
        %v820 = vld [vmem:[%s3 + $0x8] sm:$0xff]
        %v821 = vld [vmem:[%s3 + $0x10] sm:$0xff]
        %v822 = vld [vmem:[%s3 + $0x18] sm:$0xff]
        %v823 = vld [vmem:[#allocation7] sm:$0x1]
        %v824 = vld [vmem:[%s5] sm:$0xff]
        %v825 = vld [vmem:[%s5 + $0x8] sm:$0xff]
        %v826 = vld [vmem:[%s5 + $0x10] sm:$0xff]
        %v827 = vld [vmem:[%s5 + $0x18] sm:$0xff]
        %v828 = vld [vmem:[#allocation8] sm:$0x1]
        %v830 = vlaneseq
        %v831 = vshrl.u32 %v830, 7
        %v832 = vsub.s32 0, %v831
        %v833 = vrot.slane %v823, %v832
        %v836 = vsel %vm775, %v817, 0
        %v839 = vsel %vm775, %v818, 0
        %841 = vmatprep.subr.mxu0 0.0
        %842 = vmatpush1.msra.mxu0 %v819
        %843 = vmatprep.subr.mxu0 0.0
        %844 = vmatpush1.msra.mxu0 %v820
        %845 = vmatprep.subr.mxu0 0.0
        %846 = vmatpush1.msra.mxu0 %v821
        %847 = vmatprep.subr.mxu0 0.0
        %848 = vmatpush1.msra.mxu0 %v822
        %849 = vmatprep.subr.mxu0 0.0
        %850 = vmatpush1.msra.mxu0 0.0
        %851 = vmatprep.subr.mxu0 0.0
        %852 = vmatpush1.msra.mxu0 0.0
        %853 = vmatprep.subr.mxu0 0.0
        %854 = vmatpush1.msra.mxu0 0.0
        %855 = vmatprep.subr.mxu0 0.0
        %856 = vmatpush1.msra.mxu0 0.0
        %857 = vmatprep.subr.mxu0 0.0
        %858 = vmatpush1.msra.mxu0 0.0
        %859 = vmatprep.subr.mxu0 0.0
        %860 = vmatpush1.msra.mxu0 0.0
        %861 = vmatprep.subr.mxu0 0.0
        %862 = vmatpush1.msra.mxu0 0.0
        %863 = vmatprep.subr.mxu0 0.0
        %864 = vmatpush1.msra.mxu0 0.0
        %865 = vmatprep.subr.mxu0 0.0
        %866 = vmatpush1.msra.mxu0 0.0
        %867 = vmatprep.subr.mxu0 0.0
        %868 = vmatpush1.msra.mxu0 0.0
        %869 = vmatprep.subr.mxu0 0.0
        %870 = vmatpush1.msra.mxu0 0.0
        %871 = vmatprep.subr.mxu0 0.0
        %872 = vmatpush1.msra.mxu0 0.0
        %873 = vmatprep.subr.mxu0 0.0
        %874 = vmatpush1.msra.mxu0 0.0
        %875 = vmatprep.subr.mxu0 0.0
        %876 = vmatpush1.msra.mxu0 0.0
        %877 = vmatprep.subr.mxu0 0.0
        %878 = vmatpush1.msra.mxu0 0.0
        %879 = vmatprep.subr.mxu0 0.0
        %880 = vmatpush1.msra.mxu0 0.0
        %881 = vmatprep.subr.mxu0 0.0
        %882 = vmatpush1.msra.mxu0 0.0
        %883 = vmatprep.subr.mxu0 0.0
        %884 = vmatpush1.msra.mxu0 0.0
        %885 = vmatprep.subr.mxu0 0.0
        %886 = vmatpush1.msra.mxu0 0.0
        %887 = vmatprep.subr.mxu0 0.0
        %888 = vmatpush1.msra.mxu0 0.0
        %889 = vmatprep.subr.mxu0 0.0
        %890 = vmatpush1.msra.mxu0 0.0
        %891 = vmatprep.subr.mxu0 0.0
        %892 = vmatpush1.msra.mxu0 0.0
        %893 = vmatprep.subr.mxu0 0.0
        %894 = vmatpush1.msra.mxu0 0.0
        %895 = vmatprep.subr.mxu0 0.0
        %896 = vmatpush1.msra.mxu0 0.0
        %897 = vmatprep.subr.mxu0 0.0
        %898 = vmatpush1.msra.mxu0 0.0
        %899 = vmatprep.subr.mxu0 0.0
        %900 = vmatpush1.msra.mxu0 0.0
        %901 = vmatprep.subr.mxu0 0.0
        %902 = vmatpush1.msra.mxu0 0.0
        %903 = vmatprep.subr.mxu0 0.0
        %904 = vmatpush1.msra.mxu0 0.0
        %905 = vmatprep.mubr.f32.mxu0 0.0
        %906 = vmatmul.mubr.f32.gmra.mrb[0].mxu0 %v836
        %v907 = vpop.f32.mrb[0].mxu0
        %v908 = vadd.f32 %v833, %v907
        %v909 = vpop.f32.mrb[0].mxu0
        %910 = vmatprep.mubr.f32.mxu0 0.0
        %911 = vmatmul.mubr.f32.gmra.mrb[0].mxu0 %v839
        %v912 = vpop.f32.mrb[0].mxu0
        %v913 = vadd.f32 %v833, %v912
        %v914 = vpop.f32.mrb[0].mxu0
        %915 = vdwg.mxu0
        %v916 = vmul.f32 %v908, 0.35355338
        %v917 = vmul.f32 %v913, 0.35355338
        %919 = vrot.lane.b32.xlu0 %v908, 96
        %v920 = vpop.permute.xlu0 %919
        %vm921 = vcmask 64512
        %v923 = vsel %vm921, %v916, 0
        %v925 = vsel %vm921, %v920, 0
        %927 = vmatprep.subr.mxu0 0.0
        %928 = vmatpush1.xpose.msra.mxu0 %v925
        %929 = vmatprep.subr.mxu0 0.0
        %930 = vmatpush1.xpose.msra.mxu0 0.0
        %931 = vmatprep.subr.mxu0 0.0
        %932 = vmatpush1.xpose.msra.mxu0 0.0
        %933 = vmatprep.subr.mxu0 0.0
        %934 = vmatpush1.xpose.msra.mxu0 0.0
        %935 = vmatprep.subr.mxu0 0.0
        %936 = vmatpush1.xpose.msra.mxu0 0.0
        %937 = vmatprep.subr.mxu0 0.0
        %938 = vmatpush1.xpose.msra.mxu0 0.0
        %939 = vmatprep.subr.mxu0 0.0
        %940 = vmatpush1.xpose.msra.mxu0 0.0
        %941 = vmatprep.subr.mxu0 0.0
        %942 = vmatpush1.xpose.msra.mxu0 0.0
        %943 = vmatprep.subr.mxu0 0.0
        %944 = vmatpush1.xpose.msra.mxu0 0.0
        %945 = vmatprep.subr.mxu0 0.0
        %946 = vmatpush1.xpose.msra.mxu0 0.0
        %947 = vmatprep.subr.mxu0 0.0
        %948 = vmatpush1.xpose.msra.mxu0 0.0
        %949 = vmatprep.subr.mxu0 0.0
        %950 = vmatpush1.xpose.msra.mxu0 0.0
        %951 = vmatprep.subr.mxu0 0.0
        %952 = vmatpush1.xpose.msra.mxu0 0.0
        %953 = vmatprep.subr.mxu0 0.0
        %954 = vmatpush1.xpose.msra.mxu0 0.0
        %955 = vmatprep.subr.mxu0 0.0
        %956 = vmatpush1.xpose.msra.mxu0 0.0
        %957 = vmatprep.subr.mxu0 0.0
        %958 = vmatpush1.xpose.msra.mxu0 0.0
        %959 = vmatprep.subr.mxu0 0.0
        %960 = vmatpush1.xpose.msra.mxu0 0.0
        %961 = vmatprep.subr.mxu0 0.0
        %962 = vmatpush1.xpose.msra.mxu0 0.0
        %963 = vmatprep.subr.mxu0 0.0
        %964 = vmatpush1.xpose.msra.mxu0 0.0
        %965 = vmatprep.subr.mxu0 0.0
        %966 = vmatpush1.xpose.msra.mxu0 0.0
        %967 = vmatprep.subr.mxu0 0.0
        %968 = vmatpush1.xpose.msra.mxu0 0.0
        %969 = vmatprep.subr.mxu0 0.0
        %970 = vmatpush1.xpose.msra.mxu0 0.0
        %971 = vmatprep.subr.mxu0 0.0
        %972 = vmatpush1.xpose.msra.mxu0 0.0
        %973 = vmatprep.subr.mxu0 0.0
        %974 = vmatpush1.xpose.msra.mxu0 0.0
        %975 = vmatprep.subr.mxu0 0.0
        %976 = vmatpush1.xpose.msra.mxu0 0.0
        %977 = vmatprep.subr.mxu0 0.0
        %978 = vmatpush1.xpose.msra.mxu0 0.0
        %979 = vmatprep.subr.mxu0 0.0
        %980 = vmatpush1.xpose.msra.mxu0 0.0
        %981 = vmatprep.subr.mxu0 0.0
        %982 = vmatpush1.xpose.msra.mxu0 0.0
        %983 = vmatprep.subr.mxu0 0.0
        %984 = vmatpush1.xpose.msra.mxu0 0.0
        %985 = vmatprep.subr.mxu0 0.0
        %986 = vmatpush1.xpose.msra.mxu0 0.0
        %987 = vmatprep.subr.mxu0 0.0
        %988 = vmatpush1.xpose.msra.mxu0 0.0
        %989 = vmatprep.subr.mxu0 0.0
        %990 = vmatpush1.xpose.msra.mxu0 0.0
        %991 = vmatprep.mubr.f32.mxu0 0.0
        %992 = vmatmul.mubr.f32.gmra.mrb[0].mxu0 %v923
        %v993 = vpop.f32.mrb[0].mxu0
        %v994 = vadd.f32 0.0, %v993
        %v995 = vpop.f32.mrb[0].mxu0
        %996 = vdwg.mxu0
        %998 = vrot.lane.b32.xlu0 %v913, 96
        %v999 = vpop.permute.xlu0 %998
        %v1001 = vsel %vm921, %v917, 0
        %v1003 = vsel %vm921, %v999, 0
        %1005 = vmatprep.subr.mxu0 0.0
        %1006 = vmatpush1.xpose.msra.mxu0 %v1003
        %1007 = vmatprep.subr.mxu0 0.0
        %1008 = vmatpush1.xpose.msra.mxu0 0.0
        %1009 = vmatprep.subr.mxu0 0.0
        %1010 = vmatpush1.xpose.msra.mxu0 0.0
        %1011 = vmatprep.subr.mxu0 0.0
        %1012 = vmatpush1.xpose.msra.mxu0 0.0
        %1013 = vmatprep.subr.mxu0 0.0
        %1014 = vmatpush1.xpose.msra.mxu0 0.0
        %1015 = vmatprep.subr.mxu0 0.0
        %1016 = vmatpush1.xpose.msra.mxu0 0.0
        %1017 = vmatprep.subr.mxu0 0.0
        %1018 = vmatpush1.xpose.msra.mxu0 0.0
        %1019 = vmatprep.subr.mxu0 0.0
        %1020 = vmatpush1.xpose.msra.mxu0 0.0
        %1021 = vmatprep.subr.mxu0 0.0
        %1022 = vmatpush1.xpose.msra.mxu0 0.0
        %1023 = vmatprep.subr.mxu0 0.0
        %1024 = vmatpush1.xpose.msra.mxu0 0.0
        %1025 = vmatprep.subr.mxu0 0.0
        %1026 = vmatpush1.xpose.msra.mxu0 0.0
        %1027 = vmatprep.subr.mxu0 0.0
        %1028 = vmatpush1.xpose.msra.mxu0 0.0
        %1029 = vmatprep.subr.mxu0 0.0
        %1030 = vmatpush1.xpose.msra.mxu0 0.0
        %1031 = vmatprep.subr.mxu0 0.0
        %1032 = vmatpush1.xpose.msra.mxu0 0.0
        %1033 = vmatprep.subr.mxu0 0.0
        %1034 = vmatpush1.xpose.msra.mxu0 0.0
        %1035 = vmatprep.subr.mxu0 0.0
        %1036 = vmatpush1.xpose.msra.mxu0 0.0
        %1037 = vmatprep.subr.mxu0 0.0
        %1038 = vmatpush1.xpose.msra.mxu0 0.0
        %1039 = vmatprep.subr.mxu0 0.0
        %1040 = vmatpush1.xpose.msra.mxu0 0.0
        %1041 = vmatprep.subr.mxu0 0.0
        %1042 = vmatpush1.xpose.msra.mxu0 0.0
        %1043 = vmatprep.subr.mxu0 0.0
        %1044 = vmatpush1.xpose.msra.mxu0 0.0
        %1045 = vmatprep.subr.mxu0 0.0
        %1046 = vmatpush1.xpose.msra.mxu0 0.0
        %1047 = vmatprep.subr.mxu0 0.0
        %1048 = vmatpush1.xpose.msra.mxu0 0.0
        %1049 = vmatprep.subr.mxu0 0.0
        %1050 = vmatpush1.xpose.msra.mxu0 0.0
        %1051 = vmatprep.subr.mxu0 0.0
        %1052 = vmatpush1.xpose.msra.mxu0 0.0
        %1053 = vmatprep.subr.mxu0 0.0
        %1054 = vmatpush1.xpose.msra.mxu0 0.0
        %1055 = vmatprep.subr.mxu0 0.0
        %1056 = vmatpush1.xpose.msra.mxu0 0.0
        %1057 = vmatprep.subr.mxu0 0.0
        %1058 = vmatpush1.xpose.msra.mxu0 0.0
        %1059 = vmatprep.subr.mxu0 0.0
        %1060 = vmatpush1.xpose.msra.mxu0 0.0
        %1061 = vmatprep.subr.mxu0 0.0
        %1062 = vmatpush1.xpose.msra.mxu0 0.0
        %1063 = vmatprep.subr.mxu0 0.0
        %1064 = vmatpush1.xpose.msra.mxu0 0.0
        %1065 = vmatprep.subr.mxu0 0.0
        %1066 = vmatpush1.xpose.msra.mxu0 0.0
        %1067 = vmatprep.subr.mxu0 0.0
        %1068 = vmatpush1.xpose.msra.mxu0 0.0
        %1069 = vmatprep.mubr.f32.mxu0 0.0
        %1070 = vmatmul.mubr.f32.gmra.mrb[0].mxu0 %v1001
        %v1071 = vpop.f32.mrb[0].mxu0
        %v1072 = vadd.f32 0.0, %v1071
        %v1073 = vpop.f32.mrb[0].mxu0
        %1074 = vdwg.mxu0
        %v1075 = vsel %vm921, %v994, -inf
        %1076 = vmax.xlane.f32.xlu0 %v1075
        %v1077 = vpop.xlane.xlu0 %1076
        %v1078 = vsel %vm921, %v1072, -inf
        %1079 = vmax.xlane.f32.xlu0 %v1078
        %v1080 = vpop.xlane.xlu0 %1079
        %v1081 = vsub.f32 %v994, %v1077
        %v1082 = vsub.f32 %v1072, %v1080
        %v1083 = vmul.f32 %v1081, 1.442695
        %v1084 = vpow.pop %v1083
        %v1085 = vmul.f32 %v1082, 1.442695
        %v1086 = vpow.pop %v1085
        %v1087 = vsel %vm921, %v1084, 0.0
        %1088 = vadd.xlane.f32.xlu0 %v1087
        %v1089 = vpop.xlane.xlu0 %1088
        %v1090 = vsel %vm921, %v1086, 0.0
        %1091 = vadd.xlane.f32.xlu0 %v1090
        %v1092 = vpop.xlane.xlu0 %1091
        %v1093 = vrcp.pop %v1089
        %v1094 = vrcp.pop %v1092
        %v1095 = vmul.f32 %v1084, %v1093
        %v1096 = vmul.f32 %v1086, %v1094
        %1097 = vrot.lane.b32.xlu0 %v908, 64
        %v1098 = vpop.permute.xlu0 %1097
        %v1101 = vsel %vm921, %v1095, 0
        %1103 = vmatprep.subr.mxu0 0.0
        %1104 = vmatpush1.msra.mxu0 %v1098
        %1105 = vmatprep.subr.mxu0 0.0
        %1106 = vmatpush1.msra.mxu0 0.0
        %1107 = vmatprep.subr.mxu0 0.0
        %1108 = vmatpush1.msra.mxu0 0.0
        %1109 = vmatprep.subr.mxu0 0.0
        %1110 = vmatpush1.msra.mxu0 0.0
        %1111 = vmatprep.subr.mxu0 0.0
        %1112 = vmatpush1.msra.mxu0 0.0
        %1113 = vmatprep.subr.mxu0 0.0
        %1114 = vmatpush1.msra.mxu0 0.0
        %1115 = vmatprep.subr.mxu0 0.0
        %1116 = vmatpush1.msra.mxu0 0.0
        %1117 = vmatprep.subr.mxu0 0.0
        %1118 = vmatpush1.msra.mxu0 0.0
        %1119 = vmatprep.subr.mxu0 0.0
        %1120 = vmatpush1.msra.mxu0 0.0
        %1121 = vmatprep.subr.mxu0 0.0
        %1122 = vmatpush1.msra.mxu0 0.0
        %1123 = vmatprep.subr.mxu0 0.0
        %1124 = vmatpush1.msra.mxu0 0.0
        %1125 = vmatprep.subr.mxu0 0.0
        %1126 = vmatpush1.msra.mxu0 0.0
        %1127 = vmatprep.subr.mxu0 0.0
        %1128 = vmatpush1.msra.mxu0 0.0
        %1129 = vmatprep.subr.mxu0 0.0
        %1130 = vmatpush1.msra.mxu0 0.0
        %1131 = vmatprep.subr.mxu0 0.0
        %1132 = vmatpush1.msra.mxu0 0.0
        %1133 = vmatprep.subr.mxu0 0.0
        %1134 = vmatpush1.msra.mxu0 0.0
        %1135 = vmatprep.subr.mxu0 0.0
        %1136 = vmatpush1.msra.mxu0 0.0
        %1137 = vmatprep.subr.mxu0 0.0
        %1138 = vmatpush1.msra.mxu0 0.0
        %1139 = vmatprep.subr.mxu0 0.0
        %1140 = vmatpush1.msra.mxu0 0.0
        %1141 = vmatprep.subr.mxu0 0.0
        %1142 = vmatpush1.msra.mxu0 0.0
        %1143 = vmatprep.subr.mxu0 0.0
        %1144 = vmatpush1.msra.mxu0 0.0
        %1145 = vmatprep.subr.mxu0 0.0
        %1146 = vmatpush1.msra.mxu0 0.0
        %1147 = vmatprep.subr.mxu0 0.0
        %1148 = vmatpush1.msra.mxu0 0.0
        %1149 = vmatprep.subr.mxu0 0.0
        %1150 = vmatpush1.msra.mxu0 0.0
        %1151 = vmatprep.subr.mxu0 0.0
        %1152 = vmatpush1.msra.mxu0 0.0
        %1153 = vmatprep.subr.mxu0 0.0
        %1154 = vmatpush1.msra.mxu0 0.0
        %1155 = vmatprep.subr.mxu0 0.0
        %1156 = vmatpush1.msra.mxu0 0.0
        %1157 = vmatprep.subr.mxu0 0.0
        %1158 = vmatpush1.msra.mxu0 0.0
        %1159 = vmatprep.subr.mxu0 0.0
        %1160 = vmatpush1.msra.mxu0 0.0
        %1161 = vmatprep.subr.mxu0 0.0
        %1162 = vmatpush1.msra.mxu0 0.0
        %1163 = vmatprep.subr.mxu0 0.0
        %1164 = vmatpush1.msra.mxu0 0.0
        %1165 = vmatprep.subr.mxu0 0.0
        %1166 = vmatpush1.msra.mxu0 0.0
        %1167 = vmatprep.mubr.f32.mxu0 0.0
        %1168 = vmatmul.mubr.f32.gmra.mrb[0].mxu0 %v1101
        %v1169 = vpop.f32.mrb[0].mxu0
        %v1170 = vadd.f32 0.0, %v1169
        %v1171 = vpop.f32.mrb[0].mxu0
        %1172 = vdwg.mxu0
        %1173 = vrot.lane.b32.xlu0 %v913, 64
        %v1174 = vpop.permute.xlu0 %1173
        %v1177 = vsel %vm921, %v1096, 0
        %1179 = vmatprep.subr.mxu0 0.0
        %1180 = vmatpush1.msra.mxu0 %v1174
        %1181 = vmatprep.subr.mxu0 0.0
        %1182 = vmatpush1.msra.mxu0 0.0
        %1183 = vmatprep.subr.mxu0 0.0
        %1184 = vmatpush1.msra.mxu0 0.0
        %1185 = vmatprep.subr.mxu0 0.0
        %1186 = vmatpush1.msra.mxu0 0.0
        %1187 = vmatprep.subr.mxu0 0.0
        %1188 = vmatpush1.msra.mxu0 0.0
        %1189 = vmatprep.subr.mxu0 0.0
        %1190 = vmatpush1.msra.mxu0 0.0
        %1191 = vmatprep.subr.mxu0 0.0
        %1192 = vmatpush1.msra.mxu0 0.0
        %1193 = vmatprep.subr.mxu0 0.0
        %1194 = vmatpush1.msra.mxu0 0.0
        %1195 = vmatprep.subr.mxu0 0.0
        %1196 = vmatpush1.msra.mxu0 0.0
        %1197 = vmatprep.subr.mxu0 0.0
        %1198 = vmatpush1.msra.mxu0 0.0
        %1199 = vmatprep.subr.mxu0 0.0
        %1200 = vmatpush1.msra.mxu0 0.0
        %1201 = vmatprep.subr.mxu0 0.0
        %1202 = vmatpush1.msra.mxu0 0.0
        %1203 = vmatprep.subr.mxu0 0.0
        %1204 = vmatpush1.msra.mxu0 0.0
        %1205 = vmatprep.subr.mxu0 0.0
        %1206 = vmatpush1.msra.mxu0 0.0
        %1207 = vmatprep.subr.mxu0 0.0
        %1208 = vmatpush1.msra.mxu0 0.0
        %1209 = vmatprep.subr.mxu0 0.0
        %1210 = vmatpush1.msra.mxu0 0.0
        %1211 = vmatprep.subr.mxu0 0.0
        %1212 = vmatpush1.msra.mxu0 0.0
        %1213 = vmatprep.subr.mxu0 0.0
        %1214 = vmatpush1.msra.mxu0 0.0
        %1215 = vmatprep.subr.mxu0 0.0
        %1216 = vmatpush1.msra.mxu0 0.0
        %1217 = vmatprep.subr.mxu0 0.0
        %1218 = vmatpush1.msra.mxu0 0.0
        %1219 = vmatprep.subr.mxu0 0.0
        %1220 = vmatpush1.msra.mxu0 0.0
        %1221 = vmatprep.subr.mxu0 0.0
        %1222 = vmatpush1.msra.mxu0 0.0
        %1223 = vmatprep.subr.mxu0 0.0
        %1224 = vmatpush1.msra.mxu0 0.0
        %1225 = vmatprep.subr.mxu0 0.0
        %1226 = vmatpush1.msra.mxu0 0.0
        %1227 = vmatprep.subr.mxu0 0.0
        %1228 = vmatpush1.msra.mxu0 0.0
        %1229 = vmatprep.subr.mxu0 0.0
        %1230 = vmatpush1.msra.mxu0 0.0
        %1231 = vmatprep.subr.mxu0 0.0
        %1232 = vmatpush1.msra.mxu0 0.0
        %1233 = vmatprep.subr.mxu0 0.0
        %1234 = vmatpush1.msra.mxu0 0.0
        %1235 = vmatprep.subr.mxu0 0.0
        %1236 = vmatpush1.msra.mxu0 0.0
        %1237 = vmatprep.subr.mxu0 0.0
        %1238 = vmatpush1.msra.mxu0 0.0
        %1239 = vmatprep.subr.mxu0 0.0
        %1240 = vmatpush1.msra.mxu0 0.0
        %1241 = vmatprep.subr.mxu0 0.0
        %1242 = vmatpush1.msra.mxu0 0.0
        %1243 = vmatprep.mubr.f32.mxu0 0.0
        %1244 = vmatmul.mubr.f32.gmra.mrb[0].mxu0 %v1177
        %v1245 = vpop.f32.mrb[0].mxu0
        %v1246 = vadd.f32 0.0, %v1245
        %v1247 = vpop.f32.mrb[0].mxu0
        %1248 = vdwg.mxu0
        %1249 = vrot.lane.b32.xlu0 %v916, 120
        %v1250 = vpop.permute.xlu0 %1249
        %1251 = vrot.lane.b32.xlu0 %v908, 88
        %v1252 = vpop.permute.xlu0 %1251
        %v1253 = vsel %vm921, %v1250, 0
        %v1255 = vsel %vm921, %v1252, 0
        %1257 = vmatprep.subr.mxu0 0.0
        %1258 = vmatpush1.xpose.msra.mxu0 %v1255
        %1259 = vmatprep.subr.mxu0 0.0
        %1260 = vmatpush1.xpose.msra.mxu0 0.0
        %1261 = vmatprep.subr.mxu0 0.0
        %1262 = vmatpush1.xpose.msra.mxu0 0.0
        %1263 = vmatprep.subr.mxu0 0.0
        %1264 = vmatpush1.xpose.msra.mxu0 0.0
        %1265 = vmatprep.subr.mxu0 0.0
        %1266 = vmatpush1.xpose.msra.mxu0 0.0
        %1267 = vmatprep.subr.mxu0 0.0
        %1268 = vmatpush1.xpose.msra.mxu0 0.0
        %1269 = vmatprep.subr.mxu0 0.0
        %1270 = vmatpush1.xpose.msra.mxu0 0.0
        %1271 = vmatprep.subr.mxu0 0.0
        %1272 = vmatpush1.xpose.msra.mxu0 0.0
        %1273 = vmatprep.subr.mxu0 0.0
        %1274 = vmatpush1.xpose.msra.mxu0 0.0
        %1275 = vmatprep.subr.mxu0 0.0
        %1276 = vmatpush1.xpose.msra.mxu0 0.0
        %1277 = vmatprep.subr.mxu0 0.0
        %1278 = vmatpush1.xpose.msra.mxu0 0.0
        %1279 = vmatprep.subr.mxu0 0.0
        %1280 = vmatpush1.xpose.msra.mxu0 0.0
        %1281 = vmatprep.subr.mxu0 0.0
        %1282 = vmatpush1.xpose.msra.mxu0 0.0
        %1283 = vmatprep.subr.mxu0 0.0
        %1284 = vmatpush1.xpose.msra.mxu0 0.0
        %1285 = vmatprep.subr.mxu0 0.0
        %1286 = vmatpush1.xpose.msra.mxu0 0.0
        %1287 = vmatprep.subr.mxu0 0.0
        %1288 = vmatpush1.xpose.msra.mxu0 0.0
        %1289 = vmatprep.subr.mxu0 0.0
        %1290 = vmatpush1.xpose.msra.mxu0 0.0
        %1291 = vmatprep.subr.mxu0 0.0
        %1292 = vmatpush1.xpose.msra.mxu0 0.0
        %1293 = vmatprep.subr.mxu0 0.0
        %1294 = vmatpush1.xpose.msra.mxu0 0.0
        %1295 = vmatprep.subr.mxu0 0.0
        %1296 = vmatpush1.xpose.msra.mxu0 0.0
        %1297 = vmatprep.subr.mxu0 0.0
        %1298 = vmatpush1.xpose.msra.mxu0 0.0
        %1299 = vmatprep.subr.mxu0 0.0
        %1300 = vmatpush1.xpose.msra.mxu0 0.0
        %1301 = vmatprep.subr.mxu0 0.0
        %1302 = vmatpush1.xpose.msra.mxu0 0.0
        %1303 = vmatprep.subr.mxu0 0.0
        %1304 = vmatpush1.xpose.msra.mxu0 0.0
        %1305 = vmatprep.subr.mxu0 0.0
        %1306 = vmatpush1.xpose.msra.mxu0 0.0
        %1307 = vmatprep.subr.mxu0 0.0
        %1308 = vmatpush1.xpose.msra.mxu0 0.0
        %1309 = vmatprep.subr.mxu0 0.0
        %1310 = vmatpush1.xpose.msra.mxu0 0.0
        %1311 = vmatprep.subr.mxu0 0.0
        %1312 = vmatpush1.xpose.msra.mxu0 0.0
        %1313 = vmatprep.subr.mxu0 0.0
        %1314 = vmatpush1.xpose.msra.mxu0 0.0
        %1315 = vmatprep.subr.mxu0 0.0
        %1316 = vmatpush1.xpose.msra.mxu0 0.0
        %1317 = vmatprep.subr.mxu0 0.0
        %1318 = vmatpush1.xpose.msra.mxu0 0.0
        %1319 = vmatprep.subr.mxu0 0.0
        %1320 = vmatpush1.xpose.msra.mxu0 0.0
        %1321 = vmatprep.mubr.f32.mxu0 0.0
        %1322 = vmatmul.mubr.f32.gmra.mrb[0].mxu0 %v1253
        %v1323 = vpop.f32.mrb[0].mxu0
        %v1324 = vadd.f32 0.0, %v1323
        %v1325 = vpop.f32.mrb[0].mxu0
        %1326 = vdwg.mxu0
        %1327 = vrot.lane.b32.xlu0 %v917, 120
        %v1328 = vpop.permute.xlu0 %1327
        %1329 = vrot.lane.b32.xlu0 %v913, 88
        %v1330 = vpop.permute.xlu0 %1329
        %v1331 = vsel %vm921, %v1328, 0
        %v1333 = vsel %vm921, %v1330, 0
        %1335 = vmatprep.subr.mxu0 0.0
        %1336 = vmatpush1.xpose.msra.mxu0 %v1333
        %1337 = vmatprep.subr.mxu0 0.0
        %1338 = vmatpush1.xpose.msra.mxu0 0.0
        %1339 = vmatprep.subr.mxu0 0.0
        %1340 = vmatpush1.xpose.msra.mxu0 0.0
        %1341 = vmatprep.subr.mxu0 0.0
        %1342 = vmatpush1.xpose.msra.mxu0 0.0
        %1343 = vmatprep.subr.mxu0 0.0
        %1344 = vmatpush1.xpose.msra.mxu0 0.0
        %1345 = vmatprep.subr.mxu0 0.0
        %1346 = vmatpush1.xpose.msra.mxu0 0.0
        %1347 = vmatprep.subr.mxu0 0.0
        %1348 = vmatpush1.xpose.msra.mxu0 0.0
        %1349 = vmatprep.subr.mxu0 0.0
        %1350 = vmatpush1.xpose.msra.mxu0 0.0
        %1351 = vmatprep.subr.mxu0 0.0
        %1352 = vmatpush1.xpose.msra.mxu0 0.0
        %1353 = vmatprep.subr.mxu0 0.0
        %1354 = vmatpush1.xpose.msra.mxu0 0.0
        %1355 = vmatprep.subr.mxu0 0.0
        %1356 = vmatpush1.xpose.msra.mxu0 0.0
        %1357 = vmatprep.subr.mxu0 0.0
        %1358 = vmatpush1.xpose.msra.mxu0 0.0
        %1359 = vmatprep.subr.mxu0 0.0
        %1360 = vmatpush1.xpose.msra.mxu0 0.0
        %1361 = vmatprep.subr.mxu0 0.0
        %1362 = vmatpush1.xpose.msra.mxu0 0.0
        %1363 = vmatprep.subr.mxu0 0.0
        %1364 = vmatpush1.xpose.msra.mxu0 0.0
        %1365 = vmatprep.subr.mxu0 0.0
        %1366 = vmatpush1.xpose.msra.mxu0 0.0
        %1367 = vmatprep.subr.mxu0 0.0
        %1368 = vmatpush1.xpose.msra.mxu0 0.0
        %1369 = vmatprep.subr.mxu0 0.0
        %1370 = vmatpush1.xpose.msra.mxu0 0.0
        %1371 = vmatprep.subr.mxu0 0.0
        %1372 = vmatpush1.xpose.msra.mxu0 0.0
        %1373 = vmatprep.subr.mxu0 0.0
        %1374 = vmatpush1.xpose.msra.mxu0 0.0
        %1375 = vmatprep.subr.mxu0 0.0
        %1376 = vmatpush1.xpose.msra.mxu0 0.0
        %1377 = vmatprep.subr.mxu0 0.0
        %1378 = vmatpush1.xpose.msra.mxu0 0.0
        %1379 = vmatprep.subr.mxu0 0.0
        %1380 = vmatpush1.xpose.msra.mxu0 0.0
        %1381 = vmatprep.subr.mxu0 0.0
        %1382 = vmatpush1.xpose.msra.mxu0 0.0
        %1383 = vmatprep.subr.mxu0 0.0
        %1384 = vmatpush1.xpose.msra.mxu0 0.0
        %1385 = vmatprep.subr.mxu0 0.0
        %1386 = vmatpush1.xpose.msra.mxu0 0.0
        %1387 = vmatprep.subr.mxu0 0.0
        %1388 = vmatpush1.xpose.msra.mxu0 0.0
        %1389 = vmatprep.subr.mxu0 0.0
        %1390 = vmatpush1.xpose.msra.mxu0 0.0
        %1391 = vmatprep.subr.mxu0 0.0
        %1392 = vmatpush1.xpose.msra.mxu0 0.0
        %1393 = vmatprep.subr.mxu0 0.0
        %1394 = vmatpush1.xpose.msra.mxu0 0.0
        %1395 = vmatprep.subr.mxu0 0.0
        %1396 = vmatpush1.xpose.msra.mxu0 0.0
        %1397 = vmatprep.subr.mxu0 0.0
        %1398 = vmatpush1.xpose.msra.mxu0 0.0
        %1399 = vmatprep.mubr.f32.mxu0 0.0
        %1400 = vmatmul.mubr.f32.gmra.mrb[0].mxu0 %v1331
        %v1401 = vpop.f32.mrb[0].mxu0
        %v1402 = vadd.f32 0.0, %v1401
        %v1403 = vpop.f32.mrb[0].mxu0
        %1404 = vdwg.mxu0
        %v1405 = vsel %vm921, %v1324, -inf
        %1406 = vmax.xlane.f32.xlu0 %v1405
        %v1407 = vpop.xlane.xlu0 %1406
        %v1408 = vsel %vm921, %v1402, -inf
        %1409 = vmax.xlane.f32.xlu0 %v1408
        %v1410 = vpop.xlane.xlu0 %1409
        %v1411 = vsub.f32 %v1324, %v1407
        %v1412 = vsub.f32 %v1402, %v1410
        %v1413 = vmul.f32 %v1411, 1.442695
        %v1414 = vpow.pop %v1413
        %v1415 = vmul.f32 %v1412, 1.442695
        %v1416 = vpow.pop %v1415
        %v1417 = vsel %vm921, %v1414, 0.0
        %1418 = vadd.xlane.f32.xlu0 %v1417
        %v1419 = vpop.xlane.xlu0 %1418
        %v1420 = vsel %vm921, %v1416, 0.0
        %1421 = vadd.xlane.f32.xlu0 %v1420
        %v1422 = vpop.xlane.xlu0 %1421
        %v1423 = vrcp.pop %v1419
        %v1424 = vrcp.pop %v1422
        %v1425 = vmul.f32 %v1414, %v1423
        %v1426 = vmul.f32 %v1416, %v1424
        %1427 = vrot.lane.b32.xlu0 %v908, 56
        %v1428 = vpop.permute.xlu0 %1427
        %v1431 = vsel %vm921, %v1425, 0
        %1433 = vmatprep.subr.mxu0 0.0
        %1434 = vmatpush1.msra.mxu0 %v1428
        %1435 = vmatprep.subr.mxu0 0.0
        %1436 = vmatpush1.msra.mxu0 0.0
        %1437 = vmatprep.subr.mxu0 0.0
        %1438 = vmatpush1.msra.mxu0 0.0
        %1439 = vmatprep.subr.mxu0 0.0
        %1440 = vmatpush1.msra.mxu0 0.0
        %1441 = vmatprep.subr.mxu0 0.0
        %1442 = vmatpush1.msra.mxu0 0.0
        %1443 = vmatprep.subr.mxu0 0.0
        %1444 = vmatpush1.msra.mxu0 0.0
        %1445 = vmatprep.subr.mxu0 0.0
        %1446 = vmatpush1.msra.mxu0 0.0
        %1447 = vmatprep.subr.mxu0 0.0
        %1448 = vmatpush1.msra.mxu0 0.0
        %1449 = vmatprep.subr.mxu0 0.0
        %1450 = vmatpush1.msra.mxu0 0.0
        %1451 = vmatprep.subr.mxu0 0.0
        %1452 = vmatpush1.msra.mxu0 0.0
        %1453 = vmatprep.subr.mxu0 0.0
        %1454 = vmatpush1.msra.mxu0 0.0
        %1455 = vmatprep.subr.mxu0 0.0
        %1456 = vmatpush1.msra.mxu0 0.0
        %1457 = vmatprep.subr.mxu0 0.0
        %1458 = vmatpush1.msra.mxu0 0.0
        %1459 = vmatprep.subr.mxu0 0.0
        %1460 = vmatpush1.msra.mxu0 0.0
        %1461 = vmatprep.subr.mxu0 0.0
        %1462 = vmatpush1.msra.mxu0 0.0
        %1463 = vmatprep.subr.mxu0 0.0
        %1464 = vmatpush1.msra.mxu0 0.0
        %1465 = vmatprep.subr.mxu0 0.0
        %1466 = vmatpush1.msra.mxu0 0.0
        %1467 = vmatprep.subr.mxu0 0.0
        %1468 = vmatpush1.msra.mxu0 0.0
        %1469 = vmatprep.subr.mxu0 0.0
        %1470 = vmatpush1.msra.mxu0 0.0
        %1471 = vmatprep.subr.mxu0 0.0
        %1472 = vmatpush1.msra.mxu0 0.0
        %1473 = vmatprep.subr.mxu0 0.0
        %1474 = vmatpush1.msra.mxu0 0.0
        %1475 = vmatprep.subr.mxu0 0.0
        %1476 = vmatpush1.msra.mxu0 0.0
        %1477 = vmatprep.subr.mxu0 0.0
        %1478 = vmatpush1.msra.mxu0 0.0
        %1479 = vmatprep.subr.mxu0 0.0
        %1480 = vmatpush1.msra.mxu0 0.0
        %1481 = vmatprep.subr.mxu0 0.0
        %1482 = vmatpush1.msra.mxu0 0.0
        %1483 = vmatprep.subr.mxu0 0.0
        %1484 = vmatpush1.msra.mxu0 0.0
        %1485 = vmatprep.subr.mxu0 0.0
        %1486 = vmatpush1.msra.mxu0 0.0
        %1487 = vmatprep.subr.mxu0 0.0
        %1488 = vmatpush1.msra.mxu0 0.0
        %1489 = vmatprep.subr.mxu0 0.0
        %1490 = vmatpush1.msra.mxu0 0.0
        %1491 = vmatprep.subr.mxu0 0.0
        %1492 = vmatpush1.msra.mxu0 0.0
        %1493 = vmatprep.subr.mxu0 0.0
        %1494 = vmatpush1.msra.mxu0 0.0
        %1495 = vmatprep.subr.mxu0 0.0
        %1496 = vmatpush1.msra.mxu0 0.0
        %1497 = vmatprep.mubr.f32.mxu0 0.0
        %1498 = vmatmul.mubr.f32.gmra.mrb[0].mxu0 %v1431
        %v1499 = vpop.f32.mrb[0].mxu0
        %v1500 = vadd.f32 0.0, %v1499
        %v1501 = vpop.f32.mrb[0].mxu0
        %1502 = vdwg.mxu0
        %1503 = vrot.lane.b32.xlu0 %v913, 56
        %v1504 = vpop.permute.xlu0 %1503
        %v1507 = vsel %vm921, %v1426, 0
        %1509 = vmatprep.subr.mxu0 0.0
        %1510 = vmatpush1.msra.mxu0 %v1504
        %1511 = vmatprep.subr.mxu0 0.0
        %1512 = vmatpush1.msra.mxu0 0.0
        %1513 = vmatprep.subr.mxu0 0.0
        %1514 = vmatpush1.msra.mxu0 0.0
        %1515 = vmatprep.subr.mxu0 0.0
        %1516 = vmatpush1.msra.mxu0 0.0
        %1517 = vmatprep.subr.mxu0 0.0
        %1518 = vmatpush1.msra.mxu0 0.0
        %1519 = vmatprep.subr.mxu0 0.0
        %1520 = vmatpush1.msra.mxu0 0.0
        %1521 = vmatprep.subr.mxu0 0.0
        %1522 = vmatpush1.msra.mxu0 0.0
        %1523 = vmatprep.subr.mxu0 0.0
        %1524 = vmatpush1.msra.mxu0 0.0
        %1525 = vmatprep.subr.mxu0 0.0
        %1526 = vmatpush1.msra.mxu0 0.0
        %1527 = vmatprep.subr.mxu0 0.0
        %1528 = vmatpush1.msra.mxu0 0.0
        %1529 = vmatprep.subr.mxu0 0.0
        %1530 = vmatpush1.msra.mxu0 0.0
        %1531 = vmatprep.subr.mxu0 0.0
        %1532 = vmatpush1.msra.mxu0 0.0
        %1533 = vmatprep.subr.mxu0 0.0
        %1534 = vmatpush1.msra.mxu0 0.0
        %1535 = vmatprep.subr.mxu0 0.0
        %1536 = vmatpush1.msra.mxu0 0.0
        %1537 = vmatprep.subr.mxu0 0.0
        %1538 = vmatpush1.msra.mxu0 0.0
        %1539 = vmatprep.subr.mxu0 0.0
        %1540 = vmatpush1.msra.mxu0 0.0
        %1541 = vmatprep.subr.mxu0 0.0
        %1542 = vmatpush1.msra.mxu0 0.0
        %1543 = vmatprep.subr.mxu0 0.0
        %1544 = vmatpush1.msra.mxu0 0.0
        %1545 = vmatprep.subr.mxu0 0.0
        %1546 = vmatpush1.msra.mxu0 0.0
        %1547 = vmatprep.subr.mxu0 0.0
        %1548 = vmatpush1.msra.mxu0 0.0
        %1549 = vmatprep.subr.mxu0 0.0
        %1550 = vmatpush1.msra.mxu0 0.0
        %1551 = vmatprep.subr.mxu0 0.0
        %1552 = vmatpush1.msra.mxu0 0.0
        %1553 = vmatprep.subr.mxu0 0.0
        %1554 = vmatpush1.msra.mxu0 0.0
        %1555 = vmatprep.subr.mxu0 0.0
        %1556 = vmatpush1.msra.mxu0 0.0
        %1557 = vmatprep.subr.mxu0 0.0
        %1558 = vmatpush1.msra.mxu0 0.0
        %1559 = vmatprep.subr.mxu0 0.0
        %1560 = vmatpush1.msra.mxu0 0.0
        %1561 = vmatprep.subr.mxu0 0.0
        %1562 = vmatpush1.msra.mxu0 0.0
        %1563 = vmatprep.subr.mxu0 0.0
        %1564 = vmatpush1.msra.mxu0 0.0
        %1565 = vmatprep.subr.mxu0 0.0
        %1566 = vmatpush1.msra.mxu0 0.0
        %1567 = vmatprep.subr.mxu0 0.0
        %1568 = vmatpush1.msra.mxu0 0.0
        %1569 = vmatprep.subr.mxu0 0.0
        %1570 = vmatpush1.msra.mxu0 0.0
        %1571 = vmatprep.subr.mxu0 0.0
        %1572 = vmatpush1.msra.mxu0 0.0
        %1573 = vmatprep.mubr.f32.mxu0 0.0
        %1574 = vmatmul.mubr.f32.gmra.mrb[0].mxu0 %v1507
        %v1575 = vpop.f32.mrb[0].mxu0
        %v1576 = vadd.f32 0.0, %v1575
        %v1577 = vpop.f32.mrb[0].mxu0
        %1578 = vdwg.mxu0
        %v1580 = vsel %vm921, %v1500, 0
        %v1583 = vsel %vm921, %v1576, 0
        %1585 = vmatprep.subr.mxu0 0.0
        %1586 = vmatpush1.msra.mxu0 %v825
        %1587 = vmatprep.subr.mxu0 0.0
        %1588 = vmatpush1.msra.mxu0 0.0
        %1589 = vmatprep.subr.mxu0 0.0
        %1590 = vmatpush1.msra.mxu0 0.0
        %1591 = vmatprep.subr.mxu0 0.0
        %1592 = vmatpush1.msra.mxu0 0.0
        %1593 = vmatprep.subr.mxu0 0.0
        %1594 = vmatpush1.msra.mxu0 0.0
        %1595 = vmatprep.subr.mxu0 0.0
        %1596 = vmatpush1.msra.mxu0 0.0
        %1597 = vmatprep.subr.mxu0 0.0
        %1598 = vmatpush1.msra.mxu0 0.0
        %1599 = vmatprep.subr.mxu0 0.0
        %1600 = vmatpush1.msra.mxu0 0.0
        %1601 = vmatprep.subr.mxu0 0.0
        %1602 = vmatpush1.msra.mxu0 0.0
        %1603 = vmatprep.subr.mxu0 0.0
        %1604 = vmatpush1.msra.mxu0 0.0
        %1605 = vmatprep.subr.mxu0 0.0
        %1606 = vmatpush1.msra.mxu0 0.0
        %1607 = vmatprep.subr.mxu0 0.0
        %1608 = vmatpush1.msra.mxu0 0.0
        %1609 = vmatprep.subr.mxu0 0.0
        %1610 = vmatpush1.msra.mxu0 0.0
        %1611 = vmatprep.subr.mxu0 0.0
        %1612 = vmatpush1.msra.mxu0 0.0
        %1613 = vmatprep.subr.mxu0 0.0
        %1614 = vmatpush1.msra.mxu0 0.0
        %1615 = vmatprep.subr.mxu0 0.0
        %1616 = vmatpush1.msra.mxu0 0.0
        %1617 = vmatprep.subr.mxu0 0.0
        %1618 = vmatpush1.msra.mxu0 0.0
        %1619 = vmatprep.subr.mxu0 0.0
        %1620 = vmatpush1.msra.mxu0 0.0
        %1621 = vmatprep.subr.mxu0 0.0
        %1622 = vmatpush1.msra.mxu0 0.0
        %1623 = vmatprep.subr.mxu0 0.0
        %1624 = vmatpush1.msra.mxu0 0.0
        %1625 = vmatprep.subr.mxu0 0.0
        %1626 = vmatpush1.msra.mxu0 0.0
        %1627 = vmatprep.subr.mxu0 0.0
        %1628 = vmatpush1.msra.mxu0 0.0
        %1629 = vmatprep.subr.mxu0 0.0
        %1630 = vmatpush1.msra.mxu0 0.0
        %1631 = vmatprep.subr.mxu0 0.0
        %1632 = vmatpush1.msra.mxu0 0.0
        %1633 = vmatprep.subr.mxu0 0.0
        %1634 = vmatpush1.msra.mxu0 0.0
        %1635 = vmatprep.subr.mxu0 0.0
        %1636 = vmatpush1.msra.mxu0 0.0
        %1637 = vmatprep.subr.mxu0 0.0
        %1638 = vmatpush1.msra.mxu0 0.0
        %1639 = vmatprep.subr.mxu0 0.0
        %1640 = vmatpush1.msra.mxu0 0.0
        %1641 = vmatprep.subr.mxu0 0.0
        %1642 = vmatpush1.msra.mxu0 0.0
        %1643 = vmatprep.subr.mxu0 0.0
        %1644 = vmatpush1.msra.mxu0 0.0
        %1645 = vmatprep.subr.mxu0 0.0
        %1646 = vmatpush1.msra.mxu0 0.0
        %1647 = vmatprep.subr.mxu0 0.0
        %1648 = vmatpush1.msra.mxu0 0.0
        %1649 = vmatprep.mubr.f32.mxu0 0.0
        %1650 = vmatmul.mubr.f32.gmra.mrb[0].mxu0 %v1580
        %v1651 = vpop.f32.mrb[0].mxu0
        %v1652 = vadd.f32 0.0, %v1651
        %v1653 = vpop.f32.mrb[0].mxu0
        %1654 = vmatprep.mubr.f32.mxu0 0.0
        %1655 = vmatmul.mubr.f32.gmra.mrb[0].mxu0 %v1583
        %v1656 = vpop.f32.mrb[0].mxu0
        %v1657 = vadd.f32 0.0, %v1656
        %v1658 = vpop.f32.mrb[0].mxu0
        %1659 = vdwg.mxu0
        %v1661 = vsel %vm921, %v1170, 0
        %v1664 = vsel %vm921, %v1246, 0
        %1666 = vmatprep.subr.mxu0 0.0
        %1667 = vmatpush1.msra.mxu0 %v824
        %1668 = vmatprep.subr.mxu0 0.0
        %1669 = vmatpush1.msra.mxu0 0.0
        %1670 = vmatprep.subr.mxu0 0.0
        %1671 = vmatpush1.msra.mxu0 0.0
        %1672 = vmatprep.subr.mxu0 0.0
        %1673 = vmatpush1.msra.mxu0 0.0
        %1674 = vmatprep.subr.mxu0 0.0
        %1675 = vmatpush1.msra.mxu0 0.0
        %1676 = vmatprep.subr.mxu0 0.0
        %1677 = vmatpush1.msra.mxu0 0.0
        %1678 = vmatprep.subr.mxu0 0.0
        %1679 = vmatpush1.msra.mxu0 0.0
        %1680 = vmatprep.subr.mxu0 0.0
        %1681 = vmatpush1.msra.mxu0 0.0
        %1682 = vmatprep.subr.mxu0 0.0
        %1683 = vmatpush1.msra.mxu0 0.0
        %1684 = vmatprep.subr.mxu0 0.0
        %1685 = vmatpush1.msra.mxu0 0.0
        %1686 = vmatprep.subr.mxu0 0.0
        %1687 = vmatpush1.msra.mxu0 0.0
        %1688 = vmatprep.subr.mxu0 0.0
        %1689 = vmatpush1.msra.mxu0 0.0
        %1690 = vmatprep.subr.mxu0 0.0
        %1691 = vmatpush1.msra.mxu0 0.0
        %1692 = vmatprep.subr.mxu0 0.0
        %1693 = vmatpush1.msra.mxu0 0.0
        %1694 = vmatprep.subr.mxu0 0.0
        %1695 = vmatpush1.msra.mxu0 0.0
        %1696 = vmatprep.subr.mxu0 0.0
        %1697 = vmatpush1.msra.mxu0 0.0
        %1698 = vmatprep.subr.mxu0 0.0
        %1699 = vmatpush1.msra.mxu0 0.0
        %1700 = vmatprep.subr.mxu0 0.0
        %1701 = vmatpush1.msra.mxu0 0.0
        %1702 = vmatprep.subr.mxu0 0.0
        %1703 = vmatpush1.msra.mxu0 0.0
        %1704 = vmatprep.subr.mxu0 0.0
        %1705 = vmatpush1.msra.mxu0 0.0
        %1706 = vmatprep.subr.mxu0 0.0
        %1707 = vmatpush1.msra.mxu0 0.0
        %1708 = vmatprep.subr.mxu0 0.0
        %1709 = vmatpush1.msra.mxu0 0.0
        %1710 = vmatprep.subr.mxu0 0.0
        %1711 = vmatpush1.msra.mxu0 0.0
        %1712 = vmatprep.subr.mxu0 0.0
        %1713 = vmatpush1.msra.mxu0 0.0
        %1714 = vmatprep.subr.mxu0 0.0
        %1715 = vmatpush1.msra.mxu0 0.0
        %1716 = vmatprep.subr.mxu0 0.0
        %1717 = vmatpush1.msra.mxu0 0.0
        %1718 = vmatprep.subr.mxu0 0.0
        %1719 = vmatpush1.msra.mxu0 0.0
        %1720 = vmatprep.subr.mxu0 0.0
        %1721 = vmatpush1.msra.mxu0 0.0
        %1722 = vmatprep.subr.mxu0 0.0
        %1723 = vmatpush1.msra.mxu0 0.0
        %1724 = vmatprep.subr.mxu0 0.0
        %1725 = vmatpush1.msra.mxu0 0.0
        %1726 = vmatprep.subr.mxu0 0.0
        %1727 = vmatpush1.msra.mxu0 0.0
        %1728 = vmatprep.subr.mxu0 0.0
        %1729 = vmatpush1.msra.mxu0 0.0
        %1730 = vmatprep.mubr.f32.mxu0 0.0
        %1731 = vmatmul.mubr.f32.gmra.mrb[0].mxu0 %v1661
        %v1732 = vpop.f32.mrb[0].mxu0
        %v1733 = vadd.f32 %v1652, %v1732
        %v1734 = vpop.f32.mrb[0].mxu0
        %1735 = vmatprep.mubr.f32.mxu0 0.0
        %1736 = vmatmul.mubr.f32.gmra.mrb[0].mxu0 %v1664
        %v1737 = vpop.f32.mrb[0].mxu0
        %v1738 = vadd.f32 %v1657, %v1737
        %v1739 = vpop.f32.mrb[0].mxu0
        %1740 = vdwg.mxu0
        %1741 = vrot.lane.b32.xlu0 %v916, 112
        %v1742 = vpop.permute.xlu0 %1741
        %1743 = vrot.lane.b32.xlu0 %v908, 80
        %v1744 = vpop.permute.xlu0 %1743
        %v1745 = vsel %vm921, %v1742, 0
        %v1747 = vsel %vm921, %v1744, 0
        %1749 = vmatprep.subr.mxu0 0.0
        %1750 = vmatpush1.xpose.msra.mxu0 %v1747
        %1751 = vmatprep.subr.mxu0 0.0
        %1752 = vmatpush1.xpose.msra.mxu0 0.0
        %1753 = vmatprep.subr.mxu0 0.0
        %1754 = vmatpush1.xpose.msra.mxu0 0.0
        %1755 = vmatprep.subr.mxu0 0.0
        %1756 = vmatpush1.xpose.msra.mxu0 0.0
        %1757 = vmatprep.subr.mxu0 0.0
        %1758 = vmatpush1.xpose.msra.mxu0 0.0
        %1759 = vmatprep.subr.mxu0 0.0
        %1760 = vmatpush1.xpose.msra.mxu0 0.0
        %1761 = vmatprep.subr.mxu0 0.0
        %1762 = vmatpush1.xpose.msra.mxu0 0.0
        %1763 = vmatprep.subr.mxu0 0.0
        %1764 = vmatpush1.xpose.msra.mxu0 0.0
        %1765 = vmatprep.subr.mxu0 0.0
        %1766 = vmatpush1.xpose.msra.mxu0 0.0
        %1767 = vmatprep.subr.mxu0 0.0
        %1768 = vmatpush1.xpose.msra.mxu0 0.0
        %1769 = vmatprep.subr.mxu0 0.0
        %1770 = vmatpush1.xpose.msra.mxu0 0.0
        %1771 = vmatprep.subr.mxu0 0.0
        %1772 = vmatpush1.xpose.msra.mxu0 0.0
        %1773 = vmatprep.subr.mxu0 0.0
        %1774 = vmatpush1.xpose.msra.mxu0 0.0
        %1775 = vmatprep.subr.mxu0 0.0
        %1776 = vmatpush1.xpose.msra.mxu0 0.0
        %1777 = vmatprep.subr.mxu0 0.0
        %1778 = vmatpush1.xpose.msra.mxu0 0.0
        %1779 = vmatprep.subr.mxu0 0.0
        %1780 = vmatpush1.xpose.msra.mxu0 0.0
        %1781 = vmatprep.subr.mxu0 0.0
        %1782 = vmatpush1.xpose.msra.mxu0 0.0
        %1783 = vmatprep.subr.mxu0 0.0
        %1784 = vmatpush1.xpose.msra.mxu0 0.0
        %1785 = vmatprep.subr.mxu0 0.0
        %1786 = vmatpush1.xpose.msra.mxu0 0.0
        %1787 = vmatprep.subr.mxu0 0.0
        %1788 = vmatpush1.xpose.msra.mxu0 0.0
        %1789 = vmatprep.subr.mxu0 0.0
        %1790 = vmatpush1.xpose.msra.mxu0 0.0
        %1791 = vmatprep.subr.mxu0 0.0
        %1792 = vmatpush1.xpose.msra.mxu0 0.0
        %1793 = vmatprep.subr.mxu0 0.0
        %1794 = vmatpush1.xpose.msra.mxu0 0.0
        %1795 = vmatprep.subr.mxu0 0.0
        %1796 = vmatpush1.xpose.msra.mxu0 0.0
        %1797 = vmatprep.subr.mxu0 0.0
        %1798 = vmatpush1.xpose.msra.mxu0 0.0
        %1799 = vmatprep.subr.mxu0 0.0
        %1800 = vmatpush1.xpose.msra.mxu0 0.0
        %1801 = vmatprep.subr.mxu0 0.0
        %1802 = vmatpush1.xpose.msra.mxu0 0.0
        %1803 = vmatprep.subr.mxu0 0.0
        %1804 = vmatpush1.xpose.msra.mxu0 0.0
        %1805 = vmatprep.subr.mxu0 0.0
        %1806 = vmatpush1.xpose.msra.mxu0 0.0
        %1807 = vmatprep.subr.mxu0 0.0
        %1808 = vmatpush1.xpose.msra.mxu0 0.0
        %1809 = vmatprep.subr.mxu0 0.0
        %1810 = vmatpush1.xpose.msra.mxu0 0.0
        %1811 = vmatprep.subr.mxu0 0.0
        %1812 = vmatpush1.xpose.msra.mxu0 0.0
        %1813 = vmatprep.mubr.f32.mxu0 0.0
        %1814 = vmatmul.mubr.f32.gmra.mrb[0].mxu0 %v1745
        %v1815 = vpop.f32.mrb[0].mxu0
        %v1816 = vadd.f32 0.0, %v1815
        %v1817 = vpop.f32.mrb[0].mxu0
        %1818 = vdwg.mxu0
        %1819 = vrot.lane.b32.xlu0 %v917, 112
        %v1820 = vpop.permute.xlu0 %1819
        %1821 = vrot.lane.b32.xlu0 %v913, 80
        %v1822 = vpop.permute.xlu0 %1821
        %v1823 = vsel %vm921, %v1820, 0
        %v1825 = vsel %vm921, %v1822, 0
        %1827 = vmatprep.subr.mxu0 0.0
        %1828 = vmatpush1.xpose.msra.mxu0 %v1825
        %1829 = vmatprep.subr.mxu0 0.0
        %1830 = vmatpush1.xpose.msra.mxu0 0.0
        %1831 = vmatprep.subr.mxu0 0.0
        %1832 = vmatpush1.xpose.msra.mxu0 0.0
        %1833 = vmatprep.subr.mxu0 0.0
        %1834 = vmatpush1.xpose.msra.mxu0 0.0
        %1835 = vmatprep.subr.mxu0 0.0
        %1836 = vmatpush1.xpose.msra.mxu0 0.0
        %1837 = vmatprep.subr.mxu0 0.0
        %1838 = vmatpush1.xpose.msra.mxu0 0.0
        %1839 = vmatprep.subr.mxu0 0.0
        %1840 = vmatpush1.xpose.msra.mxu0 0.0
        %1841 = vmatprep.subr.mxu0 0.0
        %1842 = vmatpush1.xpose.msra.mxu0 0.0
        %1843 = vmatprep.subr.mxu0 0.0
        %1844 = vmatpush1.xpose.msra.mxu0 0.0
        %1845 = vmatprep.subr.mxu0 0.0
        %1846 = vmatpush1.xpose.msra.mxu0 0.0
        %1847 = vmatprep.subr.mxu0 0.0
        %1848 = vmatpush1.xpose.msra.mxu0 0.0
        %1849 = vmatprep.subr.mxu0 0.0
        %1850 = vmatpush1.xpose.msra.mxu0 0.0
        %1851 = vmatprep.subr.mxu0 0.0
        %1852 = vmatpush1.xpose.msra.mxu0 0.0
        %1853 = vmatprep.subr.mxu0 0.0
        %1854 = vmatpush1.xpose.msra.mxu0 0.0
        %1855 = vmatprep.subr.mxu0 0.0
        %1856 = vmatpush1.xpose.msra.mxu0 0.0
        %1857 = vmatprep.subr.mxu0 0.0
        %1858 = vmatpush1.xpose.msra.mxu0 0.0
        %1859 = vmatprep.subr.mxu0 0.0
        %1860 = vmatpush1.xpose.msra.mxu0 0.0
        %1861 = vmatprep.subr.mxu0 0.0
        %1862 = vmatpush1.xpose.msra.mxu0 0.0
        %1863 = vmatprep.subr.mxu0 0.0
        %1864 = vmatpush1.xpose.msra.mxu0 0.0
        %1865 = vmatprep.subr.mxu0 0.0
        %1866 = vmatpush1.xpose.msra.mxu0 0.0
        %1867 = vmatprep.subr.mxu0 0.0
        %1868 = vmatpush1.xpose.msra.mxu0 0.0
        %1869 = vmatprep.subr.mxu0 0.0
        %1870 = vmatpush1.xpose.msra.mxu0 0.0
        %1871 = vmatprep.subr.mxu0 0.0
        %1872 = vmatpush1.xpose.msra.mxu0 0.0
        %1873 = vmatprep.subr.mxu0 0.0
        %1874 = vmatpush1.xpose.msra.mxu0 0.0
        %1875 = vmatprep.subr.mxu0 0.0
        %1876 = vmatpush1.xpose.msra.mxu0 0.0
        %1877 = vmatprep.subr.mxu0 0.0
        %1878 = vmatpush1.xpose.msra.mxu0 0.0
        %1879 = vmatprep.subr.mxu0 0.0
        %1880 = vmatpush1.xpose.msra.mxu0 0.0
        %1881 = vmatprep.subr.mxu0 0.0
        %1882 = vmatpush1.xpose.msra.mxu0 0.0
        %1883 = vmatprep.subr.mxu0 0.0
        %1884 = vmatpush1.xpose.msra.mxu0 0.0
        %1885 = vmatprep.subr.mxu0 0.0
        %1886 = vmatpush1.xpose.msra.mxu0 0.0
        %1887 = vmatprep.subr.mxu0 0.0
        %1888 = vmatpush1.xpose.msra.mxu0 0.0
        %1889 = vmatprep.subr.mxu0 0.0
        %1890 = vmatpush1.xpose.msra.mxu0 0.0
        %1891 = vmatprep.mubr.f32.mxu0 0.0
        %1892 = vmatmul.mubr.f32.gmra.mrb[0].mxu0 %v1823
        %v1893 = vpop.f32.mrb[0].mxu0
        %v1894 = vadd.f32 0.0, %v1893
        %v1895 = vpop.f32.mrb[0].mxu0
        %1896 = vdwg.mxu0
        %v1897 = vsel %vm921, %v1816, -inf
        %1898 = vmax.xlane.f32.xlu0 %v1897
        %v1899 = vpop.xlane.xlu0 %1898
        %v1900 = vsel %vm921, %v1894, -inf
        %1901 = vmax.xlane.f32.xlu0 %v1900
        %v1902 = vpop.xlane.xlu0 %1901
        %v1903 = vsub.f32 %v1816, %v1899
        %v1904 = vsub.f32 %v1894, %v1902
        %v1905 = vmul.f32 %v1903, 1.442695
        %v1906 = vpow.pop %v1905
        %v1907 = vmul.f32 %v1904, 1.442695
        %v1908 = vpow.pop %v1907
        %v1909 = vsel %vm921, %v1906, 0.0
        %1910 = vadd.xlane.f32.xlu0 %v1909
        %v1911 = vpop.xlane.xlu0 %1910
        %v1912 = vsel %vm921, %v1908, 0.0
        %1913 = vadd.xlane.f32.xlu0 %v1912
        %v1914 = vpop.xlane.xlu0 %1913
        %v1915 = vrcp.pop %v1911
        %v1916 = vrcp.pop %v1914
        %v1917 = vmul.f32 %v1906, %v1915
        %v1918 = vmul.f32 %v1908, %v1916
        %1919 = vrot.lane.b32.xlu0 %v908, 48
        %v1920 = vpop.permute.xlu0 %1919
        %v1923 = vsel %vm921, %v1917, 0
        %1925 = vmatprep.subr.mxu0 0.0
        %1926 = vmatpush1.msra.mxu0 %v1920
        %1927 = vmatprep.subr.mxu0 0.0
        %1928 = vmatpush1.msra.mxu0 0.0
        %1929 = vmatprep.subr.mxu0 0.0
        %1930 = vmatpush1.msra.mxu0 0.0
        %1931 = vmatprep.subr.mxu0 0.0
        %1932 = vmatpush1.msra.mxu0 0.0
        %1933 = vmatprep.subr.mxu0 0.0
        %1934 = vmatpush1.msra.mxu0 0.0
        %1935 = vmatprep.subr.mxu0 0.0
        %1936 = vmatpush1.msra.mxu0 0.0
        %1937 = vmatprep.subr.mxu0 0.0
        %1938 = vmatpush1.msra.mxu0 0.0
        %1939 = vmatprep.subr.mxu0 0.0
        %1940 = vmatpush1.msra.mxu0 0.0
        %1941 = vmatprep.subr.mxu0 0.0
        %1942 = vmatpush1.msra.mxu0 0.0
        %1943 = vmatprep.subr.mxu0 0.0
        %1944 = vmatpush1.msra.mxu0 0.0
        %1945 = vmatprep.subr.mxu0 0.0
        %1946 = vmatpush1.msra.mxu0 0.0
        %1947 = vmatprep.subr.mxu0 0.0
        %1948 = vmatpush1.msra.mxu0 0.0
        %1949 = vmatprep.subr.mxu0 0.0
        %1950 = vmatpush1.msra.mxu0 0.0
        %1951 = vmatprep.subr.mxu0 0.0
        %1952 = vmatpush1.msra.mxu0 0.0
        %1953 = vmatprep.subr.mxu0 0.0
        %1954 = vmatpush1.msra.mxu0 0.0
        %1955 = vmatprep.subr.mxu0 0.0
        %1956 = vmatpush1.msra.mxu0 0.0
        %1957 = vmatprep.subr.mxu0 0.0
        %1958 = vmatpush1.msra.mxu0 0.0
        %1959 = vmatprep.subr.mxu0 0.0
        %1960 = vmatpush1.msra.mxu0 0.0
        %1961 = vmatprep.subr.mxu0 0.0
        %1962 = vmatpush1.msra.mxu0 0.0
        %1963 = vmatprep.subr.mxu0 0.0
        %1964 = vmatpush1.msra.mxu0 0.0
        %1965 = vmatprep.subr.mxu0 0.0
        %1966 = vmatpush1.msra.mxu0 0.0
        %1967 = vmatprep.subr.mxu0 0.0
        %1968 = vmatpush1.msra.mxu0 0.0
        %1969 = vmatprep.subr.mxu0 0.0
        %1970 = vmatpush1.msra.mxu0 0.0
        %1971 = vmatprep.subr.mxu0 0.0
        %1972 = vmatpush1.msra.mxu0 0.0
        %1973 = vmatprep.subr.mxu0 0.0
        %1974 = vmatpush1.msra.mxu0 0.0
        %1975 = vmatprep.subr.mxu0 0.0
        %1976 = vmatpush1.msra.mxu0 0.0
        %1977 = vmatprep.subr.mxu0 0.0
        %1978 = vmatpush1.msra.mxu0 0.0
        %1979 = vmatprep.subr.mxu0 0.0
        %1980 = vmatpush1.msra.mxu0 0.0
        %1981 = vmatprep.subr.mxu0 0.0
        %1982 = vmatpush1.msra.mxu0 0.0
        %1983 = vmatprep.subr.mxu0 0.0
        %1984 = vmatpush1.msra.mxu0 0.0
        %1985 = vmatprep.subr.mxu0 0.0
        %1986 = vmatpush1.msra.mxu0 0.0
        %1987 = vmatprep.subr.mxu0 0.0
        %1988 = vmatpush1.msra.mxu0 0.0
        %1989 = vmatprep.mubr.f32.mxu0 0.0
        %1990 = vmatmul.mubr.f32.gmra.mrb[0].mxu0 %v1923
        %v1991 = vpop.f32.mrb[0].mxu0
        %v1992 = vadd.f32 0.0, %v1991
        %v1993 = vpop.f32.mrb[0].mxu0
        %1994 = vdwg.mxu0
        %1995 = vrot.lane.b32.xlu0 %v913, 48
        %v1996 = vpop.permute.xlu0 %1995
        %v1999 = vsel %vm921, %v1918, 0
        %2001 = vmatprep.subr.mxu0 0.0
        %2002 = vmatpush1.msra.mxu0 %v1996
        %2003 = vmatprep.subr.mxu0 0.0
        %2004 = vmatpush1.msra.mxu0 0.0
        %2005 = vmatprep.subr.mxu0 0.0
        %2006 = vmatpush1.msra.mxu0 0.0
        %2007 = vmatprep.subr.mxu0 0.0
        %2008 = vmatpush1.msra.mxu0 0.0
        %2009 = vmatprep.subr.mxu0 0.0
        %2010 = vmatpush1.msra.mxu0 0.0
        %2011 = vmatprep.subr.mxu0 0.0
        %2012 = vmatpush1.msra.mxu0 0.0
        %2013 = vmatprep.subr.mxu0 0.0
        %2014 = vmatpush1.msra.mxu0 0.0
        %2015 = vmatprep.subr.mxu0 0.0
        %2016 = vmatpush1.msra.mxu0 0.0
        %2017 = vmatprep.subr.mxu0 0.0
        %2018 = vmatpush1.msra.mxu0 0.0
        %2019 = vmatprep.subr.mxu0 0.0
        %2020 = vmatpush1.msra.mxu0 0.0
        %2021 = vmatprep.subr.mxu0 0.0
        %2022 = vmatpush1.msra.mxu0 0.0
        %2023 = vmatprep.subr.mxu0 0.0
        %2024 = vmatpush1.msra.mxu0 0.0
        %2025 = vmatprep.subr.mxu0 0.0
        %2026 = vmatpush1.msra.mxu0 0.0
        %2027 = vmatprep.subr.mxu0 0.0
        %2028 = vmatpush1.msra.mxu0 0.0
        %2029 = vmatprep.subr.mxu0 0.0
        %2030 = vmatpush1.msra.mxu0 0.0
        %2031 = vmatprep.subr.mxu0 0.0
        %2032 = vmatpush1.msra.mxu0 0.0
        %2033 = vmatprep.subr.mxu0 0.0
        %2034 = vmatpush1.msra.mxu0 0.0
        %2035 = vmatprep.subr.mxu0 0.0
        %2036 = vmatpush1.msra.mxu0 0.0
        %2037 = vmatprep.subr.mxu0 0.0
        %2038 = vmatpush1.msra.mxu0 0.0
        %2039 = vmatprep.subr.mxu0 0.0
        %2040 = vmatpush1.msra.mxu0 0.0
        %2041 = vmatprep.subr.mxu0 0.0
        %2042 = vmatpush1.msra.mxu0 0.0
        %2043 = vmatprep.subr.mxu0 0.0
        %2044 = vmatpush1.msra.mxu0 0.0
        %2045 = vmatprep.subr.mxu0 0.0
        %2046 = vmatpush1.msra.mxu0 0.0
        %2047 = vmatprep.subr.mxu0 0.0
        %2048 = vmatpush1.msra.mxu0 0.0
        %2049 = vmatprep.subr.mxu0 0.0
        %2050 = vmatpush1.msra.mxu0 0.0
        %2051 = vmatprep.subr.mxu0 0.0
        %2052 = vmatpush1.msra.mxu0 0.0
        %2053 = vmatprep.subr.mxu0 0.0
        %2054 = vmatpush1.msra.mxu0 0.0
        %2055 = vmatprep.subr.mxu0 0.0
        %2056 = vmatpush1.msra.mxu0 0.0
        %2057 = vmatprep.subr.mxu0 0.0
        %2058 = vmatpush1.msra.mxu0 0.0
        %2059 = vmatprep.subr.mxu0 0.0
        %2060 = vmatpush1.msra.mxu0 0.0
        %2061 = vmatprep.subr.mxu0 0.0
        %2062 = vmatpush1.msra.mxu0 0.0
        %2063 = vmatprep.subr.mxu0 0.0
        %2064 = vmatpush1.msra.mxu0 0.0
        %2065 = vmatprep.mubr.f32.mxu0 0.0
        %2066 = vmatmul.mubr.f32.gmra.mrb[0].mxu0 %v1999
        %v2067 = vpop.f32.mrb[0].mxu0
        %v2068 = vadd.f32 0.0, %v2067
        %v2069 = vpop.f32.mrb[0].mxu0
        %2070 = vdwg.mxu0
        %v2072 = vsel %vm921, %v1992, 0
        %v2075 = vsel %vm921, %v2068, 0
        %2077 = vmatprep.subr.mxu0 0.0
        %2078 = vmatpush1.msra.mxu0 %v826
        %2079 = vmatprep.subr.mxu0 0.0
        %2080 = vmatpush1.msra.mxu0 0.0
        %2081 = vmatprep.subr.mxu0 0.0
        %2082 = vmatpush1.msra.mxu0 0.0
        %2083 = vmatprep.subr.mxu0 0.0
        %2084 = vmatpush1.msra.mxu0 0.0
        %2085 = vmatprep.subr.mxu0 0.0
        %2086 = vmatpush1.msra.mxu0 0.0
        %2087 = vmatprep.subr.mxu0 0.0
        %2088 = vmatpush1.msra.mxu0 0.0
        %2089 = vmatprep.subr.mxu0 0.0
        %2090 = vmatpush1.msra.mxu0 0.0
        %2091 = vmatprep.subr.mxu0 0.0
        %2092 = vmatpush1.msra.mxu0 0.0
        %2093 = vmatprep.subr.mxu0 0.0
        %2094 = vmatpush1.msra.mxu0 0.0
        %2095 = vmatprep.subr.mxu0 0.0
        %2096 = vmatpush1.msra.mxu0 0.0
        %2097 = vmatprep.subr.mxu0 0.0
        %2098 = vmatpush1.msra.mxu0 0.0
        %2099 = vmatprep.subr.mxu0 0.0
        %2100 = vmatpush1.msra.mxu0 0.0
        %2101 = vmatprep.subr.mxu0 0.0
        %2102 = vmatpush1.msra.mxu0 0.0
        %2103 = vmatprep.subr.mxu0 0.0
        %2104 = vmatpush1.msra.mxu0 0.0
        %2105 = vmatprep.subr.mxu0 0.0
        %2106 = vmatpush1.msra.mxu0 0.0
        %2107 = vmatprep.subr.mxu0 0.0
        %2108 = vmatpush1.msra.mxu0 0.0
        %2109 = vmatprep.subr.mxu0 0.0
        %2110 = vmatpush1.msra.mxu0 0.0
        %2111 = vmatprep.subr.mxu0 0.0
        %2112 = vmatpush1.msra.mxu0 0.0
        %2113 = vmatprep.subr.mxu0 0.0
        %2114 = vmatpush1.msra.mxu0 0.0
        %2115 = vmatprep.subr.mxu0 0.0
        %2116 = vmatpush1.msra.mxu0 0.0
        %2117 = vmatprep.subr.mxu0 0.0
        %2118 = vmatpush1.msra.mxu0 0.0
        %2119 = vmatprep.subr.mxu0 0.0
        %2120 = vmatpush1.msra.mxu0 0.0
        %2121 = vmatprep.subr.mxu0 0.0
        %2122 = vmatpush1.msra.mxu0 0.0
        %2123 = vmatprep.subr.mxu0 0.0
        %2124 = vmatpush1.msra.mxu0 0.0
        %2125 = vmatprep.subr.mxu0 0.0
        %2126 = vmatpush1.msra.mxu0 0.0
        %2127 = vmatprep.subr.mxu0 0.0
        %2128 = vmatpush1.msra.mxu0 0.0
        %2129 = vmatprep.subr.mxu0 0.0
        %2130 = vmatpush1.msra.mxu0 0.0
        %2131 = vmatprep.subr.mxu0 0.0
        %2132 = vmatpush1.msra.mxu0 0.0
        %2133 = vmatprep.subr.mxu0 0.0
        %2134 = vmatpush1.msra.mxu0 0.0
        %2135 = vmatprep.subr.mxu0 0.0
        %2136 = vmatpush1.msra.mxu0 0.0
        %2137 = vmatprep.subr.mxu0 0.0
        %2138 = vmatpush1.msra.mxu0 0.0
        %2139 = vmatprep.subr.mxu0 0.0
        %2140 = vmatpush1.msra.mxu0 0.0
        %2141 = vmatprep.mubr.f32.mxu0 0.0
        %2142 = vmatmul.mubr.f32.gmra.mrb[0].mxu0 %v2072
        %v2143 = vpop.f32.mrb[0].mxu0
        %v2144 = vadd.f32 0.0, %v2143
        %v2145 = vpop.f32.mrb[0].mxu0
        %2146 = vmatprep.mubr.f32.mxu0 0.0
        %2147 = vmatmul.mubr.f32.gmra.mrb[0].mxu0 %v2075
        %v2148 = vpop.f32.mrb[0].mxu0
        %v2149 = vadd.f32 0.0, %v2148
        %v2150 = vpop.f32.mrb[0].mxu0
        %2151 = vdwg.mxu0
        %v2152 = vadd.f32 %v1733, %v2144
        %v2153 = vadd.f32 %v1738, %v2149
        %2154 = vrot.lane.b32.xlu0 %v916, 104
        %v2155 = vpop.permute.xlu0 %2154
        %2156 = vrot.lane.b32.xlu0 %v908, 72
        %v2157 = vpop.permute.xlu0 %2156
        %v2158 = vsel %vm921, %v2155, 0
        %v2160 = vsel %vm921, %v2157, 0
        %2162 = vmatprep.subr.mxu0 0.0
        %2163 = vmatpush1.xpose.msra.mxu0 %v2160
        %2164 = vmatprep.subr.mxu0 0.0
        %2165 = vmatpush1.xpose.msra.mxu0 0.0
        %2166 = vmatprep.subr.mxu0 0.0
        %2167 = vmatpush1.xpose.msra.mxu0 0.0
        %2168 = vmatprep.subr.mxu0 0.0
        %2169 = vmatpush1.xpose.msra.mxu0 0.0
        %2170 = vmatprep.subr.mxu0 0.0
        %2171 = vmatpush1.xpose.msra.mxu0 0.0
        %2172 = vmatprep.subr.mxu0 0.0
        %2173 = vmatpush1.xpose.msra.mxu0 0.0
        %2174 = vmatprep.subr.mxu0 0.0
        %2175 = vmatpush1.xpose.msra.mxu0 0.0
        %2176 = vmatprep.subr.mxu0 0.0
        %2177 = vmatpush1.xpose.msra.mxu0 0.0
        %2178 = vmatprep.subr.mxu0 0.0
        %2179 = vmatpush1.xpose.msra.mxu0 0.0
        %2180 = vmatprep.subr.mxu0 0.0
        %2181 = vmatpush1.xpose.msra.mxu0 0.0
        %2182 = vmatprep.subr.mxu0 0.0
        %2183 = vmatpush1.xpose.msra.mxu0 0.0
        %2184 = vmatprep.subr.mxu0 0.0
        %2185 = vmatpush1.xpose.msra.mxu0 0.0
        %2186 = vmatprep.subr.mxu0 0.0
        %2187 = vmatpush1.xpose.msra.mxu0 0.0
        %2188 = vmatprep.subr.mxu0 0.0
        %2189 = vmatpush1.xpose.msra.mxu0 0.0
        %2190 = vmatprep.subr.mxu0 0.0
        %2191 = vmatpush1.xpose.msra.mxu0 0.0
        %2192 = vmatprep.subr.mxu0 0.0
        %2193 = vmatpush1.xpose.msra.mxu0 0.0
        %2194 = vmatprep.subr.mxu0 0.0
        %2195 = vmatpush1.xpose.msra.mxu0 0.0
        %2196 = vmatprep.subr.mxu0 0.0
        %2197 = vmatpush1.xpose.msra.mxu0 0.0
        %2198 = vmatprep.subr.mxu0 0.0
        %2199 = vmatpush1.xpose.msra.mxu0 0.0
        %2200 = vmatprep.subr.mxu0 0.0
        %2201 = vmatpush1.xpose.msra.mxu0 0.0
        %2202 = vmatprep.subr.mxu0 0.0
        %2203 = vmatpush1.xpose.msra.mxu0 0.0
        %2204 = vmatprep.subr.mxu0 0.0
        %2205 = vmatpush1.xpose.msra.mxu0 0.0
        %2206 = vmatprep.subr.mxu0 0.0
        %2207 = vmatpush1.xpose.msra.mxu0 0.0
        %2208 = vmatprep.subr.mxu0 0.0
        %2209 = vmatpush1.xpose.msra.mxu0 0.0
        %2210 = vmatprep.subr.mxu0 0.0
        %2211 = vmatpush1.xpose.msra.mxu0 0.0
        %2212 = vmatprep.subr.mxu0 0.0
        %2213 = vmatpush1.xpose.msra.mxu0 0.0
        %2214 = vmatprep.subr.mxu0 0.0
        %2215 = vmatpush1.xpose.msra.mxu0 0.0
        %2216 = vmatprep.subr.mxu0 0.0
        %2217 = vmatpush1.xpose.msra.mxu0 0.0
        %2218 = vmatprep.subr.mxu0 0.0
        %2219 = vmatpush1.xpose.msra.mxu0 0.0
        %2220 = vmatprep.subr.mxu0 0.0
        %2221 = vmatpush1.xpose.msra.mxu0 0.0
        %2222 = vmatprep.subr.mxu0 0.0
        %2223 = vmatpush1.xpose.msra.mxu0 0.0
        %2224 = vmatprep.subr.mxu0 0.0
        %2225 = vmatpush1.xpose.msra.mxu0 0.0
        %2226 = vmatprep.mubr.f32.mxu0 0.0
        %2227 = vmatmul.mubr.f32.gmra.mrb[0].mxu0 %v2158
        %v2228 = vpop.f32.mrb[0].mxu0
        %v2229 = vadd.f32 0.0, %v2228
        %v2230 = vpop.f32.mrb[0].mxu0
        %2231 = vdwg.mxu0
        %2232 = vrot.lane.b32.xlu0 %v917, 104
        %v2233 = vpop.permute.xlu0 %2232
        %2234 = vrot.lane.b32.xlu0 %v913, 72
        %v2235 = vpop.permute.xlu0 %2234
        %v2236 = vsel %vm921, %v2233, 0
        %v2238 = vsel %vm921, %v2235, 0
        %2240 = vmatprep.subr.mxu0 0.0
        %2241 = vmatpush1.xpose.msra.mxu0 %v2238
        %2242 = vmatprep.subr.mxu0 0.0
        %2243 = vmatpush1.xpose.msra.mxu0 0.0
        %2244 = vmatprep.subr.mxu0 0.0
        %2245 = vmatpush1.xpose.msra.mxu0 0.0
        %2246 = vmatprep.subr.mxu0 0.0
        %2247 = vmatpush1.xpose.msra.mxu0 0.0
        %2248 = vmatprep.subr.mxu0 0.0
        %2249 = vmatpush1.xpose.msra.mxu0 0.0
        %2250 = vmatprep.subr.mxu0 0.0
        %2251 = vmatpush1.xpose.msra.mxu0 0.0
        %2252 = vmatprep.subr.mxu0 0.0
        %2253 = vmatpush1.xpose.msra.mxu0 0.0
        %2254 = vmatprep.subr.mxu0 0.0
        %2255 = vmatpush1.xpose.msra.mxu0 0.0
        %2256 = vmatprep.subr.mxu0 0.0
        %2257 = vmatpush1.xpose.msra.mxu0 0.0
        %2258 = vmatprep.subr.mxu0 0.0
        %2259 = vmatpush1.xpose.msra.mxu0 0.0
        %2260 = vmatprep.subr.mxu0 0.0
        %2261 = vmatpush1.xpose.msra.mxu0 0.0
        %2262 = vmatprep.subr.mxu0 0.0
        %2263 = vmatpush1.xpose.msra.mxu0 0.0
        %2264 = vmatprep.subr.mxu0 0.0
        %2265 = vmatpush1.xpose.msra.mxu0 0.0
        %2266 = vmatprep.subr.mxu0 0.0
        %2267 = vmatpush1.xpose.msra.mxu0 0.0
        %2268 = vmatprep.subr.mxu0 0.0
        %2269 = vmatpush1.xpose.msra.mxu0 0.0
        %2270 = vmatprep.subr.mxu0 0.0
        %2271 = vmatpush1.xpose.msra.mxu0 0.0
        %2272 = vmatprep.subr.mxu0 0.0
        %2273 = vmatpush1.xpose.msra.mxu0 0.0
        %2274 = vmatprep.subr.mxu0 0.0
        %2275 = vmatpush1.xpose.msra.mxu0 0.0
        %2276 = vmatprep.subr.mxu0 0.0
        %2277 = vmatpush1.xpose.msra.mxu0 0.0
        %2278 = vmatprep.subr.mxu0 0.0
        %2279 = vmatpush1.xpose.msra.mxu0 0.0
        %2280 = vmatprep.subr.mxu0 0.0
        %2281 = vmatpush1.xpose.msra.mxu0 0.0
        %2282 = vmatprep.subr.mxu0 0.0
        %2283 = vmatpush1.xpose.msra.mxu0 0.0
        %2284 = vmatprep.subr.mxu0 0.0
        %2285 = vmatpush1.xpose.msra.mxu0 0.0
        %2286 = vmatprep.subr.mxu0 0.0
        %2287 = vmatpush1.xpose.msra.mxu0 0.0
        %2288 = vmatprep.subr.mxu0 0.0
        %2289 = vmatpush1.xpose.msra.mxu0 0.0
        %2290 = vmatprep.subr.mxu0 0.0
        %2291 = vmatpush1.xpose.msra.mxu0 0.0
        %2292 = vmatprep.subr.mxu0 0.0
        %2293 = vmatpush1.xpose.msra.mxu0 0.0
        %2294 = vmatprep.subr.mxu0 0.0
        %2295 = vmatpush1.xpose.msra.mxu0 0.0
        %2296 = vmatprep.subr.mxu0 0.0
        %2297 = vmatpush1.xpose.msra.mxu0 0.0
        %2298 = vmatprep.subr.mxu0 0.0
        %2299 = vmatpush1.xpose.msra.mxu0 0.0
        %2300 = vmatprep.subr.mxu0 0.0
        %2301 = vmatpush1.xpose.msra.mxu0 0.0
        %2302 = vmatprep.subr.mxu0 0.0
        %2303 = vmatpush1.xpose.msra.mxu0 0.0
        %2304 = vmatprep.mubr.f32.mxu0 0.0
        %2305 = vmatmul.mubr.f32.gmra.mrb[0].mxu0 %v2236
        %v2306 = vpop.f32.mrb[0].mxu0
        %v2307 = vadd.f32 0.0, %v2306
        %v2308 = vpop.f32.mrb[0].mxu0
        %2309 = vdwg.mxu0
        %v2310 = vsel %vm921, %v2229, -inf
        %2311 = vmax.xlane.f32.xlu0 %v2310
        %v2312 = vpop.xlane.xlu0 %2311
        %v2313 = vsel %vm921, %v2307, -inf
        %2314 = vmax.xlane.f32.xlu0 %v2313
        %v2315 = vpop.xlane.xlu0 %2314
        %v2316 = vsub.f32 %v2229, %v2312
        %v2317 = vsub.f32 %v2307, %v2315
        %v2318 = vmul.f32 %v2316, 1.442695
        %v2319 = vpow.pop %v2318
        %v2320 = vmul.f32 %v2317, 1.442695
        %v2321 = vpow.pop %v2320
        %v2322 = vsel %vm921, %v2319, 0.0
        %2323 = vadd.xlane.f32.xlu0 %v2322
        %v2324 = vpop.xlane.xlu0 %2323
        %v2325 = vsel %vm921, %v2321, 0.0
        %2326 = vadd.xlane.f32.xlu0 %v2325
        %v2327 = vpop.xlane.xlu0 %2326
        %v2328 = vrcp.pop %v2324
        %v2329 = vrcp.pop %v2327
        %v2330 = vmul.f32 %v2319, %v2328
        %v2331 = vmul.f32 %v2321, %v2329
        %2332 = vrot.lane.b32.xlu0 %v908, 40
        %v2333 = vpop.permute.xlu0 %2332
        %v2336 = vsel %vm921, %v2330, 0
        %2338 = vmatprep.subr.mxu0 0.0
        %2339 = vmatpush1.msra.mxu0 %v2333
        %2340 = vmatprep.subr.mxu0 0.0
        %2341 = vmatpush1.msra.mxu0 0.0
        %2342 = vmatprep.subr.mxu0 0.0
        %2343 = vmatpush1.msra.mxu0 0.0
        %2344 = vmatprep.subr.mxu0 0.0
        %2345 = vmatpush1.msra.mxu0 0.0
        %2346 = vmatprep.subr.mxu0 0.0
        %2347 = vmatpush1.msra.mxu0 0.0
        %2348 = vmatprep.subr.mxu0 0.0
        %2349 = vmatpush1.msra.mxu0 0.0
        %2350 = vmatprep.subr.mxu0 0.0
        %2351 = vmatpush1.msra.mxu0 0.0
        %2352 = vmatprep.subr.mxu0 0.0
        %2353 = vmatpush1.msra.mxu0 0.0
        %2354 = vmatprep.subr.mxu0 0.0
        %2355 = vmatpush1.msra.mxu0 0.0
        %2356 = vmatprep.subr.mxu0 0.0
        %2357 = vmatpush1.msra.mxu0 0.0
        %2358 = vmatprep.subr.mxu0 0.0
        %2359 = vmatpush1.msra.mxu0 0.0
        %2360 = vmatprep.subr.mxu0 0.0
        %2361 = vmatpush1.msra.mxu0 0.0
        %2362 = vmatprep.subr.mxu0 0.0
        %2363 = vmatpush1.msra.mxu0 0.0
        %2364 = vmatprep.subr.mxu0 0.0
        %2365 = vmatpush1.msra.mxu0 0.0
        %2366 = vmatprep.subr.mxu0 0.0
        %2367 = vmatpush1.msra.mxu0 0.0
        %2368 = vmatprep.subr.mxu0 0.0
        %2369 = vmatpush1.msra.mxu0 0.0
        %2370 = vmatprep.subr.mxu0 0.0
        %2371 = vmatpush1.msra.mxu0 0.0
        %2372 = vmatprep.subr.mxu0 0.0
        %2373 = vmatpush1.msra.mxu0 0.0
        %2374 = vmatprep.subr.mxu0 0.0
        %2375 = vmatpush1.msra.mxu0 0.0
        %2376 = vmatprep.subr.mxu0 0.0
        %2377 = vmatpush1.msra.mxu0 0.0
        %2378 = vmatprep.subr.mxu0 0.0
        %2379 = vmatpush1.msra.mxu0 0.0
        %2380 = vmatprep.subr.mxu0 0.0
        %2381 = vmatpush1.msra.mxu0 0.0
        %2382 = vmatprep.subr.mxu0 0.0
        %2383 = vmatpush1.msra.mxu0 0.0
        %2384 = vmatprep.subr.mxu0 0.0
        %2385 = vmatpush1.msra.mxu0 0.0
        %2386 = vmatprep.subr.mxu0 0.0
        %2387 = vmatpush1.msra.mxu0 0.0
        %2388 = vmatprep.subr.mxu0 0.0
        %2389 = vmatpush1.msra.mxu0 0.0
        %2390 = vmatprep.subr.mxu0 0.0
        %2391 = vmatpush1.msra.mxu0 0.0
        %2392 = vmatprep.subr.mxu0 0.0
        %2393 = vmatpush1.msra.mxu0 0.0
        %2394 = vmatprep.subr.mxu0 0.0
        %2395 = vmatpush1.msra.mxu0 0.0
        %2396 = vmatprep.subr.mxu0 0.0
        %2397 = vmatpush1.msra.mxu0 0.0
        %2398 = vmatprep.subr.mxu0 0.0
        %2399 = vmatpush1.msra.mxu0 0.0
        %2400 = vmatprep.subr.mxu0 0.0
        %2401 = vmatpush1.msra.mxu0 0.0
        %2402 = vmatprep.mubr.f32.mxu0 0.0
        %2403 = vmatmul.mubr.f32.gmra.mrb[0].mxu0 %v2336
        %v2404 = vpop.f32.mrb[0].mxu0
        %v2405 = vadd.f32 0.0, %v2404
        %v2406 = vpop.f32.mrb[0].mxu0
        %2407 = vdwg.mxu0
        %2408 = vrot.lane.b32.xlu0 %v913, 40
        %v2409 = vpop.permute.xlu0 %2408
        %v2412 = vsel %vm921, %v2331, 0
        %2414 = vmatprep.subr.mxu0 0.0
        %2415 = vmatpush1.msra.mxu0 %v2409
        %2416 = vmatprep.subr.mxu0 0.0
        %2417 = vmatpush1.msra.mxu0 0.0
        %2418 = vmatprep.subr.mxu0 0.0
        %2419 = vmatpush1.msra.mxu0 0.0
        %2420 = vmatprep.subr.mxu0 0.0
        %2421 = vmatpush1.msra.mxu0 0.0
        %2422 = vmatprep.subr.mxu0 0.0
        %2423 = vmatpush1.msra.mxu0 0.0
        %2424 = vmatprep.subr.mxu0 0.0
        %2425 = vmatpush1.msra.mxu0 0.0
        %2426 = vmatprep.subr.mxu0 0.0
        %2427 = vmatpush1.msra.mxu0 0.0
        %2428 = vmatprep.subr.mxu0 0.0
        %2429 = vmatpush1.msra.mxu0 0.0
        %2430 = vmatprep.subr.mxu0 0.0
        %2431 = vmatpush1.msra.mxu0 0.0
        %2432 = vmatprep.subr.mxu0 0.0
        %2433 = vmatpush1.msra.mxu0 0.0
        %2434 = vmatprep.subr.mxu0 0.0
        %2435 = vmatpush1.msra.mxu0 0.0
        %2436 = vmatprep.subr.mxu0 0.0
        %2437 = vmatpush1.msra.mxu0 0.0
        %2438 = vmatprep.subr.mxu0 0.0
        %2439 = vmatpush1.msra.mxu0 0.0
        %2440 = vmatprep.subr.mxu0 0.0
        %2441 = vmatpush1.msra.mxu0 0.0
        %2442 = vmatprep.subr.mxu0 0.0
        %2443 = vmatpush1.msra.mxu0 0.0
        %2444 = vmatprep.subr.mxu0 0.0
        %2445 = vmatpush1.msra.mxu0 0.0
        %2446 = vmatprep.subr.mxu0 0.0
        %2447 = vmatpush1.msra.mxu0 0.0
        %2448 = vmatprep.subr.mxu0 0.0
        %2449 = vmatpush1.msra.mxu0 0.0
        %2450 = vmatprep.subr.mxu0 0.0
        %2451 = vmatpush1.msra.mxu0 0.0
        %2452 = vmatprep.subr.mxu0 0.0
        %2453 = vmatpush1.msra.mxu0 0.0
        %2454 = vmatprep.subr.mxu0 0.0
        %2455 = vmatpush1.msra.mxu0 0.0
        %2456 = vmatprep.subr.mxu0 0.0
        %2457 = vmatpush1.msra.mxu0 0.0
        %2458 = vmatprep.subr.mxu0 0.0
        %2459 = vmatpush1.msra.mxu0 0.0
        %2460 = vmatprep.subr.mxu0 0.0
        %2461 = vmatpush1.msra.mxu0 0.0
        %2462 = vmatprep.subr.mxu0 0.0
        %2463 = vmatpush1.msra.mxu0 0.0
        %2464 = vmatprep.subr.mxu0 0.0
        %2465 = vmatpush1.msra.mxu0 0.0
        %2466 = vmatprep.subr.mxu0 0.0
        %2467 = vmatpush1.msra.mxu0 0.0
        %2468 = vmatprep.subr.mxu0 0.0
        %2469 = vmatpush1.msra.mxu0 0.0
        %2470 = vmatprep.subr.mxu0 0.0
        %2471 = vmatpush1.msra.mxu0 0.0
        %2472 = vmatprep.subr.mxu0 0.0
        %2473 = vmatpush1.msra.mxu0 0.0
        %2474 = vmatprep.subr.mxu0 0.0
        %2475 = vmatpush1.msra.mxu0 0.0
        %2476 = vmatprep.subr.mxu0 0.0
        %2477 = vmatpush1.msra.mxu0 0.0
        %2478 = vmatprep.mubr.f32.mxu0 0.0
        %2479 = vmatmul.mubr.f32.gmra.mrb[0].mxu0 %v2412
        %v2480 = vpop.f32.mrb[0].mxu0
        %v2481 = vadd.f32 0.0, %v2480
        %v2482 = vpop.f32.mrb[0].mxu0
        %2483 = vdwg.mxu0
        %v2485 = vsel %vm921, %v2405, 0
        %v2488 = vsel %vm921, %v2481, 0
        %2490 = vmatprep.subr.mxu0 0.0
        %2491 = vmatpush1.msra.mxu0 %v827
        %2492 = vmatprep.subr.mxu0 0.0
        %2493 = vmatpush1.msra.mxu0 0.0
        %2494 = vmatprep.subr.mxu0 0.0
        %2495 = vmatpush1.msra.mxu0 0.0
        %2496 = vmatprep.subr.mxu0 0.0
        %2497 = vmatpush1.msra.mxu0 0.0
        %2498 = vmatprep.subr.mxu0 0.0
        %2499 = vmatpush1.msra.mxu0 0.0
        %2500 = vmatprep.subr.mxu0 0.0
        %2501 = vmatpush1.msra.mxu0 0.0
        %2502 = vmatprep.subr.mxu0 0.0
        %2503 = vmatpush1.msra.mxu0 0.0
        %2504 = vmatprep.subr.mxu0 0.0
        %2505 = vmatpush1.msra.mxu0 0.0
        %2506 = vmatprep.subr.mxu0 0.0
        %2507 = vmatpush1.msra.mxu0 0.0
        %2508 = vmatprep.subr.mxu0 0.0
        %2509 = vmatpush1.msra.mxu0 0.0
        %2510 = vmatprep.subr.mxu0 0.0
        %2511 = vmatpush1.msra.mxu0 0.0
        %2512 = vmatprep.subr.mxu0 0.0
        %2513 = vmatpush1.msra.mxu0 0.0
        %2514 = vmatprep.subr.mxu0 0.0
        %2515 = vmatpush1.msra.mxu0 0.0
        %2516 = vmatprep.subr.mxu0 0.0
        %2517 = vmatpush1.msra.mxu0 0.0
        %2518 = vmatprep.subr.mxu0 0.0
        %2519 = vmatpush1.msra.mxu0 0.0
        %2520 = vmatprep.subr.mxu0 0.0
        %2521 = vmatpush1.msra.mxu0 0.0
        %2522 = vmatprep.subr.mxu0 0.0
        %2523 = vmatpush1.msra.mxu0 0.0
        %2524 = vmatprep.subr.mxu0 0.0
        %2525 = vmatpush1.msra.mxu0 0.0
        %2526 = vmatprep.subr.mxu0 0.0
        %2527 = vmatpush1.msra.mxu0 0.0
        %2528 = vmatprep.subr.mxu0 0.0
        %2529 = vmatpush1.msra.mxu0 0.0
        %2530 = vmatprep.subr.mxu0 0.0
        %2531 = vmatpush1.msra.mxu0 0.0
        %2532 = vmatprep.subr.mxu0 0.0
        %2533 = vmatpush1.msra.mxu0 0.0
        %2534 = vmatprep.subr.mxu0 0.0
        %2535 = vmatpush1.msra.mxu0 0.0
        %2536 = vmatprep.subr.mxu0 0.0
        %2537 = vmatpush1.msra.mxu0 0.0
        %2538 = vmatprep.subr.mxu0 0.0
        %2539 = vmatpush1.msra.mxu0 0.0
        %2540 = vmatprep.subr.mxu0 0.0
        %2541 = vmatpush1.msra.mxu0 0.0
        %2542 = vmatprep.subr.mxu0 0.0
        %2543 = vmatpush1.msra.mxu0 0.0
        %2544 = vmatprep.subr.mxu0 0.0
        %2545 = vmatpush1.msra.mxu0 0.0
        %2546 = vmatprep.subr.mxu0 0.0
        %2547 = vmatpush1.msra.mxu0 0.0
        %2548 = vmatprep.subr.mxu0 0.0
        %2549 = vmatpush1.msra.mxu0 0.0
        %2550 = vmatprep.subr.mxu0 0.0
        %2551 = vmatpush1.msra.mxu0 0.0
        %2552 = vmatprep.subr.mxu0 0.0
        %2553 = vmatpush1.msra.mxu0 0.0
        %2554 = vmatprep.mubr.f32.mxu0 0.0
        %2555 = vmatmul.mubr.f32.gmra.mrb[0].mxu0 %v2485
        %v2556 = vpop.f32.mrb[0].mxu0
        %v2557 = vadd.f32 0.0, %v2556
        %v2558 = vpop.f32.mrb[0].mxu0
        %2559 = vmatprep.mubr.f32.mxu0 0.0
        %2560 = vmatmul.mubr.f32.gmra.mrb[0].mxu0 %v2488
        %v2561 = vpop.f32.mrb[0].mxu0
        %v2562 = vadd.f32 0.0, %v2561
        %v2563 = vpop.f32.mrb[0].mxu0
        %2564 = vdwg.mxu0
        %v2565 = vadd.f32 %v2152, %v2557
        %v2566 = vadd.f32 %v2153, %v2562
        %v2568 = vlaneseq
        %v2569 = vshrl.u32 %v2568, 7
        %v2570 = vsub.s32 0, %v2569
        %v2571 = vrot.slane %v828, %v2570
        %v2573 = vadd.f32 %v2565, %v2571
        %v2574 = vadd.f32 %v2566, %v2571
        %v2575 = vadd.f32 %v771, %v2573
        %v2576 = vadd.f32 %v772, %v2574
        %v2577 = vld [vmem:[#allocation10] sm:$0x1]
        %v2578 = vld [vmem:[#allocation11] sm:$0x1]
        %v2579 = vsel %vm775, %v2575, 0.0
        %2580 = vadd.xlane.f32.xlu0 %v2579
        %v2581 = vpop.xlane.xlu0 %2580
        %v2582 = vsel %vm775, %v2576, 0.0
        %2583 = vadd.xlane.f32.xlu0 %v2582
        %v2584 = vpop.xlane.xlu0 %2583
        %v2585 = vmul.f32 %v2581, %v782
        %v2586 = vmul.f32 %v2584, %v782
        %v2587 = vsub.f32 %v2575, %v2585
        %v2588 = vsub.f32 %v2576, %v2586
        %v2589 = vmul.f32 %v2587, %v2587
        %v2590 = vmul.f32 %v2588, %v2588
        %v2591 = vsel %vm775, %v2589, 0.0
        %2592 = vadd.xlane.f32.xlu0 %v2591
        %v2593 = vpop.xlane.xlu0 %2592
        %v2594 = vsel %vm775, %v2590, 0.0
        %2595 = vadd.xlane.f32.xlu0 %v2594
        %v2596 = vpop.xlane.xlu0 %2595
        %v2597 = vmul.f32 %v2593, %v782
        %v2598 = vmul.f32 %v2596, %v782
        %v2599 = vadd.f32 %v2597, 1e-05
        %v2600 = vadd.f32 %v2598, 1e-05
        %v2601 = vrsqrt.pop %v2599
        %v2602 = vrsqrt.pop %v2600
        %v2603 = vmul.f32 %v2587, %v2601
        %v2604 = vmul.f32 %v2588, %v2602
        %v2606 = vlaneseq
        %v2607 = vshrl.u32 %v2606, 7
        %v2608 = vsub.s32 0, %v2607
        %v2609 = vrot.slane %v2577, %v2608
        %v2611 = vmul.f32 %v2603, %v2609
        %v2612 = vmul.f32 %v2604, %v2609
        %v2614 = vlaneseq
        %v2615 = vshrl.u32 %v2614, 7
        %v2616 = vsub.s32 0, %v2615
        %v2617 = vrot.slane %v2578, %v2616
        %v2619 = vadd.f32 %v2611, %v2617
        %v2620 = vadd.f32 %v2612, %v2617
        %v2621 = vld [vmem:[%s9] sm:$0xff]
        %v2622 = vld [vmem:[%s9 + $0x8] sm:$0xff]
        %v2623 = vld [vmem:[%s9 + $0x10] sm:$0xff]
        %v2624 = vld [vmem:[%s9 + $0x18] sm:$0xff]
        %v2625 = vld [vmem:[#allocation13] sm:$0x1]
        %v2626 = vld [vmem:[#allocation14] sm:$0xff]
        %v2627 = vld [vmem:[#allocation14 + $0x8] sm:$0xff]
        %v2628 = vld [vmem:[#allocation14 + $0x10] sm:$0xff]
        %v2629 = vld [vmem:[#allocation14 + $0x18] sm:$0xff]
        %v2630 = vld [vmem:[#allocation16] sm:$0x1]
        %v2632 = vlaneseq
        %v2633 = vshrl.u32 %v2632, 7
        %v2634 = vsub.s32 0, %v2633
        %v2635 = vrot.slane %v2625, %v2634
        %v2638 = vsel %vm775, %v2619, 0
        %v2641 = vsel %vm775, %v2620, 0
        %2643 = vmatprep.subr.mxu0 0.0
        %2644 = vmatpush1.msra.mxu0 %v2621
        %2645 = vmatprep.subr.mxu0 0.0
        %2646 = vmatpush1.msra.mxu0 %v2622
        %2647 = vmatprep.subr.mxu0 0.0
        %2648 = vmatpush1.msra.mxu0 %v2623
        %2649 = vmatprep.subr.mxu0 0.0
        %2650 = vmatpush1.msra.mxu0 %v2624
        %2651 = vmatprep.subr.mxu0 0.0
        %2652 = vmatpush1.msra.mxu0 0.0
        %2653 = vmatprep.subr.mxu0 0.0
        %2654 = vmatpush1.msra.mxu0 0.0
        %2655 = vmatprep.subr.mxu0 0.0
        %2656 = vmatpush1.msra.mxu0 0.0
        %2657 = vmatprep.subr.mxu0 0.0
        %2658 = vmatpush1.msra.mxu0 0.0
        %2659 = vmatprep.subr.mxu0 0.0
        %2660 = vmatpush1.msra.mxu0 0.0
        %2661 = vmatprep.subr.mxu0 0.0
        %2662 = vmatpush1.msra.mxu0 0.0
        %2663 = vmatprep.subr.mxu0 0.0
        %2664 = vmatpush1.msra.mxu0 0.0
        %2665 = vmatprep.subr.mxu0 0.0
        %2666 = vmatpush1.msra.mxu0 0.0
        %2667 = vmatprep.subr.mxu0 0.0
        %2668 = vmatpush1.msra.mxu0 0.0
        %2669 = vmatprep.subr.mxu0 0.0
        %2670 = vmatpush1.msra.mxu0 0.0
        %2671 = vmatprep.subr.mxu0 0.0
        %2672 = vmatpush1.msra.mxu0 0.0
        %2673 = vmatprep.subr.mxu0 0.0
        %2674 = vmatpush1.msra.mxu0 0.0
        %2675 = vmatprep.subr.mxu0 0.0
        %2676 = vmatpush1.msra.mxu0 0.0
        %2677 = vmatprep.subr.mxu0 0.0
        %2678 = vmatpush1.msra.mxu0 0.0
        %2679 = vmatprep.subr.mxu0 0.0
        %2680 = vmatpush1.msra.mxu0 0.0
        %2681 = vmatprep.subr.mxu0 0.0
        %2682 = vmatpush1.msra.mxu0 0.0
        %2683 = vmatprep.subr.mxu0 0.0
        %2684 = vmatpush1.msra.mxu0 0.0
        %2685 = vmatprep.subr.mxu0 0.0
        %2686 = vmatpush1.msra.mxu0 0.0
        %2687 = vmatprep.subr.mxu0 0.0
        %2688 = vmatpush1.msra.mxu0 0.0
        %2689 = vmatprep.subr.mxu0 0.0
        %2690 = vmatpush1.msra.mxu0 0.0
        %2691 = vmatprep.subr.mxu0 0.0
        %2692 = vmatpush1.msra.mxu0 0.0
        %2693 = vmatprep.subr.mxu0 0.0
        %2694 = vmatpush1.msra.mxu0 0.0
        %2695 = vmatprep.subr.mxu0 0.0
        %2696 = vmatpush1.msra.mxu0 0.0
        %2697 = vmatprep.subr.mxu0 0.0
        %2698 = vmatpush1.msra.mxu0 0.0
        %2699 = vmatprep.subr.mxu0 0.0
        %2700 = vmatpush1.msra.mxu0 0.0
        %2701 = vmatprep.subr.mxu0 0.0
        %2702 = vmatpush1.msra.mxu0 0.0
        %2703 = vmatprep.subr.mxu0 0.0
        %2704 = vmatpush1.msra.mxu0 0.0
        %2705 = vmatprep.subr.mxu0 0.0
        %2706 = vmatpush1.msra.mxu0 0.0
        %2707 = vmatprep.mubr.f32.mxu0 0.0
        %2708 = vmatmul.mubr.f32.gmra.mrb[0].mxu0 %v2638
        %v2709 = vpop.f32.mrb[0].mxu0
        %v2710 = vadd.f32 %v2635, %v2709
        %v2711 = vpop.f32.mrb[0].mxu0
        %2712 = vmatprep.mubr.f32.mxu0 0.0
        %2713 = vmatmul.mubr.f32.gmra.mrb[0].mxu0 %v2641
        %v2714 = vpop.f32.mrb[0].mxu0
        %v2715 = vadd.f32 %v2635, %v2714
        %v2716 = vpop.f32.mrb[0].mxu0
        %2717 = vdwg.mxu0
        %v2718 = vmul.f32 %v2710, 0.35355338
        %v2719 = vmul.f32 %v2715, 0.35355338
        %2721 = vrot.lane.b32.xlu0 %v2710, 96
        %v2722 = vpop.permute.xlu0 %2721
        %v2724 = vsel %vm921, %v2718, 0
        %v2726 = vsel %vm921, %v2722, 0
        %2728 = vmatprep.subr.mxu0 0.0
        %2729 = vmatpush1.xpose.msra.mxu0 %v2726
        %2730 = vmatprep.subr.mxu0 0.0
        %2731 = vmatpush1.xpose.msra.mxu0 0.0
        %2732 = vmatprep.subr.mxu0 0.0
        %2733 = vmatpush1.xpose.msra.mxu0 0.0
        %2734 = vmatprep.subr.mxu0 0.0
        %2735 = vmatpush1.xpose.msra.mxu0 0.0
        %2736 = vmatprep.subr.mxu0 0.0
        %2737 = vmatpush1.xpose.msra.mxu0 0.0
        %2738 = vmatprep.subr.mxu0 0.0
        %2739 = vmatpush1.xpose.msra.mxu0 0.0
        %2740 = vmatprep.subr.mxu0 0.0
        %2741 = vmatpush1.xpose.msra.mxu0 0.0
        %2742 = vmatprep.subr.mxu0 0.0
        %2743 = vmatpush1.xpose.msra.mxu0 0.0
        %2744 = vmatprep.subr.mxu0 0.0
        %2745 = vmatpush1.xpose.msra.mxu0 0.0
        %2746 = vmatprep.subr.mxu0 0.0
        %2747 = vmatpush1.xpose.msra.mxu0 0.0
        %2748 = vmatprep.subr.mxu0 0.0
        %2749 = vmatpush1.xpose.msra.mxu0 0.0
        %2750 = vmatprep.subr.mxu0 0.0
        %2751 = vmatpush1.xpose.msra.mxu0 0.0
        %2752 = vmatprep.subr.mxu0 0.0
        %2753 = vmatpush1.xpose.msra.mxu0 0.0
        %2754 = vmatprep.subr.mxu0 0.0
        %2755 = vmatpush1.xpose.msra.mxu0 0.0
        %2756 = vmatprep.subr.mxu0 0.0
        %2757 = vmatpush1.xpose.msra.mxu0 0.0
        %2758 = vmatprep.subr.mxu0 0.0
        %2759 = vmatpush1.xpose.msra.mxu0 0.0
        %2760 = vmatprep.subr.mxu0 0.0
        %2761 = vmatpush1.xpose.msra.mxu0 0.0
        %2762 = vmatprep.subr.mxu0 0.0
        %2763 = vmatpush1.xpose.msra.mxu0 0.0
        %2764 = vmatprep.subr.mxu0 0.0
        %2765 = vmatpush1.xpose.msra.mxu0 0.0
        %2766 = vmatprep.subr.mxu0 0.0
        %2767 = vmatpush1.xpose.msra.mxu0 0.0
        %2768 = vmatprep.subr.mxu0 0.0
        %2769 = vmatpush1.xpose.msra.mxu0 0.0
        %2770 = vmatprep.subr.mxu0 0.0
        %2771 = vmatpush1.xpose.msra.mxu0 0.0
        %2772 = vmatprep.subr.mxu0 0.0
        %2773 = vmatpush1.xpose.msra.mxu0 0.0
        %2774 = vmatprep.subr.mxu0 0.0
        %2775 = vmatpush1.xpose.msra.mxu0 0.0
        %2776 = vmatprep.subr.mxu0 0.0
        %2777 = vmatpush1.xpose.msra.mxu0 0.0
        %2778 = vmatprep.subr.mxu0 0.0
        %2779 = vmatpush1.xpose.msra.mxu0 0.0
        %2780 = vmatprep.subr.mxu0 0.0
        %2781 = vmatpush1.xpose.msra.mxu0 0.0
        %2782 = vmatprep.subr.mxu0 0.0
        %2783 = vmatpush1.xpose.msra.mxu0 0.0
        %2784 = vmatprep.subr.mxu0 0.0
        %2785 = vmatpush1.xpose.msra.mxu0 0.0
        %2786 = vmatprep.subr.mxu0 0.0
        %2787 = vmatpush1.xpose.msra.mxu0 0.0
        %2788 = vmatprep.subr.mxu0 0.0
        %2789 = vmatpush1.xpose.msra.mxu0 0.0
        %2790 = vmatprep.subr.mxu0 0.0
        %2791 = vmatpush1.xpose.msra.mxu0 0.0
        %2792 = vmatprep.mubr.f32.mxu0 0.0
        %2793 = vmatmul.mubr.f32.gmra.mrb[0].mxu0 %v2724
        %v2794 = vpop.f32.mrb[0].mxu0
        %v2795 = vadd.f32 0.0, %v2794
        %v2796 = vpop.f32.mrb[0].mxu0
        %2797 = vdwg.mxu0
        %2799 = vrot.lane.b32.xlu0 %v2715, 96
        %v2800 = vpop.permute.xlu0 %2799
        %v2802 = vsel %vm921, %v2719, 0
        %v2804 = vsel %vm921, %v2800, 0
        %2806 = vmatprep.subr.mxu0 0.0
        %2807 = vmatpush1.xpose.msra.mxu0 %v2804
        %2808 = vmatprep.subr.mxu0 0.0
        %2809 = vmatpush1.xpose.msra.mxu0 0.0
        %2810 = vmatprep.subr.mxu0 0.0
        %2811 = vmatpush1.xpose.msra.mxu0 0.0
        %2812 = vmatprep.subr.mxu0 0.0
        %2813 = vmatpush1.xpose.msra.mxu0 0.0
        %2814 = vmatprep.subr.mxu0 0.0
        %2815 = vmatpush1.xpose.msra.mxu0 0.0
        %2816 = vmatprep.subr.mxu0 0.0
        %2817 = vmatpush1.xpose.msra.mxu0 0.0
        %2818 = vmatprep.subr.mxu0 0.0
        %2819 = vmatpush1.xpose.msra.mxu0 0.0
        %2820 = vmatprep.subr.mxu0 0.0
        %2821 = vmatpush1.xpose.msra.mxu0 0.0
        %2822 = vmatprep.subr.mxu0 0.0
        %2823 = vmatpush1.xpose.msra.mxu0 0.0
        %2824 = vmatprep.subr.mxu0 0.0
        %2825 = vmatpush1.xpose.msra.mxu0 0.0
        %2826 = vmatprep.subr.mxu0 0.0
        %2827 = vmatpush1.xpose.msra.mxu0 0.0
        %2828 = vmatprep.subr.mxu0 0.0
        %2829 = vmatpush1.xpose.msra.mxu0 0.0
        %2830 = vmatprep.subr.mxu0 0.0
        %2831 = vmatpush1.xpose.msra.mxu0 0.0
        %2832 = vmatprep.subr.mxu0 0.0
        %2833 = vmatpush1.xpose.msra.mxu0 0.0
        %2834 = vmatprep.subr.mxu0 0.0
        %2835 = vmatpush1.xpose.msra.mxu0 0.0
        %2836 = vmatprep.subr.mxu0 0.0
        %2837 = vmatpush1.xpose.msra.mxu0 0.0
        %2838 = vmatprep.subr.mxu0 0.0
        %2839 = vmatpush1.xpose.msra.mxu0 0.0
        %2840 = vmatprep.subr.mxu0 0.0
        %2841 = vmatpush1.xpose.msra.mxu0 0.0
        %2842 = vmatprep.subr.mxu0 0.0
        %2843 = vmatpush1.xpose.msra.mxu0 0.0
        %2844 = vmatprep.subr.mxu0 0.0
        %2845 = vmatpush1.xpose.msra.mxu0 0.0
        %2846 = vmatprep.subr.mxu0 0.0
        %2847 = vmatpush1.xpose.msra.mxu0 0.0
        %2848 = vmatprep.subr.mxu0 0.0
        %2849 = vmatpush1.xpose.msra.mxu0 0.0
        %2850 = vmatprep.subr.mxu0 0.0
        %2851 = vmatpush1.xpose.msra.mxu0 0.0
        %2852 = vmatprep.subr.mxu0 0.0
        %2853 = vmatpush1.xpose.msra.mxu0 0.0
        %2854 = vmatprep.subr.mxu0 0.0
        %2855 = vmatpush1.xpose.msra.mxu0 0.0
        %2856 = vmatprep.subr.mxu0 0.0
        %2857 = vmatpush1.xpose.msra.mxu0 0.0
        %2858 = vmatprep.subr.mxu0 0.0
        %2859 = vmatpush1.xpose.msra.mxu0 0.0
        %2860 = vmatprep.subr.mxu0 0.0
        %2861 = vmatpush1.xpose.msra.mxu0 0.0
        %2862 = vmatprep.subr.mxu0 0.0
        %2863 = vmatpush1.xpose.msra.mxu0 0.0
        %2864 = vmatprep.subr.mxu0 0.0
        %2865 = vmatpush1.xpose.msra.mxu0 0.0
        %2866 = vmatprep.subr.mxu0 0.0
        %2867 = vmatpush1.xpose.msra.mxu0 0.0
        %2868 = vmatprep.subr.mxu0 0.0
        %2869 = vmatpush1.xpose.msra.mxu0 0.0
        %2870 = vmatprep.mubr.f32.mxu0 0.0
        %2871 = vmatmul.mubr.f32.gmra.mrb[0].mxu0 %v2802
        %v2872 = vpop.f32.mrb[0].mxu0
        %v2873 = vadd.f32 0.0, %v2872
        %v2874 = vpop.f32.mrb[0].mxu0
        %2875 = vdwg.mxu0
        %v2876 = vsel %vm921, %v2795, -inf
        %2877 = vmax.xlane.f32.xlu0 %v2876
        %v2878 = vpop.xlane.xlu0 %2877
        %v2879 = vsel %vm921, %v2873, -inf
        %2880 = vmax.xlane.f32.xlu0 %v2879
        %v2881 = vpop.xlane.xlu0 %2880
        %v2882 = vsub.f32 %v2795, %v2878
        %v2883 = vsub.f32 %v2873, %v2881
        %v2884 = vmul.f32 %v2882, 1.442695
        %v2885 = vpow.pop %v2884
        %v2886 = vmul.f32 %v2883, 1.442695
        %v2887 = vpow.pop %v2886
        %v2888 = vsel %vm921, %v2885, 0.0
        %2889 = vadd.xlane.f32.xlu0 %v2888
        %v2890 = vpop.xlane.xlu0 %2889
        %v2891 = vsel %vm921, %v2887, 0.0
        %2892 = vadd.xlane.f32.xlu0 %v2891
        %v2893 = vpop.xlane.xlu0 %2892
        %v2894 = vrcp.pop %v2890
        %v2895 = vrcp.pop %v2893
        %v2896 = vmul.f32 %v2885, %v2894
        %v2897 = vmul.f32 %v2887, %v2895
        %2898 = vrot.lane.b32.xlu0 %v2710, 64
        %v2899 = vpop.permute.xlu0 %2898
        %v2902 = vsel %vm921, %v2896, 0
        %2904 = vmatprep.subr.mxu0 0.0
        %2905 = vmatpush1.msra.mxu0 %v2899
        %2906 = vmatprep.subr.mxu0 0.0
        %2907 = vmatpush1.msra.mxu0 0.0
        %2908 = vmatprep.subr.mxu0 0.0
        %2909 = vmatpush1.msra.mxu0 0.0
        %2910 = vmatprep.subr.mxu0 0.0
        %2911 = vmatpush1.msra.mxu0 0.0
        %2912 = vmatprep.subr.mxu0 0.0
        %2913 = vmatpush1.msra.mxu0 0.0
        %2914 = vmatprep.subr.mxu0 0.0
        %2915 = vmatpush1.msra.mxu0 0.0
        %2916 = vmatprep.subr.mxu0 0.0
        %2917 = vmatpush1.msra.mxu0 0.0
        %2918 = vmatprep.subr.mxu0 0.0
        %2919 = vmatpush1.msra.mxu0 0.0
        %2920 = vmatprep.subr.mxu0 0.0
        %2921 = vmatpush1.msra.mxu0 0.0
        %2922 = vmatprep.subr.mxu0 0.0
        %2923 = vmatpush1.msra.mxu0 0.0
        %2924 = vmatprep.subr.mxu0 0.0
        %2925 = vmatpush1.msra.mxu0 0.0
        %2926 = vmatprep.subr.mxu0 0.0
        %2927 = vmatpush1.msra.mxu0 0.0
        %2928 = vmatprep.subr.mxu0 0.0
        %2929 = vmatpush1.msra.mxu0 0.0
        %2930 = vmatprep.subr.mxu0 0.0
        %2931 = vmatpush1.msra.mxu0 0.0
        %2932 = vmatprep.subr.mxu0 0.0
        %2933 = vmatpush1.msra.mxu0 0.0
        %2934 = vmatprep.subr.mxu0 0.0
        %2935 = vmatpush1.msra.mxu0 0.0
        %2936 = vmatprep.subr.mxu0 0.0
        %2937 = vmatpush1.msra.mxu0 0.0
        %2938 = vmatprep.subr.mxu0 0.0
        %2939 = vmatpush1.msra.mxu0 0.0
        %2940 = vmatprep.subr.mxu0 0.0
        %2941 = vmatpush1.msra.mxu0 0.0
        %2942 = vmatprep.subr.mxu0 0.0
        %2943 = vmatpush1.msra.mxu0 0.0
        %2944 = vmatprep.subr.mxu0 0.0
        %2945 = vmatpush1.msra.mxu0 0.0
        %2946 = vmatprep.subr.mxu0 0.0
        %2947 = vmatpush1.msra.mxu0 0.0
        %2948 = vmatprep.subr.mxu0 0.0
        %2949 = vmatpush1.msra.mxu0 0.0
        %2950 = vmatprep.subr.mxu0 0.0
        %2951 = vmatpush1.msra.mxu0 0.0
        %2952 = vmatprep.subr.mxu0 0.0
        %2953 = vmatpush1.msra.mxu0 0.0
        %2954 = vmatprep.subr.mxu0 0.0
        %2955 = vmatpush1.msra.mxu0 0.0
        %2956 = vmatprep.subr.mxu0 0.0
        %2957 = vmatpush1.msra.mxu0 0.0
        %2958 = vmatprep.subr.mxu0 0.0
        %2959 = vmatpush1.msra.mxu0 0.0
        %2960 = vmatprep.subr.mxu0 0.0
        %2961 = vmatpush1.msra.mxu0 0.0
        %2962 = vmatprep.subr.mxu0 0.0
        %2963 = vmatpush1.msra.mxu0 0.0
        %2964 = vmatprep.subr.mxu0 0.0
        %2965 = vmatpush1.msra.mxu0 0.0
        %2966 = vmatprep.subr.mxu0 0.0
        %2967 = vmatpush1.msra.mxu0 0.0
        %2968 = vmatprep.mubr.f32.mxu0 0.0
        %2969 = vmatmul.mubr.f32.gmra.mrb[0].mxu0 %v2902
        %v2970 = vpop.f32.mrb[0].mxu0
        %v2971 = vadd.f32 0.0, %v2970
        %v2972 = vpop.f32.mrb[0].mxu0
        %2973 = vdwg.mxu0
        %2974 = vrot.lane.b32.xlu0 %v2715, 64
        %v2975 = vpop.permute.xlu0 %2974
        %v2978 = vsel %vm921, %v2897, 0
        %2980 = vmatprep.subr.mxu0 0.0
        %2981 = vmatpush1.msra.mxu0 %v2975
        %2982 = vmatprep.subr.mxu0 0.0
        %2983 = vmatpush1.msra.mxu0 0.0
        %2984 = vmatprep.subr.mxu0 0.0
        %2985 = vmatpush1.msra.mxu0 0.0
        %2986 = vmatprep.subr.mxu0 0.0
        %2987 = vmatpush1.msra.mxu0 0.0
        %2988 = vmatprep.subr.mxu0 0.0
        %2989 = vmatpush1.msra.mxu0 0.0
        %2990 = vmatprep.subr.mxu0 0.0
        %2991 = vmatpush1.msra.mxu0 0.0
        %2992 = vmatprep.subr.mxu0 0.0
        %2993 = vmatpush1.msra.mxu0 0.0
        %2994 = vmatprep.subr.mxu0 0.0
        %2995 = vmatpush1.msra.mxu0 0.0
        %2996 = vmatprep.subr.mxu0 0.0
        %2997 = vmatpush1.msra.mxu0 0.0
        %2998 = vmatprep.subr.mxu0 0.0
        %2999 = vmatpush1.msra.mxu0 0.0
        %3000 = vmatprep.subr.mxu0 0.0
        %3001 = vmatpush1.msra.mxu0 0.0
        %3002 = vmatprep.subr.mxu0 0.0
        %3003 = vmatpush1.msra.mxu0 0.0
        %3004 = vmatprep.subr.mxu0 0.0
        %3005 = vmatpush1.msra.mxu0 0.0
        %3006 = vmatprep.subr.mxu0 0.0
        %3007 = vmatpush1.msra.mxu0 0.0
        %3008 = vmatprep.subr.mxu0 0.0
        %3009 = vmatpush1.msra.mxu0 0.0
        %3010 = vmatprep.subr.mxu0 0.0
        %3011 = vmatpush1.msra.mxu0 0.0
        %3012 = vmatprep.subr.mxu0 0.0
        %3013 = vmatpush1.msra.mxu0 0.0
        %3014 = vmatprep.subr.mxu0 0.0
        %3015 = vmatpush1.msra.mxu0 0.0
        %3016 = vmatprep.subr.mxu0 0.0
        %3017 = vmatpush1.msra.mxu0 0.0
        %3018 = vmatprep.subr.mxu0 0.0
        %3019 = vmatpush1.msra.mxu0 0.0
        %3020 = vmatprep.subr.mxu0 0.0
        %3021 = vmatpush1.msra.mxu0 0.0
        %3022 = vmatprep.subr.mxu0 0.0
        %3023 = vmatpush1.msra.mxu0 0.0
        %3024 = vmatprep.subr.mxu0 0.0
        %3025 = vmatpush1.msra.mxu0 0.0
        %3026 = vmatprep.subr.mxu0 0.0
        %3027 = vmatpush1.msra.mxu0 0.0
        %3028 = vmatprep.subr.mxu0 0.0
        %3029 = vmatpush1.msra.mxu0 0.0
        %3030 = vmatprep.subr.mxu0 0.0
        %3031 = vmatpush1.msra.mxu0 0.0
        %3032 = vmatprep.subr.mxu0 0.0
        %3033 = vmatpush1.msra.mxu0 0.0
        %3034 = vmatprep.subr.mxu0 0.0
        %3035 = vmatpush1.msra.mxu0 0.0
        %3036 = vmatprep.subr.mxu0 0.0
        %3037 = vmatpush1.msra.mxu0 0.0
        %3038 = vmatprep.subr.mxu0 0.0
        %3039 = vmatpush1.msra.mxu0 0.0
        %3040 = vmatprep.subr.mxu0 0.0
        %3041 = vmatpush1.msra.mxu0 0.0
        %3042 = vmatprep.subr.mxu0 0.0
        %3043 = vmatpush1.msra.mxu0 0.0
        %3044 = vmatprep.mubr.f32.mxu0 0.0
        %3045 = vmatmul.mubr.f32.gmra.mrb[0].mxu0 %v2978
        %v3046 = vpop.f32.mrb[0].mxu0
        %v3047 = vadd.f32 0.0, %v3046
        %v3048 = vpop.f32.mrb[0].mxu0
        %3049 = vdwg.mxu0
        %3050 = vrot.lane.b32.xlu0 %v2718, 120
        %v3051 = vpop.permute.xlu0 %3050
        %3052 = vrot.lane.b32.xlu0 %v2710, 88
        %v3053 = vpop.permute.xlu0 %3052
        %v3054 = vsel %vm921, %v3051, 0
        %v3056 = vsel %vm921, %v3053, 0
        %3058 = vmatprep.subr.mxu0 0.0
        %3059 = vmatpush1.xpose.msra.mxu0 %v3056
        %3060 = vmatprep.subr.mxu0 0.0
        %3061 = vmatpush1.xpose.msra.mxu0 0.0
        %3062 = vmatprep.subr.mxu0 0.0
        %3063 = vmatpush1.xpose.msra.mxu0 0.0
        %3064 = vmatprep.subr.mxu0 0.0
        %3065 = vmatpush1.xpose.msra.mxu0 0.0
        %3066 = vmatprep.subr.mxu0 0.0
        %3067 = vmatpush1.xpose.msra.mxu0 0.0
        %3068 = vmatprep.subr.mxu0 0.0
        %3069 = vmatpush1.xpose.msra.mxu0 0.0
        %3070 = vmatprep.subr.mxu0 0.0
        %3071 = vmatpush1.xpose.msra.mxu0 0.0
        %3072 = vmatprep.subr.mxu0 0.0
        %3073 = vmatpush1.xpose.msra.mxu0 0.0
        %3074 = vmatprep.subr.mxu0 0.0
        %3075 = vmatpush1.xpose.msra.mxu0 0.0
        %3076 = vmatprep.subr.mxu0 0.0
        %3077 = vmatpush1.xpose.msra.mxu0 0.0
        %3078 = vmatprep.subr.mxu0 0.0
        %3079 = vmatpush1.xpose.msra.mxu0 0.0
        %3080 = vmatprep.subr.mxu0 0.0
        %3081 = vmatpush1.xpose.msra.mxu0 0.0
        %3082 = vmatprep.subr.mxu0 0.0
        %3083 = vmatpush1.xpose.msra.mxu0 0.0
        %3084 = vmatprep.subr.mxu0 0.0
        %3085 = vmatpush1.xpose.msra.mxu0 0.0
        %3086 = vmatprep.subr.mxu0 0.0
        %3087 = vmatpush1.xpose.msra.mxu0 0.0
        %3088 = vmatprep.subr.mxu0 0.0
        %3089 = vmatpush1.xpose.msra.mxu0 0.0
        %3090 = vmatprep.subr.mxu0 0.0
        %3091 = vmatpush1.xpose.msra.mxu0 0.0
        %3092 = vmatprep.subr.mxu0 0.0
        %3093 = vmatpush1.xpose.msra.mxu0 0.0
        %3094 = vmatprep.subr.mxu0 0.0
        %3095 = vmatpush1.xpose.msra.mxu0 0.0
        %3096 = vmatprep.subr.mxu0 0.0
        %3097 = vmatpush1.xpose.msra.mxu0 0.0
        %3098 = vmatprep.subr.mxu0 0.0
        %3099 = vmatpush1.xpose.msra.mxu0 0.0
        %3100 = vmatprep.subr.mxu0 0.0
        %3101 = vmatpush1.xpose.msra.mxu0 0.0
        %3102 = vmatprep.subr.mxu0 0.0
        %3103 = vmatpush1.xpose.msra.mxu0 0.0
        %3104 = vmatprep.subr.mxu0 0.0
        %3105 = vmatpush1.xpose.msra.mxu0 0.0
        %3106 = vmatprep.subr.mxu0 0.0
        %3107 = vmatpush1.xpose.msra.mxu0 0.0
        %3108 = vmatprep.subr.mxu0 0.0
        %3109 = vmatpush1.xpose.msra.mxu0 0.0
        %3110 = vmatprep.subr.mxu0 0.0
        %3111 = vmatpush1.xpose.msra.mxu0 0.0
        %3112 = vmatprep.subr.mxu0 0.0
        %3113 = vmatpush1.xpose.msra.mxu0 0.0
        %3114 = vmatprep.subr.mxu0 0.0
        %3115 = vmatpush1.xpose.msra.mxu0 0.0
        %3116 = vmatprep.subr.mxu0 0.0
        %3117 = vmatpush1.xpose.msra.mxu0 0.0
        %3118 = vmatprep.subr.mxu0 0.0
        %3119 = vmatpush1.xpose.msra.mxu0 0.0
        %3120 = vmatprep.subr.mxu0 0.0
        %3121 = vmatpush1.xpose.msra.mxu0 0.0
        %3122 = vmatprep.mubr.f32.mxu0 0.0
        %3123 = vmatmul.mubr.f32.gmra.mrb[0].mxu0 %v3054
        %v3124 = vpop.f32.mrb[0].mxu0
        %v3125 = vadd.f32 0.0, %v3124
        %v3126 = vpop.f32.mrb[0].mxu0
        %3127 = vdwg.mxu0
        %3128 = vrot.lane.b32.xlu0 %v2719, 120
        %v3129 = vpop.permute.xlu0 %3128
        %3130 = vrot.lane.b32.xlu0 %v2715, 88
        %v3131 = vpop.permute.xlu0 %3130
        %v3132 = vsel %vm921, %v3129, 0
        %v3134 = vsel %vm921, %v3131, 0
        %3136 = vmatprep.subr.mxu0 0.0
        %3137 = vmatpush1.xpose.msra.mxu0 %v3134
        %3138 = vmatprep.subr.mxu0 0.0
        %3139 = vmatpush1.xpose.msra.mxu0 0.0
        %3140 = vmatprep.subr.mxu0 0.0
        %3141 = vmatpush1.xpose.msra.mxu0 0.0
        %3142 = vmatprep.subr.mxu0 0.0
        %3143 = vmatpush1.xpose.msra.mxu0 0.0
        %3144 = vmatprep.subr.mxu0 0.0
        %3145 = vmatpush1.xpose.msra.mxu0 0.0
        %3146 = vmatprep.subr.mxu0 0.0
        %3147 = vmatpush1.xpose.msra.mxu0 0.0
        %3148 = vmatprep.subr.mxu0 0.0
        %3149 = vmatpush1.xpose.msra.mxu0 0.0
        %3150 = vmatprep.subr.mxu0 0.0
        %3151 = vmatpush1.xpose.msra.mxu0 0.0
        %3152 = vmatprep.subr.mxu0 0.0
        %3153 = vmatpush1.xpose.msra.mxu0 0.0
        %3154 = vmatprep.subr.mxu0 0.0
        %3155 = vmatpush1.xpose.msra.mxu0 0.0
        %3156 = vmatprep.subr.mxu0 0.0
        %3157 = vmatpush1.xpose.msra.mxu0 0.0
        %3158 = vmatprep.subr.mxu0 0.0
        %3159 = vmatpush1.xpose.msra.mxu0 0.0
        %3160 = vmatprep.subr.mxu0 0.0
        %3161 = vmatpush1.xpose.msra.mxu0 0.0
        %3162 = vmatprep.subr.mxu0 0.0
        %3163 = vmatpush1.xpose.msra.mxu0 0.0
        %3164 = vmatprep.subr.mxu0 0.0
        %3165 = vmatpush1.xpose.msra.mxu0 0.0
        %3166 = vmatprep.subr.mxu0 0.0
        %3167 = vmatpush1.xpose.msra.mxu0 0.0
        %3168 = vmatprep.subr.mxu0 0.0
        %3169 = vmatpush1.xpose.msra.mxu0 0.0
        %3170 = vmatprep.subr.mxu0 0.0
        %3171 = vmatpush1.xpose.msra.mxu0 0.0
        %3172 = vmatprep.subr.mxu0 0.0
        %3173 = vmatpush1.xpose.msra.mxu0 0.0
        %3174 = vmatprep.subr.mxu0 0.0
        %3175 = vmatpush1.xpose.msra.mxu0 0.0
        %3176 = vmatprep.subr.mxu0 0.0
        %3177 = vmatpush1.xpose.msra.mxu0 0.0
        %3178 = vmatprep.subr.mxu0 0.0
        %3179 = vmatpush1.xpose.msra.mxu0 0.0
        %3180 = vmatprep.subr.mxu0 0.0
        %3181 = vmatpush1.xpose.msra.mxu0 0.0
        %3182 = vmatprep.subr.mxu0 0.0
        %3183 = vmatpush1.xpose.msra.mxu0 0.0
        %3184 = vmatprep.subr.mxu0 0.0
        %3185 = vmatpush1.xpose.msra.mxu0 0.0
        %3186 = vmatprep.subr.mxu0 0.0
        %3187 = vmatpush1.xpose.msra.mxu0 0.0
        %3188 = vmatprep.subr.mxu0 0.0
        %3189 = vmatpush1.xpose.msra.mxu0 0.0
        %3190 = vmatprep.subr.mxu0 0.0
        %3191 = vmatpush1.xpose.msra.mxu0 0.0
        %3192 = vmatprep.subr.mxu0 0.0
        %3193 = vmatpush1.xpose.msra.mxu0 0.0
        %3194 = vmatprep.subr.mxu0 0.0
        %3195 = vmatpush1.xpose.msra.mxu0 0.0
        %3196 = vmatprep.subr.mxu0 0.0
        %3197 = vmatpush1.xpose.msra.mxu0 0.0
        %3198 = vmatprep.subr.mxu0 0.0
        %3199 = vmatpush1.xpose.msra.mxu0 0.0
        %3200 = vmatprep.mubr.f32.mxu0 0.0
        %3201 = vmatmul.mubr.f32.gmra.mrb[0].mxu0 %v3132
        %v3202 = vpop.f32.mrb[0].mxu0
        %v3203 = vadd.f32 0.0, %v3202
        %v3204 = vpop.f32.mrb[0].mxu0
        %3205 = vdwg.mxu0
        %v3206 = vsel %vm921, %v3125, -inf
        %3207 = vmax.xlane.f32.xlu0 %v3206
        %v3208 = vpop.xlane.xlu0 %3207
        %v3209 = vsel %vm921, %v3203, -inf
        %3210 = vmax.xlane.f32.xlu0 %v3209
        %v3211 = vpop.xlane.xlu0 %3210
        %v3212 = vsub.f32 %v3125, %v3208
        %v3213 = vsub.f32 %v3203, %v3211
        %v3214 = vmul.f32 %v3212, 1.442695
        %v3215 = vpow.pop %v3214
        %v3216 = vmul.f32 %v3213, 1.442695
        %v3217 = vpow.pop %v3216
        %v3218 = vsel %vm921, %v3215, 0.0
        %3219 = vadd.xlane.f32.xlu0 %v3218
        %v3220 = vpop.xlane.xlu0 %3219
        %v3221 = vsel %vm921, %v3217, 0.0
        %3222 = vadd.xlane.f32.xlu0 %v3221
        %v3223 = vpop.xlane.xlu0 %3222
        %v3224 = vrcp.pop %v3220
        %v3225 = vrcp.pop %v3223
        %v3226 = vmul.f32 %v3215, %v3224
        %v3227 = vmul.f32 %v3217, %v3225
        %3228 = vrot.lane.b32.xlu0 %v2710, 56
        %v3229 = vpop.permute.xlu0 %3228
        %v3232 = vsel %vm921, %v3226, 0
        %3234 = vmatprep.subr.mxu0 0.0
        %3235 = vmatpush1.msra.mxu0 %v3229
        %3236 = vmatprep.subr.mxu0 0.0
        %3237 = vmatpush1.msra.mxu0 0.0
        %3238 = vmatprep.subr.mxu0 0.0
        %3239 = vmatpush1.msra.mxu0 0.0
        %3240 = vmatprep.subr.mxu0 0.0
        %3241 = vmatpush1.msra.mxu0 0.0
        %3242 = vmatprep.subr.mxu0 0.0
        %3243 = vmatpush1.msra.mxu0 0.0
        %3244 = vmatprep.subr.mxu0 0.0
        %3245 = vmatpush1.msra.mxu0 0.0
        %3246 = vmatprep.subr.mxu0 0.0
        %3247 = vmatpush1.msra.mxu0 0.0
        %3248 = vmatprep.subr.mxu0 0.0
        %3249 = vmatpush1.msra.mxu0 0.0
        %3250 = vmatprep.subr.mxu0 0.0
        %3251 = vmatpush1.msra.mxu0 0.0
        %3252 = vmatprep.subr.mxu0 0.0
        %3253 = vmatpush1.msra.mxu0 0.0
        %3254 = vmatprep.subr.mxu0 0.0
        %3255 = vmatpush1.msra.mxu0 0.0
        %3256 = vmatprep.subr.mxu0 0.0
        %3257 = vmatpush1.msra.mxu0 0.0
        %3258 = vmatprep.subr.mxu0 0.0
        %3259 = vmatpush1.msra.mxu0 0.0
        %3260 = vmatprep.subr.mxu0 0.0
        %3261 = vmatpush1.msra.mxu0 0.0
        %3262 = vmatprep.subr.mxu0 0.0
        %3263 = vmatpush1.msra.mxu0 0.0
        %3264 = vmatprep.subr.mxu0 0.0
        %3265 = vmatpush1.msra.mxu0 0.0
        %3266 = vmatprep.subr.mxu0 0.0
        %3267 = vmatpush1.msra.mxu0 0.0
        %3268 = vmatprep.subr.mxu0 0.0
        %3269 = vmatpush1.msra.mxu0 0.0
        %3270 = vmatprep.subr.mxu0 0.0
        %3271 = vmatpush1.msra.mxu0 0.0
        %3272 = vmatprep.subr.mxu0 0.0
        %3273 = vmatpush1.msra.mxu0 0.0
        %3274 = vmatprep.subr.mxu0 0.0
        %3275 = vmatpush1.msra.mxu0 0.0
        %3276 = vmatprep.subr.mxu0 0.0
        %3277 = vmatpush1.msra.mxu0 0.0
        %3278 = vmatprep.subr.mxu0 0.0
        %3279 = vmatpush1.msra.mxu0 0.0
        %3280 = vmatprep.subr.mxu0 0.0
        %3281 = vmatpush1.msra.mxu0 0.0
        %3282 = vmatprep.subr.mxu0 0.0
        %3283 = vmatpush1.msra.mxu0 0.0
        %3284 = vmatprep.subr.mxu0 0.0
        %3285 = vmatpush1.msra.mxu0 0.0
        %3286 = vmatprep.subr.mxu0 0.0
        %3287 = vmatpush1.msra.mxu0 0.0
        %3288 = vmatprep.subr.mxu0 0.0
        %3289 = vmatpush1.msra.mxu0 0.0
        %3290 = vmatprep.subr.mxu0 0.0
        %3291 = vmatpush1.msra.mxu0 0.0
        %3292 = vmatprep.subr.mxu0 0.0
        %3293 = vmatpush1.msra.mxu0 0.0
        %3294 = vmatprep.subr.mxu0 0.0
        %3295 = vmatpush1.msra.mxu0 0.0
        %3296 = vmatprep.subr.mxu0 0.0
        %3297 = vmatpush1.msra.mxu0 0.0
        %3298 = vmatprep.mubr.f32.mxu0 0.0
        %3299 = vmatmul.mubr.f32.gmra.mrb[0].mxu0 %v3232
        %v3300 = vpop.f32.mrb[0].mxu0
        %v3301 = vadd.f32 0.0, %v3300
        %v3302 = vpop.f32.mrb[0].mxu0
        %3303 = vdwg.mxu0
        %3304 = vrot.lane.b32.xlu0 %v2715, 56
        %v3305 = vpop.permute.xlu0 %3304
        %v3308 = vsel %vm921, %v3227, 0
        %3310 = vmatprep.subr.mxu0 0.0
        %3311 = vmatpush1.msra.mxu0 %v3305
        %3312 = vmatprep.subr.mxu0 0.0
        %3313 = vmatpush1.msra.mxu0 0.0
        %3314 = vmatprep.subr.mxu0 0.0
        %3315 = vmatpush1.msra.mxu0 0.0
        %3316 = vmatprep.subr.mxu0 0.0
        %3317 = vmatpush1.msra.mxu0 0.0
        %3318 = vmatprep.subr.mxu0 0.0
        %3319 = vmatpush1.msra.mxu0 0.0
        %3320 = vmatprep.subr.mxu0 0.0
        %3321 = vmatpush1.msra.mxu0 0.0
        %3322 = vmatprep.subr.mxu0 0.0
        %3323 = vmatpush1.msra.mxu0 0.0
        %3324 = vmatprep.subr.mxu0 0.0
        %3325 = vmatpush1.msra.mxu0 0.0
        %3326 = vmatprep.subr.mxu0 0.0
        %3327 = vmatpush1.msra.mxu0 0.0
        %3328 = vmatprep.subr.mxu0 0.0
        %3329 = vmatpush1.msra.mxu0 0.0
        %3330 = vmatprep.subr.mxu0 0.0
        %3331 = vmatpush1.msra.mxu0 0.0
        %3332 = vmatprep.subr.mxu0 0.0
        %3333 = vmatpush1.msra.mxu0 0.0
        %3334 = vmatprep.subr.mxu0 0.0
        %3335 = vmatpush1.msra.mxu0 0.0
        %3336 = vmatprep.subr.mxu0 0.0
        %3337 = vmatpush1.msra.mxu0 0.0
        %3338 = vmatprep.subr.mxu0 0.0
        %3339 = vmatpush1.msra.mxu0 0.0
        %3340 = vmatprep.subr.mxu0 0.0
        %3341 = vmatpush1.msra.mxu0 0.0
        %3342 = vmatprep.subr.mxu0 0.0
        %3343 = vmatpush1.msra.mxu0 0.0
        %3344 = vmatprep.subr.mxu0 0.0
        %3345 = vmatpush1.msra.mxu0 0.0
        %3346 = vmatprep.subr.mxu0 0.0
        %3347 = vmatpush1.msra.mxu0 0.0
        %3348 = vmatprep.subr.mxu0 0.0
        %3349 = vmatpush1.msra.mxu0 0.0
        %3350 = vmatprep.subr.mxu0 0.0
        %3351 = vmatpush1.msra.mxu0 0.0
        %3352 = vmatprep.subr.mxu0 0.0
        %3353 = vmatpush1.msra.mxu0 0.0
        %3354 = vmatprep.subr.mxu0 0.0
        %3355 = vmatpush1.msra.mxu0 0.0
        %3356 = vmatprep.subr.mxu0 0.0
        %3357 = vmatpush1.msra.mxu0 0.0
        %3358 = vmatprep.subr.mxu0 0.0
        %3359 = vmatpush1.msra.mxu0 0.0
        %3360 = vmatprep.subr.mxu0 0.0
        %3361 = vmatpush1.msra.mxu0 0.0
        %3362 = vmatprep.subr.mxu0 0.0
        %3363 = vmatpush1.msra.mxu0 0.0
        %3364 = vmatprep.subr.mxu0 0.0
        %3365 = vmatpush1.msra.mxu0 0.0
        %3366 = vmatprep.subr.mxu0 0.0
        %3367 = vmatpush1.msra.mxu0 0.0
        %3368 = vmatprep.subr.mxu0 0.0
        %3369 = vmatpush1.msra.mxu0 0.0
        %3370 = vmatprep.subr.mxu0 0.0
        %3371 = vmatpush1.msra.mxu0 0.0
        %3372 = vmatprep.subr.mxu0 0.0
        %3373 = vmatpush1.msra.mxu0 0.0
        %3374 = vmatprep.mubr.f32.mxu0 0.0
        %3375 = vmatmul.mubr.f32.gmra.mrb[0].mxu0 %v3308
        %v3376 = vpop.f32.mrb[0].mxu0
        %v3377 = vadd.f32 0.0, %v3376
        %v3378 = vpop.f32.mrb[0].mxu0
        %3379 = vdwg.mxu0
        %v3381 = vsel %vm921, %v3301, 0
        %v3384 = vsel %vm921, %v3377, 0
        %3386 = vmatprep.subr.mxu0 0.0
        %3387 = vmatpush1.msra.mxu0 %v2627
        %3388 = vmatprep.subr.mxu0 0.0
        %3389 = vmatpush1.msra.mxu0 0.0
        %3390 = vmatprep.subr.mxu0 0.0
        %3391 = vmatpush1.msra.mxu0 0.0
        %3392 = vmatprep.subr.mxu0 0.0
        %3393 = vmatpush1.msra.mxu0 0.0
        %3394 = vmatprep.subr.mxu0 0.0
        %3395 = vmatpush1.msra.mxu0 0.0
        %3396 = vmatprep.subr.mxu0 0.0
        %3397 = vmatpush1.msra.mxu0 0.0
        %3398 = vmatprep.subr.mxu0 0.0
        %3399 = vmatpush1.msra.mxu0 0.0
        %3400 = vmatprep.subr.mxu0 0.0
        %3401 = vmatpush1.msra.mxu0 0.0
        %3402 = vmatprep.subr.mxu0 0.0
        %3403 = vmatpush1.msra.mxu0 0.0
        %3404 = vmatprep.subr.mxu0 0.0
        %3405 = vmatpush1.msra.mxu0 0.0
        %3406 = vmatprep.subr.mxu0 0.0
        %3407 = vmatpush1.msra.mxu0 0.0
        %3408 = vmatprep.subr.mxu0 0.0
        %3409 = vmatpush1.msra.mxu0 0.0
        %3410 = vmatprep.subr.mxu0 0.0
        %3411 = vmatpush1.msra.mxu0 0.0
        %3412 = vmatprep.subr.mxu0 0.0
        %3413 = vmatpush1.msra.mxu0 0.0
        %3414 = vmatprep.subr.mxu0 0.0
        %3415 = vmatpush1.msra.mxu0 0.0
        %3416 = vmatprep.subr.mxu0 0.0
        %3417 = vmatpush1.msra.mxu0 0.0
        %3418 = vmatprep.subr.mxu0 0.0
        %3419 = vmatpush1.msra.mxu0 0.0
        %3420 = vmatprep.subr.mxu0 0.0
        %3421 = vmatpush1.msra.mxu0 0.0
        %3422 = vmatprep.subr.mxu0 0.0
        %3423 = vmatpush1.msra.mxu0 0.0
        %3424 = vmatprep.subr.mxu0 0.0
        %3425 = vmatpush1.msra.mxu0 0.0
        %3426 = vmatprep.subr.mxu0 0.0
        %3427 = vmatpush1.msra.mxu0 0.0
        %3428 = vmatprep.subr.mxu0 0.0
        %3429 = vmatpush1.msra.mxu0 0.0
        %3430 = vmatprep.subr.mxu0 0.0
        %3431 = vmatpush1.msra.mxu0 0.0
        %3432 = vmatprep.subr.mxu0 0.0
        %3433 = vmatpush1.msra.mxu0 0.0
        %3434 = vmatprep.subr.mxu0 0.0
        %3435 = vmatpush1.msra.mxu0 0.0
        %3436 = vmatprep.subr.mxu0 0.0
        %3437 = vmatpush1.msra.mxu0 0.0
        %3438 = vmatprep.subr.mxu0 0.0
        %3439 = vmatpush1.msra.mxu0 0.0
        %3440 = vmatprep.subr.mxu0 0.0
        %3441 = vmatpush1.msra.mxu0 0.0
        %3442 = vmatprep.subr.mxu0 0.0
        %3443 = vmatpush1.msra.mxu0 0.0
        %3444 = vmatprep.subr.mxu0 0.0
        %3445 = vmatpush1.msra.mxu0 0.0
        %3446 = vmatprep.subr.mxu0 0.0
        %3447 = vmatpush1.msra.mxu0 0.0
        %3448 = vmatprep.subr.mxu0 0.0
        %3449 = vmatpush1.msra.mxu0 0.0
        %3450 = vmatprep.mubr.f32.mxu0 0.0
        %3451 = vmatmul.mubr.f32.gmra.mrb[0].mxu0 %v3381
        %v3452 = vpop.f32.mrb[0].mxu0
        %v3453 = vadd.f32 0.0, %v3452
        %v3454 = vpop.f32.mrb[0].mxu0
        %3455 = vmatprep.mubr.f32.mxu0 0.0
        %3456 = vmatmul.mubr.f32.gmra.mrb[0].mxu0 %v3384
        %v3457 = vpop.f32.mrb[0].mxu0
        %v3458 = vadd.f32 0.0, %v3457
        %v3459 = vpop.f32.mrb[0].mxu0
        %3460 = vdwg.mxu0
        %v3462 = vsel %vm921, %v2971, 0
        %v3465 = vsel %vm921, %v3047, 0
        %3467 = vmatprep.subr.mxu0 0.0
        %3468 = vmatpush1.msra.mxu0 %v2626
        %3469 = vmatprep.subr.mxu0 0.0
        %3470 = vmatpush1.msra.mxu0 0.0
        %3471 = vmatprep.subr.mxu0 0.0
        %3472 = vmatpush1.msra.mxu0 0.0
        %3473 = vmatprep.subr.mxu0 0.0
        %3474 = vmatpush1.msra.mxu0 0.0
        %3475 = vmatprep.subr.mxu0 0.0
        %3476 = vmatpush1.msra.mxu0 0.0
        %3477 = vmatprep.subr.mxu0 0.0
        %3478 = vmatpush1.msra.mxu0 0.0
        %3479 = vmatprep.subr.mxu0 0.0
        %3480 = vmatpush1.msra.mxu0 0.0
        %3481 = vmatprep.subr.mxu0 0.0
        %3482 = vmatpush1.msra.mxu0 0.0
        %3483 = vmatprep.subr.mxu0 0.0
        %3484 = vmatpush1.msra.mxu0 0.0
        %3485 = vmatprep.subr.mxu0 0.0
        %3486 = vmatpush1.msra.mxu0 0.0
        %3487 = vmatprep.subr.mxu0 0.0
        %3488 = vmatpush1.msra.mxu0 0.0
        %3489 = vmatprep.subr.mxu0 0.0
        %3490 = vmatpush1.msra.mxu0 0.0
        %3491 = vmatprep.subr.mxu0 0.0
        %3492 = vmatpush1.msra.mxu0 0.0
        %3493 = vmatprep.subr.mxu0 0.0
        %3494 = vmatpush1.msra.mxu0 0.0
        %3495 = vmatprep.subr.mxu0 0.0
        %3496 = vmatpush1.msra.mxu0 0.0
        %3497 = vmatprep.subr.mxu0 0.0
        %3498 = vmatpush1.msra.mxu0 0.0
        %3499 = vmatprep.subr.mxu0 0.0
        %3500 = vmatpush1.msra.mxu0 0.0
        %3501 = vmatprep.subr.mxu0 0.0
        %3502 = vmatpush1.msra.mxu0 0.0
        %3503 = vmatprep.subr.mxu0 0.0
        %3504 = vmatpush1.msra.mxu0 0.0
        %3505 = vmatprep.subr.mxu0 0.0
        %3506 = vmatpush1.msra.mxu0 0.0
        %3507 = vmatprep.subr.mxu0 0.0
        %3508 = vmatpush1.msra.mxu0 0.0
        %3509 = vmatprep.subr.mxu0 0.0
        %3510 = vmatpush1.msra.mxu0 0.0
        %3511 = vmatprep.subr.mxu0 0.0
        %3512 = vmatpush1.msra.mxu0 0.0
        %3513 = vmatprep.subr.mxu0 0.0
        %3514 = vmatpush1.msra.mxu0 0.0
        %3515 = vmatprep.subr.mxu0 0.0
        %3516 = vmatpush1.msra.mxu0 0.0
        %3517 = vmatprep.subr.mxu0 0.0
        %3518 = vmatpush1.msra.mxu0 0.0
        %3519 = vmatprep.subr.mxu0 0.0
        %3520 = vmatpush1.msra.mxu0 0.0
        %3521 = vmatprep.subr.mxu0 0.0
        %3522 = vmatpush1.msra.mxu0 0.0
        %3523 = vmatprep.subr.mxu0 0.0
        %3524 = vmatpush1.msra.mxu0 0.0
        %3525 = vmatprep.subr.mxu0 0.0
        %3526 = vmatpush1.msra.mxu0 0.0
        %3527 = vmatprep.subr.mxu0 0.0
        %3528 = vmatpush1.msra.mxu0 0.0
        %3529 = vmatprep.subr.mxu0 0.0
        %3530 = vmatpush1.msra.mxu0 0.0
        %3531 = vmatprep.mubr.f32.mxu0 0.0
        %3532 = vmatmul.mubr.f32.gmra.mrb[0].mxu0 %v3462
        %v3533 = vpop.f32.mrb[0].mxu0
        %v3534 = vadd.f32 %v3453, %v3533
        %v3535 = vpop.f32.mrb[0].mxu0
        %3536 = vmatprep.mubr.f32.mxu0 0.0
        %3537 = vmatmul.mubr.f32.gmra.mrb[0].mxu0 %v3465
        %v3538 = vpop.f32.mrb[0].mxu0
        %v3539 = vadd.f32 %v3458, %v3538
        %v3540 = vpop.f32.mrb[0].mxu0
        %3541 = vdwg.mxu0
        %3542 = vrot.lane.b32.xlu0 %v2718, 112
        %v3543 = vpop.permute.xlu0 %3542
        %3544 = vrot.lane.b32.xlu0 %v2710, 80
        %v3545 = vpop.permute.xlu0 %3544
        %v3546 = vsel %vm921, %v3543, 0
        %v3548 = vsel %vm921, %v3545, 0
        %3550 = vmatprep.subr.mxu0 0.0
        %3551 = vmatpush1.xpose.msra.mxu0 %v3548
        %3552 = vmatprep.subr.mxu0 0.0
        %3553 = vmatpush1.xpose.msra.mxu0 0.0
        %3554 = vmatprep.subr.mxu0 0.0
        %3555 = vmatpush1.xpose.msra.mxu0 0.0
        %3556 = vmatprep.subr.mxu0 0.0
        %3557 = vmatpush1.xpose.msra.mxu0 0.0
        %3558 = vmatprep.subr.mxu0 0.0
        %3559 = vmatpush1.xpose.msra.mxu0 0.0
        %3560 = vmatprep.subr.mxu0 0.0
        %3561 = vmatpush1.xpose.msra.mxu0 0.0
        %3562 = vmatprep.subr.mxu0 0.0
        %3563 = vmatpush1.xpose.msra.mxu0 0.0
        %3564 = vmatprep.subr.mxu0 0.0
        %3565 = vmatpush1.xpose.msra.mxu0 0.0
        %3566 = vmatprep.subr.mxu0 0.0
        %3567 = vmatpush1.xpose.msra.mxu0 0.0
        %3568 = vmatprep.subr.mxu0 0.0
        %3569 = vmatpush1.xpose.msra.mxu0 0.0
        %3570 = vmatprep.subr.mxu0 0.0
        %3571 = vmatpush1.xpose.msra.mxu0 0.0
        %3572 = vmatprep.subr.mxu0 0.0
        %3573 = vmatpush1.xpose.msra.mxu0 0.0
        %3574 = vmatprep.subr.mxu0 0.0
        %3575 = vmatpush1.xpose.msra.mxu0 0.0
        %3576 = vmatprep.subr.mxu0 0.0
        %3577 = vmatpush1.xpose.msra.mxu0 0.0
        %3578 = vmatprep.subr.mxu0 0.0
        %3579 = vmatpush1.xpose.msra.mxu0 0.0
        %3580 = vmatprep.subr.mxu0 0.0
        %3581 = vmatpush1.xpose.msra.mxu0 0.0
        %3582 = vmatprep.subr.mxu0 0.0
        %3583 = vmatpush1.xpose.msra.mxu0 0.0
        %3584 = vmatprep.subr.mxu0 0.0
        %3585 = vmatpush1.xpose.msra.mxu0 0.0
        %3586 = vmatprep.subr.mxu0 0.0
        %3587 = vmatpush1.xpose.msra.mxu0 0.0
        %3588 = vmatprep.subr.mxu0 0.0
        %3589 = vmatpush1.xpose.msra.mxu0 0.0
        %3590 = vmatprep.subr.mxu0 0.0
        %3591 = vmatpush1.xpose.msra.mxu0 0.0
        %3592 = vmatprep.subr.mxu0 0.0
        %3593 = vmatpush1.xpose.msra.mxu0 0.0
        %3594 = vmatprep.subr.mxu0 0.0
        %3595 = vmatpush1.xpose.msra.mxu0 0.0
        %3596 = vmatprep.subr.mxu0 0.0
        %3597 = vmatpush1.xpose.msra.mxu0 0.0
        %3598 = vmatprep.subr.mxu0 0.0
        %3599 = vmatpush1.xpose.msra.mxu0 0.0
        %3600 = vmatprep.subr.mxu0 0.0
        %3601 = vmatpush1.xpose.msra.mxu0 0.0
        %3602 = vmatprep.subr.mxu0 0.0
        %3603 = vmatpush1.xpose.msra.mxu0 0.0
        %3604 = vmatprep.subr.mxu0 0.0
        %3605 = vmatpush1.xpose.msra.mxu0 0.0
        %3606 = vmatprep.subr.mxu0 0.0
        %3607 = vmatpush1.xpose.msra.mxu0 0.0
        %3608 = vmatprep.subr.mxu0 0.0
        %3609 = vmatpush1.xpose.msra.mxu0 0.0
        %3610 = vmatprep.subr.mxu0 0.0
        %3611 = vmatpush1.xpose.msra.mxu0 0.0
        %3612 = vmatprep.subr.mxu0 0.0
        %3613 = vmatpush1.xpose.msra.mxu0 0.0
        %3614 = vmatprep.mubr.f32.mxu0 0.0
        %3615 = vmatmul.mubr.f32.gmra.mrb[0].mxu0 %v3546
        %v3616 = vpop.f32.mrb[0].mxu0
        %v3617 = vadd.f32 0.0, %v3616
        %v3618 = vpop.f32.mrb[0].mxu0
        %3619 = vdwg.mxu0
        %3620 = vrot.lane.b32.xlu0 %v2719, 112
        %v3621 = vpop.permute.xlu0 %3620
        %3622 = vrot.lane.b32.xlu0 %v2715, 80
        %v3623 = vpop.permute.xlu0 %3622
        %v3624 = vsel %vm921, %v3621, 0
        %v3626 = vsel %vm921, %v3623, 0
        %3628 = vmatprep.subr.mxu0 0.0
        %3629 = vmatpush1.xpose.msra.mxu0 %v3626
        %3630 = vmatprep.subr.mxu0 0.0
        %3631 = vmatpush1.xpose.msra.mxu0 0.0
        %3632 = vmatprep.subr.mxu0 0.0
        %3633 = vmatpush1.xpose.msra.mxu0 0.0
        %3634 = vmatprep.subr.mxu0 0.0
        %3635 = vmatpush1.xpose.msra.mxu0 0.0
        %3636 = vmatprep.subr.mxu0 0.0
        %3637 = vmatpush1.xpose.msra.mxu0 0.0
        %3638 = vmatprep.subr.mxu0 0.0
        %3639 = vmatpush1.xpose.msra.mxu0 0.0
        %3640 = vmatprep.subr.mxu0 0.0
        %3641 = vmatpush1.xpose.msra.mxu0 0.0
        %3642 = vmatprep.subr.mxu0 0.0
        %3643 = vmatpush1.xpose.msra.mxu0 0.0
        %3644 = vmatprep.subr.mxu0 0.0
        %3645 = vmatpush1.xpose.msra.mxu0 0.0
        %3646 = vmatprep.subr.mxu0 0.0
        %3647 = vmatpush1.xpose.msra.mxu0 0.0
        %3648 = vmatprep.subr.mxu0 0.0
        %3649 = vmatpush1.xpose.msra.mxu0 0.0
        %3650 = vmatprep.subr.mxu0 0.0
        %3651 = vmatpush1.xpose.msra.mxu0 0.0
        %3652 = vmatprep.subr.mxu0 0.0
        %3653 = vmatpush1.xpose.msra.mxu0 0.0
        %3654 = vmatprep.subr.mxu0 0.0
        %3655 = vmatpush1.xpose.msra.mxu0 0.0
        %3656 = vmatprep.subr.mxu0 0.0
        %3657 = vmatpush1.xpose.msra.mxu0 0.0
        %3658 = vmatprep.subr.mxu0 0.0
        %3659 = vmatpush1.xpose.msra.mxu0 0.0
        %3660 = vmatprep.subr.mxu0 0.0
        %3661 = vmatpush1.xpose.msra.mxu0 0.0
        %3662 = vmatprep.subr.mxu0 0.0
        %3663 = vmatpush1.xpose.msra.mxu0 0.0
        %3664 = vmatprep.subr.mxu0 0.0
        %3665 = vmatpush1.xpose.msra.mxu0 0.0
        %3666 = vmatprep.subr.mxu0 0.0
        %3667 = vmatpush1.xpose.msra.mxu0 0.0
        %3668 = vmatprep.subr.mxu0 0.0
        %3669 = vmatpush1.xpose.msra.mxu0 0.0
        %3670 = vmatprep.subr.mxu0 0.0
        %3671 = vmatpush1.xpose.msra.mxu0 0.0
        %3672 = vmatprep.subr.mxu0 0.0
        %3673 = vmatpush1.xpose.msra.mxu0 0.0
        %3674 = vmatprep.subr.mxu0 0.0
        %3675 = vmatpush1.xpose.msra.mxu0 0.0
        %3676 = vmatprep.subr.mxu0 0.0
        %3677 = vmatpush1.xpose.msra.mxu0 0.0
        %3678 = vmatprep.subr.mxu0 0.0
        %3679 = vmatpush1.xpose.msra.mxu0 0.0
        %3680 = vmatprep.subr.mxu0 0.0
        %3681 = vmatpush1.xpose.msra.mxu0 0.0
        %3682 = vmatprep.subr.mxu0 0.0
        %3683 = vmatpush1.xpose.msra.mxu0 0.0
        %3684 = vmatprep.subr.mxu0 0.0
        %3685 = vmatpush1.xpose.msra.mxu0 0.0
        %3686 = vmatprep.subr.mxu0 0.0
        %3687 = vmatpush1.xpose.msra.mxu0 0.0
        %3688 = vmatprep.subr.mxu0 0.0
        %3689 = vmatpush1.xpose.msra.mxu0 0.0
        %3690 = vmatprep.subr.mxu0 0.0
        %3691 = vmatpush1.xpose.msra.mxu0 0.0
        %3692 = vmatprep.mubr.f32.mxu0 0.0
        %3693 = vmatmul.mubr.f32.gmra.mrb[0].mxu0 %v3624
        %v3694 = vpop.f32.mrb[0].mxu0
        %v3695 = vadd.f32 0.0, %v3694
        %v3696 = vpop.f32.mrb[0].mxu0
        %3697 = vdwg.mxu0
        %v3698 = vsel %vm921, %v3617, -inf
        %3699 = vmax.xlane.f32.xlu0 %v3698
        %v3700 = vpop.xlane.xlu0 %3699
        %v3701 = vsel %vm921, %v3695, -inf
        %3702 = vmax.xlane.f32.xlu0 %v3701
        %v3703 = vpop.xlane.xlu0 %3702
        %v3704 = vsub.f32 %v3617, %v3700
        %v3705 = vsub.f32 %v3695, %v3703
        %v3706 = vmul.f32 %v3704, 1.442695
        %v3707 = vpow.pop %v3706
        %v3708 = vmul.f32 %v3705, 1.442695
        %v3709 = vpow.pop %v3708
        %v3710 = vsel %vm921, %v3707, 0.0
        %3711 = vadd.xlane.f32.xlu0 %v3710
        %v3712 = vpop.xlane.xlu0 %3711
        %v3713 = vsel %vm921, %v3709, 0.0
        %3714 = vadd.xlane.f32.xlu0 %v3713
        %v3715 = vpop.xlane.xlu0 %3714
        %v3716 = vrcp.pop %v3712
        %v3717 = vrcp.pop %v3715
        %v3718 = vmul.f32 %v3707, %v3716
        %v3719 = vmul.f32 %v3709, %v3717
        %3720 = vrot.lane.b32.xlu0 %v2710, 48
        %v3721 = vpop.permute.xlu0 %3720
        %v3724 = vsel %vm921, %v3718, 0
        %3726 = vmatprep.subr.mxu0 0.0
        %3727 = vmatpush1.msra.mxu0 %v3721
        %3728 = vmatprep.subr.mxu0 0.0
        %3729 = vmatpush1.msra.mxu0 0.0
        %3730 = vmatprep.subr.mxu0 0.0
        %3731 = vmatpush1.msra.mxu0 0.0
        %3732 = vmatprep.subr.mxu0 0.0
        %3733 = vmatpush1.msra.mxu0 0.0
        %3734 = vmatprep.subr.mxu0 0.0
        %3735 = vmatpush1.msra.mxu0 0.0
        %3736 = vmatprep.subr.mxu0 0.0
        %3737 = vmatpush1.msra.mxu0 0.0
        %3738 = vmatprep.subr.mxu0 0.0
        %3739 = vmatpush1.msra.mxu0 0.0
        %3740 = vmatprep.subr.mxu0 0.0
        %3741 = vmatpush1.msra.mxu0 0.0
        %3742 = vmatprep.subr.mxu0 0.0
        %3743 = vmatpush1.msra.mxu0 0.0
        %3744 = vmatprep.subr.mxu0 0.0
        %3745 = vmatpush1.msra.mxu0 0.0
        %3746 = vmatprep.subr.mxu0 0.0
        %3747 = vmatpush1.msra.mxu0 0.0
        %3748 = vmatprep.subr.mxu0 0.0
        %3749 = vmatpush1.msra.mxu0 0.0
        %3750 = vmatprep.subr.mxu0 0.0
        %3751 = vmatpush1.msra.mxu0 0.0
        %3752 = vmatprep.subr.mxu0 0.0
        %3753 = vmatpush1.msra.mxu0 0.0
        %3754 = vmatprep.subr.mxu0 0.0
        %3755 = vmatpush1.msra.mxu0 0.0
        %3756 = vmatprep.subr.mxu0 0.0
        %3757 = vmatpush1.msra.mxu0 0.0
        %3758 = vmatprep.subr.mxu0 0.0
        %3759 = vmatpush1.msra.mxu0 0.0
        %3760 = vmatprep.subr.mxu0 0.0
        %3761 = vmatpush1.msra.mxu0 0.0
        %3762 = vmatprep.subr.mxu0 0.0
        %3763 = vmatpush1.msra.mxu0 0.0
        %3764 = vmatprep.subr.mxu0 0.0
        %3765 = vmatpush1.msra.mxu0 0.0
        %3766 = vmatprep.subr.mxu0 0.0
        %3767 = vmatpush1.msra.mxu0 0.0
        %3768 = vmatprep.subr.mxu0 0.0
        %3769 = vmatpush1.msra.mxu0 0.0
        %3770 = vmatprep.subr.mxu0 0.0
        %3771 = vmatpush1.msra.mxu0 0.0
        %3772 = vmatprep.subr.mxu0 0.0
        %3773 = vmatpush1.msra.mxu0 0.0
        %3774 = vmatprep.subr.mxu0 0.0
        %3775 = vmatpush1.msra.mxu0 0.0
        %3776 = vmatprep.subr.mxu0 0.0
        %3777 = vmatpush1.msra.mxu0 0.0
        %3778 = vmatprep.subr.mxu0 0.0
        %3779 = vmatpush1.msra.mxu0 0.0
        %3780 = vmatprep.subr.mxu0 0.0
        %3781 = vmatpush1.msra.mxu0 0.0
        %3782 = vmatprep.subr.mxu0 0.0
        %3783 = vmatpush1.msra.mxu0 0.0
        %3784 = vmatprep.subr.mxu0 0.0
        %3785 = vmatpush1.msra.mxu0 0.0
        %3786 = vmatprep.subr.mxu0 0.0
        %3787 = vmatpush1.msra.mxu0 0.0
        %3788 = vmatprep.subr.mxu0 0.0
        %3789 = vmatpush1.msra.mxu0 0.0
        %3790 = vmatprep.mubr.f32.mxu0 0.0
        %3791 = vmatmul.mubr.f32.gmra.mrb[0].mxu0 %v3724
        %v3792 = vpop.f32.mrb[0].mxu0
        %v3793 = vadd.f32 0.0, %v3792
        %v3794 = vpop.f32.mrb[0].mxu0
        %3795 = vdwg.mxu0
        %3796 = vrot.lane.b32.xlu0 %v2715, 48
        %v3797 = vpop.permute.xlu0 %3796
        %v3800 = vsel %vm921, %v3719, 0
        %3802 = vmatprep.subr.mxu0 0.0
        %3803 = vmatpush1.msra.mxu0 %v3797
        %3804 = vmatprep.subr.mxu0 0.0
        %3805 = vmatpush1.msra.mxu0 0.0
        %3806 = vmatprep.subr.mxu0 0.0
        %3807 = vmatpush1.msra.mxu0 0.0
        %3808 = vmatprep.subr.mxu0 0.0
        %3809 = vmatpush1.msra.mxu0 0.0
        %3810 = vmatprep.subr.mxu0 0.0
        %3811 = vmatpush1.msra.mxu0 0.0
        %3812 = vmatprep.subr.mxu0 0.0
        %3813 = vmatpush1.msra.mxu0 0.0
        %3814 = vmatprep.subr.mxu0 0.0
        %3815 = vmatpush1.msra.mxu0 0.0
        %3816 = vmatprep.subr.mxu0 0.0
        %3817 = vmatpush1.msra.mxu0 0.0
        %3818 = vmatprep.subr.mxu0 0.0
        %3819 = vmatpush1.msra.mxu0 0.0
        %3820 = vmatprep.subr.mxu0 0.0
        %3821 = vmatpush1.msra.mxu0 0.0
        %3822 = vmatprep.subr.mxu0 0.0
        %3823 = vmatpush1.msra.mxu0 0.0
        %3824 = vmatprep.subr.mxu0 0.0
        %3825 = vmatpush1.msra.mxu0 0.0
        %3826 = vmatprep.subr.mxu0 0.0
        %3827 = vmatpush1.msra.mxu0 0.0
        %3828 = vmatprep.subr.mxu0 0.0
        %3829 = vmatpush1.msra.mxu0 0.0
        %3830 = vmatprep.subr.mxu0 0.0
        %3831 = vmatpush1.msra.mxu0 0.0
        %3832 = vmatprep.subr.mxu0 0.0
        %3833 = vmatpush1.msra.mxu0 0.0
        %3834 = vmatprep.subr.mxu0 0.0
        %3835 = vmatpush1.msra.mxu0 0.0
        %3836 = vmatprep.subr.mxu0 0.0
        %3837 = vmatpush1.msra.mxu0 0.0
        %3838 = vmatprep.subr.mxu0 0.0
        %3839 = vmatpush1.msra.mxu0 0.0
        %3840 = vmatprep.subr.mxu0 0.0
        %3841 = vmatpush1.msra.mxu0 0.0
        %3842 = vmatprep.subr.mxu0 0.0
        %3843 = vmatpush1.msra.mxu0 0.0
        %3844 = vmatprep.subr.mxu0 0.0
        %3845 = vmatpush1.msra.mxu0 0.0
        %3846 = vmatprep.subr.mxu0 0.0
        %3847 = vmatpush1.msra.mxu0 0.0
        %3848 = vmatprep.subr.mxu0 0.0
        %3849 = vmatpush1.msra.mxu0 0.0
        %3850 = vmatprep.subr.mxu0 0.0
        %3851 = vmatpush1.msra.mxu0 0.0
        %3852 = vmatprep.subr.mxu0 0.0
        %3853 = vmatpush1.msra.mxu0 0.0
        %3854 = vmatprep.subr.mxu0 0.0
        %3855 = vmatpush1.msra.mxu0 0.0
        %3856 = vmatprep.subr.mxu0 0.0
        %3857 = vmatpush1.msra.mxu0 0.0
        %3858 = vmatprep.subr.mxu0 0.0
        %3859 = vmatpush1.msra.mxu0 0.0
        %3860 = vmatprep.subr.mxu0 0.0
        %3861 = vmatpush1.msra.mxu0 0.0
        %3862 = vmatprep.subr.mxu0 0.0
        %3863 = vmatpush1.msra.mxu0 0.0
        %3864 = vmatprep.subr.mxu0 0.0
        %3865 = vmatpush1.msra.mxu0 0.0
        %3866 = vmatprep.mubr.f32.mxu0 0.0
        %3867 = vmatmul.mubr.f32.gmra.mrb[0].mxu0 %v3800
        %v3868 = vpop.f32.mrb[0].mxu0
        %v3869 = vadd.f32 0.0, %v3868
        %v3870 = vpop.f32.mrb[0].mxu0
        %3871 = vdwg.mxu0
        %v3873 = vsel %vm921, %v3793, 0
        %v3876 = vsel %vm921, %v3869, 0
        %3878 = vmatprep.subr.mxu0 0.0
        %3879 = vmatpush1.msra.mxu0 %v2628
        %3880 = vmatprep.subr.mxu0 0.0
        %3881 = vmatpush1.msra.mxu0 0.0
        %3882 = vmatprep.subr.mxu0 0.0
        %3883 = vmatpush1.msra.mxu0 0.0
        %3884 = vmatprep.subr.mxu0 0.0
        %3885 = vmatpush1.msra.mxu0 0.0
        %3886 = vmatprep.subr.mxu0 0.0
        %3887 = vmatpush1.msra.mxu0 0.0
        %3888 = vmatprep.subr.mxu0 0.0
        %3889 = vmatpush1.msra.mxu0 0.0
        %3890 = vmatprep.subr.mxu0 0.0
        %3891 = vmatpush1.msra.mxu0 0.0
        %3892 = vmatprep.subr.mxu0 0.0
        %3893 = vmatpush1.msra.mxu0 0.0
        %3894 = vmatprep.subr.mxu0 0.0
        %3895 = vmatpush1.msra.mxu0 0.0
        %3896 = vmatprep.subr.mxu0 0.0
        %3897 = vmatpush1.msra.mxu0 0.0
        %3898 = vmatprep.subr.mxu0 0.0
        %3899 = vmatpush1.msra.mxu0 0.0
        %3900 = vmatprep.subr.mxu0 0.0
        %3901 = vmatpush1.msra.mxu0 0.0
        %3902 = vmatprep.subr.mxu0 0.0
        %3903 = vmatpush1.msra.mxu0 0.0
        %3904 = vmatprep.subr.mxu0 0.0
        %3905 = vmatpush1.msra.mxu0 0.0
        %3906 = vmatprep.subr.mxu0 0.0
        %3907 = vmatpush1.msra.mxu0 0.0
        %3908 = vmatprep.subr.mxu0 0.0
        %3909 = vmatpush1.msra.mxu0 0.0
        %3910 = vmatprep.subr.mxu0 0.0
        %3911 = vmatpush1.msra.mxu0 0.0
        %3912 = vmatprep.subr.mxu0 0.0
        %3913 = vmatpush1.msra.mxu0 0.0
        %3914 = vmatprep.subr.mxu0 0.0
        %3915 = vmatpush1.msra.mxu0 0.0
        %3916 = vmatprep.subr.mxu0 0.0
        %3917 = vmatpush1.msra.mxu0 0.0
        %3918 = vmatprep.subr.mxu0 0.0
        %3919 = vmatpush1.msra.mxu0 0.0
        %3920 = vmatprep.subr.mxu0 0.0
        %3921 = vmatpush1.msra.mxu0 0.0
        %3922 = vmatprep.subr.mxu0 0.0
        %3923 = vmatpush1.msra.mxu0 0.0
        %3924 = vmatprep.subr.mxu0 0.0
        %3925 = vmatpush1.msra.mxu0 0.0
        %3926 = vmatprep.subr.mxu0 0.0
        %3927 = vmatpush1.msra.mxu0 0.0
        %3928 = vmatprep.subr.mxu0 0.0
        %3929 = vmatpush1.msra.mxu0 0.0
        %3930 = vmatprep.subr.mxu0 0.0
        %3931 = vmatpush1.msra.mxu0 0.0
        %3932 = vmatprep.subr.mxu0 0.0
        %3933 = vmatpush1.msra.mxu0 0.0
        %3934 = vmatprep.subr.mxu0 0.0
        %3935 = vmatpush1.msra.mxu0 0.0
        %3936 = vmatprep.subr.mxu0 0.0
        %3937 = vmatpush1.msra.mxu0 0.0
        %3938 = vmatprep.subr.mxu0 0.0
        %3939 = vmatpush1.msra.mxu0 0.0
        %3940 = vmatprep.subr.mxu0 0.0
        %3941 = vmatpush1.msra.mxu0 0.0
        %3942 = vmatprep.mubr.f32.mxu0 0.0
        %3943 = vmatmul.mubr.f32.gmra.mrb[0].mxu0 %v3873
        %v3944 = vpop.f32.mrb[0].mxu0
        %v3945 = vadd.f32 0.0, %v3944
        %v3946 = vpop.f32.mrb[0].mxu0
        %3947 = vmatprep.mubr.f32.mxu0 0.0
        %3948 = vmatmul.mubr.f32.gmra.mrb[0].mxu0 %v3876
        %v3949 = vpop.f32.mrb[0].mxu0
        %v3950 = vadd.f32 0.0, %v3949
        %v3951 = vpop.f32.mrb[0].mxu0
        %3952 = vdwg.mxu0
        %v3953 = vadd.f32 %v3534, %v3945
        %v3954 = vadd.f32 %v3539, %v3950
        %3955 = vrot.lane.b32.xlu0 %v2718, 104
        %v3956 = vpop.permute.xlu0 %3955
        %3957 = vrot.lane.b32.xlu0 %v2710, 72
        %v3958 = vpop.permute.xlu0 %3957
        %v3959 = vsel %vm921, %v3956, 0
        %v3961 = vsel %vm921, %v3958, 0
        %3963 = vmatprep.subr.mxu0 0.0
        %3964 = vmatpush1.xpose.msra.mxu0 %v3961
        %3965 = vmatprep.subr.mxu0 0.0
        %3966 = vmatpush1.xpose.msra.mxu0 0.0
        %3967 = vmatprep.subr.mxu0 0.0
        %3968 = vmatpush1.xpose.msra.mxu0 0.0
        %3969 = vmatprep.subr.mxu0 0.0
        %3970 = vmatpush1.xpose.msra.mxu0 0.0
        %3971 = vmatprep.subr.mxu0 0.0
        %3972 = vmatpush1.xpose.msra.mxu0 0.0
        %3973 = vmatprep.subr.mxu0 0.0
        %3974 = vmatpush1.xpose.msra.mxu0 0.0
        %3975 = vmatprep.subr.mxu0 0.0
        %3976 = vmatpush1.xpose.msra.mxu0 0.0
        %3977 = vmatprep.subr.mxu0 0.0
        %3978 = vmatpush1.xpose.msra.mxu0 0.0
        %3979 = vmatprep.subr.mxu0 0.0
        %3980 = vmatpush1.xpose.msra.mxu0 0.0
        %3981 = vmatprep.subr.mxu0 0.0
        %3982 = vmatpush1.xpose.msra.mxu0 0.0
        %3983 = vmatprep.subr.mxu0 0.0
        %3984 = vmatpush1.xpose.msra.mxu0 0.0
        %3985 = vmatprep.subr.mxu0 0.0
        %3986 = vmatpush1.xpose.msra.mxu0 0.0
        %3987 = vmatprep.subr.mxu0 0.0
        %3988 = vmatpush1.xpose.msra.mxu0 0.0
        %3989 = vmatprep.subr.mxu0 0.0
        %3990 = vmatpush1.xpose.msra.mxu0 0.0
        %3991 = vmatprep.subr.mxu0 0.0
        %3992 = vmatpush1.xpose.msra.mxu0 0.0
        %3993 = vmatprep.subr.mxu0 0.0
        %3994 = vmatpush1.xpose.msra.mxu0 0.0
        %3995 = vmatprep.subr.mxu0 0.0
        %3996 = vmatpush1.xpose.msra.mxu0 0.0
        %3997 = vmatprep.subr.mxu0 0.0
        %3998 = vmatpush1.xpose.msra.mxu0 0.0
        %3999 = vmatprep.subr.mxu0 0.0
        %4000 = vmatpush1.xpose.msra.mxu0 0.0
        %4001 = vmatprep.subr.mxu0 0.0
        %4002 = vmatpush1.xpose.msra.mxu0 0.0
        %4003 = vmatprep.subr.mxu0 0.0
        %4004 = vmatpush1.xpose.msra.mxu0 0.0
        %4005 = vmatprep.subr.mxu0 0.0
        %4006 = vmatpush1.xpose.msra.mxu0 0.0
        %4007 = vmatprep.subr.mxu0 0.0
        %4008 = vmatpush1.xpose.msra.mxu0 0.0
        %4009 = vmatprep.subr.mxu0 0.0
        %4010 = vmatpush1.xpose.msra.mxu0 0.0
        %4011 = vmatprep.subr.mxu0 0.0
        %4012 = vmatpush1.xpose.msra.mxu0 0.0
        %4013 = vmatprep.subr.mxu0 0.0
        %4014 = vmatpush1.xpose.msra.mxu0 0.0
        %4015 = vmatprep.subr.mxu0 0.0
        %4016 = vmatpush1.xpose.msra.mxu0 0.0
        %4017 = vmatprep.subr.mxu0 0.0
        %4018 = vmatpush1.xpose.msra.mxu0 0.0
        %4019 = vmatprep.subr.mxu0 0.0
        %4020 = vmatpush1.xpose.msra.mxu0 0.0
        %4021 = vmatprep.subr.mxu0 0.0
        %4022 = vmatpush1.xpose.msra.mxu0 0.0
        %4023 = vmatprep.subr.mxu0 0.0
        %4024 = vmatpush1.xpose.msra.mxu0 0.0
        %4025 = vmatprep.subr.mxu0 0.0
        %4026 = vmatpush1.xpose.msra.mxu0 0.0
        %4027 = vmatprep.mubr.f32.mxu0 0.0
        %4028 = vmatmul.mubr.f32.gmra.mrb[0].mxu0 %v3959
        %v4029 = vpop.f32.mrb[0].mxu0
        %v4030 = vadd.f32 0.0, %v4029
        %v4031 = vpop.f32.mrb[0].mxu0
        %4032 = vdwg.mxu0
        %4033 = vrot.lane.b32.xlu0 %v2719, 104
        %v4034 = vpop.permute.xlu0 %4033
        %4035 = vrot.lane.b32.xlu0 %v2715, 72
        %v4036 = vpop.permute.xlu0 %4035
        %v4037 = vsel %vm921, %v4034, 0
        %v4039 = vsel %vm921, %v4036, 0
        %4041 = vmatprep.subr.mxu0 0.0
        %4042 = vmatpush1.xpose.msra.mxu0 %v4039
        %4043 = vmatprep.subr.mxu0 0.0
        %4044 = vmatpush1.xpose.msra.mxu0 0.0
        %4045 = vmatprep.subr.mxu0 0.0
        %4046 = vmatpush1.xpose.msra.mxu0 0.0
        %4047 = vmatprep.subr.mxu0 0.0
        %4048 = vmatpush1.xpose.msra.mxu0 0.0
        %4049 = vmatprep.subr.mxu0 0.0
        %4050 = vmatpush1.xpose.msra.mxu0 0.0
        %4051 = vmatprep.subr.mxu0 0.0
        %4052 = vmatpush1.xpose.msra.mxu0 0.0
        %4053 = vmatprep.subr.mxu0 0.0
        %4054 = vmatpush1.xpose.msra.mxu0 0.0
        %4055 = vmatprep.subr.mxu0 0.0
        %4056 = vmatpush1.xpose.msra.mxu0 0.0
        %4057 = vmatprep.subr.mxu0 0.0
        %4058 = vmatpush1.xpose.msra.mxu0 0.0
        %4059 = vmatprep.subr.mxu0 0.0
        %4060 = vmatpush1.xpose.msra.mxu0 0.0
        %4061 = vmatprep.subr.mxu0 0.0
        %4062 = vmatpush1.xpose.msra.mxu0 0.0
        %4063 = vmatprep.subr.mxu0 0.0
        %4064 = vmatpush1.xpose.msra.mxu0 0.0
        %4065 = vmatprep.subr.mxu0 0.0
        %4066 = vmatpush1.xpose.msra.mxu0 0.0
        %4067 = vmatprep.subr.mxu0 0.0
        %4068 = vmatpush1.xpose.msra.mxu0 0.0
        %4069 = vmatprep.subr.mxu0 0.0
        %4070 = vmatpush1.xpose.msra.mxu0 0.0
        %4071 = vmatprep.subr.mxu0 0.0
        %4072 = vmatpush1.xpose.msra.mxu0 0.0
        %4073 = vmatprep.subr.mxu0 0.0
        %4074 = vmatpush1.xpose.msra.mxu0 0.0
        %4075 = vmatprep.subr.mxu0 0.0
        %4076 = vmatpush1.xpose.msra.mxu0 0.0
        %4077 = vmatprep.subr.mxu0 0.0
        %4078 = vmatpush1.xpose.msra.mxu0 0.0
        %4079 = vmatprep.subr.mxu0 0.0
        %4080 = vmatpush1.xpose.msra.mxu0 0.0
        %4081 = vmatprep.subr.mxu0 0.0
        %4082 = vmatpush1.xpose.msra.mxu0 0.0
        %4083 = vmatprep.subr.mxu0 0.0
        %4084 = vmatpush1.xpose.msra.mxu0 0.0
        %4085 = vmatprep.subr.mxu0 0.0
        %4086 = vmatpush1.xpose.msra.mxu0 0.0
        %4087 = vmatprep.subr.mxu0 0.0
        %4088 = vmatpush1.xpose.msra.mxu0 0.0
        %4089 = vmatprep.subr.mxu0 0.0
        %4090 = vmatpush1.xpose.msra.mxu0 0.0
        %4091 = vmatprep.subr.mxu0 0.0
        %4092 = vmatpush1.xpose.msra.mxu0 0.0
        %4093 = vmatprep.subr.mxu0 0.0
        %4094 = vmatpush1.xpose.msra.mxu0 0.0
        %4095 = vmatprep.subr.mxu0 0.0
        %4096 = vmatpush1.xpose.msra.mxu0 0.0
        %4097 = vmatprep.subr.mxu0 0.0
        %4098 = vmatpush1.xpose.msra.mxu0 0.0
        %4099 = vmatprep.subr.mxu0 0.0
        %4100 = vmatpush1.xpose.msra.mxu0 0.0
        %4101 = vmatprep.subr.mxu0 0.0
        %4102 = vmatpush1.xpose.msra.mxu0 0.0
        %4103 = vmatprep.subr.mxu0 0.0
        %4104 = vmatpush1.xpose.msra.mxu0 0.0
        %4105 = vmatprep.mubr.f32.mxu0 0.0
        %4106 = vmatmul.mubr.f32.gmra.mrb[0].mxu0 %v4037
        %v4107 = vpop.f32.mrb[0].mxu0
        %v4108 = vadd.f32 0.0, %v4107
        %v4109 = vpop.f32.mrb[0].mxu0
        %4110 = vdwg.mxu0
        %v4111 = vsel %vm921, %v4030, -inf
        %4112 = vmax.xlane.f32.xlu0 %v4111
        %v4113 = vpop.xlane.xlu0 %4112
        %v4114 = vsel %vm921, %v4108, -inf
        %4115 = vmax.xlane.f32.xlu0 %v4114
        %v4116 = vpop.xlane.xlu0 %4115
        %v4117 = vsub.f32 %v4030, %v4113
        %v4118 = vsub.f32 %v4108, %v4116
        %v4119 = vmul.f32 %v4117, 1.442695
        %v4120 = vpow.pop %v4119
        %v4121 = vmul.f32 %v4118, 1.442695
        %v4122 = vpow.pop %v4121
        %v4123 = vsel %vm921, %v4120, 0.0
        %4124 = vadd.xlane.f32.xlu0 %v4123
        %v4125 = vpop.xlane.xlu0 %4124
        %v4126 = vsel %vm921, %v4122, 0.0
        %4127 = vadd.xlane.f32.xlu0 %v4126
        %v4128 = vpop.xlane.xlu0 %4127
        %v4129 = vrcp.pop %v4125
        %v4130 = vrcp.pop %v4128
        %v4131 = vmul.f32 %v4120, %v4129
        %v4132 = vmul.f32 %v4122, %v4130
        %4133 = vrot.lane.b32.xlu0 %v2710, 40
        %v4134 = vpop.permute.xlu0 %4133
        %v4137 = vsel %vm921, %v4131, 0
        %4139 = vmatprep.subr.mxu0 0.0
        %4140 = vmatpush1.msra.mxu0 %v4134
        %4141 = vmatprep.subr.mxu0 0.0
        %4142 = vmatpush1.msra.mxu0 0.0
        %4143 = vmatprep.subr.mxu0 0.0
        %4144 = vmatpush1.msra.mxu0 0.0
        %4145 = vmatprep.subr.mxu0 0.0
        %4146 = vmatpush1.msra.mxu0 0.0
        %4147 = vmatprep.subr.mxu0 0.0
        %4148 = vmatpush1.msra.mxu0 0.0
        %4149 = vmatprep.subr.mxu0 0.0
        %4150 = vmatpush1.msra.mxu0 0.0
        %4151 = vmatprep.subr.mxu0 0.0
        %4152 = vmatpush1.msra.mxu0 0.0
        %4153 = vmatprep.subr.mxu0 0.0
        %4154 = vmatpush1.msra.mxu0 0.0
        %4155 = vmatprep.subr.mxu0 0.0
        %4156 = vmatpush1.msra.mxu0 0.0
        %4157 = vmatprep.subr.mxu0 0.0
        %4158 = vmatpush1.msra.mxu0 0.0
        %4159 = vmatprep.subr.mxu0 0.0
        %4160 = vmatpush1.msra.mxu0 0.0
        %4161 = vmatprep.subr.mxu0 0.0
        %4162 = vmatpush1.msra.mxu0 0.0
        %4163 = vmatprep.subr.mxu0 0.0
        %4164 = vmatpush1.msra.mxu0 0.0
        %4165 = vmatprep.subr.mxu0 0.0
        %4166 = vmatpush1.msra.mxu0 0.0
        %4167 = vmatprep.subr.mxu0 0.0
        %4168 = vmatpush1.msra.mxu0 0.0
        %4169 = vmatprep.subr.mxu0 0.0
        %4170 = vmatpush1.msra.mxu0 0.0
        %4171 = vmatprep.subr.mxu0 0.0
        %4172 = vmatpush1.msra.mxu0 0.0
        %4173 = vmatprep.subr.mxu0 0.0
        %4174 = vmatpush1.msra.mxu0 0.0
        %4175 = vmatprep.subr.mxu0 0.0
        %4176 = vmatpush1.msra.mxu0 0.0
        %4177 = vmatprep.subr.mxu0 0.0
        %4178 = vmatpush1.msra.mxu0 0.0
        %4179 = vmatprep.subr.mxu0 0.0
        %4180 = vmatpush1.msra.mxu0 0.0
        %4181 = vmatprep.subr.mxu0 0.0
        %4182 = vmatpush1.msra.mxu0 0.0
        %4183 = vmatprep.subr.mxu0 0.0
        %4184 = vmatpush1.msra.mxu0 0.0
        %4185 = vmatprep.subr.mxu0 0.0
        %4186 = vmatpush1.msra.mxu0 0.0
        %4187 = vmatprep.subr.mxu0 0.0
        %4188 = vmatpush1.msra.mxu0 0.0
        %4189 = vmatprep.subr.mxu0 0.0
        %4190 = vmatpush1.msra.mxu0 0.0
        %4191 = vmatprep.subr.mxu0 0.0
        %4192 = vmatpush1.msra.mxu0 0.0
        %4193 = vmatprep.subr.mxu0 0.0
        %4194 = vmatpush1.msra.mxu0 0.0
        %4195 = vmatprep.subr.mxu0 0.0
        %4196 = vmatpush1.msra.mxu0 0.0
        %4197 = vmatprep.subr.mxu0 0.0
        %4198 = vmatpush1.msra.mxu0 0.0
        %4199 = vmatprep.subr.mxu0 0.0
        %4200 = vmatpush1.msra.mxu0 0.0
        %4201 = vmatprep.subr.mxu0 0.0
        %4202 = vmatpush1.msra.mxu0 0.0
        %4203 = vmatprep.mubr.f32.mxu0 0.0
        %4204 = vmatmul.mubr.f32.gmra.mrb[0].mxu0 %v4137
        %v4205 = vpop.f32.mrb[0].mxu0
        %v4206 = vadd.f32 0.0, %v4205
        %v4207 = vpop.f32.mrb[0].mxu0
        %4208 = vdwg.mxu0
        %4209 = vrot.lane.b32.xlu0 %v2715, 40
        %v4210 = vpop.permute.xlu0 %4209
        %v4213 = vsel %vm921, %v4132, 0
        %4215 = vmatprep.subr.mxu0 0.0
        %4216 = vmatpush1.msra.mxu0 %v4210
        %4217 = vmatprep.subr.mxu0 0.0
        %4218 = vmatpush1.msra.mxu0 0.0
        %4219 = vmatprep.subr.mxu0 0.0
        %4220 = vmatpush1.msra.mxu0 0.0
        %4221 = vmatprep.subr.mxu0 0.0
        %4222 = vmatpush1.msra.mxu0 0.0
        %4223 = vmatprep.subr.mxu0 0.0
        %4224 = vmatpush1.msra.mxu0 0.0
        %4225 = vmatprep.subr.mxu0 0.0
        %4226 = vmatpush1.msra.mxu0 0.0
        %4227 = vmatprep.subr.mxu0 0.0
        %4228 = vmatpush1.msra.mxu0 0.0
        %4229 = vmatprep.subr.mxu0 0.0
        %4230 = vmatpush1.msra.mxu0 0.0
        %4231 = vmatprep.subr.mxu0 0.0
        %4232 = vmatpush1.msra.mxu0 0.0
        %4233 = vmatprep.subr.mxu0 0.0
        %4234 = vmatpush1.msra.mxu0 0.0
        %4235 = vmatprep.subr.mxu0 0.0
        %4236 = vmatpush1.msra.mxu0 0.0
        %4237 = vmatprep.subr.mxu0 0.0
        %4238 = vmatpush1.msra.mxu0 0.0
        %4239 = vmatprep.subr.mxu0 0.0
        %4240 = vmatpush1.msra.mxu0 0.0
        %4241 = vmatprep.subr.mxu0 0.0
        %4242 = vmatpush1.msra.mxu0 0.0
        %4243 = vmatprep.subr.mxu0 0.0
        %4244 = vmatpush1.msra.mxu0 0.0
        %4245 = vmatprep.subr.mxu0 0.0
        %4246 = vmatpush1.msra.mxu0 0.0
        %4247 = vmatprep.subr.mxu0 0.0
        %4248 = vmatpush1.msra.mxu0 0.0
        %4249 = vmatprep.subr.mxu0 0.0
        %4250 = vmatpush1.msra.mxu0 0.0
        %4251 = vmatprep.subr.mxu0 0.0
        %4252 = vmatpush1.msra.mxu0 0.0
        %4253 = vmatprep.subr.mxu0 0.0
        %4254 = vmatpush1.msra.mxu0 0.0
        %4255 = vmatprep.subr.mxu0 0.0
        %4256 = vmatpush1.msra.mxu0 0.0
        %4257 = vmatprep.subr.mxu0 0.0
        %4258 = vmatpush1.msra.mxu0 0.0
        %4259 = vmatprep.subr.mxu0 0.0
        %4260 = vmatpush1.msra.mxu0 0.0
        %4261 = vmatprep.subr.mxu0 0.0
        %4262 = vmatpush1.msra.mxu0 0.0
        %4263 = vmatprep.subr.mxu0 0.0
        %4264 = vmatpush1.msra.mxu0 0.0
        %4265 = vmatprep.subr.mxu0 0.0
        %4266 = vmatpush1.msra.mxu0 0.0
        %4267 = vmatprep.subr.mxu0 0.0
        %4268 = vmatpush1.msra.mxu0 0.0
        %4269 = vmatprep.subr.mxu0 0.0
        %4270 = vmatpush1.msra.mxu0 0.0
        %4271 = vmatprep.subr.mxu0 0.0
        %4272 = vmatpush1.msra.mxu0 0.0
        %4273 = vmatprep.subr.mxu0 0.0
        %4274 = vmatpush1.msra.mxu0 0.0
        %4275 = vmatprep.subr.mxu0 0.0
        %4276 = vmatpush1.msra.mxu0 0.0
        %4277 = vmatprep.subr.mxu0 0.0
        %4278 = vmatpush1.msra.mxu0 0.0
        %4279 = vmatprep.mubr.f32.mxu0 0.0
        %4280 = vmatmul.mubr.f32.gmra.mrb[0].mxu0 %v4213
        %v4281 = vpop.f32.mrb[0].mxu0
        %v4282 = vadd.f32 0.0, %v4281
        %v4283 = vpop.f32.mrb[0].mxu0
        %4284 = vdwg.mxu0
        %v4286 = vsel %vm921, %v4206, 0
        %v4289 = vsel %vm921, %v4282, 0
        %4291 = vmatprep.subr.mxu0 0.0
        %4292 = vmatpush1.msra.mxu0 %v2629
        %4293 = vmatprep.subr.mxu0 0.0
        %4294 = vmatpush1.msra.mxu0 0.0
        %4295 = vmatprep.subr.mxu0 0.0
        %4296 = vmatpush1.msra.mxu0 0.0
        %4297 = vmatprep.subr.mxu0 0.0
        %4298 = vmatpush1.msra.mxu0 0.0
        %4299 = vmatprep.subr.mxu0 0.0
        %4300 = vmatpush1.msra.mxu0 0.0
        %4301 = vmatprep.subr.mxu0 0.0
        %4302 = vmatpush1.msra.mxu0 0.0
        %4303 = vmatprep.subr.mxu0 0.0
        %4304 = vmatpush1.msra.mxu0 0.0
        %4305 = vmatprep.subr.mxu0 0.0
        %4306 = vmatpush1.msra.mxu0 0.0
        %4307 = vmatprep.subr.mxu0 0.0
        %4308 = vmatpush1.msra.mxu0 0.0
        %4309 = vmatprep.subr.mxu0 0.0
        %4310 = vmatpush1.msra.mxu0 0.0
        %4311 = vmatprep.subr.mxu0 0.0
        %4312 = vmatpush1.msra.mxu0 0.0
        %4313 = vmatprep.subr.mxu0 0.0
        %4314 = vmatpush1.msra.mxu0 0.0
        %4315 = vmatprep.subr.mxu0 0.0
        %4316 = vmatpush1.msra.mxu0 0.0
        %4317 = vmatprep.subr.mxu0 0.0
        %4318 = vmatpush1.msra.mxu0 0.0
        %4319 = vmatprep.subr.mxu0 0.0
        %4320 = vmatpush1.msra.mxu0 0.0
        %4321 = vmatprep.subr.mxu0 0.0
        %4322 = vmatpush1.msra.mxu0 0.0
        %4323 = vmatprep.subr.mxu0 0.0
        %4324 = vmatpush1.msra.mxu0 0.0
        %4325 = vmatprep.subr.mxu0 0.0
        %4326 = vmatpush1.msra.mxu0 0.0
        %4327 = vmatprep.subr.mxu0 0.0
        %4328 = vmatpush1.msra.mxu0 0.0
        %4329 = vmatprep.subr.mxu0 0.0
        %4330 = vmatpush1.msra.mxu0 0.0
        %4331 = vmatprep.subr.mxu0 0.0
        %4332 = vmatpush1.msra.mxu0 0.0
        %4333 = vmatprep.subr.mxu0 0.0
        %4334 = vmatpush1.msra.mxu0 0.0
        %4335 = vmatprep.subr.mxu0 0.0
        %4336 = vmatpush1.msra.mxu0 0.0
        %4337 = vmatprep.subr.mxu0 0.0
        %4338 = vmatpush1.msra.mxu0 0.0
        %4339 = vmatprep.subr.mxu0 0.0
        %4340 = vmatpush1.msra.mxu0 0.0
        %4341 = vmatprep.subr.mxu0 0.0
        %4342 = vmatpush1.msra.mxu0 0.0
        %4343 = vmatprep.subr.mxu0 0.0
        %4344 = vmatpush1.msra.mxu0 0.0
        %4345 = vmatprep.subr.mxu0 0.0
        %4346 = vmatpush1.msra.mxu0 0.0
        %4347 = vmatprep.subr.mxu0 0.0
        %4348 = vmatpush1.msra.mxu0 0.0
        %4349 = vmatprep.subr.mxu0 0.0
        %4350 = vmatpush1.msra.mxu0 0.0
        %4351 = vmatprep.subr.mxu0 0.0
        %4352 = vmatpush1.msra.mxu0 0.0
        %4353 = vmatprep.subr.mxu0 0.0
        %4354 = vmatpush1.msra.mxu0 0.0
        %4355 = vmatprep.mubr.f32.mxu0 0.0
        %4356 = vmatmul.mubr.f32.gmra.mrb[0].mxu0 %v4286
        %v4357 = vpop.f32.mrb[0].mxu0
        %v4358 = vadd.f32 0.0, %v4357
        %v4359 = vpop.f32.mrb[0].mxu0
        %4360 = vmatprep.mubr.f32.mxu0 0.0
        %4361 = vmatmul.mubr.f32.gmra.mrb[0].mxu0 %v4289
        %v4362 = vpop.f32.mrb[0].mxu0
        %v4363 = vadd.f32 0.0, %v4362
        %v4364 = vpop.f32.mrb[0].mxu0
        %4365 = vdwg.mxu0
        %v4366 = vadd.f32 %v3953, %v4358
        %v4367 = vadd.f32 %v3954, %v4363
        %v4369 = vlaneseq
        %v4370 = vshrl.u32 %v4369, 7
        %v4371 = vsub.s32 0, %v4370
        %v4372 = vrot.slane %v2630, %v4371
        %v4374 = vadd.f32 %v4366, %v4372
        %v4375 = vadd.f32 %v4367, %v4372
        %v4376 = vadd.f32 %v2575, %v4374
        %v4377 = vadd.f32 %v2576, %v4375
        %v4378 = vld [vmem:[#allocation17] sm:$0x1]
        %v4379 = vld [vmem:[#allocation19] sm:$0x1]
        %v4380 = vsel %vm775, %v4376, 0.0
        %4381 = vadd.xlane.f32.xlu0 %v4380
        %v4382 = vpop.xlane.xlu0 %4381
        %v4383 = vsel %vm775, %v4377, 0.0
        %4384 = vadd.xlane.f32.xlu0 %v4383
        %v4385 = vpop.xlane.xlu0 %4384
        %v4386 = vmul.f32 %v4382, %v782
        %v4387 = vmul.f32 %v4385, %v782
        %v4388 = vsub.f32 %v4376, %v4386
        %v4389 = vsub.f32 %v4377, %v4387
        %v4390 = vmul.f32 %v4388, %v4388
        %v4391 = vmul.f32 %v4389, %v4389
        %v4392 = vsel %vm775, %v4390, 0.0
        %4393 = vadd.xlane.f32.xlu0 %v4392
        %v4394 = vpop.xlane.xlu0 %4393
        %v4395 = vsel %vm775, %v4391, 0.0
        %4396 = vadd.xlane.f32.xlu0 %v4395
        %v4397 = vpop.xlane.xlu0 %4396
        %v4398 = vmul.f32 %v4394, %v782
        %v4399 = vmul.f32 %v4397, %v782
        %v4400 = vadd.f32 %v4398, 1e-05
        %v4401 = vadd.f32 %v4399, 1e-05
        %v4402 = vrsqrt.pop %v4400
        %v4403 = vrsqrt.pop %v4401
        %v4404 = vmul.f32 %v4388, %v4402
        %v4405 = vmul.f32 %v4389, %v4403
        %v4407 = vlaneseq
        %v4408 = vshrl.u32 %v4407, 7
        %v4409 = vsub.s32 0, %v4408
        %v4410 = vrot.slane %v4378, %v4409
        %v4412 = vmul.f32 %v4404, %v4410
        %v4413 = vmul.f32 %v4405, %v4410
        %v4415 = vlaneseq
        %v4416 = vshrl.u32 %v4415, 7
        %v4417 = vsub.s32 0, %v4416
        %v4418 = vrot.slane %v4379, %v4417
        %v4420 = vadd.f32 %v4412, %v4418
        %v4421 = vadd.f32 %v4413, %v4418
        %v4422 = vld [vmem:[#allocation20] sm:$0xff]
        %v4423 = vld [vmem:[#allocation20 + $0x8] sm:$0xff]
        %v4424 = vld [vmem:[#allocation20 + $0x10] sm:$0xff]
        %v4425 = vld [vmem:[#allocation20 + $0x18] sm:$0xff]
        %v4426 = vld [vmem:[#allocation22] sm:$0x1]
        %v4428 = vlaneseq
        %v4429 = vshrl.u32 %v4428, 7
        %v4430 = vsub.s32 0, %v4429
        %v4431 = vrot.slane %v4426, %v4430
        %v4434 = vsel %vm775, %v4420, 0
        %v4437 = vsel %vm775, %v4421, 0
        %4439 = vmatprep.subr.mxu0 0.0
        %4440 = vmatpush1.msra.mxu0 %v4422
        %4441 = vmatprep.subr.mxu0 0.0
        %4442 = vmatpush1.msra.mxu0 %v4423
        %4443 = vmatprep.subr.mxu0 0.0
        %4444 = vmatpush1.msra.mxu0 %v4424
        %4445 = vmatprep.subr.mxu0 0.0
        %4446 = vmatpush1.msra.mxu0 %v4425
        %4447 = vmatprep.subr.mxu0 0.0
        %4448 = vmatpush1.msra.mxu0 0.0
        %4449 = vmatprep.subr.mxu0 0.0
        %4450 = vmatpush1.msra.mxu0 0.0
        %4451 = vmatprep.subr.mxu0 0.0
        %4452 = vmatpush1.msra.mxu0 0.0
        %4453 = vmatprep.subr.mxu0 0.0
        %4454 = vmatpush1.msra.mxu0 0.0
        %4455 = vmatprep.subr.mxu0 0.0
        %4456 = vmatpush1.msra.mxu0 0.0
        %4457 = vmatprep.subr.mxu0 0.0
        %4458 = vmatpush1.msra.mxu0 0.0
        %4459 = vmatprep.subr.mxu0 0.0
        %4460 = vmatpush1.msra.mxu0 0.0
        %4461 = vmatprep.subr.mxu0 0.0
        %4462 = vmatpush1.msra.mxu0 0.0
        %4463 = vmatprep.subr.mxu0 0.0
        %4464 = vmatpush1.msra.mxu0 0.0
        %4465 = vmatprep.subr.mxu0 0.0
        %4466 = vmatpush1.msra.mxu0 0.0
        %4467 = vmatprep.subr.mxu0 0.0
        %4468 = vmatpush1.msra.mxu0 0.0
        %4469 = vmatprep.subr.mxu0 0.0
        %4470 = vmatpush1.msra.mxu0 0.0
        %4471 = vmatprep.subr.mxu0 0.0
        %4472 = vmatpush1.msra.mxu0 0.0
        %4473 = vmatprep.subr.mxu0 0.0
        %4474 = vmatpush1.msra.mxu0 0.0
        %4475 = vmatprep.subr.mxu0 0.0
        %4476 = vmatpush1.msra.mxu0 0.0
        %4477 = vmatprep.subr.mxu0 0.0
        %4478 = vmatpush1.msra.mxu0 0.0
        %4479 = vmatprep.subr.mxu0 0.0
        %4480 = vmatpush1.msra.mxu0 0.0
        %4481 = vmatprep.subr.mxu0 0.0
        %4482 = vmatpush1.msra.mxu0 0.0
        %4483 = vmatprep.subr.mxu0 0.0
        %4484 = vmatpush1.msra.mxu0 0.0
        %4485 = vmatprep.subr.mxu0 0.0
        %4486 = vmatpush1.msra.mxu0 0.0
        %4487 = vmatprep.subr.mxu0 0.0
        %4488 = vmatpush1.msra.mxu0 0.0
        %4489 = vmatprep.subr.mxu0 0.0
        %4490 = vmatpush1.msra.mxu0 0.0
        %4491 = vmatprep.subr.mxu0 0.0
        %4492 = vmatpush1.msra.mxu0 0.0
        %4493 = vmatprep.subr.mxu0 0.0
        %4494 = vmatpush1.msra.mxu0 0.0
        %4495 = vmatprep.subr.mxu0 0.0
        %4496 = vmatpush1.msra.mxu0 0.0
        %4497 = vmatprep.subr.mxu0 0.0
        %4498 = vmatpush1.msra.mxu0 0.0
        %4499 = vmatprep.subr.mxu0 0.0
        %4500 = vmatpush1.msra.mxu0 0.0
        %4501 = vmatprep.subr.mxu0 0.0
        %4502 = vmatpush1.msra.mxu0 0.0
        %4503 = vmatprep.mubr.f32.mxu0 0.0
        %4504 = vmatmul.mubr.f32.gmra.mrb[0].mxu0 %v4434
        %v4505 = vpop.f32.mrb[0].mxu0
        %v4506 = vadd.f32 %v4431, %v4505
        %v4507 = vpop.f32.mrb[0].mxu0
        %4508 = vmatprep.mubr.f32.mxu0 0.0
        %4509 = vmatmul.mubr.f32.gmra.mrb[0].mxu0 %v4437
        %v4510 = vpop.f32.mrb[0].mxu0
        %v4511 = vadd.f32 %v4431, %v4510
        %v4512 = vpop.f32.mrb[0].mxu0
        %4513 = vdwg.mxu0
        %v4514 = vmax.f32 %v4506, 0.0
        %v4515 = vmax.f32 %v4511, 0.0
        %v4516 = vld [vmem:[%s17] sm:$0xff]
        %v4517 = vld [vmem:[%s17 + $0x8] sm:$0xff]
        %v4518 = vld [vmem:[%s17 + $0x10] sm:$0xff]
        %v4519 = vld [vmem:[%s17 + $0x18] sm:$0xff]
        %v4520 = vld [vmem:[%s17 + $0x20] sm:$0xff]
        %v4521 = vld [vmem:[%s17 + $0x28] sm:$0xff]
        %v4522 = vld [vmem:[%s17 + $0x30] sm:$0xff]
        %v4523 = vld [vmem:[%s17 + $0x38] sm:$0xff]
        %v4524 = vld [vmem:[%s18] sm:$0x1]
        %v4526 = vlaneseq
        %v4527 = vshrl.u32 %v4526, 7
        %v4528 = vsub.s32 0, %v4527
        %v4529 = vrot.slane %v4524, %v4528
        %vm4531 = vcmask 523264
        %v4533 = vsel %vm4531, %v4514, 0
        %v4536 = vsel %vm4531, %v4515, 0
        %4538 = vmatprep.subr.mxu0 0.0
        %4539 = vmatpush1.msra.mxu0 %v4516
        %4540 = vmatprep.subr.mxu0 0.0
        %4541 = vmatpush1.msra.mxu0 %v4517
        %4542 = vmatprep.subr.mxu0 0.0
        %4543 = vmatpush1.msra.mxu0 %v4518
        %4544 = vmatprep.subr.mxu0 0.0
        %4545 = vmatpush1.msra.mxu0 %v4519
        %4546 = vmatprep.subr.mxu0 0.0
        %4547 = vmatpush1.msra.mxu0 %v4520
        %4548 = vmatprep.subr.mxu0 0.0
        %4549 = vmatpush1.msra.mxu0 %v4521
        %4550 = vmatprep.subr.mxu0 0.0
        %4551 = vmatpush1.msra.mxu0 %v4522
        %4552 = vmatprep.subr.mxu0 0.0
        %4553 = vmatpush1.msra.mxu0 %v4523
        %4554 = vmatprep.subr.mxu0 0.0
        %4555 = vmatpush1.msra.mxu0 0.0
        %4556 = vmatprep.subr.mxu0 0.0
        %4557 = vmatpush1.msra.mxu0 0.0
        %4558 = vmatprep.subr.mxu0 0.0
        %4559 = vmatpush1.msra.mxu0 0.0
        %4560 = vmatprep.subr.mxu0 0.0
        %4561 = vmatpush1.msra.mxu0 0.0
        %4562 = vmatprep.subr.mxu0 0.0
        %4563 = vmatpush1.msra.mxu0 0.0
        %4564 = vmatprep.subr.mxu0 0.0
        %4565 = vmatpush1.msra.mxu0 0.0
        %4566 = vmatprep.subr.mxu0 0.0
        %4567 = vmatpush1.msra.mxu0 0.0
        %4568 = vmatprep.subr.mxu0 0.0
        %4569 = vmatpush1.msra.mxu0 0.0
        %4570 = vmatprep.subr.mxu0 0.0
        %4571 = vmatpush1.msra.mxu0 0.0
        %4572 = vmatprep.subr.mxu0 0.0
        %4573 = vmatpush1.msra.mxu0 0.0
        %4574 = vmatprep.subr.mxu0 0.0
        %4575 = vmatpush1.msra.mxu0 0.0
        %4576 = vmatprep.subr.mxu0 0.0
        %4577 = vmatpush1.msra.mxu0 0.0
        %4578 = vmatprep.subr.mxu0 0.0
        %4579 = vmatpush1.msra.mxu0 0.0
        %4580 = vmatprep.subr.mxu0 0.0
        %4581 = vmatpush1.msra.mxu0 0.0
        %4582 = vmatprep.subr.mxu0 0.0
        %4583 = vmatpush1.msra.mxu0 0.0
        %4584 = vmatprep.subr.mxu0 0.0
        %4585 = vmatpush1.msra.mxu0 0.0
        %4586 = vmatprep.subr.mxu0 0.0
        %4587 = vmatpush1.msra.mxu0 0.0
        %4588 = vmatprep.subr.mxu0 0.0
        %4589 = vmatpush1.msra.mxu0 0.0
        %4590 = vmatprep.subr.mxu0 0.0
        %4591 = vmatpush1.msra.mxu0 0.0
        %4592 = vmatprep.subr.mxu0 0.0
        %4593 = vmatpush1.msra.mxu0 0.0
        %4594 = vmatprep.subr.mxu0 0.0
        %4595 = vmatpush1.msra.mxu0 0.0
        %4596 = vmatprep.subr.mxu0 0.0
        %4597 = vmatpush1.msra.mxu0 0.0
        %4598 = vmatprep.subr.mxu0 0.0
        %4599 = vmatpush1.msra.mxu0 0.0
        %4600 = vmatprep.subr.mxu0 0.0
        %4601 = vmatpush1.msra.mxu0 0.0
        %4602 = vmatprep.mubr.f32.mxu0 0.0
        %4603 = vmatmul.mubr.f32.gmra.mrb[0].mxu0 %v4533
        %v4604 = vpop.f32.mrb[0].mxu0
        %v4605 = vadd.f32 %v4529, %v4604
        %v4606 = vpop.f32.mrb[0].mxu0
        %4607 = vmatprep.mubr.f32.mxu0 0.0
        %4608 = vmatmul.mubr.f32.gmra.mrb[0].mxu0 %v4536
        %v4609 = vpop.f32.mrb[0].mxu0
        %v4610 = vadd.f32 %v4529, %v4609
        %v4611 = vpop.f32.mrb[0].mxu0
        %4612 = vdwg.mxu0
        %v4613 = vadd.f32 %v4376, %v4605
        %v4614 = vadd.f32 %v4377, %v4610
        %4615 = vst.msk [vmem:[%s763] sm:$0xff] %vm775, %v4613
        %4616 = vst.msk [vmem:[%s763 + $0x8] sm:$0xff] %vm775, %v4614
        %s4617 = sand.u32 %s452, 1
        %s4618 = scalar_lea.sflag [#allocation4], %s4617
        %s4619 = sand.u32 %s452, 1
        %s4620 = smul.addr %s4619, 16
        %s4621 = scalar_lea.vmem [#allocation23], %s4620
        // Predicated region
        $region149: #{tpu_custom_call.1} parent=95 // pred_check
          %p4622 = pneg %p462
        $region150: #{tpu_custom_call.1} parent=95 // pred_check_branch
          %4624 = sbr.rel (%p4622) target = $region152
        $region151: #{tpu_custom_call.1} parent=95 // pred_region
          %s4625 = smul.u32 2, %s40
          %s4627 = ssub.s32 256, 256
          %4628 = vsyncadd %s4618, %s4627
          %s4629 = smul.addr %s4625, 128
          %s4630 = scalar_lea.hbm %s19, %s4629
          %s4631 = sshll.u32 %s4621, 4
          %s4632 = int_to_ptr.vmem [resolvable:$true] %s4631
          %4637 = dma.vmem_to_hbm [thread:$0]  %s4632, 256, %s4630, %s4618, 128, 128, 8
        $region152: #{tpu_custom_call.1} parent=95 // pred_fallthru
          _
      $region96: #{tpu_custom_call.1} parent=5 // pred_fallthru
        _
      %p4638 = scmp.le.s32.totalorder 2, %s35
      // Predicated region
      $region153: #{tpu_custom_call.1} parent=5 // pred_check
        %p4639 = pneg %p4638
      $region154: #{tpu_custom_call.1} parent=5 // pred_check_branch
        %4641 = sbr.rel (%p4639) target = $region156
      $region155: #{tpu_custom_call.1} parent=5 // pred_region
        %s4642 = ssub.s32 %s35, 2
        // Predicated region
        $region157: #{tpu_custom_call.1} parent=155 // pred_check
          %p4643 = pneg %p468
        $region158: #{tpu_custom_call.1} parent=155 // pred_check_branch
          %4645 = sbr.rel (%p4643) target = $region160
        $region159: #{tpu_custom_call.1} parent=155 // pred_region
          %s4646 = sand.u32 %s453, 1
          %s4647 = scalar_lea.sflag [#allocation4], %s4646
          %s4648 = sand.u32 %s453, 1
          %s4649 = smul.addr %s4648, 16
          %s4650 = scalar_lea.vmem [#allocation23], %s4649
          %4651 = dma.done %s4647, 256
        $region160: #{tpu_custom_call.1} parent=155 // pred_fallthru
          _
      $region156: #{tpu_custom_call.1} parent=5 // pred_fallthru
        _
    $region6: #{tpu_custom_call.1} parent=1 // loop_footer
      %s39 = sadd.s32 1, %s35
    $region7: #{tpu_custom_call.1} parent=1 // loop_footer_branch
      %34 = sbr.rel target = $region3
    $region8: #{tpu_custom_call.1} parent=1 // loop_exit
      _
    %4652 = vsyncpa [#allocation3], 1
    %s4653 = scalar_lea.sflag [#allocation3], 1
    %4654 = vsyncpa %s4653, 1
    %4655 = vsyncpa [#allocation6], 1
    %4656 = vsyncpa [#allocation9], 1
    %4657 = vsyncpa [#allocation12], 1
    %4658 = vsyncpa [#allocation15], 1
    %4659 = vsyncpa [#allocation18], 1
    %4660 = vsyncpa [#allocation21], 1
    %4661 = vsyncpa [#allocation4], 1
    %s4662 = scalar_lea.sflag [#allocation4], 1
    %4663 = vsyncpa %s4662, 1

// kernel: tpu_custom_call.1
$region0: #{tpu_custom_call.1}
  #allocation0 [shape = 'u32[]', space=smem, size = 0x4, offset = 0x4, fixed_abs, tag = 'smem constant byte address 0x4 - core index']
  #allocation1 [shape = 'u32[144,128]{1,0:T(1,128)}', space=vmem, size = 0x12000, scoped, tag = 'internal scratch']
  %s0 = inlined_call_operand.vmem [shape: f32[4,8,32], index: 0, kind: input, shape index: {}]
  %s1 = inlined_call_operand.hbm [shape: f32[1,32], index: 1, kind: input, shape index: {}]
  %s2 = inlined_call_operand.hbm [shape: f32[1,32], index: 2, kind: input, shape index: {}]
  %s3 = inlined_call_operand.vmem [shape: f32[32,96], index: 3, kind: input, shape index: {}]
  %s4 = inlined_call_operand.hbm [shape: f32[1,96], index: 4, kind: input, shape index: {}]
  %s5 = inlined_call_operand.vmem [shape: f32[32,32], index: 5, kind: input, shape index: {}]
  %s6 = inlined_call_operand.hbm [shape: f32[1,32], index: 6, kind: input, shape index: {}]
  %s7 = inlined_call_operand.hbm [shape: f32[1,32], index: 7, kind: input, shape index: {}]
  %s8 = inlined_call_operand.hbm [shape: f32[1,32], index: 8, kind: input, shape index: {}]
  %s9 = inlined_call_operand.vmem [shape: f32[32,96], index: 9, kind: input, shape index: {}]
  %s10 = inlined_call_operand.hbm [shape: f32[1,96], index: 10, kind: input, shape index: {}]
  %s11 = inlined_call_operand.hbm [shape: f32[32,32], index: 11, kind: input, shape index: {}]
  %s12 = inlined_call_operand.hbm [shape: f32[1,32], index: 12, kind: input, shape index: {}]
  %s13 = inlined_call_operand.hbm [shape: f32[1,32], index: 13, kind: input, shape index: {}]
  %s14 = inlined_call_operand.hbm [shape: f32[1,32], index: 14, kind: input, shape index: {}]
  %s15 = inlined_call_operand.hbm [shape: f32[32,64], index: 15, kind: input, shape index: {}]
  %s16 = inlined_call_operand.hbm [shape: f32[1,64], index: 16, kind: input, shape index: {}]
  %s17 = inlined_call_operand.vmem [shape: f32[64,32], index: 17, kind: input, shape index: {}]
  %s18 = inlined_call_operand.vmem [shape: f32[1,32], index: 18, kind: input, shape index: {}]
  %s19 = inlined_call_operand.hbm [shape: f32[4,8,32], index: 19, kind: output, shape index: {}]
  %s20 = sld [smem:[#allocation0]]
  $region161: #{tpu_custom_call.1} parent=0
    _
  %s22 = ssub.s32 1, %s20
  %s23 = scalar_select 0, %s22, %s20
  $region1: #{tpu_custom_call.1} parent=0
    #allocation2 [shape = 'u8[512]{0}', space=vmem, size = 0x400, scoped, tag = 'input window, operand 1, single buffered']
    #allocation3 [shape = 's32[2]{0}', space=sflag, size = 0x8, scoped, tag = 'scoped memory for tpu_custom_call.1']
    #allocation4 [shape = 's32[2]{0}', space=sflag, size = 0x8, scoped, tag = 'scoped memory for tpu_custom_call.1']
    #allocation5 [shape = 'u8[512]{0}', space=vmem, size = 0x400, scoped, tag = 'input window, operand 2, single buffered']
    #allocation6 [shape = 's32[1]{0}', space=sflag, size = 0x4, scoped, tag = 'scoped memory for tpu_custom_call.1']
    #allocation7 [shape = 'u8[512]{0}', space=vmem, size = 0x400, scoped, tag = 'input window, operand 4, single buffered']
    #allocation8 [shape = 'u8[512]{0}', space=vmem, size = 0x400, scoped, tag = 'input window, operand 6, single buffered']
    #allocation9 [shape = 's32[1]{0}', space=sflag, size = 0x4, scoped, tag = 'scoped memory for tpu_custom_call.1']
    #allocation10 [shape = 'u8[512]{0}', space=vmem, size = 0x400, scoped, tag = 'input window, operand 7, single buffered']
    #allocation11 [shape = 'u8[512]{0}', space=vmem, size = 0x400, scoped, tag = 'input window, operand 8, single buffered']
    #allocation12 [shape = 's32[1]{0}', space=sflag, size = 0x4, scoped, tag = 'scoped memory for tpu_custom_call.1']
    #allocation13 [shape = 'u8[512]{0}', space=vmem, size = 0x400, scoped, tag = 'input window, operand 10, single buffered']
    #allocation14 [shape = 'u8[16384]{0}', space=vmem, size = 0x4000, scoped, tag = 'input window, operand 11, single buffered']
    #allocation15 [shape = 's32[1]{0}', space=sflag, size = 0x4, scoped, tag = 'scoped memory for tpu_custom_call.1']
    #allocation16 [shape = 'u8[512]{0}', space=vmem, size = 0x400, scoped, tag = 'input window, operand 12, single buffered']
    #allocation17 [shape = 'u8[512]{0}', space=vmem, size = 0x400, scoped, tag = 'input window, operand 13, single buffered']
    #allocation18 [shape = 's32[1]{0}', space=sflag, size = 0x4, scoped, tag = 'scoped memory for tpu_custom_call.1']
    #allocation19 [shape = 'u8[512]{0}', space=vmem, size = 0x400, scoped, tag = 'input window, operand 14, single buffered']
    #allocation20 [shape = 'u8[16384]{0}', space=vmem, size = 0x4000, scoped, tag = 'input window, operand 15, single buffered']
    #allocation21 [shape = 's32[1]{0}', space=sflag, size = 0x4, scoped, tag = 'scoped memory for tpu_custom_call.1']
    #allocation22 [shape = 'u8[512]{0}', space=vmem, size = 0x400, scoped, tag = 'input window, operand 16, single buffered']
    #allocation23 [shape = 'u8[16384]{0}', space=vmem, size = 0x4000, scoped, tag = 'output window, operand 0']
    %24 = vsyncpa [#allocation3], 0
    %25 = vsyncpa [#allocation6], 0
    %26 = vsyncpa [#allocation9], 0
    %27 = vsyncpa [#allocation12], 0
    %28 = vsyncpa [#allocation15], 0
    %29 = vsyncpa [#allocation18], 0
    %30 = vsyncpa [#allocation21], 0
    %31 = vsyncpa [#allocation4], 0
    %s32 = scalar_lea.sflag [#allocation4], 1
    %33 = vsyncpa %s32, 0
    loop: start=0, step=1, limit=4
    $region2: #{tpu_custom_call.1} parent=1 // loop_pre_header
      _
    $region3: #{tpu_custom_call.1} parent=1 // loop_header
      %s35 = sphi 0, %s39
      %p36 = scmp.ge.s32.totalorder %s35, 4
      %s45 = sphi 0, %s47
      %s48 = sphi 0, %s45
      %s49 = sphi 0, %s48
      %s65 = sphi 0, %s49
      %s69 = sphi 0, %s69
      %s71 = sphi 0, %s69
      %s72 = sphi 0, %s71
      %s86 = sphi 0, %s72
      %s90 = sphi 0, %s90
      %s92 = sphi 0, %s90
      %s93 = sphi 0, %s92
      %s107 = sphi 0, %s93
      %s111 = sphi 0, %s111
      %s113 = sphi 0, %s111
      %s114 = sphi 0, %s113
      %s128 = sphi 0, %s114
      %s132 = sphi 0, %s132
      %s134 = sphi 0, %s132
      %s135 = sphi 0, %s134
      %s149 = sphi 0, %s135
      %s153 = sphi 0, %s153
      %s155 = sphi 0, %s153
      %s156 = sphi 0, %s155
      %s170 = sphi 0, %s156
      %s174 = sphi 0, %s174
      %s176 = sphi 0, %s174
      %s177 = sphi 0, %s176
      %s191 = sphi 0, %s177
      %s195 = sphi 0, %s195
      %s197 = sphi 0, %s195
      %s198 = sphi 0, %s197
      %s212 = sphi 0, %s198
      %s216 = sphi 0, %s216
      %s218 = sphi 0, %s216
      %s219 = sphi 0, %s218
      %s233 = sphi 0, %s219
      %s237 = sphi 0, %s237
      %s239 = sphi 0, %s237
      %s240 = sphi 0, %s239
      %s254 = sphi 0, %s240
      %s258 = sphi 0, %s258
      %s260 = sphi 0, %s258
      %s261 = sphi 0, %s260
      %s275 = sphi 0, %s261
      %s279 = sphi 0, %s279
      %s281 = sphi 0, %s279
      %s282 = sphi 0, %s281
      %s296 = sphi 0, %s282
      %s300 = sphi 0, %s300
      %s302 = sphi 0, %s300
      %s303 = sphi 0, %s302
      %s317 = sphi 0, %s303
      %s321 = sphi 0, %s321
      %s323 = sphi 0, %s321
      %s324 = sphi 0, %s323
      %s338 = sphi 0, %s324
      %s342 = sphi 0, %s342
      %s344 = sphi 0, %s342
      %s345 = sphi 0, %s344
      %s359 = sphi 0, %s345
      %s363 = sphi 0, %s363
      %s365 = sphi 0, %s363
      %s366 = sphi 0, %s365
      %s380 = sphi 0, %s366
      %s384 = sphi 0, %s384
      %s386 = sphi 0, %s384
      %s387 = sphi 0, %s386
      %s401 = sphi 0, %s387
      %s405 = sphi 0, %s405
      %s407 = sphi 0, %s405
      %s408 = sphi 0, %s407
      %s422 = sphi 0, %s408
      %s426 = sphi 0, %s426
      %s428 = sphi 0, %s426
      %s429 = sphi 0, %s428
      %s443 = sphi 0, %s429
      %s449 = sphi 0, %s451
      %s452 = sphi 0, %s449
      %s453 = sphi 0, %s452
      %s469 = sphi 0, %s453
    $region4: #{tpu_custom_call.1} parent=1 // loop_header_branch
      %38 = sbr.rel (%p36) target = $region8
    $region5: #{tpu_custom_call.1} parent=1 // loop_body
      %s40 = ssub.s32 %s35, 1
      %s41 = ssub.s32 %s35, 2
      %s42 = sadd.s32 %s35, 1
      %s43 = ssub.s32 %s35, %s42
      %p44 = scmp.eq.s32.totalorder %s43, 0
      %s46 = sadd.s32 %s45, 1
      %s47 = scalar_select %p44, %s45, %s46
      %p50 = pneg %p44
      %p51 = scmp.eq.s32.totalorder %s35, 1
      %p52 = por %p50, %p51
      %p53 = scmp.ne.s32.totalorder %s45, %s48
      %p54 = scmp.eq.s32.totalorder %s35, 0
      %p55 = por %p53, %p54
      %p56 = scmp.ne.s32.totalorder %s45, %s48
      %p57 = scmp.eq.s32.totalorder %s40, 1
      %p58 = por %p56, %p57
      %p59 = scmp.ne.s32.totalorder %s48, %s49
      %p60 = scmp.eq.s32.totalorder %s40, 0
      %p61 = por %p59, %p60
      %p62 = scmp.ne.s32.totalorder %s48, %s49
      %p63 = scmp.eq.s32.totalorder %s41, 1
      %p64 = por %p62, %p63
      %p66 = scmp.ne.s32.totalorder %s49, %s65
      %p67 = scmp.eq.s32.totalorder %s41, 0
      %p68 = por %p66, %p67
      %s70 = sadd.s32 %s69, 1
      %p73 = scmp.eq.s32.totalorder %s35, 1
      %p74 = scmp.ne.s32.totalorder %s69, %s71
      %p75 = scmp.eq.s32.totalorder %s35, 0
      %p76 = por %p74, %p75
      %p77 = scmp.ne.s32.totalorder %s69, %s71
      %p78 = scmp.eq.s32.totalorder %s40, 1
      %p79 = por %p77, %p78
      %p80 = scmp.ne.s32.totalorder %s71, %s72
      %p81 = scmp.eq.s32.totalorder %s40, 0
      %p82 = por %p80, %p81
      %p83 = scmp.ne.s32.totalorder %s71, %s72
      %p84 = scmp.eq.s32.totalorder %s41, 1
      %p85 = por %p83, %p84
      %p87 = scmp.ne.s32.totalorder %s72, %s86
      %p88 = scmp.eq.s32.totalorder %s41, 0
      %p89 = por %p87, %p88
      %s91 = sadd.s32 %s90, 1
      %p94 = scmp.eq.s32.totalorder %s35, 1
      %p95 = scmp.ne.s32.totalorder %s90, %s92
      %p96 = scmp.eq.s32.totalorder %s35, 0
      %p97 = por %p95, %p96
      %p98 = scmp.ne.s32.totalorder %s90, %s92
      %p99 = scmp.eq.s32.totalorder %s40, 1
      %p100 = por %p98, %p99
      %p101 = scmp.ne.s32.totalorder %s92, %s93
      %p102 = scmp.eq.s32.totalorder %s40, 0
      %p103 = por %p101, %p102
      %p104 = scmp.ne.s32.totalorder %s92, %s93
      %p105 = scmp.eq.s32.totalorder %s41, 1
      %p106 = por %p104, %p105
      %p108 = scmp.ne.s32.totalorder %s93, %s107
      %p109 = scmp.eq.s32.totalorder %s41, 0
      %p110 = por %p108, %p109
      %s112 = sadd.s32 %s111, 1
      %p115 = scmp.eq.s32.totalorder %s35, 1
      %p116 = scmp.ne.s32.totalorder %s111, %s113
      %p117 = scmp.eq.s32.totalorder %s35, 0
      %p118 = por %p116, %p117
      %p119 = scmp.ne.s32.totalorder %s111, %s113
      %p120 = scmp.eq.s32.totalorder %s40, 1
      %p121 = por %p119, %p120
      %p122 = scmp.ne.s32.totalorder %s113, %s114
      %p123 = scmp.eq.s32.totalorder %s40, 0
      %p124 = por %p122, %p123
      %p125 = scmp.ne.s32.totalorder %s113, %s114
      %p126 = scmp.eq.s32.totalorder %s41, 1
      %p127 = por %p125, %p126
      %p129 = scmp.ne.s32.totalorder %s114, %s128
      %p130 = scmp.eq.s32.totalorder %s41, 0
      %p131 = por %p129, %p130
      %s133 = sadd.s32 %s132, 1
      %p136 = scmp.eq.s32.totalorder %s35, 1
      %p137 = scmp.ne.s32.totalorder %s132, %s134
      %p138 = scmp.eq.s32.totalorder %s35, 0
      %p139 = por %p137, %p138
      %p140 = scmp.ne.s32.totalorder %s132, %s134
      %p141 = scmp.eq.s32.totalorder %s40, 1
      %p142 = por %p140, %p141
      %p143 = scmp.ne.s32.totalorder %s134, %s135
      %p144 = scmp.eq.s32.totalorder %s40, 0
      %p145 = por %p143, %p144
      %p146 = scmp.ne.s32.totalorder %s134, %s135
      %p147 = scmp.eq.s32.totalorder %s41, 1
      %p148 = por %p146, %p147
      %p150 = scmp.ne.s32.totalorder %s135, %s149
      %p151 = scmp.eq.s32.totalorder %s41, 0
      %p152 = por %p150, %p151
      %s154 = sadd.s32 %s153, 1
      %p157 = scmp.eq.s32.totalorder %s35, 1
      %p158 = scmp.ne.s32.totalorder %s153, %s155
      %p159 = scmp.eq.s32.totalorder %s35, 0
      %p160 = por %p158, %p159
      %p161 = scmp.ne.s32.totalorder %s153, %s155
      %p162 = scmp.eq.s32.totalorder %s40, 1
      %p163 = por %p161, %p162
      %p164 = scmp.ne.s32.totalorder %s155, %s156
      %p165 = scmp.eq.s32.totalorder %s40, 0
      %p166 = por %p164, %p165
      %p167 = scmp.ne.s32.totalorder %s155, %s156
      %p168 = scmp.eq.s32.totalorder %s41, 1
      %p169 = por %p167, %p168
      %p171 = scmp.ne.s32.totalorder %s156, %s170
      %p172 = scmp.eq.s32.totalorder %s41, 0
      %p173 = por %p171, %p172
      %s175 = sadd.s32 %s174, 1
      %p178 = scmp.eq.s32.totalorder %s35, 1
      %p179 = scmp.ne.s32.totalorder %s174, %s176
      %p180 = scmp.eq.s32.totalorder %s35, 0
      %p181 = por %p179, %p180
      %p182 = scmp.ne.s32.totalorder %s174, %s176
      %p183 = scmp.eq.s32.totalorder %s40, 1
      %p184 = por %p182, %p183
      %p185 = scmp.ne.s32.totalorder %s176, %s177
      %p186 = scmp.eq.s32.totalorder %s40, 0
      %p187 = por %p185, %p186
      %p188 = scmp.ne.s32.totalorder %s176, %s177
      %p189 = scmp.eq.s32.totalorder %s41, 1
      %p190 = por %p188, %p189
      %p192 = scmp.ne.s32.totalorder %s177, %s191
      %p193 = scmp.eq.s32.totalorder %s41, 0
      %p194 = por %p192, %p193
      %s196 = sadd.s32 %s195, 1
      %p199 = scmp.eq.s32.totalorder %s35, 1
      %p200 = scmp.ne.s32.totalorder %s195, %s197
      %p201 = scmp.eq.s32.totalorder %s35, 0
      %p202 = por %p200, %p201
      %p203 = scmp.ne.s32.totalorder %s195, %s197
      %p204 = scmp.eq.s32.totalorder %s40, 1
      %p205 = por %p203, %p204
      %p206 = scmp.ne.s32.totalorder %s197, %s198
      %p207 = scmp.eq.s32.totalorder %s40, 0
      %p208 = por %p206, %p207
      %p209 = scmp.ne.s32.totalorder %s197, %s198
      %p210 = scmp.eq.s32.totalorder %s41, 1
      %p211 = por %p209, %p210
      %p213 = scmp.ne.s32.totalorder %s198, %s212
      %p214 = scmp.eq.s32.totalorder %s41, 0
      %p215 = por %p213, %p214
      %s217 = sadd.s32 %s216, 1
      %p220 = scmp.eq.s32.totalorder %s35, 1
      %p221 = scmp.ne.s32.totalorder %s216, %s218
      %p222 = scmp.eq.s32.totalorder %s35, 0
      %p223 = por %p221, %p222
      %p224 = scmp.ne.s32.totalorder %s216, %s218
      %p225 = scmp.eq.s32.totalorder %s40, 1
      %p226 = por %p224, %p225
      %p227 = scmp.ne.s32.totalorder %s218, %s219
      %p228 = scmp.eq.s32.totalorder %s40, 0
      %p229 = por %p227, %p228
      %p230 = scmp.ne.s32.totalorder %s218, %s219
      %p231 = scmp.eq.s32.totalorder %s41, 1
      %p232 = por %p230, %p231
      %p234 = scmp.ne.s32.totalorder %s219, %s233
      %p235 = scmp.eq.s32.totalorder %s41, 0
      %p236 = por %p234, %p235
      %s238 = sadd.s32 %s237, 1
      %p241 = scmp.eq.s32.totalorder %s35, 1
      %p242 = scmp.ne.s32.totalorder %s237, %s239
      %p243 = scmp.eq.s32.totalorder %s35, 0
      %p244 = por %p242, %p243
      %p245 = scmp.ne.s32.totalorder %s237, %s239
      %p246 = scmp.eq.s32.totalorder %s40, 1
      %p247 = por %p245, %p246
      %p248 = scmp.ne.s32.totalorder %s239, %s240
      %p249 = scmp.eq.s32.totalorder %s40, 0
      %p250 = por %p248, %p249
      %p251 = scmp.ne.s32.totalorder %s239, %s240
      %p252 = scmp.eq.s32.totalorder %s41, 1
      %p253 = por %p251, %p252
      %p255 = scmp.ne.s32.totalorder %s240, %s254
      %p256 = scmp.eq.s32.totalorder %s41, 0
      %p257 = por %p255, %p256
      %s259 = sadd.s32 %s258, 1
      %p262 = scmp.eq.s32.totalorder %s35, 1
      %p263 = scmp.ne.s32.totalorder %s258, %s260
      %p264 = scmp.eq.s32.totalorder %s35, 0
      %p265 = por %p263, %p264
      %p266 = scmp.ne.s32.totalorder %s258, %s260
      %p267 = scmp.eq.s32.totalorder %s40, 1
      %p268 = por %p266, %p267
      %p269 = scmp.ne.s32.totalorder %s260, %s261
      %p270 = scmp.eq.s32.totalorder %s40, 0
      %p271 = por %p269, %p270
      %p272 = scmp.ne.s32.totalorder %s260, %s261
      %p273 = scmp.eq.s32.totalorder %s41, 1
      %p274 = por %p272, %p273
      %p276 = scmp.ne.s32.totalorder %s261, %s275
      %p277 = scmp.eq.s32.totalorder %s41, 0
      %p278 = por %p276, %p277
      %s280 = sadd.s32 %s279, 1
      %p283 = scmp.eq.s32.totalorder %s35, 1
      %p284 = scmp.ne.s32.totalorder %s279, %s281
      %p285 = scmp.eq.s32.totalorder %s35, 0
      %p286 = por %p284, %p285
      %p287 = scmp.ne.s32.totalorder %s279, %s281
      %p288 = scmp.eq.s32.totalorder %s40, 1
      %p289 = por %p287, %p288
      %p290 = scmp.ne.s32.totalorder %s281, %s282
      %p291 = scmp.eq.s32.totalorder %s40, 0
      %p292 = por %p290, %p291
      %p293 = scmp.ne.s32.totalorder %s281, %s282
      %p294 = scmp.eq.s32.totalorder %s41, 1
      %p295 = por %p293, %p294
      %p297 = scmp.ne.s32.totalorder %s282, %s296
      %p298 = scmp.eq.s32.totalorder %s41, 0
      %p299 = por %p297, %p298
      %s301 = sadd.s32 %s300, 1
      %p304 = scmp.eq.s32.totalorder %s35, 1
      %p305 = scmp.ne.s32.totalorder %s300, %s302
      %p306 = scmp.eq.s32.totalorder %s35, 0
      %p307 = por %p305, %p306
      %p308 = scmp.ne.s32.totalorder %s300, %s302
      %p309 = scmp.eq.s32.totalorder %s40, 1
      %p310 = por %p308, %p309
      %p311 = scmp.ne.s32.totalorder %s302, %s303
      %p312 = scmp.eq.s32.totalorder %s40, 0
      %p313 = por %p311, %p312
      %p314 = scmp.ne.s32.totalorder %s302, %s303
      %p315 = scmp.eq.s32.totalorder %s41, 1
      %p316 = por %p314, %p315
      %p318 = scmp.ne.s32.totalorder %s303, %s317
      %p319 = scmp.eq.s32.totalorder %s41, 0
      %p320 = por %p318, %p319
      %s322 = sadd.s32 %s321, 1
      %p325 = scmp.eq.s32.totalorder %s35, 1
      %p326 = scmp.ne.s32.totalorder %s321, %s323
      %p327 = scmp.eq.s32.totalorder %s35, 0
      %p328 = por %p326, %p327
      %p329 = scmp.ne.s32.totalorder %s321, %s323
      %p330 = scmp.eq.s32.totalorder %s40, 1
      %p331 = por %p329, %p330
      %p332 = scmp.ne.s32.totalorder %s323, %s324
      %p333 = scmp.eq.s32.totalorder %s40, 0
      %p334 = por %p332, %p333
      %p335 = scmp.ne.s32.totalorder %s323, %s324
      %p336 = scmp.eq.s32.totalorder %s41, 1
      %p337 = por %p335, %p336
      %p339 = scmp.ne.s32.totalorder %s324, %s338
      %p340 = scmp.eq.s32.totalorder %s41, 0
      %p341 = por %p339, %p340
      %s343 = sadd.s32 %s342, 1
      %p346 = scmp.eq.s32.totalorder %s35, 1
      %p347 = scmp.ne.s32.totalorder %s342, %s344
      %p348 = scmp.eq.s32.totalorder %s35, 0
      %p349 = por %p347, %p348
      %p350 = scmp.ne.s32.totalorder %s342, %s344
      %p351 = scmp.eq.s32.totalorder %s40, 1
      %p352 = por %p350, %p351
      %p353 = scmp.ne.s32.totalorder %s344, %s345
      %p354 = scmp.eq.s32.totalorder %s40, 0
      %p355 = por %p353, %p354
      %p356 = scmp.ne.s32.totalorder %s344, %s345
      %p357 = scmp.eq.s32.totalorder %s41, 1
      %p358 = por %p356, %p357
      %p360 = scmp.ne.s32.totalorder %s345, %s359
      %p361 = scmp.eq.s32.totalorder %s41, 0
      %p362 = por %p360, %p361
      %s364 = sadd.s32 %s363, 1
      %p367 = scmp.eq.s32.totalorder %s35, 1
      %p368 = scmp.ne.s32.totalorder %s363, %s365
      %p369 = scmp.eq.s32.totalorder %s35, 0
      %p370 = por %p368, %p369
      %p371 = scmp.ne.s32.totalorder %s363, %s365
      %p372 = scmp.eq.s32.totalorder %s40, 1
      %p373 = por %p371, %p372
      %p374 = scmp.ne.s32.totalorder %s365, %s366
      %p375 = scmp.eq.s32.totalorder %s40, 0
      %p376 = por %p374, %p375
      %p377 = scmp.ne.s32.totalorder %s365, %s366
      %p378 = scmp.eq.s32.totalorder %s41, 1
      %p379 = por %p377, %p378
      %p381 = scmp.ne.s32.totalorder %s366, %s380
      %p382 = scmp.eq.s32.totalorder %s41, 0
      %p383 = por %p381, %p382
      %s385 = sadd.s32 %s384, 1
      %p388 = scmp.eq.s32.totalorder %s35, 1
      %p389 = scmp.ne.s32.totalorder %s384, %s386
      %p390 = scmp.eq.s32.totalorder %s35, 0
      %p391 = por %p389, %p390
      %p392 = scmp.ne.s32.totalorder %s384, %s386
      %p393 = scmp.eq.s32.totalorder %s40, 1
      %p394 = por %p392, %p393
      %p395 = scmp.ne.s32.totalorder %s386, %s387
      %p396 = scmp.eq.s32.totalorder %s40, 0
      %p397 = por %p395, %p396
      %p398 = scmp.ne.s32.totalorder %s386, %s387
      %p399 = scmp.eq.s32.totalorder %s41, 1
      %p400 = por %p398, %p399
      %p402 = scmp.ne.s32.totalorder %s387, %s401
      %p403 = scmp.eq.s32.totalorder %s41, 0
      %p404 = por %p402, %p403
      %s406 = sadd.s32 %s405, 1
      %p409 = scmp.eq.s32.totalorder %s35, 1
      %p410 = scmp.ne.s32.totalorder %s405, %s407
      %p411 = scmp.eq.s32.totalorder %s35, 0
      %p412 = por %p410, %p411
      %p413 = scmp.ne.s32.totalorder %s405, %s407
      %p414 = scmp.eq.s32.totalorder %s40, 1
      %p415 = por %p413, %p414
      %p416 = scmp.ne.s32.totalorder %s407, %s408
      %p417 = scmp.eq.s32.totalorder %s40, 0
      %p418 = por %p416, %p417
      %p419 = scmp.ne.s32.totalorder %s407, %s408
      %p420 = scmp.eq.s32.totalorder %s41, 1
      %p421 = por %p419, %p420
      %p423 = scmp.ne.s32.totalorder %s408, %s422
      %p424 = scmp.eq.s32.totalorder %s41, 0
      %p425 = por %p423, %p424
      %s427 = sadd.s32 %s426, 1
      %p430 = scmp.eq.s32.totalorder %s35, 1
      %p431 = scmp.ne.s32.totalorder %s426, %s428
      %p432 = scmp.eq.s32.totalorder %s35, 0
      %p433 = por %p431, %p432
      %p434 = scmp.ne.s32.totalorder %s426, %s428
      %p435 = scmp.eq.s32.totalorder %s40, 1
      %p436 = por %p434, %p435
      %p437 = scmp.ne.s32.totalorder %s428, %s429
      %p438 = scmp.eq.s32.totalorder %s40, 0
      %p439 = por %p437, %p438
      %p440 = scmp.ne.s32.totalorder %s428, %s429
      %p441 = scmp.eq.s32.totalorder %s41, 1
      %p442 = por %p440, %p441
      %p444 = scmp.ne.s32.totalorder %s429, %s443
      %p445 = scmp.eq.s32.totalorder %s41, 0
      %p446 = por %p444, %p445
      %s447 = ssub.s32 %s35, %s42
      %p448 = scmp.eq.s32.totalorder %s447, 0
      %s450 = sadd.s32 %s449, 1
      %s451 = scalar_select %p448, %s449, %s450
      %p454 = pneg %p448
      %p455 = scmp.eq.s32.totalorder %s35, 1
      %p456 = por %p454, %p455
      %p457 = scmp.ne.s32.totalorder %s449, %s452
      %p458 = scmp.eq.s32.totalorder %s35, 0
      %p459 = por %p457, %p458
      %p460 = scmp.ne.s32.totalorder %s449, %s452
      %p461 = scmp.eq.s32.totalorder %s40, 1
      %p462 = por %p460, %p461
      %p463 = scmp.ne.s32.totalorder %s452, %s453
      %p464 = scmp.eq.s32.totalorder %s40, 0
      %p465 = por %p463, %p464
      %p466 = scmp.ne.s32.totalorder %s452, %s453
      %p467 = scmp.eq.s32.totalorder %s41, 1
      %p468 = por %p466, %p467
      %p470 = scmp.ne.s32.totalorder %s453, %s469
      %p471 = scmp.eq.s32.totalorder %s41, 0
      %p472 = por %p470, %p471
      %p473 = scmp.le.s32.totalorder 1, %s35
      %p474 = scmp.lt.s32.totalorder %s35, 3
      %p475 = pnand %p473, %p474
      %p476 = pneg %p475
      // Predicated region
      $region9: #{tpu_custom_call.1} parent=5 // pred_check
        _
      $region10: #{tpu_custom_call.1} parent=5 // pred_check_branch
        %478 = sbr.rel (%p475) target = $region12
      $region11: #{tpu_custom_call.1} parent=5 // pred_region
        %s479 = ssub.s32 %s35, 1
        // Predicated region
        $region13: #{tpu_custom_call.1} parent=11 // pred_check
          %p480 = pneg %p82
        $region14: #{tpu_custom_call.1} parent=11 // pred_check_branch
          %482 = sbr.rel (%p480) target = $region16
        $region15: #{tpu_custom_call.1} parent=11 // pred_region
          %s484 = ssub.s32 16, 16
          %485 = vsyncadd [#allocation3], %s484
          %s487 = sshll.u32 [#allocation2], 4
          %s488 = int_to_ptr.vmem [resolvable:$true] %s487
          %490 = dma.hbm_to_vmem [thread:$0]  %s1, 16, %s488, [#allocation3]
        $region16: #{tpu_custom_call.1} parent=11 // pred_fallthru
          _
        // Predicated region
        $region17: #{tpu_custom_call.1} parent=11 // pred_check
          %p491 = pneg %p103
        $region18: #{tpu_custom_call.1} parent=11 // pred_check_branch
          %493 = sbr.rel (%p491) target = $region20
        $region19: #{tpu_custom_call.1} parent=11 // pred_region
          %s495 = ssub.s32 16, 16
          %496 = vsyncadd [#allocation6], %s495
          %s498 = sshll.u32 [#allocation5], 4
          %s499 = int_to_ptr.vmem [resolvable:$true] %s498
          %501 = dma.hbm_to_vmem [thread:$0]  %s2, 16, %s499, [#allocation6]
        $region20: #{tpu_custom_call.1} parent=11 // pred_fallthru
          _
        // Predicated region
        $region21: #{tpu_custom_call.1} parent=11 // pred_check
          %p502 = pneg %p124
        $region22: #{tpu_custom_call.1} parent=11 // pred_check_branch
          %504 = sbr.rel (%p502) target = $region24
        $region23: #{tpu_custom_call.1} parent=11 // pred_region
          _
        $region24: #{tpu_custom_call.1} parent=11 // pred_fallthru
          _
        // Predicated region
        $region25: #{tpu_custom_call.1} parent=11 // pred_check
          %p505 = pneg %p145
        $region26: #{tpu_custom_call.1} parent=11 // pred_check_branch
          %507 = sbr.rel (%p505) target = $region28
        $region27: #{tpu_custom_call.1} parent=11 // pred_region
          %s509 = ssub.s32 16, 16
          %510 = vsyncadd [#allocation6], %s509
          %s512 = sshll.u32 [#allocation7], 4
          %s513 = int_to_ptr.vmem [resolvable:$true] %s512
          %515 = dma.hbm_to_vmem [thread:$0]  %s4, 16, %s513, [#allocation6]
        $region28: #{tpu_custom_call.1} parent=11 // pred_fallthru
          _
        // Predicated region
        $region29: #{tpu_custom_call.1} parent=11 // pred_check
          %p516 = pneg %p166
        $region30: #{tpu_custom_call.1} parent=11 // pred_check_branch
          %518 = sbr.rel (%p516) target = $region32
        $region31: #{tpu_custom_call.1} parent=11 // pred_region
          _
        $region32: #{tpu_custom_call.1} parent=11 // pred_fallthru
          _
        // Predicated region
        $region33: #{tpu_custom_call.1} parent=11 // pred_check
          %p519 = pneg %p187
        $region34: #{tpu_custom_call.1} parent=11 // pred_check_branch
          %521 = sbr.rel (%p519) target = $region36
        $region35: #{tpu_custom_call.1} parent=11 // pred_region
          %s523 = ssub.s32 16, 16
          %524 = vsyncadd [#allocation9], %s523
          %s526 = sshll.u32 [#allocation8], 4
          %s527 = int_to_ptr.vmem [resolvable:$true] %s526
          %529 = dma.hbm_to_vmem [thread:$0]  %s6, 16, %s527, [#allocation9]
        $region36: #{tpu_custom_call.1} parent=11 // pred_fallthru
          _
        // Predicated region
        $region37: #{tpu_custom_call.1} parent=11 // pred_check
          %p530 = pneg %p208
        $region38: #{tpu_custom_call.1} parent=11 // pred_check_branch
          %532 = sbr.rel (%p530) target = $region40
        $region39: #{tpu_custom_call.1} parent=11 // pred_region
          %s534 = ssub.s32 16, 16
          %535 = vsyncadd [#allocation9], %s534
          %s537 = sshll.u32 [#allocation10], 4
          %s538 = int_to_ptr.vmem [resolvable:$true] %s537
          %540 = dma.hbm_to_vmem [thread:$0]  %s7, 16, %s538, [#allocation9]
        $region40: #{tpu_custom_call.1} parent=11 // pred_fallthru
          _
        // Predicated region
        $region41: #{tpu_custom_call.1} parent=11 // pred_check
          %p541 = pneg %p229
        $region42: #{tpu_custom_call.1} parent=11 // pred_check_branch
          %543 = sbr.rel (%p541) target = $region44
        $region43: #{tpu_custom_call.1} parent=11 // pred_region
          %s545 = ssub.s32 16, 16
          %546 = vsyncadd [#allocation12], %s545
          %s548 = sshll.u32 [#allocation11], 4
          %s549 = int_to_ptr.vmem [resolvable:$true] %s548
          %551 = dma.hbm_to_vmem [thread:$0]  %s8, 16, %s549, [#allocation12]
        $region44: #{tpu_custom_call.1} parent=11 // pred_fallthru
          _
        // Predicated region
        $region45: #{tpu_custom_call.1} parent=11 // pred_check
          %p552 = pneg %p250
        $region46: #{tpu_custom_call.1} parent=11 // pred_check_branch
          %554 = sbr.rel (%p552) target = $region48
        $region47: #{tpu_custom_call.1} parent=11 // pred_region
          _
        $region48: #{tpu_custom_call.1} parent=11 // pred_fallthru
          _
        // Predicated region
        $region49: #{tpu_custom_call.1} parent=11 // pred_check
          %p555 = pneg %p271
        $region50: #{tpu_custom_call.1} parent=11 // pred_check_branch
          %557 = sbr.rel (%p555) target = $region52
        $region51: #{tpu_custom_call.1} parent=11 // pred_region
          %s559 = ssub.s32 16, 16
          %560 = vsyncadd [#allocation12], %s559
          %s562 = sshll.u32 [#allocation13], 4
          %s563 = int_to_ptr.vmem [resolvable:$true] %s562
          %565 = dma.hbm_to_vmem [thread:$0]  %s10, 16, %s563, [#allocation12]
        $region52: #{tpu_custom_call.1} parent=11 // pred_fallthru
          _
        // Predicated region
        $region53: #{tpu_custom_call.1} parent=11 // pred_check
          %p566 = pneg %p292
        $region54: #{tpu_custom_call.1} parent=11 // pred_check_branch
          %568 = sbr.rel (%p566) target = $region56
        $region55: #{tpu_custom_call.1} parent=11 // pred_region
          %s570 = ssub.s32 512, 512
          %571 = vsyncadd [#allocation15], %s570
          %s572 = sshll.u32 [#allocation14], 4
          %s573 = int_to_ptr.vmem [resolvable:$true] %s572
          %578 = dma.hbm_to_vmem [thread:$0]  %s11, 512, %s573, [#allocation15], 128, 128, 8
        $region56: #{tpu_custom_call.1} parent=11 // pred_fallthru
          _
        // Predicated region
        $region57: #{tpu_custom_call.1} parent=11 // pred_check
          %p579 = pneg %p313
        $region58: #{tpu_custom_call.1} parent=11 // pred_check_branch
          %581 = sbr.rel (%p579) target = $region60
        $region59: #{tpu_custom_call.1} parent=11 // pred_region
          %s583 = ssub.s32 16, 16
          %584 = vsyncadd [#allocation15], %s583
          %s586 = sshll.u32 [#allocation16], 4
          %s587 = int_to_ptr.vmem [resolvable:$true] %s586
          %589 = dma.hbm_to_vmem [thread:$0]  %s12, 16, %s587, [#allocation15]
        $region60: #{tpu_custom_call.1} parent=11 // pred_fallthru
          _
        // Predicated region
        $region61: #{tpu_custom_call.1} parent=11 // pred_check
          %p590 = pneg %p334
        $region62: #{tpu_custom_call.1} parent=11 // pred_check_branch
          %592 = sbr.rel (%p590) target = $region64
        $region63: #{tpu_custom_call.1} parent=11 // pred_region
          %s594 = ssub.s32 16, 16
          %595 = vsyncadd [#allocation18], %s594
          %s597 = sshll.u32 [#allocation17], 4
          %s598 = int_to_ptr.vmem [resolvable:$true] %s597
          %600 = dma.hbm_to_vmem [thread:$0]  %s13, 16, %s598, [#allocation18]
        $region64: #{tpu_custom_call.1} parent=11 // pred_fallthru
          _
        // Predicated region
        $region65: #{tpu_custom_call.1} parent=11 // pred_check
          %p601 = pneg %p355
        $region66: #{tpu_custom_call.1} parent=11 // pred_check_branch
          %603 = sbr.rel (%p601) target = $region68
        $region67: #{tpu_custom_call.1} parent=11 // pred_region
          %s605 = ssub.s32 16, 16
          %606 = vsyncadd [#allocation18], %s605
          %s608 = sshll.u32 [#allocation19], 4
          %s609 = int_to_ptr.vmem [resolvable:$true] %s608
          %611 = dma.hbm_to_vmem [thread:$0]  %s14, 16, %s609, [#allocation18]
        $region68: #{tpu_custom_call.1} parent=11 // pred_fallthru
          _
        // Predicated region
        $region69: #{tpu_custom_call.1} parent=11 // pred_check
          %p612 = pneg %p376
        $region70: #{tpu_custom_call.1} parent=11 // pred_check_branch
          %614 = sbr.rel (%p612) target = $region72
        $region71: #{tpu_custom_call.1} parent=11 // pred_region
          %s616 = ssub.s32 512, 512
          %617 = vsyncadd [#allocation21], %s616
          %s618 = sshll.u32 [#allocation20], 4
          %s619 = int_to_ptr.vmem [resolvable:$true] %s618
          %624 = dma.hbm_to_vmem [thread:$0]  %s15, 512, %s619, [#allocation21], 128, 128, 8
        $region72: #{tpu_custom_call.1} parent=11 // pred_fallthru
          _
        // Predicated region
        $region73: #{tpu_custom_call.1} parent=11 // pred_check
          %p625 = pneg %p397
        $region74: #{tpu_custom_call.1} parent=11 // pred_check_branch
          %627 = sbr.rel (%p625) target = $region76
        $region75: #{tpu_custom_call.1} parent=11 // pred_region
          %s629 = ssub.s32 16, 16
          %630 = vsyncadd [#allocation21], %s629
          %s632 = sshll.u32 [#allocation22], 4
          %s633 = int_to_ptr.vmem [resolvable:$true] %s632
          %635 = dma.hbm_to_vmem [thread:$0]  %s16, 16, %s633, [#allocation21]
        $region76: #{tpu_custom_call.1} parent=11 // pred_fallthru
          _
        // Predicated region
        $region77: #{tpu_custom_call.1} parent=11 // pred_check
          %p636 = pneg %p418
        $region78: #{tpu_custom_call.1} parent=11 // pred_check_branch
          %638 = sbr.rel (%p636) target = $region80
        $region79: #{tpu_custom_call.1} parent=11 // pred_region
          _
        $region80: #{tpu_custom_call.1} parent=11 // pred_fallthru
          _
        // Predicated region
        $region81: #{tpu_custom_call.1} parent=11 // pred_check
          %p639 = pneg %p439
        $region82: #{tpu_custom_call.1} parent=11 // pred_check_branch
          %641 = sbr.rel (%p639) target = $region84
        $region83: #{tpu_custom_call.1} parent=11 // pred_region
          _
        $region84: #{tpu_custom_call.1} parent=11 // pred_fallthru
          _
      $region12: #{tpu_custom_call.1} parent=5 // pred_fallthru
        _
      %p642 = scmp.lt.s32.totalorder %s35, 2
      // Predicated region
      $region85: #{tpu_custom_call.1} parent=5 // pred_check
        %p643 = pneg %p642
      $region86: #{tpu_custom_call.1} parent=5 // pred_check_branch
        %645 = sbr.rel (%p643) target = $region88
      $region87: #{tpu_custom_call.1} parent=5 // pred_region
        // Predicated region
        $region89: #{tpu_custom_call.1} parent=87 // pred_check
          %p646 = pneg %p55
        $region90: #{tpu_custom_call.1} parent=87 // pred_check_branch
          %648 = sbr.rel (%p646) target = $region92
        $region91: #{tpu_custom_call.1} parent=87 // pred_region
          %s649 = smul.u32 2, %s35
          %p650 = scmp.lt.s32.totalorder %s649, 3
          %s651 = scalar_select %p650, %s649, 3
          %s652 = smul.addr %s651, 8
          %s653 = scalar_lea.vmem %s0, %s652
          %s654 = smul.u32 2, %s35
        $region92: #{tpu_custom_call.1} parent=87 // pred_fallthru
          _
      $region88: #{tpu_custom_call.1} parent=5 // pred_fallthru
        _
      %p655 = scmp.le.s32.totalorder 1, %s35
      %p656 = scmp.lt.s32.totalorder %s35, 3
      %p657 = pnand %p655, %p656
      %p658 = pneg %p657
      // Predicated region
      $region93: #{tpu_custom_call.1} parent=5 // pred_check
        _
      $region94: #{tpu_custom_call.1} parent=5 // pred_check_branch
        %660 = sbr.rel (%p657) target = $region96
      $region95: #{tpu_custom_call.1} parent=5 // pred_region
        %s661 = ssub.s32 %s35, 1
        // Predicated region
        $region97: #{tpu_custom_call.1} parent=95 // pred_check
          %p662 = pneg %p82
        $region98: #{tpu_custom_call.1} parent=95 // pred_check_branch
          %664 = sbr.rel (%p662) target = $region100
        $region99: #{tpu_custom_call.1} parent=95 // pred_region
          %665 = dma.done [#allocation3], 16
        $region100: #{tpu_custom_call.1} parent=95 // pred_fallthru
          _
        // Predicated region
        $region101: #{tpu_custom_call.1} parent=95 // pred_check
          %p666 = pneg %p103
        $region102: #{tpu_custom_call.1} parent=95 // pred_check_branch
          %668 = sbr.rel (%p666) target = $region104
        $region103: #{tpu_custom_call.1} parent=95 // pred_region
          %669 = dma.done [#allocation6], 16
        $region104: #{tpu_custom_call.1} parent=95 // pred_fallthru
          _
        // Predicated region
        $region105: #{tpu_custom_call.1} parent=95 // pred_check
          %p670 = pneg %p145
        $region106: #{tpu_custom_call.1} parent=95 // pred_check_branch
          %672 = sbr.rel (%p670) target = $region108
        $region107: #{tpu_custom_call.1} parent=95 // pred_region
          %673 = dma.done [#allocation6], 16
        $region108: #{tpu_custom_call.1} parent=95 // pred_fallthru
          _
        // Predicated region
        $region109: #{tpu_custom_call.1} parent=95 // pred_check
          %p674 = pneg %p187
        $region110: #{tpu_custom_call.1} parent=95 // pred_check_branch
          %676 = sbr.rel (%p674) target = $region112
        $region111: #{tpu_custom_call.1} parent=95 // pred_region
          %677 = dma.done [#allocation9], 16
        $region112: #{tpu_custom_call.1} parent=95 // pred_fallthru
          _
        // Predicated region
        $region113: #{tpu_custom_call.1} parent=95 // pred_check
          %p678 = pneg %p208
        $region114: #{tpu_custom_call.1} parent=95 // pred_check_branch
          %680 = sbr.rel (%p678) target = $region116
        $region115: #{tpu_custom_call.1} parent=95 // pred_region
          %681 = dma.done [#allocation9], 16
        $region116: #{tpu_custom_call.1} parent=95 // pred_fallthru
          _
        // Predicated region
        $region117: #{tpu_custom_call.1} parent=95 // pred_check
          %p682 = pneg %p229
        $region118: #{tpu_custom_call.1} parent=95 // pred_check_branch
          %684 = sbr.rel (%p682) target = $region120
        $region119: #{tpu_custom_call.1} parent=95 // pred_region
          %685 = dma.done [#allocation12], 16
        $region120: #{tpu_custom_call.1} parent=95 // pred_fallthru
          _
        // Predicated region
        $region121: #{tpu_custom_call.1} parent=95 // pred_check
          %p686 = pneg %p271
        $region122: #{tpu_custom_call.1} parent=95 // pred_check_branch
          %688 = sbr.rel (%p686) target = $region124
        $region123: #{tpu_custom_call.1} parent=95 // pred_region
          %689 = dma.done [#allocation12], 16
        $region124: #{tpu_custom_call.1} parent=95 // pred_fallthru
          _
        // Predicated region
        $region125: #{tpu_custom_call.1} parent=95 // pred_check
          %p690 = pneg %p292
        $region126: #{tpu_custom_call.1} parent=95 // pred_check_branch
          %692 = sbr.rel (%p690) target = $region128
        $region127: #{tpu_custom_call.1} parent=95 // pred_region
          %693 = dma.done [#allocation15], 512
        $region128: #{tpu_custom_call.1} parent=95 // pred_fallthru
          _
        // Predicated region
        $region129: #{tpu_custom_call.1} parent=95 // pred_check
          %p694 = pneg %p313
        $region130: #{tpu_custom_call.1} parent=95 // pred_check_branch
          %696 = sbr.rel (%p694) target = $region132
        $region131: #{tpu_custom_call.1} parent=95 // pred_region
          %697 = dma.done [#allocation15], 16
        $region132: #{tpu_custom_call.1} parent=95 // pred_fallthru
          _
        // Predicated region
        $region133: #{tpu_custom_call.1} parent=95 // pred_check
          %p698 = pneg %p334
        $region134: #{tpu_custom_call.1} parent=95 // pred_check_branch
          %700 = sbr.rel (%p698) target = $region136
        $region135: #{tpu_custom_call.1} parent=95 // pred_region
          %701 = dma.done [#allocation18], 16
        $region136: #{tpu_custom_call.1} parent=95 // pred_fallthru
          _
        // Predicated region
        $region137: #{tpu_custom_call.1} parent=95 // pred_check
          %p702 = pneg %p355
        $region138: #{tpu_custom_call.1} parent=95 // pred_check_branch
          %704 = sbr.rel (%p702) target = $region140
        $region139: #{tpu_custom_call.1} parent=95 // pred_region
          %705 = dma.done [#allocation18], 16
        $region140: #{tpu_custom_call.1} parent=95 // pred_fallthru
          _
        // Predicated region
        $region141: #{tpu_custom_call.1} parent=95 // pred_check
          %p706 = pneg %p376
        $region142: #{tpu_custom_call.1} parent=95 // pred_check_branch
          %708 = sbr.rel (%p706) target = $region144
        $region143: #{tpu_custom_call.1} parent=95 // pred_region
          %709 = dma.done [#allocation21], 512
        $region144: #{tpu_custom_call.1} parent=95 // pred_fallthru
          _
        // Predicated region
        $region145: #{tpu_custom_call.1} parent=95 // pred_check
          %p710 = pneg %p397
        $region146: #{tpu_custom_call.1} parent=95 // pred_check_branch
          %712 = sbr.rel (%p710) target = $region148
        $region147: #{tpu_custom_call.1} parent=95 // pred_region
          %713 = dma.done [#allocation21], 16
        $region148: #{tpu_custom_call.1} parent=95 // pred_fallthru
          _
        %s714 = smul.u32 2, %s40
        %p715 = scmp.lt.s32.totalorder %s714, 3
        %s716 = scalar_select %p715, %s714, 3
        %s717 = smul.addr %s716, 8
        %s718 = scalar_lea.vmem %s0, %s717
        %p719 = pneg %p61
        %p720 = pneg %p58
        %p721 = pneg %p82
        %p722 = pneg %p79
        %p723 = pneg %p103
        %p724 = pneg %p100
        %p725 = pneg %p124
        %p726 = pneg %p121
        %p727 = pneg %p145
        %p728 = pneg %p142
        %p729 = pneg %p166
        %p730 = pneg %p163
        %p731 = pneg %p187
        %p732 = pneg %p184
        %p733 = pneg %p208
        %p734 = pneg %p205
        %p735 = pneg %p229
        %p736 = pneg %p226
        %p737 = pneg %p250
        %p738 = pneg %p247
        %p739 = pneg %p271
        %p740 = pneg %p268
        %p741 = pneg %p292
        %p742 = pneg %p289
        %p743 = pneg %p313
        %p744 = pneg %p310
        %p745 = pneg %p334
        %p746 = pneg %p331
        %p747 = pneg %p355
        %p748 = pneg %p352
        %p749 = pneg %p376
        %p750 = pneg %p373
        %p751 = pneg %p397
        %p752 = pneg %p394
        %p753 = pneg %p418
        %p754 = pneg %p415
        %p755 = pneg %p439
        %p756 = pneg %p436
        %p757 = pneg %p465
        %p758 = pneg %p462
        %s759 = sand.u32 %s452, 1
        %s760 = scalar_lea.sflag [#allocation4], %s759
        %s761 = sand.u32 %s452, 1
        %s762 = smul.addr %s761, 16
        %s763 = scalar_lea.vmem [#allocation23], %s762
        %s764 = smul.u32 2, %s40
        %p765 = scmp.lt.s32.totalorder %s764, 3
        %s766 = scalar_select %p765, %s764, 3
        %s767 = smul.addr %s766, 8
        %s768 = scalar_lea.vmem %s0, %s767
        %s769 = smul.u32 2, %s40
        %s770 = smul.u32 2, %s40
        %v771 = vld [vmem:[%s768] sm:$0xff]
        %v772 = vld [vmem:[%s768 + $0x8] sm:$0xff]
        %v773 = vld [vmem:[#allocation2] sm:$0x1]
        %v774 = vld [vmem:[#allocation5] sm:$0x1]
        %vm775 = vcmask 261120
        %v776 = vsel %vm775, %v771, 0.0
        %777 = vadd.xlane.f32.xlu0 %v776
        %v778 = vpop.xlane.xlu0 %777
        %v779 = vsel %vm775, %v772, 0.0
        %780 = vadd.xlane.f32.xlu0 %v779
        %v781 = vpop.xlane.xlu0 %780
        %v782 = vrcp.pop 32.0
        %v783 = vmul.f32 %v778, %v782
        %v784 = vmul.f32 %v781, %v782
        %v785 = vsub.f32 %v771, %v783
        %v786 = vsub.f32 %v772, %v784
        %v787 = vmul.f32 %v785, %v785
        %v788 = vmul.f32 %v786, %v786
        %v789 = vsel %vm775, %v787, 0.0
        %790 = vadd.xlane.f32.xlu0 %v789
        %v791 = vpop.xlane.xlu0 %790
        %v792 = vsel %vm775, %v788, 0.0
        %793 = vadd.xlane.f32.xlu0 %v792
        %v794 = vpop.xlane.xlu0 %793
        %v795 = vmul.f32 %v791, %v782
        %v796 = vmul.f32 %v794, %v782
        %v797 = vadd.f32 %v795, 1e-05
        %v798 = vadd.f32 %v796, 1e-05
        %v799 = vrsqrt.pop %v797
        %v800 = vrsqrt.pop %v798
        %v801 = vmul.f32 %v785, %v799
        %v802 = vmul.f32 %v786, %v800
        %v804 = vlaneseq
        %v805 = vshrl.u32 %v804, 7
        %v806 = vsub.s32 0, %v805
        %v807 = vrot.slane %v773, %v806
        %v809 = vmul.f32 %v801, %v807
        %v810 = vmul.f32 %v802, %v807
        %v812 = vlaneseq
        %v813 = vshrl.u32 %v812, 7
        %v814 = vsub.s32 0, %v813
        %v815 = vrot.slane %v774, %v814
        %v817 = vadd.f32 %v809, %v815
        %v818 = vadd.f32 %v810, %v815
        %v819 = vld [vmem:[%s3] sm:$0xff]
        %v820 = vld [vmem:[%s3 + $0x8] sm:$0xff]
        %v821 = vld [vmem:[%s3 + $0x10] sm:$0xff]
        %v822 = vld [vmem:[%s3 + $0x18] sm:$0xff]
        %v823 = vld [vmem:[#allocation7] sm:$0x1]
        %v824 = vld [vmem:[%s5] sm:$0xff]
        %v825 = vld [vmem:[%s5 + $0x8] sm:$0xff]
        %v826 = vld [vmem:[%s5 + $0x10] sm:$0xff]
        %v827 = vld [vmem:[%s5 + $0x18] sm:$0xff]
        %v828 = vld [vmem:[#allocation8] sm:$0x1]
        %v830 = vlaneseq
        %v831 = vshrl.u32 %v830, 7
        %v832 = vsub.s32 0, %v831
        %v833 = vrot.slane %v823, %v832
        %v836 = vsel %vm775, %v817, 0
        %v839 = vsel %vm775, %v818, 0
        %841 = vmatprep.subr.mxu0 0.0
        %842 = vmatpush1.msra.mxu0 %v819
        %843 = vmatprep.subr.mxu0 0.0
        %844 = vmatpush1.msra.mxu0 %v820
        %845 = vmatprep.subr.mxu0 0.0
        %846 = vmatpush1.msra.mxu0 %v821
        %847 = vmatprep.subr.mxu0 0.0
        %848 = vmatpush1.msra.mxu0 %v822
        %849 = vmatprep.subr.mxu0 0.0
        %850 = vmatpush1.msra.mxu0 0.0
        %851 = vmatprep.subr.mxu0 0.0
        %852 = vmatpush1.msra.mxu0 0.0
        %853 = vmatprep.subr.mxu0 0.0
        %854 = vmatpush1.msra.mxu0 0.0
        %855 = vmatprep.subr.mxu0 0.0
        %856 = vmatpush1.msra.mxu0 0.0
        %857 = vmatprep.subr.mxu0 0.0
        %858 = vmatpush1.msra.mxu0 0.0
        %859 = vmatprep.subr.mxu0 0.0
        %860 = vmatpush1.msra.mxu0 0.0
        %861 = vmatprep.subr.mxu0 0.0
        %862 = vmatpush1.msra.mxu0 0.0
        %863 = vmatprep.subr.mxu0 0.0
        %864 = vmatpush1.msra.mxu0 0.0
        %865 = vmatprep.subr.mxu0 0.0
        %866 = vmatpush1.msra.mxu0 0.0
        %867 = vmatprep.subr.mxu0 0.0
        %868 = vmatpush1.msra.mxu0 0.0
        %869 = vmatprep.subr.mxu0 0.0
        %870 = vmatpush1.msra.mxu0 0.0
        %871 = vmatprep.subr.mxu0 0.0
        %872 = vmatpush1.msra.mxu0 0.0
        %873 = vmatprep.subr.mxu0 0.0
        %874 = vmatpush1.msra.mxu0 0.0
        %875 = vmatprep.subr.mxu0 0.0
        %876 = vmatpush1.msra.mxu0 0.0
        %877 = vmatprep.subr.mxu0 0.0
        %878 = vmatpush1.msra.mxu0 0.0
        %879 = vmatprep.subr.mxu0 0.0
        %880 = vmatpush1.msra.mxu0 0.0
        %881 = vmatprep.subr.mxu0 0.0
        %882 = vmatpush1.msra.mxu0 0.0
        %883 = vmatprep.subr.mxu0 0.0
        %884 = vmatpush1.msra.mxu0 0.0
        %885 = vmatprep.subr.mxu0 0.0
        %886 = vmatpush1.msra.mxu0 0.0
        %887 = vmatprep.subr.mxu0 0.0
        %888 = vmatpush1.msra.mxu0 0.0
        %889 = vmatprep.subr.mxu0 0.0
        %890 = vmatpush1.msra.mxu0 0.0
        %891 = vmatprep.subr.mxu0 0.0
        %892 = vmatpush1.msra.mxu0 0.0
        %893 = vmatprep.subr.mxu0 0.0
        %894 = vmatpush1.msra.mxu0 0.0
        %895 = vmatprep.subr.mxu0 0.0
        %896 = vmatpush1.msra.mxu0 0.0
        %897 = vmatprep.subr.mxu0 0.0
        %898 = vmatpush1.msra.mxu0 0.0
        %899 = vmatprep.subr.mxu0 0.0
        %900 = vmatpush1.msra.mxu0 0.0
        %901 = vmatprep.subr.mxu0 0.0
        %902 = vmatpush1.msra.mxu0 0.0
        %903 = vmatprep.subr.mxu0 0.0
        %904 = vmatpush1.msra.mxu0 0.0
        %905 = vmatprep.mubr.f32.mxu0 0.0
        %906 = vmatmul.mubr.f32.gmra.mrb[0].mxu0 %v836
        %v907 = vpop.f32.mrb[0].mxu0
        %v908 = vadd.f32 %v833, %v907
        %v909 = vpop.f32.mrb[0].mxu0
        %910 = vmatprep.mubr.f32.mxu0 0.0
        %911 = vmatmul.mubr.f32.gmra.mrb[0].mxu0 %v839
        %v912 = vpop.f32.mrb[0].mxu0
        %v913 = vadd.f32 %v833, %v912
        %v914 = vpop.f32.mrb[0].mxu0
        %915 = vdwg.mxu0
        %v916 = vmul.f32 %v908, 0.35355338
        %v917 = vmul.f32 %v913, 0.35355338
        %919 = vrot.lane.b32.xlu0 %v908, 96
        %v920 = vpop.permute.xlu0 %919
        %vm921 = vcmask 64512
        %v923 = vsel %vm921, %v916, 0
        %v925 = vsel %vm921, %v920, 0
        %927 = vmatprep.subr.mxu0 0.0
        %928 = vmatpush1.xpose.msra.mxu0 %v925
        %929 = vmatprep.subr.mxu0 0.0
        %930 = vmatpush1.xpose.msra.mxu0 0.0
        %931 = vmatprep.subr.mxu0 0.0
        %932 = vmatpush1.xpose.msra.mxu0 0.0
        %933 = vmatprep.subr.mxu0 0.0
        %934 = vmatpush1.xpose.msra.mxu0 0.0
        %935 = vmatprep.subr.mxu0 0.0
        %936 = vmatpush1.xpose.msra.mxu0 0.0
        %937 = vmatprep.subr.mxu0 0.0
        %938 = vmatpush1.xpose.msra.mxu0 0.0
        %939 = vmatprep.subr.mxu0 0.0
        %940 = vmatpush1.xpose.msra.mxu0 0.0
        %941 = vmatprep.subr.mxu0 0.0
        %942 = vmatpush1.xpose.msra.mxu0 0.0
        %943 = vmatprep.subr.mxu0 0.0
        %944 = vmatpush1.xpose.msra.mxu0 0.0
        %945 = vmatprep.subr.mxu0 0.0
        %946 = vmatpush1.xpose.msra.mxu0 0.0
        %947 = vmatprep.subr.mxu0 0.0
        %948 = vmatpush1.xpose.msra.mxu0 0.0
        %949 = vmatprep.subr.mxu0 0.0
        %950 = vmatpush1.xpose.msra.mxu0 0.0
        %951 = vmatprep.subr.mxu0 0.0
        %952 = vmatpush1.xpose.msra.mxu0 0.0
        %953 = vmatprep.subr.mxu0 0.0
        %954 = vmatpush1.xpose.msra.mxu0 0.0
        %955 = vmatprep.subr.mxu0 0.0
        %956 = vmatpush1.xpose.msra.mxu0 0.0
        %957 = vmatprep.subr.mxu0 0.0
        %958 = vmatpush1.xpose.msra.mxu0 0.0
        %959 = vmatprep.subr.mxu0 0.0
        %960 = vmatpush1.xpose.msra.mxu0 0.0
        %961 = vmatprep.subr.mxu0 0.0
        %962 = vmatpush1.xpose.msra.mxu0 0.0
        %963 = vmatprep.subr.mxu0 0.0
        %964 = vmatpush1.xpose.msra.mxu0 0.0
        %965 = vmatprep.subr.mxu0 0.0
        %966 = vmatpush1.xpose.msra.mxu0 0.0
        %967 = vmatprep.subr.mxu0 0.0
        %968 = vmatpush1.xpose.msra.mxu0 0.0
        %969 = vmatprep.subr.mxu0 0.0
        %970 = vmatpush1.xpose.msra.mxu0 0.0
        %971 = vmatprep.subr.mxu0 0.0
        %972 = vmatpush1.xpose.msra.mxu0 0.0
        %973 = vmatprep.subr.mxu0 0.0
        %974 = vmatpush1.xpose.msra.mxu0 0.0
        %975 = vmatprep.subr.mxu0 0.0
        %976 = vmatpush1.xpose.msra.mxu0 0.0
        %977 = vmatprep.subr.mxu0 0.0
        %978 = vmatpush1.xpose.msra.mxu0 0.0
        %979 = vmatprep.subr.mxu0 0.0
        %980 = vmatpush1.xpose.msra.mxu0 0.0
        %981 = vmatprep.subr.mxu0 0.0
        %982 = vmatpush1.xpose.msra.mxu0 0.0
        %983 = vmatprep.subr.mxu0 0.0
        %984 = vmatpush1.xpose.msra.mxu0 0.0
        %985 = vmatprep.subr.mxu0 0.0
        %986 = vmatpush1.xpose.msra.mxu0 0.0
        %987 = vmatprep.subr.mxu0 0.0
        %988 = vmatpush1.xpose.msra.mxu0 0.0
        %989 = vmatprep.subr.mxu0 0.0
        %990 = vmatpush1.xpose.msra.mxu0 0.0
        %991 = vmatprep.mubr.f32.mxu0 0.0
        %992 = vmatmul.mubr.f32.gmra.mrb[0].mxu0 %v923
        %v993 = vpop.f32.mrb[0].mxu0
        %v994 = vadd.f32 0.0, %v993
        %v995 = vpop.f32.mrb[0].mxu0
        %996 = vdwg.mxu0
        %998 = vrot.lane.b32.xlu0 %v913, 96
        %v999 = vpop.permute.xlu0 %998
        %v1001 = vsel %vm921, %v917, 0
        %v1003 = vsel %vm921, %v999, 0
        %1005 = vmatprep.subr.mxu0 0.0
        %1006 = vmatpush1.xpose.msra.mxu0 %v1003
        %1007 = vmatprep.subr.mxu0 0.0
        %1008 = vmatpush1.xpose.msra.mxu0 0.0
        %1009 = vmatprep.subr.mxu0 0.0
        %1010 = vmatpush1.xpose.msra.mxu0 0.0
        %1011 = vmatprep.subr.mxu0 0.0
        %1012 = vmatpush1.xpose.msra.mxu0 0.0
        %1013 = vmatprep.subr.mxu0 0.0
        %1014 = vmatpush1.xpose.msra.mxu0 0.0
        %1015 = vmatprep.subr.mxu0 0.0
        %1016 = vmatpush1.xpose.msra.mxu0 0.0
        %1017 = vmatprep.subr.mxu0 0.0
        %1018 = vmatpush1.xpose.msra.mxu0 0.0
        %1019 = vmatprep.subr.mxu0 0.0
        %1020 = vmatpush1.xpose.msra.mxu0 0.0
        %1021 = vmatprep.subr.mxu0 0.0
        %1022 = vmatpush1.xpose.msra.mxu0 0.0
        %1023 = vmatprep.subr.mxu0 0.0
        %1024 = vmatpush1.xpose.msra.mxu0 0.0
        %1025 = vmatprep.subr.mxu0 0.0
        %1026 = vmatpush1.xpose.msra.mxu0 0.0
        %1027 = vmatprep.subr.mxu0 0.0
        %1028 = vmatpush1.xpose.msra.mxu0 0.0
        %1029 = vmatprep.subr.mxu0 0.0
        %1030 = vmatpush1.xpose.msra.mxu0 0.0
        %1031 = vmatprep.subr.mxu0 0.0
        %1032 = vmatpush1.xpose.msra.mxu0 0.0
        %1033 = vmatprep.subr.mxu0 0.0
        %1034 = vmatpush1.xpose.msra.mxu0 0.0
        %1035 = vmatprep.subr.mxu0 0.0
        %1036 = vmatpush1.xpose.msra.mxu0 0.0
        %1037 = vmatprep.subr.mxu0 0.0
        %1038 = vmatpush1.xpose.msra.mxu0 0.0
        %1039 = vmatprep.subr.mxu0 0.0
        %1040 = vmatpush1.xpose.msra.mxu0 0.0
        %1041 = vmatprep.subr.mxu0 0.0
        %1042 = vmatpush1.xpose.msra.mxu0 0.0
        %1043 = vmatprep.subr.mxu0 0.0
        %1044 = vmatpush1.xpose.msra.mxu0 0.0
        %1045 = vmatprep.subr.mxu0 0.0
        %1046 = vmatpush1.xpose.msra.mxu0 0.0
        %1047 = vmatprep.subr.mxu0 0.0
        %1048 = vmatpush1.xpose.msra.mxu0 0.0
        %1049 = vmatprep.subr.mxu0 0.0
        %1050 = vmatpush1.xpose.msra.mxu0 0.0
        %1051 = vmatprep.subr.mxu0 0.0
        %1052 = vmatpush1.xpose.msra.mxu0 0.0
        %1053 = vmatprep.subr.mxu0 0.0
        %1054 = vmatpush1.xpose.msra.mxu0 0.0
        %1055 = vmatprep.subr.mxu0 0.0
        %1056 = vmatpush1.xpose.msra.mxu0 0.0
        %1057 = vmatprep.subr.mxu0 0.0
        %1058 = vmatpush1.xpose.msra.mxu0 0.0
        %1059 = vmatprep.subr.mxu0 0.0
        %1060 = vmatpush1.xpose.msra.mxu0 0.0
        %1061 = vmatprep.subr.mxu0 0.0
        %1062 = vmatpush1.xpose.msra.mxu0 0.0
        %1063 = vmatprep.subr.mxu0 0.0
        %1064 = vmatpush1.xpose.msra.mxu0 0.0
        %1065 = vmatprep.subr.mxu0 0.0
        %1066 = vmatpush1.xpose.msra.mxu0 0.0
        %1067 = vmatprep.subr.mxu0 0.0
        %1068 = vmatpush1.xpose.msra.mxu0 0.0
        %1069 = vmatprep.mubr.f32.mxu0 0.0
        %1070 = vmatmul.mubr.f32.gmra.mrb[0].mxu0 %v1001
        %v1071 = vpop.f32.mrb[0].mxu0
        %v1072 = vadd.f32 0.0, %v1071
        %v1073 = vpop.f32.mrb[0].mxu0
        %1074 = vdwg.mxu0
        %v1075 = vsel %vm921, %v994, -inf
        %1076 = vmax.xlane.f32.xlu0 %v1075
        %v1077 = vpop.xlane.xlu0 %1076
        %v1078 = vsel %vm921, %v1072, -inf
        %1079 = vmax.xlane.f32.xlu0 %v1078
        %v1080 = vpop.xlane.xlu0 %1079
        %v1081 = vsub.f32 %v994, %v1077
        %v1082 = vsub.f32 %v1072, %v1080
        %v1083 = vmul.f32 %v1081, 1.442695
        %v1084 = vpow.pop %v1083
        %v1085 = vmul.f32 %v1082, 1.442695
        %v1086 = vpow.pop %v1085
        %v1087 = vsel %vm921, %v1084, 0.0
        %1088 = vadd.xlane.f32.xlu0 %v1087
        %v1089 = vpop.xlane.xlu0 %1088
        %v1090 = vsel %vm921, %v1086, 0.0
        %1091 = vadd.xlane.f32.xlu0 %v1090
        %v1092 = vpop.xlane.xlu0 %1091
        %v1093 = vrcp.pop %v1089
        %v1094 = vrcp.pop %v1092
        %v1095 = vmul.f32 %v1084, %v1093
        %v1096 = vmul.f32 %v1086, %v1094
        %1097 = vrot.lane.b32.xlu0 %v908, 64
        %v1098 = vpop.permute.xlu0 %1097
        %v1101 = vsel %vm921, %v1095, 0
        %1103 = vmatprep.subr.mxu0 0.0
        %1104 = vmatpush1.msra.mxu0 %v1098
        %1105 = vmatprep.subr.mxu0 0.0
        %1106 = vmatpush1.msra.mxu0 0.0
        %1107 = vmatprep.subr.mxu0 0.0
        %1108 = vmatpush1.msra.mxu0 0.0
        %1109 = vmatprep.subr.mxu0 0.0
        %1110 = vmatpush1.msra.mxu0 0.0
        %1111 = vmatprep.subr.mxu0 0.0
        %1112 = vmatpush1.msra.mxu0 0.0
        %1113 = vmatprep.subr.mxu0 0.0
        %1114 = vmatpush1.msra.mxu0 0.0
        %1115 = vmatprep.subr.mxu0 0.0
        %1116 = vmatpush1.msra.mxu0 0.0
        %1117 = vmatprep.subr.mxu0 0.0
        %1118 = vmatpush1.msra.mxu0 0.0
        %1119 = vmatprep.subr.mxu0 0.0
        %1120 = vmatpush1.msra.mxu0 0.0
        %1121 = vmatprep.subr.mxu0 0.0
        %1122 = vmatpush1.msra.mxu0 0.0
        %1123 = vmatprep.subr.mxu0 0.0
        %1124 = vmatpush1.msra.mxu0 0.0
        %1125 = vmatprep.subr.mxu0 0.0
        %1126 = vmatpush1.msra.mxu0 0.0
        %1127 = vmatprep.subr.mxu0 0.0
        %1128 = vmatpush1.msra.mxu0 0.0
        %1129 = vmatprep.subr.mxu0 0.0
        %1130 = vmatpush1.msra.mxu0 0.0
        %1131 = vmatprep.subr.mxu0 0.0
        %1132 = vmatpush1.msra.mxu0 0.0
        %1133 = vmatprep.subr.mxu0 0.0
        %1134 = vmatpush1.msra.mxu0 0.0
        %1135 = vmatprep.subr.mxu0 0.0
        %1136 = vmatpush1.msra.mxu0 0.0
        %1137 = vmatprep.subr.mxu0 0.0
        %1138 = vmatpush1.msra.mxu0 0.0
        %1139 = vmatprep.subr.mxu0 0.0
        %1140 = vmatpush1.msra.mxu0 0.0
        %1141 = vmatprep.subr.mxu0 0.0
        %1142 = vmatpush1.msra.mxu0 0.0
        %1143 = vmatprep.subr.mxu0 0.0
        %1144 = vmatpush1.msra.mxu0 0.0
        %1145 = vmatprep.subr.mxu0 0.0
        %1146 = vmatpush1.msra.mxu0 0.0
        %1147 = vmatprep.subr.mxu0 0.0
        %1148 = vmatpush1.msra.mxu0 0.0
        %1149 = vmatprep.subr.mxu0 0.0
        %1150 = vmatpush1.msra.mxu0 0.0
        %1151 = vmatprep.subr.mxu0 0.0
        %1152 = vmatpush1.msra.mxu0 0.0
        %1153 = vmatprep.subr.mxu0 0.0
        %1154 = vmatpush1.msra.mxu0 0.0
        %1155 = vmatprep.subr.mxu0 0.0
        %1156 = vmatpush1.msra.mxu0 0.0
        %1157 = vmatprep.subr.mxu0 0.0
        %1158 = vmatpush1.msra.mxu0 0.0
        %1159 = vmatprep.subr.mxu0 0.0
        %1160 = vmatpush1.msra.mxu0 0.0
        %1161 = vmatprep.subr.mxu0 0.0
        %1162 = vmatpush1.msra.mxu0 0.0
        %1163 = vmatprep.subr.mxu0 0.0
        %1164 = vmatpush1.msra.mxu0 0.0
        %1165 = vmatprep.subr.mxu0 0.0
        %1166 = vmatpush1.msra.mxu0 0.0
        %1167 = vmatprep.mubr.f32.mxu0 0.0
        %1168 = vmatmul.mubr.f32.gmra.mrb[0].mxu0 %v1101
        %v1169 = vpop.f32.mrb[0].mxu0
        %v1170 = vadd.f32 0.0, %v1169
        %v1171 = vpop.f32.mrb[0].mxu0
        %1172 = vdwg.mxu0
        %1173 = vrot.lane.b32.xlu0 %v913, 64
        %v1174 = vpop.permute.xlu0 %1173
        %v1177 = vsel %vm921, %v1096, 0
        %1179 = vmatprep.subr.mxu0 0.0
        %1180 = vmatpush1.msra.mxu0 %v1174
        %1181 = vmatprep.subr.mxu0 0.0
        %1182 = vmatpush1.msra.mxu0 0.0
        %1183 = vmatprep.subr.mxu0 0.0
        %1184 = vmatpush1.msra.mxu0 0.0
        %1185 = vmatprep.subr.mxu0 0.0
        %1186 = vmatpush1.msra.mxu0 0.0
        %1187 = vmatprep.subr.mxu0 0.0
        %1188 = vmatpush1.msra.mxu0 0.0
        %1189 = vmatprep.subr.mxu0 0.0
        %1190 = vmatpush1.msra.mxu0 0.0
        %1191 = vmatprep.subr.mxu0 0.0
        %1192 = vmatpush1.msra.mxu0 0.0
        %1193 = vmatprep.subr.mxu0 0.0
        %1194 = vmatpush1.msra.mxu0 0.0
        %1195 = vmatprep.subr.mxu0 0.0
        %1196 = vmatpush1.msra.mxu0 0.0
        %1197 = vmatprep.subr.mxu0 0.0
        %1198 = vmatpush1.msra.mxu0 0.0
        %1199 = vmatprep.subr.mxu0 0.0
        %1200 = vmatpush1.msra.mxu0 0.0
        %1201 = vmatprep.subr.mxu0 0.0
        %1202 = vmatpush1.msra.mxu0 0.0
        %1203 = vmatprep.subr.mxu0 0.0
        %1204 = vmatpush1.msra.mxu0 0.0
        %1205 = vmatprep.subr.mxu0 0.0
        %1206 = vmatpush1.msra.mxu0 0.0
        %1207 = vmatprep.subr.mxu0 0.0
        %1208 = vmatpush1.msra.mxu0 0.0
        %1209 = vmatprep.subr.mxu0 0.0
        %1210 = vmatpush1.msra.mxu0 0.0
        %1211 = vmatprep.subr.mxu0 0.0
        %1212 = vmatpush1.msra.mxu0 0.0
        %1213 = vmatprep.subr.mxu0 0.0
        %1214 = vmatpush1.msra.mxu0 0.0
        %1215 = vmatprep.subr.mxu0 0.0
        %1216 = vmatpush1.msra.mxu0 0.0
        %1217 = vmatprep.subr.mxu0 0.0
        %1218 = vmatpush1.msra.mxu0 0.0
        %1219 = vmatprep.subr.mxu0 0.0
        %1220 = vmatpush1.msra.mxu0 0.0
        %1221 = vmatprep.subr.mxu0 0.0
        %1222 = vmatpush1.msra.mxu0 0.0
        %1223 = vmatprep.subr.mxu0 0.0
        %1224 = vmatpush1.msra.mxu0 0.0
        %1225 = vmatprep.subr.mxu0 0.0
        %1226 = vmatpush1.msra.mxu0 0.0
        %1227 = vmatprep.subr.mxu0 0.0
        %1228 = vmatpush1.msra.mxu0 0.0
        %1229 = vmatprep.subr.mxu0 0.0
        %1230 = vmatpush1.msra.mxu0 0.0
        %1231 = vmatprep.subr.mxu0 0.0
        %1232 = vmatpush1.msra.mxu0 0.0
        %1233 = vmatprep.subr.mxu0 0.0
        %1234 = vmatpush1.msra.mxu0 0.0
        %1235 = vmatprep.subr.mxu0 0.0
        %1236 = vmatpush1.msra.mxu0 0.0
        %1237 = vmatprep.subr.mxu0 0.0
        %1238 = vmatpush1.msra.mxu0 0.0
        %1239 = vmatprep.subr.mxu0 0.0
        %1240 = vmatpush1.msra.mxu0 0.0
        %1241 = vmatprep.subr.mxu0 0.0
        %1242 = vmatpush1.msra.mxu0 0.0
        %1243 = vmatprep.mubr.f32.mxu0 0.0
        %1244 = vmatmul.mubr.f32.gmra.mrb[0].mxu0 %v1177
        %v1245 = vpop.f32.mrb[0].mxu0
        %v1246 = vadd.f32 0.0, %v1245
        %v1247 = vpop.f32.mrb[0].mxu0
        %1248 = vdwg.mxu0
        %1249 = vrot.lane.b32.xlu0 %v916, 120
        %v1250 = vpop.permute.xlu0 %1249
        %1251 = vrot.lane.b32.xlu0 %v908, 88
        %v1252 = vpop.permute.xlu0 %1251
        %v1253 = vsel %vm921, %v1250, 0
        %v1255 = vsel %vm921, %v1252, 0
        %1257 = vmatprep.subr.mxu0 0.0
        %1258 = vmatpush1.xpose.msra.mxu0 %v1255
        %1259 = vmatprep.subr.mxu0 0.0
        %1260 = vmatpush1.xpose.msra.mxu0 0.0
        %1261 = vmatprep.subr.mxu0 0.0
        %1262 = vmatpush1.xpose.msra.mxu0 0.0
        %1263 = vmatprep.subr.mxu0 0.0
        %1264 = vmatpush1.xpose.msra.mxu0 0.0
        %1265 = vmatprep.subr.mxu0 0.0
        %1266 = vmatpush1.xpose.msra.mxu0 0.0
        %1267 = vmatprep.subr.mxu0 0.0
        %1268 = vmatpush1.xpose.msra.mxu0 0.0
        %1269 = vmatprep.subr.mxu0 0.0
        %1270 = vmatpush1.xpose.msra.mxu0 0.0
        %1271 = vmatprep.subr.mxu0 0.0
        %1272 = vmatpush1.xpose.msra.mxu0 0.0
        %1273 = vmatprep.subr.mxu0 0.0
        %1274 = vmatpush1.xpose.msra.mxu0 0.0
        %1275 = vmatprep.subr.mxu0 0.0
        %1276 = vmatpush1.xpose.msra.mxu0 0.0
        %1277 = vmatprep.subr.mxu0 0.0
        %1278 = vmatpush1.xpose.msra.mxu0 0.0
        %1279 = vmatprep.subr.mxu0 0.0
        %1280 = vmatpush1.xpose.msra.mxu0 0.0
        %1281 = vmatprep.subr.mxu0 0.0
        %1282 = vmatpush1.xpose.msra.mxu0 0.0
        %1283 = vmatprep.subr.mxu0 0.0
        %1284 = vmatpush1.xpose.msra.mxu0 0.0
        %1285 = vmatprep.subr.mxu0 0.0
        %1286 = vmatpush1.xpose.msra.mxu0 0.0
        %1287 = vmatprep.subr.mxu0 0.0
        %1288 = vmatpush1.xpose.msra.mxu0 0.0
        %1289 = vmatprep.subr.mxu0 0.0
        %1290 = vmatpush1.xpose.msra.mxu0 0.0
        %1291 = vmatprep.subr.mxu0 0.0
        %1292 = vmatpush1.xpose.msra.mxu0 0.0
        %1293 = vmatprep.subr.mxu0 0.0
        %1294 = vmatpush1.xpose.msra.mxu0 0.0
        %1295 = vmatprep.subr.mxu0 0.0
        %1296 = vmatpush1.xpose.msra.mxu0 0.0
        %1297 = vmatprep.subr.mxu0 0.0
        %1298 = vmatpush1.xpose.msra.mxu0 0.0
        %1299 = vmatprep.subr.mxu0 0.0
        %1300 = vmatpush1.xpose.msra.mxu0 0.0
        %1301 = vmatprep.subr.mxu0 0.0
        %1302 = vmatpush1.xpose.msra.mxu0 0.0
        %1303 = vmatprep.subr.mxu0 0.0
        %1304 = vmatpush1.xpose.msra.mxu0 0.0
        %1305 = vmatprep.subr.mxu0 0.0
        %1306 = vmatpush1.xpose.msra.mxu0 0.0
        %1307 = vmatprep.subr.mxu0 0.0
        %1308 = vmatpush1.xpose.msra.mxu0 0.0
        %1309 = vmatprep.subr.mxu0 0.0
        %1310 = vmatpush1.xpose.msra.mxu0 0.0
        %1311 = vmatprep.subr.mxu0 0.0
        %1312 = vmatpush1.xpose.msra.mxu0 0.0
        %1313 = vmatprep.subr.mxu0 0.0
        %1314 = vmatpush1.xpose.msra.mxu0 0.0
        %1315 = vmatprep.subr.mxu0 0.0
        %1316 = vmatpush1.xpose.msra.mxu0 0.0
        %1317 = vmatprep.subr.mxu0 0.0
        %1318 = vmatpush1.xpose.msra.mxu0 0.0
        %1319 = vmatprep.subr.mxu0 0.0
        %1320 = vmatpush1.xpose.msra.mxu0 0.0
        %1321 = vmatprep.mubr.f32.mxu0 0.0
        %1322 = vmatmul.mubr.f32.gmra.mrb[0].mxu0 %v1253
        %v1323 = vpop.f32.mrb[0].mxu0
        %v1324 = vadd.f32 0.0, %v1323
        %v1325 = vpop.f32.mrb[0].mxu0
        %1326 = vdwg.mxu0
        %1327 = vrot.lane.b32.xlu0 %v917, 120
        %v1328 = vpop.permute.xlu0 %1327
        %1329 = vrot.lane.b32.xlu0 %v913, 88
        %v1330 = vpop.permute.xlu0 %1329
        %v1331 = vsel %vm921, %v1328, 0
        %v1333 = vsel %vm921, %v1330, 0
        %1335 = vmatprep.subr.mxu0 0.0
        %1336 = vmatpush1.xpose.msra.mxu0 %v1333
        %1337 = vmatprep.subr.mxu0 0.0
        %1338 = vmatpush1.xpose.msra.mxu0 0.0
        %1339 = vmatprep.subr.mxu0 0.0
        %1340 = vmatpush1.xpose.msra.mxu0 0.0
        %1341 = vmatprep.subr.mxu0 0.0
        %1342 = vmatpush1.xpose.msra.mxu0 0.0
        %1343 = vmatprep.subr.mxu0 0.0
        %1344 = vmatpush1.xpose.msra.mxu0 0.0
        %1345 = vmatprep.subr.mxu0 0.0
        %1346 = vmatpush1.xpose.msra.mxu0 0.0
        %1347 = vmatprep.subr.mxu0 0.0
        %1348 = vmatpush1.xpose.msra.mxu0 0.0
        %1349 = vmatprep.subr.mxu0 0.0
        %1350 = vmatpush1.xpose.msra.mxu0 0.0
        %1351 = vmatprep.subr.mxu0 0.0
        %1352 = vmatpush1.xpose.msra.mxu0 0.0
        %1353 = vmatprep.subr.mxu0 0.0
        %1354 = vmatpush1.xpose.msra.mxu0 0.0
        %1355 = vmatprep.subr.mxu0 0.0
        %1356 = vmatpush1.xpose.msra.mxu0 0.0
        %1357 = vmatprep.subr.mxu0 0.0
        %1358 = vmatpush1.xpose.msra.mxu0 0.0
        %1359 = vmatprep.subr.mxu0 0.0
        %1360 = vmatpush1.xpose.msra.mxu0 0.0
        %1361 = vmatprep.subr.mxu0 0.0
        %1362 = vmatpush1.xpose.msra.mxu0 0.0
        %1363 = vmatprep.subr.mxu0 0.0
        %1364 = vmatpush1.xpose.msra.mxu0 0.0
        %1365 = vmatprep.subr.mxu0 0.0
        %1366 = vmatpush1.xpose.msra.mxu0 0.0
        %1367 = vmatprep.subr.mxu0 0.0
        %1368 = vmatpush1.xpose.msra.mxu0 0.0
        %1369 = vmatprep.subr.mxu0 0.0
        %1370 = vmatpush1.xpose.msra.mxu0 0.0
        %1371 = vmatprep.subr.mxu0 0.0
        %1372 = vmatpush1.xpose.msra.mxu0 0.0
        %1373 = vmatprep.subr.mxu0 0.0
        %1374 = vmatpush1.xpose.msra.mxu0 0.0
        %1375 = vmatprep.subr.mxu0 0.0
        %1376 = vmatpush1.xpose.msra.mxu0 0.0
        %1377 = vmatprep.subr.mxu0 0.0
        %1378 = vmatpush1.xpose.msra.mxu0 0.0
        %1379 = vmatprep.subr.mxu0 0.0
        %1380 = vmatpush1.xpose.msra.mxu0 0.0
        %1381 = vmatprep.subr.mxu0 0.0
        %1382 = vmatpush1.xpose.msra.mxu0 0.0
        %1383 = vmatprep.subr.mxu0 0.0
        %1384 = vmatpush1.xpose.msra.mxu0 0.0
        %1385 = vmatprep.subr.mxu0 0.0
        %1386 = vmatpush1.xpose.msra.mxu0 0.0
        %1387 = vmatprep.subr.mxu0 0.0
        %1388 = vmatpush1.xpose.msra.mxu0 0.0
        %1389 = vmatprep.subr.mxu0 0.0
        %1390 = vmatpush1.xpose.msra.mxu0 0.0
        %1391 = vmatprep.subr.mxu0 0.0
        %1392 = vmatpush1.xpose.msra.mxu0 0.0
        %1393 = vmatprep.subr.mxu0 0.0
        %1394 = vmatpush1.xpose.msra.mxu0 0.0
        %1395 = vmatprep.subr.mxu0 0.0
        %1396 = vmatpush1.xpose.msra.mxu0 0.0
        %1397 = vmatprep.subr.mxu0 0.0
        %1398 = vmatpush1.xpose.msra.mxu0 0.0
        %1399 = vmatprep.mubr.f32.mxu0 0.0
        %1400 = vmatmul.mubr.f32.gmra.mrb[0].mxu0 %v1331
        %v1401 = vpop.f32.mrb[0].mxu0
        %v1402 = vadd.f32 0.0, %v1401
        %v1403 = vpop.f32.mrb[0].mxu0
        %1404 = vdwg.mxu0
        %v1405 = vsel %vm921, %v1324, -inf
        %1406 = vmax.xlane.f32.xlu0 %v1405
        %v1407 = vpop.xlane.xlu0 %1406
        %v1408 = vsel %vm921, %v1402, -inf
        %1409 = vmax.xlane.f32.xlu0 %v1408
        %v1410 = vpop.xlane.xlu0 %1409
        %v1411 = vsub.f32 %v1324, %v1407
        %v1412 = vsub.f32 %v1402, %v1410
        %v1413 = vmul.f32 %v1411, 1.442695
        %v1414 = vpow.pop %v1413
        %v1415 = vmul.f32 %v1412, 1.442695
        %v1416 = vpow.pop %v1415
        %v1417 = vsel %vm921, %v1414, 0.0
        %1418 = vadd.xlane.f32.xlu0 %v1417
        %v1419 = vpop.xlane.xlu0 %1418
        %v1420 = vsel %vm921, %v1416, 0.0
        %1421 = vadd.xlane.f32.xlu0 %v1420
        %v1422 = vpop.xlane.xlu0 %1421
        %v1423 = vrcp.pop %v1419
        %v1424 = vrcp.pop %v1422
        %v1425 = vmul.f32 %v1414, %v1423
        %v1426 = vmul.f32 %v1416, %v1424
        %1427 = vrot.lane.b32.xlu0 %v908, 56
        %v1428 = vpop.permute.xlu0 %1427
        %v1431 = vsel %vm921, %v1425, 0
        %1433 = vmatprep.subr.mxu0 0.0
        %1434 = vmatpush1.msra.mxu0 %v1428
        %1435 = vmatprep.subr.mxu0 0.0
        %1436 = vmatpush1.msra.mxu0 0.0
        %1437 = vmatprep.subr.mxu0 0.0
        %1438 = vmatpush1.msra.mxu0 0.0
        %1439 = vmatprep.subr.mxu0 0.0
        %1440 = vmatpush1.msra.mxu0 0.0
        %1441 = vmatprep.subr.mxu0 0.0
        %1442 = vmatpush1.msra.mxu0 0.0
        %1443 = vmatprep.subr.mxu0 0.0
        %1444 = vmatpush1.msra.mxu0 0.0
        %1445 = vmatprep.subr.mxu0 0.0
        %1446 = vmatpush1.msra.mxu0 0.0
        %1447 = vmatprep.subr.mxu0 0.0
        %1448 = vmatpush1.msra.mxu0 0.0
        %1449 = vmatprep.subr.mxu0 0.0
        %1450 = vmatpush1.msra.mxu0 0.0
        %1451 = vmatprep.subr.mxu0 0.0
        %1452 = vmatpush1.msra.mxu0 0.0
        %1453 = vmatprep.subr.mxu0 0.0
        %1454 = vmatpush1.msra.mxu0 0.0
        %1455 = vmatprep.subr.mxu0 0.0
        %1456 = vmatpush1.msra.mxu0 0.0
        %1457 = vmatprep.subr.mxu0 0.0
        %1458 = vmatpush1.msra.mxu0 0.0
        %1459 = vmatprep.subr.mxu0 0.0
        %1460 = vmatpush1.msra.mxu0 0.0
        %1461 = vmatprep.subr.mxu0 0.0
        %1462 = vmatpush1.msra.mxu0 0.0
        %1463 = vmatprep.subr.mxu0 0.0
        %1464 = vmatpush1.msra.mxu0 0.0
        %1465 = vmatprep.subr.mxu0 0.0
        %1466 = vmatpush1.msra.mxu0 0.0
        %1467 = vmatprep.subr.mxu0 0.0
        %1468 = vmatpush1.msra.mxu0 0.0
        %1469 = vmatprep.subr.mxu0 0.0
        %1470 = vmatpush1.msra.mxu0 0.0
        %1471 = vmatprep.subr.mxu0 0.0
        %1472 = vmatpush1.msra.mxu0 0.0
        %1473 = vmatprep.subr.mxu0 0.0
        %1474 = vmatpush1.msra.mxu0 0.0
        %1475 = vmatprep.subr.mxu0 0.0
        %1476 = vmatpush1.msra.mxu0 0.0
        %1477 = vmatprep.subr.mxu0 0.0
        %1478 = vmatpush1.msra.mxu0 0.0
        %1479 = vmatprep.subr.mxu0 0.0
        %1480 = vmatpush1.msra.mxu0 0.0
        %1481 = vmatprep.subr.mxu0 0.0
        %1482 = vmatpush1.msra.mxu0 0.0
        %1483 = vmatprep.subr.mxu0 0.0
        %1484 = vmatpush1.msra.mxu0 0.0
        %1485 = vmatprep.subr.mxu0 0.0
        %1486 = vmatpush1.msra.mxu0 0.0
        %1487 = vmatprep.subr.mxu0 0.0
        %1488 = vmatpush1.msra.mxu0 0.0
        %1489 = vmatprep.subr.mxu0 0.0
        %1490 = vmatpush1.msra.mxu0 0.0
        %1491 = vmatprep.subr.mxu0 0.0
        %1492 = vmatpush1.msra.mxu0 0.0
        %1493 = vmatprep.subr.mxu0 0.0
        %1494 = vmatpush1.msra.mxu0 0.0
        %1495 = vmatprep.subr.mxu0 0.0
        %1496 = vmatpush1.msra.mxu0 0.0
        %1497 = vmatprep.mubr.f32.mxu0 0.0
        %1498 = vmatmul.mubr.f32.gmra.mrb[0].mxu0 %v1431
        %v1499 = vpop.f32.mrb[0].mxu0
        %v1500 = vadd.f32 0.0, %v1499
        %v1501 = vpop.f32.mrb[0].mxu0
        %1502 = vdwg.mxu0
        %1503 = vrot.lane.b32.xlu0 %v913, 56
        %v1504 = vpop.permute.xlu0 %1503
        %v1507 = vsel %vm921, %v1426, 0
        %1509 = vmatprep.subr.mxu0 0.0
        %1510 = vmatpush1.msra.mxu0 %v1504
        %1511 = vmatprep.subr.mxu0 0.0
        %1512 = vmatpush1.msra.mxu0 0.0
        %1513 = vmatprep.subr.mxu0 0.0
        %1514 = vmatpush1.msra.mxu0 0.0
        %1515 = vmatprep.subr.mxu0 0.0
        %1516 = vmatpush1.msra.mxu0 0.0
        %1517 = vmatprep.subr.mxu0 0.0
        %1518 = vmatpush1.msra.mxu0 0.0
        %1519 = vmatprep.subr.mxu0 0.0
        %1520 = vmatpush1.msra.mxu0 0.0
        %1521 = vmatprep.subr.mxu0 0.0
        %1522 = vmatpush1.msra.mxu0 0.0
        %1523 = vmatprep.subr.mxu0 0.0
        %1524 = vmatpush1.msra.mxu0 0.0
        %1525 = vmatprep.subr.mxu0 0.0
        %1526 = vmatpush1.msra.mxu0 0.0
        %1527 = vmatprep.subr.mxu0 0.0
        %1528 = vmatpush1.msra.mxu0 0.0
        %1529 = vmatprep.subr.mxu0 0.0
        %1530 = vmatpush1.msra.mxu0 0.0
        %1531 = vmatprep.subr.mxu0 0.0
        %1532 = vmatpush1.msra.mxu0 0.0
        %1533 = vmatprep.subr.mxu0 0.0
        %1534 = vmatpush1.msra.mxu0 0.0
        %1535 = vmatprep.subr.mxu0 0.0
        %1536 = vmatpush1.msra.mxu0 0.0
        %1537 = vmatprep.subr.mxu0 0.0
        %1538 = vmatpush1.msra.mxu0 0.0
        %1539 = vmatprep.subr.mxu0 0.0
        %1540 = vmatpush1.msra.mxu0 0.0
        %1541 = vmatprep.subr.mxu0 0.0
        %1542 = vmatpush1.msra.mxu0 0.0
        %1543 = vmatprep.subr.mxu0 0.0
        %1544 = vmatpush1.msra.mxu0 0.0
        %1545 = vmatprep.subr.mxu0 0.0
        %1546 = vmatpush1.msra.mxu0 0.0
        %1547 = vmatprep.subr.mxu0 0.0
        %1548 = vmatpush1.msra.mxu0 0.0
        %1549 = vmatprep.subr.mxu0 0.0
        %1550 = vmatpush1.msra.mxu0 0.0
        %1551 = vmatprep.subr.mxu0 0.0
        %1552 = vmatpush1.msra.mxu0 0.0
        %1553 = vmatprep.subr.mxu0 0.0
        %1554 = vmatpush1.msra.mxu0 0.0
        %1555 = vmatprep.subr.mxu0 0.0
        %1556 = vmatpush1.msra.mxu0 0.0
        %1557 = vmatprep.subr.mxu0 0.0
        %1558 = vmatpush1.msra.mxu0 0.0
        %1559 = vmatprep.subr.mxu0 0.0
        %1560 = vmatpush1.msra.mxu0 0.0
        %1561 = vmatprep.subr.mxu0 0.0
        %1562 = vmatpush1.msra.mxu0 0.0
        %1563 = vmatprep.subr.mxu0 0.0
        %1564 = vmatpush1.msra.mxu0 0.0
        %1565 = vmatprep.subr.mxu0 0.0
        %1566 = vmatpush1.msra.mxu0 0.0
        %1567 = vmatprep.subr.mxu0 0.0
        %1568 = vmatpush1.msra.mxu0 0.0
        %1569 = vmatprep.subr.mxu0 0.0
        %1570 = vmatpush1.msra.mxu0 0.0
        %1571 = vmatprep.subr.mxu0 0.0
        %1572 = vmatpush1.msra.mxu0 0.0
        %1573 = vmatprep.mubr.f32.mxu0 0.0
        %1574 = vmatmul.mubr.f32.gmra.mrb[0].mxu0 %v1507
        %v1575 = vpop.f32.mrb[0].mxu0
        %v1576 = vadd.f32 0.0, %v1575
        %v1577 = vpop.f32.mrb[0].mxu0
        %1578 = vdwg.mxu0
        %v1580 = vsel %vm921, %v1500, 0
        %v1583 = vsel %vm921, %v1576, 0
        %1585 = vmatprep.subr.mxu0 0.0
        %1586 = vmatpush1.msra.mxu0 %v825
        %1587 = vmatprep.subr.mxu0 0.0
        %1588 = vmatpush1.msra.mxu0 0.0
        %1589 = vmatprep.subr.mxu0 0.0
        %1590 = vmatpush1.msra.mxu0 0.0
        %1591 = vmatprep.subr.mxu0 0.0
        %1592 = vmatpush1.msra.mxu0 0.0
        %1593 = vmatprep.subr.mxu0 0.0
        %1594 = vmatpush1.msra.mxu0 0.0
        %1595 = vmatprep.subr.mxu0 0.0
        %1596 = vmatpush1.msra.mxu0 0.0
        %1597 = vmatprep.subr.mxu0 0.0
        %1598 = vmatpush1.msra.mxu0 0.0
        %1599 = vmatprep.subr.mxu0 0.0
        %1600 = vmatpush1.msra.mxu0 0.0
        %1601 = vmatprep.subr.mxu0 0.0
        %1602 = vmatpush1.msra.mxu0 0.0
        %1603 = vmatprep.subr.mxu0 0.0
        %1604 = vmatpush1.msra.mxu0 0.0
        %1605 = vmatprep.subr.mxu0 0.0
        %1606 = vmatpush1.msra.mxu0 0.0
        %1607 = vmatprep.subr.mxu0 0.0
        %1608 = vmatpush1.msra.mxu0 0.0
        %1609 = vmatprep.subr.mxu0 0.0
        %1610 = vmatpush1.msra.mxu0 0.0
        %1611 = vmatprep.subr.mxu0 0.0
        %1612 = vmatpush1.msra.mxu0 0.0
        %1613 = vmatprep.subr.mxu0 0.0
        %1614 = vmatpush1.msra.mxu0 0.0
        %1615 = vmatprep.subr.mxu0 0.0
        %1616 = vmatpush1.msra.mxu0 0.0
        %1617 = vmatprep.subr.mxu0 0.0
        %1618 = vmatpush1.msra.mxu0 0.0
        %1619 = vmatprep.subr.mxu0 0.0
        %1620 = vmatpush1.msra.mxu0 0.0
        %1621 = vmatprep.subr.mxu0 0.0
        %1622 = vmatpush1.msra.mxu0 0.0
        %1623 = vmatprep.subr.mxu0 0.0
        %1624 = vmatpush1.msra.mxu0 0.0
        %1625 = vmatprep.subr.mxu0 0.0
        %1626 = vmatpush1.msra.mxu0 0.0
        %1627 = vmatprep.subr.mxu0 0.0
        %1628 = vmatpush1.msra.mxu0 0.0
        %1629 = vmatprep.subr.mxu0 0.0
        %1630 = vmatpush1.msra.mxu0 0.0
        %1631 = vmatprep.subr.mxu0 0.0
        %1632 = vmatpush1.msra.mxu0 0.0
        %1633 = vmatprep.subr.mxu0 0.0
        %1634 = vmatpush1.msra.mxu0 0.0
        %1635 = vmatprep.subr.mxu0 0.0
        %1636 = vmatpush1.msra.mxu0 0.0
        %1637 = vmatprep.subr.mxu0 0.0
        %1638 = vmatpush1.msra.mxu0 0.0
        %1639 = vmatprep.subr.mxu0 0.0
        %1640 = vmatpush1.msra.mxu0 0.0
        %1641 = vmatprep.subr.mxu0 0.0
        %1642 = vmatpush1.msra.mxu0 0.0
        %1643 = vmatprep.subr.mxu0 0.0
        %1644 = vmatpush1.msra.mxu0 0.0
        %1645 = vmatprep.subr.mxu0 0.0
        %1646 = vmatpush1.msra.mxu0 0.0
        %1647 = vmatprep.subr.mxu0 0.0
        %1648 = vmatpush1.msra.mxu0 0.0
        %1649 = vmatprep.mubr.f32.mxu0 0.0
        %1650 = vmatmul.mubr.f32.gmra.mrb[0].mxu0 %v1580
        %v1651 = vpop.f32.mrb[0].mxu0
        %v1652 = vadd.f32 0.0, %v1651
        %v1653 = vpop.f32.mrb[0].mxu0
        %1654 = vmatprep.mubr.f32.mxu0 0.0
        %1655 = vmatmul.mubr.f32.gmra.mrb[0].mxu0 %v1583
        %v1656 = vpop.f32.mrb[0].mxu0
        %v1657 = vadd.f32 0.0, %v1656
        %v1658 = vpop.f32.mrb[0].mxu0
        %1659 = vdwg.mxu0
        %v1661 = vsel %vm921, %v1170, 0
        %v1664 = vsel %vm921, %v1246, 0
        %1666 = vmatprep.subr.mxu0 0.0
        %1667 = vmatpush1.msra.mxu0 %v824
        %1668 = vmatprep.subr.mxu0 0.0
        %1669 = vmatpush1.msra.mxu0 0.0
        %1670 = vmatprep.subr.mxu0 0.0
        %1671 = vmatpush1.msra.mxu0 0.0
        %1672 = vmatprep.subr.mxu0 0.0
        %1673 = vmatpush1.msra.mxu0 0.0
        %1674 = vmatprep.subr.mxu0 0.0
        %1675 = vmatpush1.msra.mxu0 0.0
        %1676 = vmatprep.subr.mxu0 0.0
        %1677 = vmatpush1.msra.mxu0 0.0
        %1678 = vmatprep.subr.mxu0 0.0
        %1679 = vmatpush1.msra.mxu0 0.0
        %1680 = vmatprep.subr.mxu0 0.0
        %1681 = vmatpush1.msra.mxu0 0.0
        %1682 = vmatprep.subr.mxu0 0.0
        %1683 = vmatpush1.msra.mxu0 0.0
        %1684 = vmatprep.subr.mxu0 0.0
        %1685 = vmatpush1.msra.mxu0 0.0
        %1686 = vmatprep.subr.mxu0 0.0
        %1687 = vmatpush1.msra.mxu0 0.0
        %1688 = vmatprep.subr.mxu0 0.0
        %1689 = vmatpush1.msra.mxu0 0.0
        %1690 = vmatprep.subr.mxu0 0.0
        %1691 = vmatpush1.msra.mxu0 0.0
        %1692 = vmatprep.subr.mxu0 0.0
        %1693 = vmatpush1.msra.mxu0 0.0
        %1694 = vmatprep.subr.mxu0 0.0
        %1695 = vmatpush1.msra.mxu0 0.0
        %1696 = vmatprep.subr.mxu0 0.0
        %1697 = vmatpush1.msra.mxu0 0.0
        %1698 = vmatprep.subr.mxu0 0.0
        %1699 = vmatpush1.msra.mxu0 0.0
        %1700 = vmatprep.subr.mxu0 0.0
        %1701 = vmatpush1.msra.mxu0 0.0
        %1702 = vmatprep.subr.mxu0 0.0
        %1703 = vmatpush1.msra.mxu0 0.0
        %1704 = vmatprep.subr.mxu0 0.0
        %1705 = vmatpush1.msra.mxu0 0.0
        %1706 = vmatprep.subr.mxu0 0.0
        %1707 = vmatpush1.msra.mxu0 0.0
        %1708 = vmatprep.subr.mxu0 0.0
        %1709 = vmatpush1.msra.mxu0 0.0
        %1710 = vmatprep.subr.mxu0 0.0
        %1711 = vmatpush1.msra.mxu0 0.0
        %1712 = vmatprep.subr.mxu0 0.0
        %1713 = vmatpush1.msra.mxu0 0.0
        %1714 = vmatprep.subr.mxu0 0.0
        %1715 = vmatpush1.msra.mxu0 0.0
        %1716 = vmatprep.subr.mxu0 0.0
        %1717 = vmatpush1.msra.mxu0 0.0
        %1718 = vmatprep.subr.mxu0 0.0
        %1719 = vmatpush1.msra.mxu0 0.0
        %1720 = vmatprep.subr.mxu0 0.0
        %1721 = vmatpush1.msra.mxu0 0.0
        %1722 = vmatprep.subr.mxu0 0.0
        %1723 = vmatpush1.msra.mxu0 0.0
        %1724 = vmatprep.subr.mxu0 0.0
        %1725 = vmatpush1.msra.mxu0 0.0
        %1726 = vmatprep.subr.mxu0 0.0
        %1727 = vmatpush1.msra.mxu0 0.0
        %1728 = vmatprep.subr.mxu0 0.0
        %1729 = vmatpush1.msra.mxu0 0.0
        %1730 = vmatprep.mubr.f32.mxu0 0.0
        %1731 = vmatmul.mubr.f32.gmra.mrb[0].mxu0 %v1661
        %v1732 = vpop.f32.mrb[0].mxu0
        %v1733 = vadd.f32 %v1652, %v1732
        %v1734 = vpop.f32.mrb[0].mxu0
        %1735 = vmatprep.mubr.f32.mxu0 0.0
        %1736 = vmatmul.mubr.f32.gmra.mrb[0].mxu0 %v1664
        %v1737 = vpop.f32.mrb[0].mxu0
        %v1738 = vadd.f32 %v1657, %v1737
        %v1739 = vpop.f32.mrb[0].mxu0
        %1740 = vdwg.mxu0
        %1741 = vrot.lane.b32.xlu0 %v916, 112
        %v1742 = vpop.permute.xlu0 %1741
        %1743 = vrot.lane.b32.xlu0 %v908, 80
        %v1744 = vpop.permute.xlu0 %1743
        %v1745 = vsel %vm921, %v1742, 0
        %v1747 = vsel %vm921, %v1744, 0
        %1749 = vmatprep.subr.mxu0 0.0
        %1750 = vmatpush1.xpose.msra.mxu0 %v1747
        %1751 = vmatprep.subr.mxu0 0.0
        %1752 = vmatpush1.xpose.msra.mxu0 0.0
        %1753 = vmatprep.subr.mxu0 0.0
        %1754 = vmatpush1.xpose.msra.mxu0 0.0
        %1755 = vmatprep.subr.mxu0 0.0
        %1756 = vmatpush1.xpose.msra.mxu0 0.0
        %1757 = vmatprep.subr.mxu0 0.0
        %1758 = vmatpush1.xpose.msra.mxu0 0.0
        %1759 = vmatprep.subr.mxu0 0.0
        %1760 = vmatpush1.xpose.msra.mxu0 0.0
        %1761 = vmatprep.subr.mxu0 0.0
        %1762 = vmatpush1.xpose.msra.mxu0 0.0
        %1763 = vmatprep.subr.mxu0 0.0
        %1764 = vmatpush1.xpose.msra.mxu0 0.0
        %1765 = vmatprep.subr.mxu0 0.0
        %1766 = vmatpush1.xpose.msra.mxu0 0.0
        %1767 = vmatprep.subr.mxu0 0.0
        %1768 = vmatpush1.xpose.msra.mxu0 0.0
        %1769 = vmatprep.subr.mxu0 0.0
        %1770 = vmatpush1.xpose.msra.mxu0 0.0
        %1771 = vmatprep.subr.mxu0 0.0
        %1772 = vmatpush1.xpose.msra.mxu0 0.0
        %1773 = vmatprep.subr.mxu0 0.0
        %1774 = vmatpush1.xpose.msra.mxu0 0.0
        %1775 = vmatprep.subr.mxu0 0.0
        %1776 = vmatpush1.xpose.msra.mxu0 0.0
        %1777 = vmatprep.subr.mxu0 0.0
        %1778 = vmatpush1.xpose.msra.mxu0 0.0
        %1779 = vmatprep.subr.mxu0 0.0
        %1780 = vmatpush1.xpose.msra.mxu0 0.0
        %1781 = vmatprep.subr.mxu0 0.0
        %1782 = vmatpush1.xpose.msra.mxu0 0.0
        %1783 = vmatprep.subr.mxu0 0.0
        %1784 = vmatpush1.xpose.msra.mxu0 0.0
        %1785 = vmatprep.subr.mxu0 0.0
        %1786 = vmatpush1.xpose.msra.mxu0 0.0
        %1787 = vmatprep.subr.mxu0 0.0
        %1788 = vmatpush1.xpose.msra.mxu0 0.0
        %1789 = vmatprep.subr.mxu0 0.0
        %1790 = vmatpush1.xpose.msra.mxu0 0.0
        %1791 = vmatprep.subr.mxu0 0.0
        %1792 = vmatpush1.xpose.msra.mxu0 0.0
        %1793 = vmatprep.subr.mxu0 0.0
        %1794 = vmatpush1.xpose.msra.mxu0 0.0
        %1795 = vmatprep.subr.mxu0 0.0
        %1796 = vmatpush1.xpose.msra.mxu0 0.0
        %1797 = vmatprep.subr.mxu0 0.0
        %1798 = vmatpush1.xpose.msra.mxu0 0.0
        %1799 = vmatprep.subr.mxu0 0.0
        %1800 = vmatpush1.xpose.msra.mxu0 0.0
        %1801 = vmatprep.subr.mxu0 0.0
        %1802 = vmatpush1.xpose.msra.mxu0 0.0
        %1803 = vmatprep.subr.mxu0 0.0
        %1804 = vmatpush1.xpose.msra.mxu0 0.0
        %1805 = vmatprep.subr.mxu0 0.0
        %1806 = vmatpush1.xpose.msra.mxu0 0.0
        %1807 = vmatprep.subr.mxu0 0.0
        %1808 = vmatpush1.xpose.msra.mxu0 0.0
        %1809 = vmatprep.subr.mxu0 0.0
        %1810 = vmatpush1.xpose.msra.mxu0 0.0
        %1811 = vmatprep.subr.mxu0 0.0
        %1812 = vmatpush1.xpose.msra.mxu0 0.0
        %1813 = vmatprep.mubr.f32.mxu0 0.0
        %1814 = vmatmul.mubr.f32.gmra.mrb[0].mxu0 %v1745
        %v1815 = vpop.f32.mrb[0].mxu0
        %v1816 = vadd.f32 0.0, %v1815
        %v1817 = vpop.f32.mrb[0].mxu0
        %1818 = vdwg.mxu0
        %1819 = vrot.lane.b32.xlu0 %v917, 112
        %v1820 = vpop.permute.xlu0 %1819
        %1821 = vrot.lane.b32.xlu0 %v913, 80
        %v1822 = vpop.permute.xlu0 %1821
        %v1823 = vsel %vm921, %v1820, 0
        %v1825 = vsel %vm921, %v1822, 0
        %1827 = vmatprep.subr.mxu0 0.0
        %1828 = vmatpush1.xpose.msra.mxu0 %v1825
        %1829 = vmatprep.subr.mxu0 0.0
        %1830 = vmatpush1.xpose.msra.mxu0 0.0
        %1831 = vmatprep.subr.mxu0 0.0
        %1832 = vmatpush1.xpose.msra.mxu0 0.0
        %1833 = vmatprep.subr.mxu0 0.0
        %1834 = vmatpush1.xpose.msra.mxu0 0.0
        %1835 = vmatprep.subr.mxu0 0.0
        %1836 = vmatpush1.xpose.msra.mxu0 0.0
        %1837 = vmatprep.subr.mxu0 0.0
        %1838 = vmatpush1.xpose.msra.mxu0 0.0
        %1839 = vmatprep.subr.mxu0 0.0
        %1840 = vmatpush1.xpose.msra.mxu0 0.0
        %1841 = vmatprep.subr.mxu0 0.0
        %1842 = vmatpush1.xpose.msra.mxu0 0.0
        %1843 = vmatprep.subr.mxu0 0.0
        %1844 = vmatpush1.xpose.msra.mxu0 0.0
        %1845 = vmatprep.subr.mxu0 0.0
        %1846 = vmatpush1.xpose.msra.mxu0 0.0
        %1847 = vmatprep.subr.mxu0 0.0
        %1848 = vmatpush1.xpose.msra.mxu0 0.0
        %1849 = vmatprep.subr.mxu0 0.0
        %1850 = vmatpush1.xpose.msra.mxu0 0.0
        %1851 = vmatprep.subr.mxu0 0.0
        %1852 = vmatpush1.xpose.msra.mxu0 0.0
        %1853 = vmatprep.subr.mxu0 0.0
        %1854 = vmatpush1.xpose.msra.mxu0 0.0
        %1855 = vmatprep.subr.mxu0 0.0
        %1856 = vmatpush1.xpose.msra.mxu0 0.0
        %1857 = vmatprep.subr.mxu0 0.0
        %1858 = vmatpush1.xpose.msra.mxu0 0.0
        %1859 = vmatprep.subr.mxu0 0.0
        %1860 = vmatpush1.xpose.msra.mxu0 0.0
        %1861 = vmatprep.subr.mxu0 0.0
        %1862 = vmatpush1.xpose.msra.mxu0 0.0
        %1863 = vmatprep.subr.mxu0 0.0
        %1864 = vmatpush1.xpose.msra.mxu0 0.0
        %1865 = vmatprep.subr.mxu0 0.0
        %1866 = vmatpush1.xpose.msra.mxu0 0.0
        %1867 = vmatprep.subr.mxu0 0.0
        %1868 = vmatpush1.xpose.msra.mxu0 0.0
        %1869 = vmatprep.subr.mxu0 0.0
        %1870 = vmatpush1.xpose.msra.mxu0 0.0
        %1871 = vmatprep.subr.mxu0 0.0
        %1872 = vmatpush1.xpose.msra.mxu0 0.0
        %1873 = vmatprep.subr.mxu0 0.0
        %1874 = vmatpush1.xpose.msra.mxu0 0.0
        %1875 = vmatprep.subr.mxu0 0.0
        %1876 = vmatpush1.xpose.msra.mxu0 0.0
        %1877 = vmatprep.subr.mxu0 0.0
        %1878 = vmatpush1.xpose.msra.mxu0 0.0
        %1879 = vmatprep.subr.mxu0 0.0
        %1880 = vmatpush1.xpose.msra.mxu0 0.0
        %1881 = vmatprep.subr.mxu0 0.0
        %1882 = vmatpush1.xpose.msra.mxu0 0.0
        %1883 = vmatprep.subr.mxu0 0.0
        %1884 = vmatpush1.xpose.msra.mxu0 0.0
        %1885 = vmatprep.subr.mxu0 0.0
        %1886 = vmatpush1.xpose.msra.mxu0 0.0
        %1887 = vmatprep.subr.mxu0 0.0
        %1888 = vmatpush1.xpose.msra.mxu0 0.0
        %1889 = vmatprep.subr.mxu0 0.0
        %1890 = vmatpush1.xpose.msra.mxu0 0.0
        %1891 = vmatprep.mubr.f32.mxu0 0.0
        %1892 = vmatmul.mubr.f32.gmra.mrb[0].mxu0 %v1823
        %v1893 = vpop.f32.mrb[0].mxu0
        %v1894 = vadd.f32 0.0, %v1893
        %v1895 = vpop.f32.mrb[0].mxu0
        %1896 = vdwg.mxu0
        %v1897 = vsel %vm921, %v1816, -inf
        %1898 = vmax.xlane.f32.xlu0 %v1897
        %v1899 = vpop.xlane.xlu0 %1898
        %v1900 = vsel %vm921, %v1894, -inf
        %1901 = vmax.xlane.f32.xlu0 %v1900
        %v1902 = vpop.xlane.xlu0 %1901
        %v1903 = vsub.f32 %v1816, %v1899
        %v1904 = vsub.f32 %v1894, %v1902
        %v1905 = vmul.f32 %v1903, 1.442695
        %v1906 = vpow.pop %v1905
        %v1907 = vmul.f32 %v1904, 1.442695
        %v1908 = vpow.pop %v1907
        %v1909 = vsel %vm921, %v1906, 0.0
        %1910 = vadd.xlane.f32.xlu0 %v1909
        %v1911 = vpop.xlane.xlu0 %1910
        %v1912 = vsel %vm921, %v1908, 0.0
        %1913 = vadd.xlane.f32.xlu0 %v1912
        %v1914 = vpop.xlane.xlu0 %1913
        %v1915 = vrcp.pop %v1911
        %v1916 = vrcp.pop %v1914
        %v1917 = vmul.f32 %v1906, %v1915
        %v1918 = vmul.f32 %v1908, %v1916
        %1919 = vrot.lane.b32.xlu0 %v908, 48
        %v1920 = vpop.permute.xlu0 %1919
        %v1923 = vsel %vm921, %v1917, 0
        %1925 = vmatprep.subr.mxu0 0.0
        %1926 = vmatpush1.msra.mxu0 %v1920
        %1927 = vmatprep.subr.mxu0 0.0
        %1928 = vmatpush1.msra.mxu0 0.0
        %1929 = vmatprep.subr.mxu0 0.0
        %1930 = vmatpush1.msra.mxu0 0.0
        %1931 = vmatprep.subr.mxu0 0.0
        %1932 = vmatpush1.msra.mxu0 0.0
        %1933 = vmatprep.subr.mxu0 0.0
        %1934 = vmatpush1.msra.mxu0 0.0
        %1935 = vmatprep.subr.mxu0 0.0
        %1936 = vmatpush1.msra.mxu0 0.0
        %1937 = vmatprep.subr.mxu0 0.0
        %1938 = vmatpush1.msra.mxu0 0.0
        %1939 = vmatprep.subr.mxu0 0.0
        %1940 = vmatpush1.msra.mxu0 0.0
        %1941 = vmatprep.subr.mxu0 0.0
        %1942 = vmatpush1.msra.mxu0 0.0
        %1943 = vmatprep.subr.mxu0 0.0
        %1944 = vmatpush1.msra.mxu0 0.0
        %1945 = vmatprep.subr.mxu0 0.0
        %1946 = vmatpush1.msra.mxu0 0.0
        %1947 = vmatprep.subr.mxu0 0.0
        %1948 = vmatpush1.msra.mxu0 0.0
        %1949 = vmatprep.subr.mxu0 0.0
        %1950 = vmatpush1.msra.mxu0 0.0
        %1951 = vmatprep.subr.mxu0 0.0
        %1952 = vmatpush1.msra.mxu0 0.0
        %1953 = vmatprep.subr.mxu0 0.0
        %1954 = vmatpush1.msra.mxu0 0.0
        %1955 = vmatprep.subr.mxu0 0.0
        %1956 = vmatpush1.msra.mxu0 0.0
        %1957 = vmatprep.subr.mxu0 0.0
        %1958 = vmatpush1.msra.mxu0 0.0
        %1959 = vmatprep.subr.mxu0 0.0
        %1960 = vmatpush1.msra.mxu0 0.0
        %1961 = vmatprep.subr.mxu0 0.0
        %1962 = vmatpush1.msra.mxu0 0.0
        %1963 = vmatprep.subr.mxu0 0.0
        %1964 = vmatpush1.msra.mxu0 0.0
        %1965 = vmatprep.subr.mxu0 0.0
        %1966 = vmatpush1.msra.mxu0 0.0
        %1967 = vmatprep.subr.mxu0 0.0
        %1968 = vmatpush1.msra.mxu0 0.0
        %1969 = vmatprep.subr.mxu0 0.0
        %1970 = vmatpush1.msra.mxu0 0.0
        %1971 = vmatprep.subr.mxu0 0.0
        %1972 = vmatpush1.msra.mxu0 0.0
        %1973 = vmatprep.subr.mxu0 0.0
        %1974 = vmatpush1.msra.mxu0 0.0
        %1975 = vmatprep.subr.mxu0 0.0
        %1976 = vmatpush1.msra.mxu0 0.0
        %1977 = vmatprep.subr.mxu0 0.0
        %1978 = vmatpush1.msra.mxu0 0.0
        %1979 = vmatprep.subr.mxu0 0.0
        %1980 = vmatpush1.msra.mxu0 0.0
        %1981 = vmatprep.subr.mxu0 0.0
        %1982 = vmatpush1.msra.mxu0 0.0
        %1983 = vmatprep.subr.mxu0 0.0
        %1984 = vmatpush1.msra.mxu0 0.0
        %1985 = vmatprep.subr.mxu0 0.0
        %1986 = vmatpush1.msra.mxu0 0.0
        %1987 = vmatprep.subr.mxu0 0.0
        %1988 = vmatpush1.msra.mxu0 0.0
        %1989 = vmatprep.mubr.f32.mxu0 0.0
        %1990 = vmatmul.mubr.f32.gmra.mrb[0].mxu0 %v1923
        %v1991 = vpop.f32.mrb[0].mxu0
        %v1992 = vadd.f32 0.0, %v1991
        %v1993 = vpop.f32.mrb[0].mxu0
        %1994 = vdwg.mxu0
        %1995 = vrot.lane.b32.xlu0 %v913, 48
        %v1996 = vpop.permute.xlu0 %1995
        %v1999 = vsel %vm921, %v1918, 0
        %2001 = vmatprep.subr.mxu0 0.0
        %2002 = vmatpush1.msra.mxu0 %v1996
        %2003 = vmatprep.subr.mxu0 0.0
        %2004 = vmatpush1.msra.mxu0 0.0
        %2005 = vmatprep.subr.mxu0 0.0
        %2006 = vmatpush1.msra.mxu0 0.0
        %2007 = vmatprep.subr.mxu0 0.0
        %2008 = vmatpush1.msra.mxu0 0.0
        %2009 = vmatprep.subr.mxu0 0.0
        %2010 = vmatpush1.msra.mxu0 0.0
        %2011 = vmatprep.subr.mxu0 0.0
        %2012 = vmatpush1.msra.mxu0 0.0
        %2013 = vmatprep.subr.mxu0 0.0
        %2014 = vmatpush1.msra.mxu0 0.0
        %2015 = vmatprep.subr.mxu0 0.0
        %2016 = vmatpush1.msra.mxu0 0.0
        %2017 = vmatprep.subr.mxu0 0.0
        %2018 = vmatpush1.msra.mxu0 0.0
        %2019 = vmatprep.subr.mxu0 0.0
        %2020 = vmatpush1.msra.mxu0 0.0
        %2021 = vmatprep.subr.mxu0 0.0
        %2022 = vmatpush1.msra.mxu0 0.0
        %2023 = vmatprep.subr.mxu0 0.0
        %2024 = vmatpush1.msra.mxu0 0.0
        %2025 = vmatprep.subr.mxu0 0.0
        %2026 = vmatpush1.msra.mxu0 0.0
        %2027 = vmatprep.subr.mxu0 0.0
        %2028 = vmatpush1.msra.mxu0 0.0
        %2029 = vmatprep.subr.mxu0 0.0
        %2030 = vmatpush1.msra.mxu0 0.0
        %2031 = vmatprep.subr.mxu0 0.0
        %2032 = vmatpush1.msra.mxu0 0.0
        %2033 = vmatprep.subr.mxu0 0.0
        %2034 = vmatpush1.msra.mxu0 0.0
        %2035 = vmatprep.subr.mxu0 0.0
        %2036 = vmatpush1.msra.mxu0 0.0
        %2037 = vmatprep.subr.mxu0 0.0
        %2038 = vmatpush1.msra.mxu0 0.0
        %2039 = vmatprep.subr.mxu0 0.0
        %2040 = vmatpush1.msra.mxu0 0.0
        %2041 = vmatprep.subr.mxu0 0.0
        %2042 = vmatpush1.msra.mxu0 0.0
        %2043 = vmatprep.subr.mxu0 0.0
        %2044 = vmatpush1.msra.mxu0 0.0
        %2045 = vmatprep.subr.mxu0 0.0
        %2046 = vmatpush1.msra.mxu0 0.0
        %2047 = vmatprep.subr.mxu0 0.0
        %2048 = vmatpush1.msra.mxu0 0.0
        %2049 = vmatprep.subr.mxu0 0.0
        %2050 = vmatpush1.msra.mxu0 0.0
        %2051 = vmatprep.subr.mxu0 0.0
        %2052 = vmatpush1.msra.mxu0 0.0
        %2053 = vmatprep.subr.mxu0 0.0
        %2054 = vmatpush1.msra.mxu0 0.0
        %2055 = vmatprep.subr.mxu0 0.0
        %2056 = vmatpush1.msra.mxu0 0.0
        %2057 = vmatprep.subr.mxu0 0.0
        %2058 = vmatpush1.msra.mxu0 0.0
        %2059 = vmatprep.subr.mxu0 0.0
        %2060 = vmatpush1.msra.mxu0 0.0
        %2061 = vmatprep.subr.mxu0 0.0
        %2062 = vmatpush1.msra.mxu0 0.0
        %2063 = vmatprep.subr.mxu0 0.0
        %2064 = vmatpush1.msra.mxu0 0.0
        %2065 = vmatprep.mubr.f32.mxu0 0.0
        %2066 = vmatmul.mubr.f32.gmra.mrb[0].mxu0 %v1999
        %v2067 = vpop.f32.mrb[0].mxu0
        %v2068 = vadd.f32 0.0, %v2067
        %v2069 = vpop.f32.mrb[0].mxu0
        %2070 = vdwg.mxu0
        %v2072 = vsel %vm921, %v1992, 0
        %v2075 = vsel %vm921, %v2068, 0
        %2077 = vmatprep.subr.mxu0 0.0
        %2078 = vmatpush1.msra.mxu0 %v826
        %2079 = vmatprep.subr.mxu0 0.0
        %2080 = vmatpush1.msra.mxu0 0.0
        %2081 = vmatprep.subr.mxu0 0.0
        %2082 = vmatpush1.msra.mxu0 0.0
        %2083 = vmatprep.subr.mxu0 0.0
        %2084 = vmatpush1.msra.mxu0 0.0
        %2085 = vmatprep.subr.mxu0 0.0
        %2086 = vmatpush1.msra.mxu0 0.0
        %2087 = vmatprep.subr.mxu0 0.0
        %2088 = vmatpush1.msra.mxu0 0.0
        %2089 = vmatprep.subr.mxu0 0.0
        %2090 = vmatpush1.msra.mxu0 0.0
        %2091 = vmatprep.subr.mxu0 0.0
        %2092 = vmatpush1.msra.mxu0 0.0
        %2093 = vmatprep.subr.mxu0 0.0
        %2094 = vmatpush1.msra.mxu0 0.0
        %2095 = vmatprep.subr.mxu0 0.0
        %2096 = vmatpush1.msra.mxu0 0.0
        %2097 = vmatprep.subr.mxu0 0.0
        %2098 = vmatpush1.msra.mxu0 0.0
        %2099 = vmatprep.subr.mxu0 0.0
        %2100 = vmatpush1.msra.mxu0 0.0
        %2101 = vmatprep.subr.mxu0 0.0
        %2102 = vmatpush1.msra.mxu0 0.0
        %2103 = vmatprep.subr.mxu0 0.0
        %2104 = vmatpush1.msra.mxu0 0.0
        %2105 = vmatprep.subr.mxu0 0.0
        %2106 = vmatpush1.msra.mxu0 0.0
        %2107 = vmatprep.subr.mxu0 0.0
        %2108 = vmatpush1.msra.mxu0 0.0
        %2109 = vmatprep.subr.mxu0 0.0
        %2110 = vmatpush1.msra.mxu0 0.0
        %2111 = vmatprep.subr.mxu0 0.0
        %2112 = vmatpush1.msra.mxu0 0.0
        %2113 = vmatprep.subr.mxu0 0.0
        %2114 = vmatpush1.msra.mxu0 0.0
        %2115 = vmatprep.subr.mxu0 0.0
        %2116 = vmatpush1.msra.mxu0 0.0
        %2117 = vmatprep.subr.mxu0 0.0
        %2118 = vmatpush1.msra.mxu0 0.0
        %2119 = vmatprep.subr.mxu0 0.0
        %2120 = vmatpush1.msra.mxu0 0.0
        %2121 = vmatprep.subr.mxu0 0.0
        %2122 = vmatpush1.msra.mxu0 0.0
        %2123 = vmatprep.subr.mxu0 0.0
        %2124 = vmatpush1.msra.mxu0 0.0
        %2125 = vmatprep.subr.mxu0 0.0
        %2126 = vmatpush1.msra.mxu0 0.0
        %2127 = vmatprep.subr.mxu0 0.0
        %2128 = vmatpush1.msra.mxu0 0.0
        %2129 = vmatprep.subr.mxu0 0.0
        %2130 = vmatpush1.msra.mxu0 0.0
        %2131 = vmatprep.subr.mxu0 0.0
        %2132 = vmatpush1.msra.mxu0 0.0
        %2133 = vmatprep.subr.mxu0 0.0
        %2134 = vmatpush1.msra.mxu0 0.0
        %2135 = vmatprep.subr.mxu0 0.0
        %2136 = vmatpush1.msra.mxu0 0.0
        %2137 = vmatprep.subr.mxu0 0.0
        %2138 = vmatpush1.msra.mxu0 0.0
        %2139 = vmatprep.subr.mxu0 0.0
        %2140 = vmatpush1.msra.mxu0 0.0
        %2141 = vmatprep.mubr.f32.mxu0 0.0
        %2142 = vmatmul.mubr.f32.gmra.mrb[0].mxu0 %v2072
        %v2143 = vpop.f32.mrb[0].mxu0
        %v2144 = vadd.f32 0.0, %v2143
        %v2145 = vpop.f32.mrb[0].mxu0
        %2146 = vmatprep.mubr.f32.mxu0 0.0
        %2147 = vmatmul.mubr.f32.gmra.mrb[0].mxu0 %v2075
        %v2148 = vpop.f32.mrb[0].mxu0
        %v2149 = vadd.f32 0.0, %v2148
        %v2150 = vpop.f32.mrb[0].mxu0
        %2151 = vdwg.mxu0
        %v2152 = vadd.f32 %v1733, %v2144
        %v2153 = vadd.f32 %v1738, %v2149
        %2154 = vrot.lane.b32.xlu0 %v916, 104
        %v2155 = vpop.permute.xlu0 %2154
        %2156 = vrot.lane.b32.xlu0 %v908, 72
        %v2157 = vpop.permute.xlu0 %2156
        %v2158 = vsel %vm921, %v2155, 0
        %v2160 = vsel %vm921, %v2157, 0
        %2162 = vmatprep.subr.mxu0 0.0
        %2163 = vmatpush1.xpose.msra.mxu0 %v2160
        %2164 = vmatprep.subr.mxu0 0.0
        %2165 = vmatpush1.xpose.msra.mxu0 0.0
        %2166 = vmatprep.subr.mxu0 0.0
        %2167 = vmatpush1.xpose.msra.mxu0 0.0
        %2168 = vmatprep.subr.mxu0 0.0
        %2169 = vmatpush1.xpose.msra.mxu0 0.0
        %2170 = vmatprep.subr.mxu0 0.0
        %2171 = vmatpush1.xpose.msra.mxu0 0.0
        %2172 = vmatprep.subr.mxu0 0.0
        %2173 = vmatpush1.xpose.msra.mxu0 0.0
        %2174 = vmatprep.subr.mxu0 0.0
        %2175 = vmatpush1.xpose.msra.mxu0 0.0
        %2176 = vmatprep.subr.mxu0 0.0
        %2177 = vmatpush1.xpose.msra.mxu0 0.0
        %2178 = vmatprep.subr.mxu0 0.0
        %2179 = vmatpush1.xpose.msra.mxu0 0.0
        %2180 = vmatprep.subr.mxu0 0.0
        %2181 = vmatpush1.xpose.msra.mxu0 0.0
        %2182 = vmatprep.subr.mxu0 0.0
        %2183 = vmatpush1.xpose.msra.mxu0 0.0
        %2184 = vmatprep.subr.mxu0 0.0
        %2185 = vmatpush1.xpose.msra.mxu0 0.0
        %2186 = vmatprep.subr.mxu0 0.0
        %2187 = vmatpush1.xpose.msra.mxu0 0.0
        %2188 = vmatprep.subr.mxu0 0.0
        %2189 = vmatpush1.xpose.msra.mxu0 0.0
        %2190 = vmatprep.subr.mxu0 0.0
        %2191 = vmatpush1.xpose.msra.mxu0 0.0
        %2192 = vmatprep.subr.mxu0 0.0
        %2193 = vmatpush1.xpose.msra.mxu0 0.0
        %2194 = vmatprep.subr.mxu0 0.0
        %2195 = vmatpush1.xpose.msra.mxu0 0.0
        %2196 = vmatprep.subr.mxu0 0.0
        %2197 = vmatpush1.xpose.msra.mxu0 0.0
        %2198 = vmatprep.subr.mxu0 0.0
        %2199 = vmatpush1.xpose.msra.mxu0 0.0
        %2200 = vmatprep.subr.mxu0 0.0
        %2201 = vmatpush1.xpose.msra.mxu0 0.0
        %2202 = vmatprep.subr.mxu0 0.0
        %2203 = vmatpush1.xpose.msra.mxu0 0.0
        %2204 = vmatprep.subr.mxu0 0.0
        %2205 = vmatpush1.xpose.msra.mxu0 0.0
        %2206 = vmatprep.subr.mxu0 0.0
        %2207 = vmatpush1.xpose.msra.mxu0 0.0
        %2208 = vmatprep.subr.mxu0 0.0
        %2209 = vmatpush1.xpose.msra.mxu0 0.0
        %2210 = vmatprep.subr.mxu0 0.0
        %2211 = vmatpush1.xpose.msra.mxu0 0.0
        %2212 = vmatprep.subr.mxu0 0.0
        %2213 = vmatpush1.xpose.msra.mxu0 0.0
        %2214 = vmatprep.subr.mxu0 0.0
        %2215 = vmatpush1.xpose.msra.mxu0 0.0
        %2216 = vmatprep.subr.mxu0 0.0
        %2217 = vmatpush1.xpose.msra.mxu0 0.0
        %2218 = vmatprep.subr.mxu0 0.0
        %2219 = vmatpush1.xpose.msra.mxu0 0.0
        %2220 = vmatprep.subr.mxu0 0.0
        %2221 = vmatpush1.xpose.msra.mxu0 0.0
        %2222 = vmatprep.subr.mxu0 0.0
        %2223 = vmatpush1.xpose.msra.mxu0 0.0
        %2224 = vmatprep.subr.mxu0 0.0
        %2225 = vmatpush1.xpose.msra.mxu0 0.0
        %2226 = vmatprep.mubr.f32.mxu0 0.0
        %2227 = vmatmul.mubr.f32.gmra.mrb[0].mxu0 %v2158
        %v2228 = vpop.f32.mrb[0].mxu0
        %v2229 = vadd.f32 0.0, %v2228
        %v2230 = vpop.f32.mrb[0].mxu0
        %2231 = vdwg.mxu0
        %2232 = vrot.lane.b32.xlu0 %v917, 104
        %v2233 = vpop.permute.xlu0 %2232
        %2234 = vrot.lane.b32.xlu0 %v913, 72
        %v2235 = vpop.permute.xlu0 %2234
        %v2236 = vsel %vm921, %v2233, 0
        %v2238 = vsel %vm921, %v2235, 0
        %2240 = vmatprep.subr.mxu0 0.0
        %2241 = vmatpush1.xpose.msra.mxu0 %v2238
        %2242 = vmatprep.subr.mxu0 0.0
        %2243 = vmatpush1.xpose.msra.mxu0 0.0
        %2244 = vmatprep.subr.mxu0 0.0
        %2245 = vmatpush1.xpose.msra.mxu0 0.0
        %2246 = vmatprep.subr.mxu0 0.0
        %2247 = vmatpush1.xpose.msra.mxu0 0.0
        %2248 = vmatprep.subr.mxu0 0.0
        %2249 = vmatpush1.xpose.msra.mxu0 0.0
        %2250 = vmatprep.subr.mxu0 0.0
        %2251 = vmatpush1.xpose.msra.mxu0 0.0
        %2252 = vmatprep.subr.mxu0 0.0
        %2253 = vmatpush1.xpose.msra.mxu0 0.0
        %2254 = vmatprep.subr.mxu0 0.0
        %2255 = vmatpush1.xpose.msra.mxu0 0.0
        %2256 = vmatprep.subr.mxu0 0.0
        %2257 = vmatpush1.xpose.msra.mxu0 0.0
        %2258 = vmatprep.subr.mxu0 0.0
        %2259 = vmatpush1.xpose.msra.mxu0 0.0
        %2260 = vmatprep.subr.mxu0 0.0
        %2261 = vmatpush1.xpose.msra.mxu0 0.0
        %2262 = vmatprep.subr.mxu0 0.0
        %2263 = vmatpush1.xpose.msra.mxu0 0.0
        %2264 = vmatprep.subr.mxu0 0.0
        %2265 = vmatpush1.xpose.msra.mxu0 0.0
        %2266 = vmatprep.subr.mxu0 0.0
        %2267 = vmatpush1.xpose.msra.mxu0 0.0
        %2268 = vmatprep.subr.mxu0 0.0
        %2269 = vmatpush1.xpose.msra.mxu0 0.0
        %2270 = vmatprep.subr.mxu0 0.0
        %2271 = vmatpush1.xpose.msra.mxu0 0.0
        %2272 = vmatprep.subr.mxu0 0.0
        %2273 = vmatpush1.xpose.msra.mxu0 0.0
        %2274 = vmatprep.subr.mxu0 0.0
        %2275 = vmatpush1.xpose.msra.mxu0 0.0
        %2276 = vmatprep.subr.mxu0 0.0
        %2277 = vmatpush1.xpose.msra.mxu0 0.0
        %2278 = vmatprep.subr.mxu0 0.0
        %2279 = vmatpush1.xpose.msra.mxu0 0.0
        %2280 = vmatprep.subr.mxu0 0.0
        %2281 = vmatpush1.xpose.msra.mxu0 0.0
        %2282 = vmatprep.subr.mxu0 0.0
        %2283 = vmatpush1.xpose.msra.mxu0 0.0
        %2284 = vmatprep.subr.mxu0 0.0
        %2285 = vmatpush1.xpose.msra.mxu0 0.0
        %2286 = vmatprep.subr.mxu0 0.0
        %2287 = vmatpush1.xpose.msra.mxu0 0.0
        %2288 = vmatprep.subr.mxu0 0.0
        %2289 = vmatpush1.xpose.msra.mxu0 0.0
        %2290 = vmatprep.subr.mxu0 0.0
        %2291 = vmatpush1.xpose.msra.mxu0 0.0
        %2292 = vmatprep.subr.mxu0 0.0
        %2293 = vmatpush1.xpose.msra.mxu0 0.0
        %2294 = vmatprep.subr.mxu0 0.0
        %2295 = vmatpush1.xpose.msra.mxu0 0.0
        %2296 = vmatprep.subr.mxu0 0.0
        %2297 = vmatpush1.xpose.msra.mxu0 0.0
        %2298 = vmatprep.subr.mxu0 0.0
        %2299 = vmatpush1.xpose.msra.mxu0 0.0
        %2300 = vmatprep.subr.mxu0 0.0
        %2301 = vmatpush1.xpose.msra.mxu0 0.0
        %2302 = vmatprep.subr.mxu0 0.0
        %2303 = vmatpush1.xpose.msra.mxu0 0.0
        %2304 = vmatprep.mubr.f32.mxu0 0.0
        %2305 = vmatmul.mubr.f32.gmra.mrb[0].mxu0 %v2236
        %v2306 = vpop.f32.mrb[0].mxu0
        %v2307 = vadd.f32 0.0, %v2306
        %v2308 = vpop.f32.mrb[0].mxu0
        %2309 = vdwg.mxu0
        %v2310 = vsel %vm921, %v2229, -inf
        %2311 = vmax.xlane.f32.xlu0 %v2310
        %v2312 = vpop.xlane.xlu0 %2311
        %v2313 = vsel %vm921, %v2307, -inf
        %2314 = vmax.xlane.f32.xlu0 %v2313
        %v2315 = vpop.xlane.xlu0 %2314
        %v2316 = vsub.f32 %v2229, %v2312
        %v2317 = vsub.f32 %v2307, %v2315
        %v2318 = vmul.f32 %v2316, 1.442695
        %v2319 = vpow.pop %v2318
        %v2320 = vmul.f32 %v2317, 1.442695
        %v2321 = vpow.pop %v2320
        %v2322 = vsel %vm921, %v2319, 0.0
        %2323 = vadd.xlane.f32.xlu0 %v2322
        %v2324 = vpop.xlane.xlu0 %2323
        %v2325 = vsel %vm921, %v2321, 0.0
        %2326 = vadd.xlane.f32.xlu0 %v2325
        %v2327 = vpop.xlane.xlu0 %2326
        %v2328 = vrcp.pop %v2324
        %v2329 = vrcp.pop %v2327
        %v2330 = vmul.f32 %v2319, %v2328
        %v2331 = vmul.f32 %v2321, %v2329
        %2332 = vrot.lane.b32.xlu0 %v908, 40
        %v2333 = vpop.permute.xlu0 %2332
        %v2336 = vsel %vm921, %v2330, 0
        %2338 = vmatprep.subr.mxu0 0.0
        %2339 = vmatpush1.msra.mxu0 %v2333
        %2340 = vmatprep.subr.mxu0 0.0
        %2341 = vmatpush1.msra.mxu0 0.0
        %2342 = vmatprep.subr.mxu0 0.0
        %2343 = vmatpush1.msra.mxu0 0.0
        %2344 = vmatprep.subr.mxu0 0.0
        %2345 = vmatpush1.msra.mxu0 0.0
        %2346 = vmatprep.subr.mxu0 0.0
        %2347 = vmatpush1.msra.mxu0 0.0
        %2348 = vmatprep.subr.mxu0 0.0
        %2349 = vmatpush1.msra.mxu0 0.0
        %2350 = vmatprep.subr.mxu0 0.0
        %2351 = vmatpush1.msra.mxu0 0.0
        %2352 = vmatprep.subr.mxu0 0.0
        %2353 = vmatpush1.msra.mxu0 0.0
        %2354 = vmatprep.subr.mxu0 0.0
        %2355 = vmatpush1.msra.mxu0 0.0
        %2356 = vmatprep.subr.mxu0 0.0
        %2357 = vmatpush1.msra.mxu0 0.0
        %2358 = vmatprep.subr.mxu0 0.0
        %2359 = vmatpush1.msra.mxu0 0.0
        %2360 = vmatprep.subr.mxu0 0.0
        %2361 = vmatpush1.msra.mxu0 0.0
        %2362 = vmatprep.subr.mxu0 0.0
        %2363 = vmatpush1.msra.mxu0 0.0
        %2364 = vmatprep.subr.mxu0 0.0
        %2365 = vmatpush1.msra.mxu0 0.0
        %2366 = vmatprep.subr.mxu0 0.0
        %2367 = vmatpush1.msra.mxu0 0.0
        %2368 = vmatprep.subr.mxu0 0.0
        %2369 = vmatpush1.msra.mxu0 0.0
        %2370 = vmatprep.subr.mxu0 0.0
        %2371 = vmatpush1.msra.mxu0 0.0
        %2372 = vmatprep.subr.mxu0 0.0
        %2373 = vmatpush1.msra.mxu0 0.0
        %2374 = vmatprep.subr.mxu0 0.0
        %2375 = vmatpush1.msra.mxu0 0.0
        %2376 = vmatprep.subr.mxu0 0.0
        %2377 = vmatpush1.msra.mxu0 0.0
        %2378 = vmatprep.subr.mxu0 0.0
        %2379 = vmatpush1.msra.mxu0 0.0
        %2380 = vmatprep.subr.mxu0 0.0
        %2381 = vmatpush1.msra.mxu0 0.0
        %2382 = vmatprep.subr.mxu0 0.0
        %2383 = vmatpush1.msra.mxu0 0.0
        %2384 = vmatprep.subr.mxu0 0.0
        %2385 = vmatpush1.msra.mxu0 0.0
        %2386 = vmatprep.subr.mxu0 0.0
        %2387 = vmatpush1.msra.mxu0 0.0
        %2388 = vmatprep.subr.mxu0 0.0
        %2389 = vmatpush1.msra.mxu0 0.0
        %2390 = vmatprep.subr.mxu0 0.0
        %2391 = vmatpush1.msra.mxu0 0.0
        %2392 = vmatprep.subr.mxu0 0.0
        %2393 = vmatpush1.msra.mxu0 0.0
        %2394 = vmatprep.subr.mxu0 0.0
        %2395 = vmatpush1.msra.mxu0 0.0
        %2396 = vmatprep.subr.mxu0 0.0
        %2397 = vmatpush1.msra.mxu0 0.0
        %2398 = vmatprep.subr.mxu0 0.0
        %2399 = vmatpush1.msra.mxu0 0.0
        %2400 = vmatprep.subr.mxu0 0.0
        %2401 = vmatpush1.msra.mxu0 0.0
        %2402 = vmatprep.mubr.f32.mxu0 0.0
        %2403 = vmatmul.mubr.f32.gmra.mrb[0].mxu0 %v2336
        %v2404 = vpop.f32.mrb[0].mxu0
        %v2405 = vadd.f32 0.0, %v2404
        %v2406 = vpop.f32.mrb[0].mxu0
        %2407 = vdwg.mxu0
        %2408 = vrot.lane.b32.xlu0 %v913, 40
        %v2409 = vpop.permute.xlu0 %2408
        %v2412 = vsel %vm921, %v2331, 0
        %2414 = vmatprep.subr.mxu0 0.0
        %2415 = vmatpush1.msra.mxu0 %v2409
        %2416 = vmatprep.subr.mxu0 0.0
        %2417 = vmatpush1.msra.mxu0 0.0
        %2418 = vmatprep.subr.mxu0 0.0
        %2419 = vmatpush1.msra.mxu0 0.0
        %2420 = vmatprep.subr.mxu0 0.0
        %2421 = vmatpush1.msra.mxu0 0.0
        %2422 = vmatprep.subr.mxu0 0.0
        %2423 = vmatpush1.msra.mxu0 0.0
        %2424 = vmatprep.subr.mxu0 0.0
        %2425 = vmatpush1.msra.mxu0 0.0
        %2426 = vmatprep.subr.mxu0 0.0
        %2427 = vmatpush1.msra.mxu0 0.0
        %2428 = vmatprep.subr.mxu0 0.0
        %2429 = vmatpush1.msra.mxu0 0.0
        %2430 = vmatprep.subr.mxu0 0.0
        %2431 = vmatpush1.msra.mxu0 0.0
        %2432 = vmatprep.subr.mxu0 0.0
        %2433 = vmatpush1.msra.mxu0 0.0
        %2434 = vmatprep.subr.mxu0 0.0
        %2435 = vmatpush1.msra.mxu0 0.0
        %2436 = vmatprep.subr.mxu0 0.0
        %2437 = vmatpush1.msra.mxu0 0.0
        %2438 = vmatprep.subr.mxu0 0.0
        %2439 = vmatpush1.msra.mxu0 0.0
        %2440 = vmatprep.subr.mxu0 0.0
        %2441 = vmatpush1.msra.mxu0 0.0
        %2442 = vmatprep.subr.mxu0 0.0
        %2443 = vmatpush1.msra.mxu0 0.0
        %2444 = vmatprep.subr.mxu0 0.0
        %2445 = vmatpush1.msra.mxu0 0.0
        %2446 = vmatprep.subr.mxu0 0.0
        %2447 = vmatpush1.msra.mxu0 0.0
        %2448 = vmatprep.subr.mxu0 0.0
        %2449 = vmatpush1.msra.mxu0 0.0
        %2450 = vmatprep.subr.mxu0 0.0
        %2451 = vmatpush1.msra.mxu0 0.0
        %2452 = vmatprep.subr.mxu0 0.0
        %2453 = vmatpush1.msra.mxu0 0.0
        %2454 = vmatprep.subr.mxu0 0.0
        %2455 = vmatpush1.msra.mxu0 0.0
        %2456 = vmatprep.subr.mxu0 0.0
        %2457 = vmatpush1.msra.mxu0 0.0
        %2458 = vmatprep.subr.mxu0 0.0
        %2459 = vmatpush1.msra.mxu0 0.0
        %2460 = vmatprep.subr.mxu0 0.0
        %2461 = vmatpush1.msra.mxu0 0.0
        %2462 = vmatprep.subr.mxu0 0.0
        %2463 = vmatpush1.msra.mxu0 0.0
        %2464 = vmatprep.subr.mxu0 0.0
        %2465 = vmatpush1.msra.mxu0 0.0
        %2466 = vmatprep.subr.mxu0 0.0
        %2467 = vmatpush1.msra.mxu0 0.0
        %2468 = vmatprep.subr.mxu0 0.0
        %2469 = vmatpush1.msra.mxu0 0.0
        %2470 = vmatprep.subr.mxu0 0.0
        %2471 = vmatpush1.msra.mxu0 0.0
        %2472 = vmatprep.subr.mxu0 0.0
        %2473 = vmatpush1.msra.mxu0 0.0
        %2474 = vmatprep.subr.mxu0 0.0
        %2475 = vmatpush1.msra.mxu0 0.0
        %2476 = vmatprep.subr.mxu0 0.0
        %2477 = vmatpush1.msra.mxu0 0.0
        %2478 = vmatprep.mubr.f32.mxu0 0.0
        %2479 = vmatmul.mubr.f32.gmra.mrb[0].mxu0 %v2412
        %v2480 = vpop.f32.mrb[0].mxu0
        %v2481 = vadd.f32 0.0, %v2480
        %v2482 = vpop.f32.mrb[0].mxu0
        %2483 = vdwg.mxu0
        %v2485 = vsel %vm921, %v2405, 0
        %v2488 = vsel %vm921, %v2481, 0
        %2490 = vmatprep.subr.mxu0 0.0
        %2491 = vmatpush1.msra.mxu0 %v827
        %2492 = vmatprep.subr.mxu0 0.0
        %2493 = vmatpush1.msra.mxu0 0.0
        %2494 = vmatprep.subr.mxu0 0.0
        %2495 = vmatpush1.msra.mxu0 0.0
        %2496 = vmatprep.subr.mxu0 0.0
        %2497 = vmatpush1.msra.mxu0 0.0
        %2498 = vmatprep.subr.mxu0 0.0
        %2499 = vmatpush1.msra.mxu0 0.0
        %2500 = vmatprep.subr.mxu0 0.0
        %2501 = vmatpush1.msra.mxu0 0.0
        %2502 = vmatprep.subr.mxu0 0.0
        %2503 = vmatpush1.msra.mxu0 0.0
        %2504 = vmatprep.subr.mxu0 0.0
        %2505 = vmatpush1.msra.mxu0 0.0
        %2506 = vmatprep.subr.mxu0 0.0
        %2507 = vmatpush1.msra.mxu0 0.0
        %2508 = vmatprep.subr.mxu0 0.0
        %2509 = vmatpush1.msra.mxu0 0.0
        %2510 = vmatprep.subr.mxu0 0.0
        %2511 = vmatpush1.msra.mxu0 0.0
        %2512 = vmatprep.subr.mxu0 0.0
        %2513 = vmatpush1.msra.mxu0 0.0
        %2514 = vmatprep.subr.mxu0 0.0
        %2515 = vmatpush1.msra.mxu0 0.0
        %2516 = vmatprep.subr.mxu0 0.0
        %2517 = vmatpush1.msra.mxu0 0.0
        %2518 = vmatprep.subr.mxu0 0.0
        %2519 = vmatpush1.msra.mxu0 0.0
        %2520 = vmatprep.subr.mxu0 0.0
        %2521 = vmatpush1.msra.mxu0 0.0
        %2522 = vmatprep.subr.mxu0 0.0
        %2523 = vmatpush1.msra.mxu0 0.0
        %2524 = vmatprep.subr.mxu0 0.0
        %2525 = vmatpush1.msra.mxu0 0.0
        %2526 = vmatprep.subr.mxu0 0.0
        %2527 = vmatpush1.msra.mxu0 0.0
        %2528 = vmatprep.subr.mxu0 0.0
        %2529 = vmatpush1.msra.mxu0 0.0
        %2530 = vmatprep.subr.mxu0 0.0
        %2531 = vmatpush1.msra.mxu0 0.0
        %2532 = vmatprep.subr.mxu0 0.0
        %2533 = vmatpush1.msra.mxu0 0.0
        %2534 = vmatprep.subr.mxu0 0.0
        %2535 = vmatpush1.msra.mxu0 0.0
        %2536 = vmatprep.subr.mxu0 0.0
        %2537 = vmatpush1.msra.mxu0 0.0
        %2538 = vmatprep.subr.mxu0 0.0
        %2539 = vmatpush1.msra.mxu0 0.0
        %2540 = vmatprep.subr.mxu0 0.0
        %2541 = vmatpush1.msra.mxu0 0.0
        %2542 = vmatprep.subr.mxu0 0.0
        %2543 = vmatpush1.msra.mxu0 0.0
        %2544 = vmatprep.subr.mxu0 0.0
        %2545 = vmatpush1.msra.mxu0 0.0
        %2546 = vmatprep.subr.mxu0 0.0
        %2547 = vmatpush1.msra.mxu0 0.0
        %2548 = vmatprep.subr.mxu0 0.0
        %2549 = vmatpush1.msra.mxu0 0.0
        %2550 = vmatprep.subr.mxu0 0.0
        %2551 = vmatpush1.msra.mxu0 0.0
        %2552 = vmatprep.subr.mxu0 0.0
        %2553 = vmatpush1.msra.mxu0 0.0
        %2554 = vmatprep.mubr.f32.mxu0 0.0
        %2555 = vmatmul.mubr.f32.gmra.mrb[0].mxu0 %v2485
        %v2556 = vpop.f32.mrb[0].mxu0
        %v2557 = vadd.f32 0.0, %v2556
        %v2558 = vpop.f32.mrb[0].mxu0
        %2559 = vmatprep.mubr.f32.mxu0 0.0
        %2560 = vmatmul.mubr.f32.gmra.mrb[0].mxu0 %v2488
        %v2561 = vpop.f32.mrb[0].mxu0
        %v2562 = vadd.f32 0.0, %v2561
        %v2563 = vpop.f32.mrb[0].mxu0
        %2564 = vdwg.mxu0
        %v2565 = vadd.f32 %v2152, %v2557
        %v2566 = vadd.f32 %v2153, %v2562
        %v2568 = vlaneseq
        %v2569 = vshrl.u32 %v2568, 7
        %v2570 = vsub.s32 0, %v2569
        %v2571 = vrot.slane %v828, %v2570
        %v2573 = vadd.f32 %v2565, %v2571
        %v2574 = vadd.f32 %v2566, %v2571
        %v2575 = vadd.f32 %v771, %v2573
        %v2576 = vadd.f32 %v772, %v2574
        %v2577 = vld [vmem:[#allocation10] sm:$0x1]
        %v2578 = vld [vmem:[#allocation11] sm:$0x1]
        %v2579 = vsel %vm775, %v2575, 0.0
        %2580 = vadd.xlane.f32.xlu0 %v2579
        %v2581 = vpop.xlane.xlu0 %2580
        %v2582 = vsel %vm775, %v2576, 0.0
        %2583 = vadd.xlane.f32.xlu0 %v2582
        %v2584 = vpop.xlane.xlu0 %2583
        %v2585 = vmul.f32 %v2581, %v782
        %v2586 = vmul.f32 %v2584, %v782
        %v2587 = vsub.f32 %v2575, %v2585
        %v2588 = vsub.f32 %v2576, %v2586
        %v2589 = vmul.f32 %v2587, %v2587
        %v2590 = vmul.f32 %v2588, %v2588
        %v2591 = vsel %vm775, %v2589, 0.0
        %2592 = vadd.xlane.f32.xlu0 %v2591
        %v2593 = vpop.xlane.xlu0 %2592
        %v2594 = vsel %vm775, %v2590, 0.0
        %2595 = vadd.xlane.f32.xlu0 %v2594
        %v2596 = vpop.xlane.xlu0 %2595
        %v2597 = vmul.f32 %v2593, %v782
        %v2598 = vmul.f32 %v2596, %v782
        %v2599 = vadd.f32 %v2597, 1e-05
        %v2600 = vadd.f32 %v2598, 1e-05
        %v2601 = vrsqrt.pop %v2599
        %v2602 = vrsqrt.pop %v2600
        %v2603 = vmul.f32 %v2587, %v2601
        %v2604 = vmul.f32 %v2588, %v2602
        %v2606 = vlaneseq
        %v2607 = vshrl.u32 %v2606, 7
        %v2608 = vsub.s32 0, %v2607
        %v2609 = vrot.slane %v2577, %v2608
        %v2611 = vmul.f32 %v2603, %v2609
        %v2612 = vmul.f32 %v2604, %v2609
        %v2614 = vlaneseq
        %v2615 = vshrl.u32 %v2614, 7
        %v2616 = vsub.s32 0, %v2615
        %v2617 = vrot.slane %v2578, %v2616
        %v2619 = vadd.f32 %v2611, %v2617
        %v2620 = vadd.f32 %v2612, %v2617
        %v2621 = vld [vmem:[%s9] sm:$0xff]
        %v2622 = vld [vmem:[%s9 + $0x8] sm:$0xff]
        %v2623 = vld [vmem:[%s9 + $0x10] sm:$0xff]
        %v2624 = vld [vmem:[%s9 + $0x18] sm:$0xff]
        %v2625 = vld [vmem:[#allocation13] sm:$0x1]
        %v2626 = vld [vmem:[#allocation14] sm:$0xff]
        %v2627 = vld [vmem:[#allocation14 + $0x8] sm:$0xff]
        %v2628 = vld [vmem:[#allocation14 + $0x10] sm:$0xff]
        %v2629 = vld [vmem:[#allocation14 + $0x18] sm:$0xff]
        %v2630 = vld [vmem:[#allocation16] sm:$0x1]
        %v2632 = vlaneseq
        %v2633 = vshrl.u32 %v2632, 7
        %v2634 = vsub.s32 0, %v2633
        %v2635 = vrot.slane %v2625, %v2634
        %v2638 = vsel %vm775, %v2619, 0
        %v2641 = vsel %vm775, %v2620, 0
        %2643 = vmatprep.subr.mxu0 0.0
        %2644 = vmatpush1.msra.mxu0 %v2621
        %2645 = vmatprep.subr.mxu0 0.0
        %2646 = vmatpush1.msra.mxu0 %v2622
        %2647 = vmatprep.subr.mxu0 0.0
        %2648 = vmatpush1.msra.mxu0 %v2623
        %2649 = vmatprep.subr.mxu0 0.0
        %2650 = vmatpush1.msra.mxu0 %v2624
        %2651 = vmatprep.subr.mxu0 0.0
        %2652 = vmatpush1.msra.mxu0 0.0
        %2653 = vmatprep.subr.mxu0 0.0
        %2654 = vmatpush1.msra.mxu0 0.0
        %2655 = vmatprep.subr.mxu0 0.0
        %2656 = vmatpush1.msra.mxu0 0.0
        %2657 = vmatprep.subr.mxu0 0.0
        %2658 = vmatpush1.msra.mxu0 0.0
        %2659 = vmatprep.subr.mxu0 0.0
        %2660 = vmatpush1.msra.mxu0 0.0
        %2661 = vmatprep.subr.mxu0 0.0
        %2662 = vmatpush1.msra.mxu0 0.0
        %2663 = vmatprep.subr.mxu0 0.0
        %2664 = vmatpush1.msra.mxu0 0.0
        %2665 = vmatprep.subr.mxu0 0.0
        %2666 = vmatpush1.msra.mxu0 0.0
        %2667 = vmatprep.subr.mxu0 0.0
        %2668 = vmatpush1.msra.mxu0 0.0
        %2669 = vmatprep.subr.mxu0 0.0
        %2670 = vmatpush1.msra.mxu0 0.0
        %2671 = vmatprep.subr.mxu0 0.0
        %2672 = vmatpush1.msra.mxu0 0.0
        %2673 = vmatprep.subr.mxu0 0.0
        %2674 = vmatpush1.msra.mxu0 0.0
        %2675 = vmatprep.subr.mxu0 0.0
        %2676 = vmatpush1.msra.mxu0 0.0
        %2677 = vmatprep.subr.mxu0 0.0
        %2678 = vmatpush1.msra.mxu0 0.0
        %2679 = vmatprep.subr.mxu0 0.0
        %2680 = vmatpush1.msra.mxu0 0.0
        %2681 = vmatprep.subr.mxu0 0.0
        %2682 = vmatpush1.msra.mxu0 0.0
        %2683 = vmatprep.subr.mxu0 0.0
        %2684 = vmatpush1.msra.mxu0 0.0
        %2685 = vmatprep.subr.mxu0 0.0
        %2686 = vmatpush1.msra.mxu0 0.0
        %2687 = vmatprep.subr.mxu0 0.0
        %2688 = vmatpush1.msra.mxu0 0.0
        %2689 = vmatprep.subr.mxu0 0.0
        %2690 = vmatpush1.msra.mxu0 0.0
        %2691 = vmatprep.subr.mxu0 0.0
        %2692 = vmatpush1.msra.mxu0 0.0
        %2693 = vmatprep.subr.mxu0 0.0
        %2694 = vmatpush1.msra.mxu0 0.0
        %2695 = vmatprep.subr.mxu0 0.0
        %2696 = vmatpush1.msra.mxu0 0.0
        %2697 = vmatprep.subr.mxu0 0.0
        %2698 = vmatpush1.msra.mxu0 0.0
        %2699 = vmatprep.subr.mxu0 0.0
        %2700 = vmatpush1.msra.mxu0 0.0
        %2701 = vmatprep.subr.mxu0 0.0
        %2702 = vmatpush1.msra.mxu0 0.0
        %2703 = vmatprep.subr.mxu0 0.0
        %2704 = vmatpush1.msra.mxu0 0.0
        %2705 = vmatprep.subr.mxu0 0.0
        %2706 = vmatpush1.msra.mxu0 0.0
        %2707 = vmatprep.mubr.f32.mxu0 0.0
        %2708 = vmatmul.mubr.f32.gmra.mrb[0].mxu0 %v2638
        %v2709 = vpop.f32.mrb[0].mxu0
        %v2710 = vadd.f32 %v2635, %v2709
        %v2711 = vpop.f32.mrb[0].mxu0
        %2712 = vmatprep.mubr.f32.mxu0 0.0
        %2713 = vmatmul.mubr.f32.gmra.mrb[0].mxu0 %v2641
        %v2714 = vpop.f32.mrb[0].mxu0
        %v2715 = vadd.f32 %v2635, %v2714
        %v2716 = vpop.f32.mrb[0].mxu0
        %2717 = vdwg.mxu0
        %v2718 = vmul.f32 %v2710, 0.35355338
        %v2719 = vmul.f32 %v2715, 0.35355338
        %2721 = vrot.lane.b32.xlu0 %v2710, 96
        %v2722 = vpop.permute.xlu0 %2721
        %v2724 = vsel %vm921, %v2718, 0
        %v2726 = vsel %vm921, %v2722, 0
        %2728 = vmatprep.subr.mxu0 0.0
        %2729 = vmatpush1.xpose.msra.mxu0 %v2726
        %2730 = vmatprep.subr.mxu0 0.0
        %2731 = vmatpush1.xpose.msra.mxu0 0.0
        %2732 = vmatprep.subr.mxu0 0.0
        %2733 = vmatpush1.xpose.msra.mxu0 0.0
        %2734 = vmatprep.subr.mxu0 0.0
        %2735 = vmatpush1.xpose.msra.mxu0 0.0
        %2736 = vmatprep.subr.mxu0 0.0
        %2737 = vmatpush1.xpose.msra.mxu0 0.0
        %2738 = vmatprep.subr.mxu0 0.0
        %2739 = vmatpush1.xpose.msra.mxu0 0.0
        %2740 = vmatprep.subr.mxu0 0.0
        %2741 = vmatpush1.xpose.msra.mxu0 0.0
        %2742 = vmatprep.subr.mxu0 0.0
        %2743 = vmatpush1.xpose.msra.mxu0 0.0
        %2744 = vmatprep.subr.mxu0 0.0
        %2745 = vmatpush1.xpose.msra.mxu0 0.0
        %2746 = vmatprep.subr.mxu0 0.0
        %2747 = vmatpush1.xpose.msra.mxu0 0.0
        %2748 = vmatprep.subr.mxu0 0.0
        %2749 = vmatpush1.xpose.msra.mxu0 0.0
        %2750 = vmatprep.subr.mxu0 0.0
        %2751 = vmatpush1.xpose.msra.mxu0 0.0
        %2752 = vmatprep.subr.mxu0 0.0
        %2753 = vmatpush1.xpose.msra.mxu0 0.0
        %2754 = vmatprep.subr.mxu0 0.0
        %2755 = vmatpush1.xpose.msra.mxu0 0.0
        %2756 = vmatprep.subr.mxu0 0.0
        %2757 = vmatpush1.xpose.msra.mxu0 0.0
        %2758 = vmatprep.subr.mxu0 0.0
        %2759 = vmatpush1.xpose.msra.mxu0 0.0
        %2760 = vmatprep.subr.mxu0 0.0
        %2761 = vmatpush1.xpose.msra.mxu0 0.0
        %2762 = vmatprep.subr.mxu0 0.0
        %2763 = vmatpush1.xpose.msra.mxu0 0.0
        %2764 = vmatprep.subr.mxu0 0.0
        %2765 = vmatpush1.xpose.msra.mxu0 0.0
        %2766 = vmatprep.subr.mxu0 0.0
        %2767 = vmatpush1.xpose.msra.mxu0 0.0
        %2768 = vmatprep.subr.mxu0 0.0
        %2769 = vmatpush1.xpose.msra.mxu0 0.0
        %2770 = vmatprep.subr.mxu0 0.0
        %2771 = vmatpush1.xpose.msra.mxu0 0.0
        %2772 = vmatprep.subr.mxu0 0.0
        %2773 = vmatpush1.xpose.msra.mxu0 0.0
        %2774 = vmatprep.subr.mxu0 0.0
        %2775 = vmatpush1.xpose.msra.mxu0 0.0
        %2776 = vmatprep.subr.mxu0 0.0
        %2777 = vmatpush1.xpose.msra.mxu0 0.0
        %2778 = vmatprep.subr.mxu0 0.0
        %2779 = vmatpush1.xpose.msra.mxu0 0.0
        %2780 = vmatprep.subr.mxu0 0.0
        %2781 = vmatpush1.xpose.msra.mxu0 0.0
        %2782 = vmatprep.subr.mxu0 0.0
        %2783 = vmatpush1.xpose.msra.mxu0 0.0
        %2784 = vmatprep.subr.mxu0 0.0
        %2785 = vmatpush1.xpose.msra.mxu0 0.0
        %2786 = vmatprep.subr.mxu0 0.0
        %2787 = vmatpush1.xpose.msra.mxu0 0.0
        %2788 = vmatprep.subr.mxu0 0.0
        %2789 = vmatpush1.xpose.msra.mxu0 0.0
        %2790 = vmatprep.subr.mxu0 0.0
        %2791 = vmatpush1.xpose.msra.mxu0 0.0
        %2792 = vmatprep.mubr.f32.mxu0 0.0
        %2793 = vmatmul.mubr.f32.gmra.mrb[0].mxu0 %v2724
        %v2794 = vpop.f32.mrb[0].mxu0
        %v2795 = vadd.f32 0.0, %v2794
        %v2796 = vpop.f32.mrb[0].mxu0
        %2797 = vdwg.mxu0
        %2799 = vrot.lane.b32.xlu0 %v2715, 96
        %v2800 = vpop.permute.xlu0 %2799
        %v2802 = vsel %vm921, %v2719, 0
        %v2804 = vsel %vm921, %v2800, 0
        %2806 = vmatprep.subr.mxu0 0.0
        %2807 = vmatpush1.xpose.msra.mxu0 %v2804
        %2808 = vmatprep.subr.mxu0 0.0
        %2809 = vmatpush1.xpose.msra.mxu0 0.0
        %2810 = vmatprep.subr.mxu0 0.0
        %2811 = vmatpush1.xpose.msra.mxu0 0.0
        %2812 = vmatprep.subr.mxu0 0.0
        %2813 = vmatpush1.xpose.msra.mxu0 0.0
        %2814 = vmatprep.subr.mxu0 0.0
        %2815 = vmatpush1.xpose.msra.mxu0 0.0
        %2816 = vmatprep.subr.mxu0 0.0
        %2817 = vmatpush1.xpose.msra.mxu0 0.0
        %2818 = vmatprep.subr.mxu0 0.0
        %2819 = vmatpush1.xpose.msra.mxu0 0.0
        %2820 = vmatprep.subr.mxu0 0.0
        %2821 = vmatpush1.xpose.msra.mxu0 0.0
        %2822 = vmatprep.subr.mxu0 0.0
        %2823 = vmatpush1.xpose.msra.mxu0 0.0
        %2824 = vmatprep.subr.mxu0 0.0
        %2825 = vmatpush1.xpose.msra.mxu0 0.0
        %2826 = vmatprep.subr.mxu0 0.0
        %2827 = vmatpush1.xpose.msra.mxu0 0.0
        %2828 = vmatprep.subr.mxu0 0.0
        %2829 = vmatpush1.xpose.msra.mxu0 0.0
        %2830 = vmatprep.subr.mxu0 0.0
        %2831 = vmatpush1.xpose.msra.mxu0 0.0
        %2832 = vmatprep.subr.mxu0 0.0
        %2833 = vmatpush1.xpose.msra.mxu0 0.0
        %2834 = vmatprep.subr.mxu0 0.0
        %2835 = vmatpush1.xpose.msra.mxu0 0.0
        %2836 = vmatprep.subr.mxu0 0.0
        %2837 = vmatpush1.xpose.msra.mxu0 0.0
        %2838 = vmatprep.subr.mxu0 0.0
        %2839 = vmatpush1.xpose.msra.mxu0 0.0
        %2840 = vmatprep.subr.mxu0 0.0
        %2841 = vmatpush1.xpose.msra.mxu0 0.0
        %2842 = vmatprep.subr.mxu0 0.0
        %2843 = vmatpush1.xpose.msra.mxu0 0.0
        %2844 = vmatprep.subr.mxu0 0.0
        %2845 = vmatpush1.xpose.msra.mxu0 0.0
        %2846 = vmatprep.subr.mxu0 0.0
        %2847 = vmatpush1.xpose.msra.mxu0 0.0
        %2848 = vmatprep.subr.mxu0 0.0
        %2849 = vmatpush1.xpose.msra.mxu0 0.0
        %2850 = vmatprep.subr.mxu0 0.0
        %2851 = vmatpush1.xpose.msra.mxu0 0.0
        %2852 = vmatprep.subr.mxu0 0.0
        %2853 = vmatpush1.xpose.msra.mxu0 0.0
        %2854 = vmatprep.subr.mxu0 0.0
        %2855 = vmatpush1.xpose.msra.mxu0 0.0
        %2856 = vmatprep.subr.mxu0 0.0
        %2857 = vmatpush1.xpose.msra.mxu0 0.0
        %2858 = vmatprep.subr.mxu0 0.0
        %2859 = vmatpush1.xpose.msra.mxu0 0.0
        %2860 = vmatprep.subr.mxu0 0.0
        %2861 = vmatpush1.xpose.msra.mxu0 0.0
        %2862 = vmatprep.subr.mxu0 0.0
        %2863 = vmatpush1.xpose.msra.mxu0 0.0
        %2864 = vmatprep.subr.mxu0 0.0
        %2865 = vmatpush1.xpose.msra.mxu0 0.0
        %2866 = vmatprep.subr.mxu0 0.0
        %2867 = vmatpush1.xpose.msra.mxu0 0.0
        %2868 = vmatprep.subr.mxu0 0.0
        %2869 = vmatpush1.xpose.msra.mxu0 0.0
        %2870 = vmatprep.mubr.f32.mxu0 0.0
        %2871 = vmatmul.mubr.f32.gmra.mrb[0].mxu0 %v2802
        %v2872 = vpop.f32.mrb[0].mxu0
        %v2873 = vadd.f32 0.0, %v2872
        %v2874 = vpop.f32.mrb[0].mxu0
        %2875 = vdwg.mxu0
        %v2876 = vsel %vm921, %v2795, -inf
        %2877 = vmax.xlane.f32.xlu0 %v2876
        %v2878 = vpop.xlane.xlu0 %2877
        %v2879 = vsel %vm921, %v2873, -inf
        %2880 = vmax.xlane.f32.xlu0 %v2879
        %v2881 = vpop.xlane.xlu0 %2880
        %v2882 = vsub.f32 %v2795, %v2878
        %v2883 = vsub.f32 %v2873, %v2881
        %v2884 = vmul.f32 %v2882, 1.442695
        %v2885 = vpow.pop %v2884
        %v2886 = vmul.f32 %v2883, 1.442695
        %v2887 = vpow.pop %v2886
        %v2888 = vsel %vm921, %v2885, 0.0
        %2889 = vadd.xlane.f32.xlu0 %v2888
        %v2890 = vpop.xlane.xlu0 %2889
        %v2891 = vsel %vm921, %v2887, 0.0
        %2892 = vadd.xlane.f32.xlu0 %v2891
        %v2893 = vpop.xlane.xlu0 %2892
        %v2894 = vrcp.pop %v2890
        %v2895 = vrcp.pop %v2893
        %v2896 = vmul.f32 %v2885, %v2894
        %v2897 = vmul.f32 %v2887, %v2895
        %2898 = vrot.lane.b32.xlu0 %v2710, 64
        %v2899 = vpop.permute.xlu0 %2898
        %v2902 = vsel %vm921, %v2896, 0
        %2904 = vmatprep.subr.mxu0 0.0
        %2905 = vmatpush1.msra.mxu0 %v2899
        %2906 = vmatprep.subr.mxu0 0.0
        %2907 = vmatpush1.msra.mxu0 0.0
        %2908 = vmatprep.subr.mxu0 0.0
        %2909 = vmatpush1.msra.mxu0 0.0
        %2910 = vmatprep.subr.mxu0 0.0
        %2911 = vmatpush1.msra.mxu0 0.0
        %2912 = vmatprep.subr.mxu0 0.0
        %2913 = vmatpush1.msra.mxu0 0.0
        %2914 = vmatprep.subr.mxu0 0.0
        %2915 = vmatpush1.msra.mxu0 0.0
        %2916 = vmatprep.subr.mxu0 0.0
        %2917 = vmatpush1.msra.mxu0 0.0
        %2918 = vmatprep.subr.mxu0 0.0
        %2919 = vmatpush1.msra.mxu0 0.0
        %2920 = vmatprep.subr.mxu0 0.0
        %2921 = vmatpush1.msra.mxu0 0.0
        %2922 = vmatprep.subr.mxu0 0.0
        %2923 = vmatpush1.msra.mxu0 0.0
        %2924 = vmatprep.subr.mxu0 0.0
        %2925 = vmatpush1.msra.mxu0 0.0
        %2926 = vmatprep.subr.mxu0 0.0
        %2927 = vmatpush1.msra.mxu0 0.0
        %2928 = vmatprep.subr.mxu0 0.0
        %2929 = vmatpush1.msra.mxu0 0.0
        %2930 = vmatprep.subr.mxu0 0.0
        %2931 = vmatpush1.msra.mxu0 0.0
        %2932 = vmatprep.subr.mxu0 0.0
        %2933 = vmatpush1.msra.mxu0 0.0
        %2934 = vmatprep.subr.mxu0 0.0
        %2935 = vmatpush1.msra.mxu0 0.0
        %2936 = vmatprep.subr.mxu0 0.0
        %2937 = vmatpush1.msra.mxu0 0.0
        %2938 = vmatprep.subr.mxu0 0.0
        %2939 = vmatpush1.msra.mxu0 0.0
        %2940 = vmatprep.subr.mxu0 0.0
        %2941 = vmatpush1.msra.mxu0 0.0
        %2942 = vmatprep.subr.mxu0 0.0
        %2943 = vmatpush1.msra.mxu0 0.0
        %2944 = vmatprep.subr.mxu0 0.0
        %2945 = vmatpush1.msra.mxu0 0.0
        %2946 = vmatprep.subr.mxu0 0.0
        %2947 = vmatpush1.msra.mxu0 0.0
        %2948 = vmatprep.subr.mxu0 0.0
        %2949 = vmatpush1.msra.mxu0 0.0
        %2950 = vmatprep.subr.mxu0 0.0
        %2951 = vmatpush1.msra.mxu0 0.0
        %2952 = vmatprep.subr.mxu0 0.0
        %2953 = vmatpush1.msra.mxu0 0.0
        %2954 = vmatprep.subr.mxu0 0.0
        %2955 = vmatpush1.msra.mxu0 0.0
        %2956 = vmatprep.subr.mxu0 0.0
        %2957 = vmatpush1.msra.mxu0 0.0
        %2958 = vmatprep.subr.mxu0 0.0
        %2959 = vmatpush1.msra.mxu0 0.0
        %2960 = vmatprep.subr.mxu0 0.0
        %2961 = vmatpush1.msra.mxu0 0.0
        %2962 = vmatprep.subr.mxu0 0.0
        %2963 = vmatpush1.msra.mxu0 0.0
        %2964 = vmatprep.subr.mxu0 0.0
        %2965 = vmatpush1.msra.mxu0 0.0
        %2966 = vmatprep.subr.mxu0 0.0
        %2967 = vmatpush1.msra.mxu0 0.0
        %2968 = vmatprep.mubr.f32.mxu0 0.0
        %2969 = vmatmul.mubr.f32.gmra.mrb[0].mxu0 %v2902
        %v2970 = vpop.f32.mrb[0].mxu0
        %v2971 = vadd.f32 0.0, %v2970
        %v2972 = vpop.f32.mrb[0].mxu0
        %2973 = vdwg.mxu0
        %2974 = vrot.lane.b32.xlu0 %v2715, 64
        %v2975 = vpop.permute.xlu0 %2974
        %v2978 = vsel %vm921, %v2897, 0
        %2980 = vmatprep.subr.mxu0 0.0
        %2981 = vmatpush1.msra.mxu0 %v2975
        %2982 = vmatprep.subr.mxu0 0.0
        %2983 = vmatpush1.msra.mxu0 0.0
        %2984 = vmatprep.subr.mxu0 0.0
        %2985 = vmatpush1.msra.mxu0 0.0
        %2986 = vmatprep.subr.mxu0 0.0
        %2987 = vmatpush1.msra.mxu0 0.0
        %2988 = vmatprep.subr.mxu0 0.0
        %2989 = vmatpush1.msra.mxu0 0.0
        %2990 = vmatprep.subr.mxu0 0.0
        %2991 = vmatpush1.msra.mxu0 0.0
        %2992 = vmatprep.subr.mxu0 0.0
        %2993 = vmatpush1.msra.mxu0 0.0
        %2994 = vmatprep.subr.mxu0 0.0
        %2995 = vmatpush1.msra.mxu0 0.0
        %2996 = vmatprep.subr.mxu0 0.0
        %2997 = vmatpush1.msra.mxu0 0.0
        %2998 = vmatprep.subr.mxu0 0.0
        %2999 = vmatpush1.msra.mxu0 0.0
        %3000 = vmatprep.subr.mxu0 0.0
        %3001 = vmatpush1.msra.mxu0 0.0
        %3002 = vmatprep.subr.mxu0 0.0
        %3003 = vmatpush1.msra.mxu0 0.0
        %3004 = vmatprep.subr.mxu0 0.0
        %3005 = vmatpush1.msra.mxu0 0.0
        %3006 = vmatprep.subr.mxu0 0.0
        %3007 = vmatpush1.msra.mxu0 0.0
        %3008 = vmatprep.subr.mxu0 0.0
        %3009 = vmatpush1.msra.mxu0 0.0
        %3010 = vmatprep.subr.mxu0 0.0
        %3011 = vmatpush1.msra.mxu0 0.0
        %3012 = vmatprep.subr.mxu0 0.0
        %3013 = vmatpush1.msra.mxu0 0.0
        %3014 = vmatprep.subr.mxu0 0.0
        %3015 = vmatpush1.msra.mxu0 0.0
        %3016 = vmatprep.subr.mxu0 0.0
        %3017 = vmatpush1.msra.mxu0 0.0
        %3018 = vmatprep.subr.mxu0 0.0
        %3019 = vmatpush1.msra.mxu0 0.0
        %3020 = vmatprep.subr.mxu0 0.0
        %3021 = vmatpush1.msra.mxu0 0.0
        %3022 = vmatprep.subr.mxu0 0.0
        %3023 = vmatpush1.msra.mxu0 0.0
        %3024 = vmatprep.subr.mxu0 0.0
        %3025 = vmatpush1.msra.mxu0 0.0
        %3026 = vmatprep.subr.mxu0 0.0
        %3027 = vmatpush1.msra.mxu0 0.0
        %3028 = vmatprep.subr.mxu0 0.0
        %3029 = vmatpush1.msra.mxu0 0.0
        %3030 = vmatprep.subr.mxu0 0.0
        %3031 = vmatpush1.msra.mxu0 0.0
        %3032 = vmatprep.subr.mxu0 0.0
        %3033 = vmatpush1.msra.mxu0 0.0
        %3034 = vmatprep.subr.mxu0 0.0
        %3035 = vmatpush1.msra.mxu0 0.0
        %3036 = vmatprep.subr.mxu0 0.0
        %3037 = vmatpush1.msra.mxu0 0.0
        %3038 = vmatprep.subr.mxu0 0.0
        %3039 = vmatpush1.msra.mxu0 0.0
        %3040 = vmatprep.subr.mxu0 0.0
        %3041 = vmatpush1.msra.mxu0 0.0
        %3042 = vmatprep.subr.mxu0 0.0
        %3043 = vmatpush1.msra.mxu0 0.0
        %3044 = vmatprep.mubr.f32.mxu0 0.0
        %3045 = vmatmul.mubr.f32.gmra.mrb[0].mxu0 %v2978
        %v3046 = vpop.f32.mrb[0].mxu0
        %v3047 = vadd.f32 0.0, %v3046
        %v3048 = vpop.f32.mrb[0].mxu0
        %3049 = vdwg.mxu0
        %3050 = vrot.lane.b32.xlu0 %v2718, 120
        %v3051 = vpop.permute.xlu0 %3050
        %3052 = vrot.lane.b32.xlu0 %v2710, 88
        %v3053 = vpop.permute.xlu0 %3052
        %v3054 = vsel %vm921, %v3051, 0
        %v3056 = vsel %vm921, %v3053, 0
        %3058 = vmatprep.subr.mxu0 0.0
        %3059 = vmatpush1.xpose.msra.mxu0 %v3056
        %3060 = vmatprep.subr.mxu0 0.0
        %3061 = vmatpush1.xpose.msra.mxu0 0.0
        %3062 = vmatprep.subr.mxu0 0.0
        %3063 = vmatpush1.xpose.msra.mxu0 0.0
        %3064 = vmatprep.subr.mxu0 0.0
        %3065 = vmatpush1.xpose.msra.mxu0 0.0
        %3066 = vmatprep.subr.mxu0 0.0
        %3067 = vmatpush1.xpose.msra.mxu0 0.0
        %3068 = vmatprep.subr.mxu0 0.0
        %3069 = vmatpush1.xpose.msra.mxu0 0.0
        %3070 = vmatprep.subr.mxu0 0.0
        %3071 = vmatpush1.xpose.msra.mxu0 0.0
        %3072 = vmatprep.subr.mxu0 0.0
        %3073 = vmatpush1.xpose.msra.mxu0 0.0
        %3074 = vmatprep.subr.mxu0 0.0
        %3075 = vmatpush1.xpose.msra.mxu0 0.0
        %3076 = vmatprep.subr.mxu0 0.0
        %3077 = vmatpush1.xpose.msra.mxu0 0.0
        %3078 = vmatprep.subr.mxu0 0.0
        %3079 = vmatpush1.xpose.msra.mxu0 0.0
        %3080 = vmatprep.subr.mxu0 0.0
        %3081 = vmatpush1.xpose.msra.mxu0 0.0
        %3082 = vmatprep.subr.mxu0 0.0
        %3083 = vmatpush1.xpose.msra.mxu0 0.0
        %3084 = vmatprep.subr.mxu0 0.0
        %3085 = vmatpush1.xpose.msra.mxu0 0.0
        %3086 = vmatprep.subr.mxu0 0.0
        %3087 = vmatpush1.xpose.msra.mxu0 0.0
        %3088 = vmatprep.subr.mxu0 0.0
        %3089 = vmatpush1.xpose.msra.mxu0 0.0
        %3090 = vmatprep.subr.mxu0 0.0
        %3091 = vmatpush1.xpose.msra.mxu0 0.0
        %3092 = vmatprep.subr.mxu0 0.0
        %3093 = vmatpush1.xpose.msra.mxu0 0.0
        %3094 = vmatprep.subr.mxu0 0.0
        %3095 = vmatpush1.xpose.msra.mxu0 0.0
        %3096 = vmatprep.subr.mxu0 0.0
        %3097 = vmatpush1.xpose.msra.mxu0 0.0
        %3098 = vmatprep.subr.mxu0 0.0
        %3099 = vmatpush1.xpose.msra.mxu0 0.0
        %3100 = vmatprep.subr.mxu0 0.0
        %3101 = vmatpush1.xpose.msra.mxu0 0.0
        %3102 = vmatprep.subr.mxu0 0.0
        %3103 = vmatpush1.xpose.msra.mxu0 0.0
        %3104 = vmatprep.subr.mxu0 0.0
        %3105 = vmatpush1.xpose.msra.mxu0 0.0
        %3106 = vmatprep.subr.mxu0 0.0
        %3107 = vmatpush1.xpose.msra.mxu0 0.0
        %3108 = vmatprep.subr.mxu0 0.0
        %3109 = vmatpush1.xpose.msra.mxu0 0.0
        %3110 = vmatprep.subr.mxu0 0.0
        %3111 = vmatpush1.xpose.msra.mxu0 0.0
        %3112 = vmatprep.subr.mxu0 0.0
        %3113 = vmatpush1.xpose.msra.mxu0 0.0
        %3114 = vmatprep.subr.mxu0 0.0
        %3115 = vmatpush1.xpose.msra.mxu0 0.0
        %3116 = vmatprep.subr.mxu0 0.0
        %3117 = vmatpush1.xpose.msra.mxu0 0.0
        %3118 = vmatprep.subr.mxu0 0.0
        %3119 = vmatpush1.xpose.msra.mxu0 0.0
        %3120 = vmatprep.subr.mxu0 0.0
        %3121 = vmatpush1.xpose.msra.mxu0 0.0
        %3122 = vmatprep.mubr.f32.mxu0 0.0
        %3123 = vmatmul.mubr.f32.gmra.mrb[0].mxu0 %v3054
        %v3124 = vpop.f32.mrb[0].mxu0
        %v3125 = vadd.f32 0.0, %v3124
        %v3126 = vpop.f32.mrb[0].mxu0
        %3127 = vdwg.mxu0
        %3128 = vrot.lane.b32.xlu0 %v2719, 120
        %v3129 = vpop.permute.xlu0 %3128
        %3130 = vrot.lane.b32.xlu0 %v2715, 88
        %v3131 = vpop.permute.xlu0 %3130
        %v3132 = vsel %vm921, %v3129, 0
        %v3134 = vsel %vm921, %v3131, 0
        %3136 = vmatprep.subr.mxu0 0.0
        %3137 = vmatpush1.xpose.msra.mxu0 %v3134
        %3138 = vmatprep.subr.mxu0 0.0
        %3139 = vmatpush1.xpose.msra.mxu0 0.0
        %3140 = vmatprep.subr.mxu0 0.0
        %3141 = vmatpush1.xpose.msra.mxu0 0.0
        %3142 = vmatprep.subr.mxu0 0.0
        %3143 = vmatpush1.xpose.msra.mxu0 0.0
        %3144 = vmatprep.subr.mxu0 0.0
        %3145 = vmatpush1.xpose.msra.mxu0 0.0
        %3146 = vmatprep.subr.mxu0 0.0
        %3147 = vmatpush1.xpose.msra.mxu0 0.0
        %3148 = vmatprep.subr.mxu0 0.0
        %3149 = vmatpush1.xpose.msra.mxu0 0.0
        %3150 = vmatprep.subr.mxu0 0.0
        %3151 = vmatpush1.xpose.msra.mxu0 0.0
        %3152 = vmatprep.subr.mxu0 0.0
        %3153 = vmatpush1.xpose.msra.mxu0 0.0
        %3154 = vmatprep.subr.mxu0 0.0
        %3155 = vmatpush1.xpose.msra.mxu0 0.0
        %3156 = vmatprep.subr.mxu0 0.0
        %3157 = vmatpush1.xpose.msra.mxu0 0.0
        %3158 = vmatprep.subr.mxu0 0.0
        %3159 = vmatpush1.xpose.msra.mxu0 0.0
        %3160 = vmatprep.subr.mxu0 0.0
        %3161 = vmatpush1.xpose.msra.mxu0 0.0
        %3162 = vmatprep.subr.mxu0 0.0
        %3163 = vmatpush1.xpose.msra.mxu0 0.0
        %3164 = vmatprep.subr.mxu0 0.0
        %3165 = vmatpush1.xpose.msra.mxu0 0.0
        %3166 = vmatprep.subr.mxu0 0.0
        %3167 = vmatpush1.xpose.msra.mxu0 0.0
        %3168 = vmatprep.subr.mxu0 0.0
        %3169 = vmatpush1.xpose.msra.mxu0 0.0
        %3170 = vmatprep.subr.mxu0 0.0
        %3171 = vmatpush1.xpose.msra.mxu0 0.0
        %3172 = vmatprep.subr.mxu0 0.0
        %3173 = vmatpush1.xpose.msra.mxu0 0.0
        %3174 = vmatprep.subr.mxu0 0.0
        %3175 = vmatpush1.xpose.msra.mxu0 0.0
        %3176 = vmatprep.subr.mxu0 0.0
        %3177 = vmatpush1.xpose.msra.mxu0 0.0
        %3178 = vmatprep.subr.mxu0 0.0
        %3179 = vmatpush1.xpose.msra.mxu0 0.0
        %3180 = vmatprep.subr.mxu0 0.0
        %3181 = vmatpush1.xpose.msra.mxu0 0.0
        %3182 = vmatprep.subr.mxu0 0.0
        %3183 = vmatpush1.xpose.msra.mxu0 0.0
        %3184 = vmatprep.subr.mxu0 0.0
        %3185 = vmatpush1.xpose.msra.mxu0 0.0
        %3186 = vmatprep.subr.mxu0 0.0
        %3187 = vmatpush1.xpose.msra.mxu0 0.0
        %3188 = vmatprep.subr.mxu0 0.0
        %3189 = vmatpush1.xpose.msra.mxu0 0.0
        %3190 = vmatprep.subr.mxu0 0.0
        %3191 = vmatpush1.xpose.msra.mxu0 0.0
        %3192 = vmatprep.subr.mxu0 0.0
        %3193 = vmatpush1.xpose.msra.mxu0 0.0
        %3194 = vmatprep.subr.mxu0 0.0
        %3195 = vmatpush1.xpose.msra.mxu0 0.0
        %3196 = vmatprep.subr.mxu0 0.0
        %3197 = vmatpush1.xpose.msra.mxu0 0.0
        %3198 = vmatprep.subr.mxu0 0.0
        %3199 = vmatpush1.xpose.msra.mxu0 0.0
        %3200 = vmatprep.mubr.f32.mxu0 0.0
        %3201 = vmatmul.mubr.f32.gmra.mrb[0].mxu0 %v3132
        %v3202 = vpop.f32.mrb[0].mxu0
        %v3203 = vadd.f32 0.0, %v3202
        %v3204 = vpop.f32.mrb[0].mxu0
        %3205 = vdwg.mxu0
        %v3206 = vsel %vm921, %v3125, -inf
        %3207 = vmax.xlane.f32.xlu0 %v3206
        %v3208 = vpop.xlane.xlu0 %3207
        %v3209 = vsel %vm921, %v3203, -inf
        %3210 = vmax.xlane.f32.xlu0 %v3209
        %v3211 = vpop.xlane.xlu0 %3210
        %v3212 = vsub.f32 %v3125, %v3208
        %v3213 = vsub.f32 %v3203, %v3211
        %v3214 = vmul.f32 %v3212, 1.442695
        %v3215 = vpow.pop %v3214
        %v3216 = vmul.f32 %v3213, 1.442695
        %v3217 = vpow.pop %v3216
        %v3218 = vsel %vm921, %v3215, 0.0
        %3219 = vadd.xlane.f32.xlu0 %v3218
        %v3220 = vpop.xlane.xlu0 %3219
        %v3221 = vsel %vm921, %v3217, 0.0
        %3222 = vadd.xlane.f32.xlu0 %v3221
        %v3223 = vpop.xlane.xlu0 %3222
        %v3224 = vrcp.pop %v3220
        %v3225 = vrcp.pop %v3223
        %v3226 = vmul.f32 %v3215, %v3224
        %v3227 = vmul.f32 %v3217, %v3225
        %3228 = vrot.lane.b32.xlu0 %v2710, 56
        %v3229 = vpop.permute.xlu0 %3228
        %v3232 = vsel %vm921, %v3226, 0
        %3234 = vmatprep.subr.mxu0 0.0
        %3235 = vmatpush1.msra.mxu0 %v3229
        %3236 = vmatprep.subr.mxu0 0.0
        %3237 = vmatpush1.msra.mxu0 0.0
        %3238 = vmatprep.subr.mxu0 0.0
        %3239 = vmatpush1.msra.mxu0 0.0
        %3240 = vmatprep.subr.mxu0 0.0
        %3241 = vmatpush1.msra.mxu0 0.0
        %3242 = vmatprep.subr.mxu0 0.0
        %3243 = vmatpush1.msra.mxu0 0.0
        %3244 = vmatprep.subr.mxu0 0.0
        %3245 = vmatpush1.msra.mxu0 0.0
        %3246 = vmatprep.subr.mxu0 0.0
        %3247 = vmatpush1.msra.mxu0 0.0
        %3248 = vmatprep.subr.mxu0 0.0
        %3249 = vmatpush1.msra.mxu0 0.0
        %3250 = vmatprep.subr.mxu0 0.0
        %3251 = vmatpush1.msra.mxu0 0.0
        %3252 = vmatprep.subr.mxu0 0.0
        %3253 = vmatpush1.msra.mxu0 0.0
        %3254 = vmatprep.subr.mxu0 0.0
        %3255 = vmatpush1.msra.mxu0 0.0
        %3256 = vmatprep.subr.mxu0 0.0
        %3257 = vmatpush1.msra.mxu0 0.0
        %3258 = vmatprep.subr.mxu0 0.0
        %3259 = vmatpush1.msra.mxu0 0.0
        %3260 = vmatprep.subr.mxu0 0.0
        %3261 = vmatpush1.msra.mxu0 0.0
        %3262 = vmatprep.subr.mxu0 0.0
        %3263 = vmatpush1.msra.mxu0 0.0
        %3264 = vmatprep.subr.mxu0 0.0
        %3265 = vmatpush1.msra.mxu0 0.0
        %3266 = vmatprep.subr.mxu0 0.0
        %3267 = vmatpush1.msra.mxu0 0.0
        %3268 = vmatprep.subr.mxu0 0.0
        %3269 = vmatpush1.msra.mxu0 0.0
        %3270 = vmatprep.subr.mxu0 0.0
        %3271 = vmatpush1.msra.mxu0 0.0
        %3272 = vmatprep.subr.mxu0 0.0
        %3273 = vmatpush1.msra.mxu0 0.0
        %3274 = vmatprep.subr.mxu0 0.0
        %3275 = vmatpush1.msra.mxu0 0.0
        %3276 = vmatprep.subr.mxu0 0.0
        %3277 = vmatpush1.msra.mxu0 0.0
        %3278 = vmatprep.subr.mxu0 0.0
        %3279 = vmatpush1.msra.mxu0 0.0
        %3280 = vmatprep.subr.mxu0 0.0
        %3281 = vmatpush1.msra.mxu0 0.0
        %3282 = vmatprep.subr.mxu0 0.0
        %3283 = vmatpush1.msra.mxu0 0.0
        %3284 = vmatprep.subr.mxu0 0.0
        %3285 = vmatpush1.msra.mxu0 0.0
        %3286 = vmatprep.subr.mxu0 0.0
        %3287 = vmatpush1.msra.mxu0 0.0
        %3288 = vmatprep.subr.mxu0 0.0
        %3289 = vmatpush1.msra.mxu0 0.0
        %3290 = vmatprep.subr.mxu0 0.0
        %3291 = vmatpush1.msra.mxu0 0.0
        %3292 = vmatprep.subr.mxu0 0.0
        %3293 = vmatpush1.msra.mxu0 0.0
        %3294 = vmatprep.subr.mxu0 0.0
        %3295 = vmatpush1.msra.mxu0 0.0
        %3296 = vmatprep.subr.mxu0 0.0
        %3297 = vmatpush1.msra.mxu0 0.0
        %3298 = vmatprep.mubr.f32.mxu0 0.0
        %3299 = vmatmul.mubr.f32.gmra.mrb[0].mxu0 %v3232
        %v3300 = vpop.f32.mrb[0].mxu0
        %v3301 = vadd.f32 0.0, %v3300
        %v3302 = vpop.f32.mrb[0].mxu0
        %3303 = vdwg.mxu0
        %3304 = vrot.lane.b32.xlu0 %v2715, 56
        %v3305 = vpop.permute.xlu0 %3304
        %v3308 = vsel %vm921, %v3227, 0
        %3310 = vmatprep.subr.mxu0 0.0
        %3311 = vmatpush1.msra.mxu0 %v3305
        %3312 = vmatprep.subr.mxu0 0.0
        %3313 = vmatpush1.msra.mxu0 0.0
        %3314 = vmatprep.subr.mxu0 0.0
        %3315 = vmatpush1.msra.mxu0 0.0
        %3316 = vmatprep.subr.mxu0 0.0
        %3317 = vmatpush1.msra.mxu0 0.0
        %3318 = vmatprep.subr.mxu0 0.0
        %3319 = vmatpush1.msra.mxu0 0.0
        %3320 = vmatprep.subr.mxu0 0.0
        %3321 = vmatpush1.msra.mxu0 0.0
        %3322 = vmatprep.subr.mxu0 0.0
        %3323 = vmatpush1.msra.mxu0 0.0
        %3324 = vmatprep.subr.mxu0 0.0
        %3325 = vmatpush1.msra.mxu0 0.0
        %3326 = vmatprep.subr.mxu0 0.0
        %3327 = vmatpush1.msra.mxu0 0.0
        %3328 = vmatprep.subr.mxu0 0.0
        %3329 = vmatpush1.msra.mxu0 0.0
        %3330 = vmatprep.subr.mxu0 0.0
        %3331 = vmatpush1.msra.mxu0 0.0
        %3332 = vmatprep.subr.mxu0 0.0
        %3333 = vmatpush1.msra.mxu0 0.0
        %3334 = vmatprep.subr.mxu0 0.0
        %3335 = vmatpush1.msra.mxu0 0.0
        %3336 = vmatprep.subr.mxu0 0.0
        %3337 = vmatpush1.msra.mxu0 0.0
        %3338 = vmatprep.subr.mxu0 0.0
        %3339 = vmatpush1.msra.mxu0 0.0
        %3340 = vmatprep.subr.mxu0 0.0
        %3341 = vmatpush1.msra.mxu0 0.0
        %3342 = vmatprep.subr.mxu0 0.0
        %3343 = vmatpush1.msra.mxu0 0.0
        %3344 = vmatprep.subr.mxu0 0.0
        %3345 = vmatpush1.msra.mxu0 0.0
        %3346 = vmatprep.subr.mxu0 0.0
        %3347 = vmatpush1.msra.mxu0 0.0
        %3348 = vmatprep.subr.mxu0 0.0
        %3349 = vmatpush1.msra.mxu0 0.0
        %3350 = vmatprep.subr.mxu0 0.0
        %3351 = vmatpush1.msra.mxu0 0.0
        %3352 = vmatprep.subr.mxu0 0.0
        %3353 = vmatpush1.msra.mxu0 0.0
        %3354 = vmatprep.subr.mxu0 0.0
        %3355 = vmatpush1.msra.mxu0 0.0
        %3356 = vmatprep.subr.mxu0 0.0
        %3357 = vmatpush1.msra.mxu0 0.0
        %3358 = vmatprep.subr.mxu0 0.0
        %3359 = vmatpush1.msra.mxu0 0.0
        %3360 = vmatprep.subr.mxu0 0.0
        %3361 = vmatpush1.msra.mxu0 0.0
        %3362 = vmatprep.subr.mxu0 0.0
        %3363 = vmatpush1.msra.mxu0 0.0
        %3364 = vmatprep.subr.mxu0 0.0
        %3365 = vmatpush1.msra.mxu0 0.0
        %3366 = vmatprep.subr.mxu0 0.0
        %3367 = vmatpush1.msra.mxu0 0.0
        %3368 = vmatprep.subr.mxu0 0.0
        %3369 = vmatpush1.msra.mxu0 0.0
        %3370 = vmatprep.subr.mxu0 0.0
        %3371 = vmatpush1.msra.mxu0 0.0
        %3372 = vmatprep.subr.mxu0 0.0
        %3373 = vmatpush1.msra.mxu0 0.0
        %3374 = vmatprep.mubr.f32.mxu0 0.0
        %3375 = vmatmul.mubr.f32.gmra.mrb[0].mxu0 %v3308
        %v3376 = vpop.f32.mrb[0].mxu0
        %v3377 = vadd.f32 0.0, %v3376
        %v3378 = vpop.f32.mrb[0].mxu0
        %3379 = vdwg.mxu0
        %v3381 = vsel %vm921, %v3301, 0
        %v3384 = vsel %vm921, %v3377, 0
        %3386 = vmatprep.subr.mxu0 0.0
        %3387 = vmatpush1.msra.mxu0 %v2627
        %3388 = vmatprep.subr.mxu0 0.0
        %3389 = vmatpush1.msra.mxu0 0.0
        %3390 = vmatprep.subr.mxu0 0.0
        %3391 = vmatpush1.msra.mxu0 0.0
        %3392 = vmatprep.subr.mxu0 0.0
        %3393 = vmatpush1.msra.mxu0 0.0
        %3394 = vmatprep.subr.mxu0 0.0
        %3395 = vmatpush1.msra.mxu0 0.0
        %3396 = vmatprep.subr.mxu0 0.0
        %3397 = vmatpush1.msra.mxu0 0.0
        %3398 = vmatprep.subr.mxu0 0.0
        %3399 = vmatpush1.msra.mxu0 0.0
        %3400 = vmatprep.subr.mxu0 0.0
        %3401 = vmatpush1.msra.mxu0 0.0
        %3402 = vmatprep.subr.mxu0 0.0
        %3403 = vmatpush1.msra.mxu0 0.0
        %3404 = vmatprep.subr.mxu0 0.0
        %3405 = vmatpush1.msra.mxu0 0.0
        %3406 = vmatprep.subr.mxu0 0.0
        %3407 = vmatpush1.msra.mxu0 0.0
        %3408 = vmatprep.subr.mxu0 0.0
        %3409 = vmatpush1.msra.mxu0 0.0
        %3410 = vmatprep.subr.mxu0 0.0
        %3411 = vmatpush1.msra.mxu0 0.0
        %3412 = vmatprep.subr.mxu0 0.0
        %3413 = vmatpush1.msra.mxu0 0.0
        %3414 = vmatprep.subr.mxu0 0.0
        %3415 = vmatpush1.msra.mxu0 0.0
        %3416 = vmatprep.subr.mxu0 0.0
        %3417 = vmatpush1.msra.mxu0 0.0
        %3418 = vmatprep.subr.mxu0 0.0
        %3419 = vmatpush1.msra.mxu0 0.0
        %3420 = vmatprep.subr.mxu0 0.0
        %3421 = vmatpush1.msra.mxu0 0.0
        %3422 = vmatprep.subr.mxu0 0.0
        %3423 = vmatpush1.msra.mxu0 0.0
        %3424 = vmatprep.subr.mxu0 0.0
        %3425 = vmatpush1.msra.mxu0 0.0
        %3426 = vmatprep.subr.mxu0 0.0
        %3427 = vmatpush1.msra.mxu0 0.0
        %3428 = vmatprep.subr.mxu0 0.0
        %3429 = vmatpush1.msra.mxu0 0.0
        %3430 = vmatprep.subr.mxu0 0.0
        %3431 = vmatpush1.msra.mxu0 0.0
        %3432 = vmatprep.subr.mxu0 0.0
        %3433 = vmatpush1.msra.mxu0 0.0
        %3434 = vmatprep.subr.mxu0 0.0
        %3435 = vmatpush1.msra.mxu0 0.0
        %3436 = vmatprep.subr.mxu0 0.0
        %3437 = vmatpush1.msra.mxu0 0.0
        %3438 = vmatprep.subr.mxu0 0.0
        %3439 = vmatpush1.msra.mxu0 0.0
        %3440 = vmatprep.subr.mxu0 0.0
        %3441 = vmatpush1.msra.mxu0 0.0
        %3442 = vmatprep.subr.mxu0 0.0
        %3443 = vmatpush1.msra.mxu0 0.0
        %3444 = vmatprep.subr.mxu0 0.0
        %3445 = vmatpush1.msra.mxu0 0.0
        %3446 = vmatprep.subr.mxu0 0.0
        %3447 = vmatpush1.msra.mxu0 0.0
        %3448 = vmatprep.subr.mxu0 0.0
        %3449 = vmatpush1.msra.mxu0 0.0
        %3450 = vmatprep.mubr.f32.mxu0 0.0
        %3451 = vmatmul.mubr.f32.gmra.mrb[0].mxu0 %v3381
        %v3452 = vpop.f32.mrb[0].mxu0
        %v3453 = vadd.f32 0.0, %v3452
        %v3454 = vpop.f32.mrb[0].mxu0
        %3455 = vmatprep.mubr.f32.mxu0 0.0
        %3456 = vmatmul.mubr.f32.gmra.mrb[0].mxu0 %v3384
        %v3457 = vpop.f32.mrb[0].mxu0
        %v3458 = vadd.f32 0.0, %v3457
        %v3459 = vpop.f32.mrb[0].mxu0
        %3460 = vdwg.mxu0
        %v3462 = vsel %vm921, %v2971, 0
        %v3465 = vsel %vm921, %v3047, 0
        %3467 = vmatprep.subr.mxu0 0.0
        %3468 = vmatpush1.msra.mxu0 %v2626
        %3469 = vmatprep.subr.mxu0 0.0
        %3470 = vmatpush1.msra.mxu0 0.0
        %3471 = vmatprep.subr.mxu0 0.0
        %3472 = vmatpush1.msra.mxu0 0.0
        %3473 = vmatprep.subr.mxu0 0.0
        %3474 = vmatpush1.msra.mxu0 0.0
        %3475 = vmatprep.subr.mxu0 0.0
        %3476 = vmatpush1.msra.mxu0 0.0
        %3477 = vmatprep.subr.mxu0 0.0
        %3478 = vmatpush1.msra.mxu0 0.0
        %3479 = vmatprep.subr.mxu0 0.0
        %3480 = vmatpush1.msra.mxu0 0.0
        %3481 = vmatprep.subr.mxu0 0.0
        %3482 = vmatpush1.msra.mxu0 0.0
        %3483 = vmatprep.subr.mxu0 0.0
        %3484 = vmatpush1.msra.mxu0 0.0
        %3485 = vmatprep.subr.mxu0 0.0
        %3486 = vmatpush1.msra.mxu0 0.0
        %3487 = vmatprep.subr.mxu0 0.0
        %3488 = vmatpush1.msra.mxu0 0.0
        %3489 = vmatprep.subr.mxu0 0.0
        %3490 = vmatpush1.msra.mxu0 0.0
        %3491 = vmatprep.subr.mxu0 0.0
        %3492 = vmatpush1.msra.mxu0 0.0
        %3493 = vmatprep.subr.mxu0 0.0
        %3494 = vmatpush1.msra.mxu0 0.0
        %3495 = vmatprep.subr.mxu0 0.0
        %3496 = vmatpush1.msra.mxu0 0.0
        %3497 = vmatprep.subr.mxu0 0.0
        %3498 = vmatpush1.msra.mxu0 0.0
        %3499 = vmatprep.subr.mxu0 0.0
        %3500 = vmatpush1.msra.mxu0 0.0
        %3501 = vmatprep.subr.mxu0 0.0
        %3502 = vmatpush1.msra.mxu0 0.0
        %3503 = vmatprep.subr.mxu0 0.0
        %3504 = vmatpush1.msra.mxu0 0.0
        %3505 = vmatprep.subr.mxu0 0.0
        %3506 = vmatpush1.msra.mxu0 0.0
        %3507 = vmatprep.subr.mxu0 0.0
        %3508 = vmatpush1.msra.mxu0 0.0
        %3509 = vmatprep.subr.mxu0 0.0
        %3510 = vmatpush1.msra.mxu0 0.0
        %3511 = vmatprep.subr.mxu0 0.0
        %3512 = vmatpush1.msra.mxu0 0.0
        %3513 = vmatprep.subr.mxu0 0.0
        %3514 = vmatpush1.msra.mxu0 0.0
        %3515 = vmatprep.subr.mxu0 0.0
        %3516 = vmatpush1.msra.mxu0 0.0
        %3517 = vmatprep.subr.mxu0 0.0
        %3518 = vmatpush1.msra.mxu0 0.0
        %3519 = vmatprep.subr.mxu0 0.0
        %3520 = vmatpush1.msra.mxu0 0.0
        %3521 = vmatprep.subr.mxu0 0.0
        %3522 = vmatpush1.msra.mxu0 0.0
        %3523 = vmatprep.subr.mxu0 0.0
        %3524 = vmatpush1.msra.mxu0 0.0
        %3525 = vmatprep.subr.mxu0 0.0
        %3526 = vmatpush1.msra.mxu0 0.0
        %3527 = vmatprep.subr.mxu0 0.0
        %3528 = vmatpush1.msra.mxu0 0.0
        %3529 = vmatprep.subr.mxu0 0.0
        %3530 = vmatpush1.msra.mxu0 0.0
        %3531 = vmatprep.mubr.f32.mxu0 0.0
        %3532 = vmatmul.mubr.f32.gmra.mrb[0].mxu0 %v3462
        %v3533 = vpop.f32.mrb[0].mxu0
        %v3534 = vadd.f32 %v3453, %v3533
        %v3535 = vpop.f32.mrb[0].mxu0
        %3536 = vmatprep.mubr.f32.mxu0 0.0
        %3537 = vmatmul.mubr.f32.gmra.mrb[0].mxu0 %v3465
        %v3538 = vpop.f32.mrb[0].mxu0
        %v3539 = vadd.f32 %v3458, %v3538
        %v3540 = vpop.f32.mrb[0].mxu0
        %3541 = vdwg.mxu0
        %3542 = vrot.lane.b32.xlu0 %v2718, 112
        %v3543 = vpop.permute.xlu0 %3542
        %3544 = vrot.lane.b32.xlu0 %v2710, 80
        %v3545 = vpop.permute.xlu0 %3544
        %v3546 = vsel %vm921, %v3543, 0
        %v3548 = vsel %vm921, %v3545, 0
        %3550 = vmatprep.subr.mxu0 0.0
        %3551 = vmatpush1.xpose.msra.mxu0 %v3548
        %3552 = vmatprep.subr.mxu0 0.0
        %3553 = vmatpush1.xpose.msra.mxu0 0.0
        %3554 = vmatprep.subr.mxu0 0.0
        %3555 = vmatpush1.xpose.msra.mxu0 0.0
        %3556 = vmatprep.subr.mxu0 0.0
        %3557 = vmatpush1.xpose.msra.mxu0 0.0
        %3558 = vmatprep.subr.mxu0 0.0
        %3559 = vmatpush1.xpose.msra.mxu0 0.0
        %3560 = vmatprep.subr.mxu0 0.0
        %3561 = vmatpush1.xpose.msra.mxu0 0.0
        %3562 = vmatprep.subr.mxu0 0.0
        %3563 = vmatpush1.xpose.msra.mxu0 0.0
        %3564 = vmatprep.subr.mxu0 0.0
        %3565 = vmatpush1.xpose.msra.mxu0 0.0
        %3566 = vmatprep.subr.mxu0 0.0
        %3567 = vmatpush1.xpose.msra.mxu0 0.0
        %3568 = vmatprep.subr.mxu0 0.0
        %3569 = vmatpush1.xpose.msra.mxu0 0.0
        %3570 = vmatprep.subr.mxu0 0.0
        %3571 = vmatpush1.xpose.msra.mxu0 0.0
        %3572 = vmatprep.subr.mxu0 0.0
        %3573 = vmatpush1.xpose.msra.mxu0 0.0
        %3574 = vmatprep.subr.mxu0 0.0
        %3575 = vmatpush1.xpose.msra.mxu0 0.0
        %3576 = vmatprep.subr.mxu0 0.0
        %3577 = vmatpush1.xpose.msra.mxu0 0.0
        %3578 = vmatprep.subr.mxu0 0.0
        %3579 = vmatpush1.xpose.msra.mxu0 0.0
        %3580 = vmatprep.subr.mxu0 0.0
        %3581 = vmatpush1.xpose.msra.mxu0 0.0
        %3582 = vmatprep.subr.mxu0 0.0
        %3583 = vmatpush1.xpose.msra.mxu0 0.0
        %3584 = vmatprep.subr.mxu0 0.0
        %3585 = vmatpush1.xpose.msra.mxu0 0.0
        %3586 = vmatprep.subr.mxu0 0.0
        %3587 = vmatpush1.xpose.msra.mxu0 0.0
        %3588 = vmatprep.subr.mxu0 0.0
        %3589 = vmatpush1.xpose.msra.mxu0 0.0
        %3590 = vmatprep.subr.mxu0 0.0
        %3591 = vmatpush1.xpose.msra.mxu0 0.0
        %3592 = vmatprep.subr.mxu0 0.0
        %3593 = vmatpush1.xpose.msra.mxu0 0.0
        %3594 = vmatprep.subr.mxu0 0.0
        %3595 = vmatpush1.xpose.msra.mxu0 0.0
        %3596 = vmatprep.subr.mxu0 0.0
        %3597 = vmatpush1.xpose.msra.mxu0 0.0
        %3598 = vmatprep.subr.mxu0 0.0
        %3599 = vmatpush1.xpose.msra.mxu0 0.0
        %3600 = vmatprep.subr.mxu0 0.0
        %3601 = vmatpush1.xpose.msra.mxu0 0.0
        %3602 = vmatprep.subr.mxu0 0.0
        %3603 = vmatpush1.xpose.msra.mxu0 0.0
        %3604 = vmatprep.subr.mxu0 0.0
        %3605 = vmatpush1.xpose.msra.mxu0 0.0
        %3606 = vmatprep.subr.mxu0 0.0
        %3607 = vmatpush1.xpose.msra.mxu0 0.0
        %3608 = vmatprep.subr.mxu0 0.0
        %3609 = vmatpush1.xpose.msra.mxu0 0.0
        %3610 = vmatprep.subr.mxu0 0.0
        %3611 = vmatpush1.xpose.msra.mxu0 0.0
        %3612 = vmatprep.subr.mxu0 0.0
        %3613 = vmatpush1.xpose.msra.mxu0 0.0
        %3614 = vmatprep.mubr.f32.mxu0 0.0
        %3615 = vmatmul.mubr.f32.gmra.mrb[0].mxu0 %v3546
        %v3616 = vpop.f32.mrb[0].mxu0
        %v3617 = vadd.f32 0.0, %v3616
        %v3618 = vpop.f32.mrb[0].mxu0
        %3619 = vdwg.mxu0
        %3620 = vrot.lane.b32.xlu0 %v2719, 112
        %v3621 = vpop.permute.xlu0 %3620
        %3622 = vrot.lane.b32.xlu0 %v2715, 80
        %v3623 = vpop.permute.xlu0 %3622
        %v3624 = vsel %vm921, %v3621, 0
        %v3626 = vsel %vm921, %v3623, 0
        %3628 = vmatprep.subr.mxu0 0.0
        %3629 = vmatpush1.xpose.msra.mxu0 %v3626
        %3630 = vmatprep.subr.mxu0 0.0
        %3631 = vmatpush1.xpose.msra.mxu0 0.0
        %3632 = vmatprep.subr.mxu0 0.0
        %3633 = vmatpush1.xpose.msra.mxu0 0.0
        %3634 = vmatprep.subr.mxu0 0.0
        %3635 = vmatpush1.xpose.msra.mxu0 0.0
        %3636 = vmatprep.subr.mxu0 0.0
        %3637 = vmatpush1.xpose.msra.mxu0 0.0
        %3638 = vmatprep.subr.mxu0 0.0
        %3639 = vmatpush1.xpose.msra.mxu0 0.0
        %3640 = vmatprep.subr.mxu0 0.0
        %3641 = vmatpush1.xpose.msra.mxu0 0.0
        %3642 = vmatprep.subr.mxu0 0.0
        %3643 = vmatpush1.xpose.msra.mxu0 0.0
        %3644 = vmatprep.subr.mxu0 0.0
        %3645 = vmatpush1.xpose.msra.mxu0 0.0
        %3646 = vmatprep.subr.mxu0 0.0
        %3647 = vmatpush1.xpose.msra.mxu0 0.0
        %3648 = vmatprep.subr.mxu0 0.0
        %3649 = vmatpush1.xpose.msra.mxu0 0.0
        %3650 = vmatprep.subr.mxu0 0.0
        %3651 = vmatpush1.xpose.msra.mxu0 0.0
        %3652 = vmatprep.subr.mxu0 0.0
        %3653 = vmatpush1.xpose.msra.mxu0 0.0
        %3654 = vmatprep.subr.mxu0 0.0
        %3655 = vmatpush1.xpose.msra.mxu0 0.0
        %3656 = vmatprep.subr.mxu0 0.0
        %3657 = vmatpush1.xpose.msra.mxu0 0.0
        %3658 = vmatprep.subr.mxu0 0.0
        %3659 = vmatpush1.xpose.msra.mxu0 0.0
        %3660 = vmatprep.subr.mxu0 0.0
        %3661 = vmatpush1.xpose.msra.mxu0 0.0
        %3662 = vmatprep.subr.mxu0 0.0
        %3663 = vmatpush1.xpose.msra.mxu0 0.0
        %3664 = vmatprep.subr.mxu0 0.0
        %3665 = vmatpush1.xpose.msra.mxu0 0.0
        %3666 = vmatprep.subr.mxu0 0.0
        %3667 = vmatpush1.xpose.msra.mxu0 0.0
        %3668 = vmatprep.subr.mxu0 0.0
        %3669 = vmatpush1.xpose.msra.mxu0 0.0
        %3670 = vmatprep.subr.mxu0 0.0
        %3671 = vmatpush1.xpose.msra.mxu0 0.0
        %3672 = vmatprep.subr.mxu0 0.0
        %3673 = vmatpush1.xpose.msra.mxu0 0.0
        %3674 = vmatprep.subr.mxu0 0.0
        %3675 = vmatpush1.xpose.msra.mxu0 0.0
        %3676 = vmatprep.subr.mxu0 0.0
        %3677 = vmatpush1.xpose.msra.mxu0 0.0
        %3678 = vmatprep.subr.mxu0 0.0
        %3679 = vmatpush1.xpose.msra.mxu0 0.0
        %3680 = vmatprep.subr.mxu0 0.0
        %3681 = vmatpush1.xpose.msra.mxu0 0.0
        %3682 = vmatprep.subr.mxu0 0.0
        %3683 = vmatpush1.xpose.msra.mxu0 0.0
        %3684 = vmatprep.subr.mxu0 0.0
        %3685 = vmatpush1.xpose.msra.mxu0 0.0
        %3686 = vmatprep.subr.mxu0 0.0
        %3687 = vmatpush1.xpose.msra.mxu0 0.0
        %3688 = vmatprep.subr.mxu0 0.0
        %3689 = vmatpush1.xpose.msra.mxu0 0.0
        %3690 = vmatprep.subr.mxu0 0.0
        %3691 = vmatpush1.xpose.msra.mxu0 0.0
        %3692 = vmatprep.mubr.f32.mxu0 0.0
        %3693 = vmatmul.mubr.f32.gmra.mrb[0].mxu0 %v3624
        %v3694 = vpop.f32.mrb[0].mxu0
        %v3695 = vadd.f32 0.0, %v3694
        %v3696 = vpop.f32.mrb[0].mxu0
        %3697 = vdwg.mxu0
        %v3698 = vsel %vm921, %v3617, -inf
        %3699 = vmax.xlane.f32.xlu0 %v3698
        %v3700 = vpop.xlane.xlu0 %3699
        %v3701 = vsel %vm921, %v3695, -inf
        %3702 = vmax.xlane.f32.xlu0 %v3701
        %v3703 = vpop.xlane.xlu0 %3702
        %v3704 = vsub.f32 %v3617, %v3700
        %v3705 = vsub.f32 %v3695, %v3703
        %v3706 = vmul.f32 %v3704, 1.442695
        %v3707 = vpow.pop %v3706
        %v3708 = vmul.f32 %v3705, 1.442695
        %v3709 = vpow.pop %v3708
        %v3710 = vsel %vm921, %v3707, 0.0
        %3711 = vadd.xlane.f32.xlu0 %v3710
        %v3712 = vpop.xlane.xlu0 %3711
        %v3713 = vsel %vm921, %v3709, 0.0
        %3714 = vadd.xlane.f32.xlu0 %v3713
        %v3715 = vpop.xlane.xlu0 %3714
        %v3716 = vrcp.pop %v3712
        %v3717 = vrcp.pop %v3715
        %v3718 = vmul.f32 %v3707, %v3716
        %v3719 = vmul.f32 %v3709, %v3717
        %3720 = vrot.lane.b32.xlu0 %v2710, 48
        %v3721 = vpop.permute.xlu0 %3720
        %v3724 = vsel %vm921, %v3718, 0
        %3726 = vmatprep.subr.mxu0 0.0
        %3727 = vmatpush1.msra.mxu0 %v3721
        %3728 = vmatprep.subr.mxu0 0.0
        %3729 = vmatpush1.msra.mxu0 0.0
        %3730 = vmatprep.subr.mxu0 0.0
        %3731 = vmatpush1.msra.mxu0 0.0
        %3732 = vmatprep.subr.mxu0 0.0
        %3733 = vmatpush1.msra.mxu0 0.0
        %3734 = vmatprep.subr.mxu0 0.0
        %3735 = vmatpush1.msra.mxu0 0.0
        %3736 = vmatprep.subr.mxu0 0.0
        %3737 = vmatpush1.msra.mxu0 0.0
        %3738 = vmatprep.subr.mxu0 0.0
        %3739 = vmatpush1.msra.mxu0 0.0
        %3740 = vmatprep.subr.mxu0 0.0
        %3741 = vmatpush1.msra.mxu0 0.0
        %3742 = vmatprep.subr.mxu0 0.0
        %3743 = vmatpush1.msra.mxu0 0.0
        %3744 = vmatprep.subr.mxu0 0.0
        %3745 = vmatpush1.msra.mxu0 0.0
        %3746 = vmatprep.subr.mxu0 0.0
        %3747 = vmatpush1.msra.mxu0 0.0
        %3748 = vmatprep.subr.mxu0 0.0
        %3749 = vmatpush1.msra.mxu0 0.0
        %3750 = vmatprep.subr.mxu0 0.0
        %3751 = vmatpush1.msra.mxu0 0.0
        %3752 = vmatprep.subr.mxu0 0.0
        %3753 = vmatpush1.msra.mxu0 0.0
        %3754 = vmatprep.subr.mxu0 0.0
        %3755 = vmatpush1.msra.mxu0 0.0
        %3756 = vmatprep.subr.mxu0 0.0
        %3757 = vmatpush1.msra.mxu0 0.0
        %3758 = vmatprep.subr.mxu0 0.0
        %3759 = vmatpush1.msra.mxu0 0.0
        %3760 = vmatprep.subr.mxu0 0.0
        %3761 = vmatpush1.msra.mxu0 0.0
        %3762 = vmatprep.subr.mxu0 0.0
        %3763 = vmatpush1.msra.mxu0 0.0
        %3764 = vmatprep.subr.mxu0 0.0
        %3765 = vmatpush1.msra.mxu0 0.0
        %3766 = vmatprep.subr.mxu0 0.0
        %3767 = vmatpush1.msra.mxu0 0.0
        %3768 = vmatprep.subr.mxu0 0.0
        %3769 = vmatpush1.msra.mxu0 0.0
        %3770 = vmatprep.subr.mxu0 0.0
        %3771 = vmatpush1.msra.mxu0 0.0
        %3772 = vmatprep.subr.mxu0 0.0
        %3773 = vmatpush1.msra.mxu0 0.0
        %3774 = vmatprep.subr.mxu0 0.0
        %3775 = vmatpush1.msra.mxu0 0.0
        %3776 = vmatprep.subr.mxu0 0.0
        %3777 = vmatpush1.msra.mxu0 0.0
        %3778 = vmatprep.subr.mxu0 0.0
        %3779 = vmatpush1.msra.mxu0 0.0
        %3780 = vmatprep.subr.mxu0 0.0
        %3781 = vmatpush1.msra.mxu0 0.0
        %3782 = vmatprep.subr.mxu0 0.0
        %3783 = vmatpush1.msra.mxu0 0.0
        %3784 = vmatprep.subr.mxu0 0.0
        %3785 = vmatpush1.msra.mxu0 0.0
        %3786 = vmatprep.subr.mxu0 0.0
        %3787 = vmatpush1.msra.mxu0 0.0
        %3788 = vmatprep.subr.mxu0 0.0
        %3789 = vmatpush1.msra.mxu0 0.0
        %3790 = vmatprep.mubr.f32.mxu0 0.0
        %3791 = vmatmul.mubr.f32.gmra.mrb[0].mxu0 %v3724
        %v3792 = vpop.f32.mrb[0].mxu0
        %v3793 = vadd.f32 0.0, %v3792
        %v3794 = vpop.f32.mrb[0].mxu0
        %3795 = vdwg.mxu0
        %3796 = vrot.lane.b32.xlu0 %v2715, 48
        %v3797 = vpop.permute.xlu0 %3796
        %v3800 = vsel %vm921, %v3719, 0
        %3802 = vmatprep.subr.mxu0 0.0
        %3803 = vmatpush1.msra.mxu0 %v3797
        %3804 = vmatprep.subr.mxu0 0.0
        %3805 = vmatpush1.msra.mxu0 0.0
        %3806 = vmatprep.subr.mxu0 0.0
        %3807 = vmatpush1.msra.mxu0 0.0
        %3808 = vmatprep.subr.mxu0 0.0
        %3809 = vmatpush1.msra.mxu0 0.0
        %3810 = vmatprep.subr.mxu0 0.0
        %3811 = vmatpush1.msra.mxu0 0.0
        %3812 = vmatprep.subr.mxu0 0.0
        %3813 = vmatpush1.msra.mxu0 0.0
        %3814 = vmatprep.subr.mxu0 0.0
        %3815 = vmatpush1.msra.mxu0 0.0
        %3816 = vmatprep.subr.mxu0 0.0
        %3817 = vmatpush1.msra.mxu0 0.0
        %3818 = vmatprep.subr.mxu0 0.0
        %3819 = vmatpush1.msra.mxu0 0.0
        %3820 = vmatprep.subr.mxu0 0.0
        %3821 = vmatpush1.msra.mxu0 0.0
        %3822 = vmatprep.subr.mxu0 0.0
        %3823 = vmatpush1.msra.mxu0 0.0
        %3824 = vmatprep.subr.mxu0 0.0
        %3825 = vmatpush1.msra.mxu0 0.0
        %3826 = vmatprep.subr.mxu0 0.0
        %3827 = vmatpush1.msra.mxu0 0.0
        %3828 = vmatprep.subr.mxu0 0.0
        %3829 = vmatpush1.msra.mxu0 0.0
        %3830 = vmatprep.subr.mxu0 0.0
        %3831 = vmatpush1.msra.mxu0 0.0
        %3832 = vmatprep.subr.mxu0 0.0
        %3833 = vmatpush1.msra.mxu0 0.0
        %3834 = vmatprep.subr.mxu0 0.0
        %3835 = vmatpush1.msra.mxu0 0.0
        %3836 = vmatprep.subr.mxu0 0.0
        %3837 = vmatpush1.msra.mxu0 0.0
        %3838 = vmatprep.subr.mxu0 0.0
        %3839 = vmatpush1.msra.mxu0 0.0
        %3840 = vmatprep.subr.mxu0 0.0
        %3841 = vmatpush1.msra.mxu0 0.0
        %3842 = vmatprep.subr.mxu0 0.0
        %3843 = vmatpush1.msra.mxu0 0.0
        %3844 = vmatprep.subr.mxu0 0.0
        %3845 = vmatpush1.msra.mxu0 0.0
        %3846 = vmatprep.subr.mxu0 0.0
        %3847 = vmatpush1.msra.mxu0 0.0
        %3848 = vmatprep.subr.mxu0 0.0
        %3849 = vmatpush1.msra.mxu0 0.0
        %3850 = vmatprep.subr.mxu0 0.0
        %3851 = vmatpush1.msra.mxu0 0.0
        %3852 = vmatprep.subr.mxu0 0.0
        %3853 = vmatpush1.msra.mxu0 0.0
        %3854 = vmatprep.subr.mxu0 0.0
        %3855 = vmatpush1.msra.mxu0 0.0
        %3856 = vmatprep.subr.mxu0 0.0
        %3857 = vmatpush1.msra.mxu0 0.0
        %3858 = vmatprep.subr.mxu0 0.0
        %3859 = vmatpush1.msra.mxu0 0.0
        %3860 = vmatprep.subr.mxu0 0.0
        %3861 = vmatpush1.msra.mxu0 0.0
        %3862 = vmatprep.subr.mxu0 0.0
        %3863 = vmatpush1.msra.mxu0 0.0
        %3864 = vmatprep.subr.mxu0 0.0
        %3865 = vmatpush1.msra.mxu0 0.0
        %3866 = vmatprep.mubr.f32.mxu0 0.0
        %3867 = vmatmul.mubr.f32.gmra.mrb[0].mxu0 %v3800
        %v3868 = vpop.f32.mrb[0].mxu0
        %v3869 = vadd.f32 0.0, %v3868
        %v3870 = vpop.f32.mrb[0].mxu0
        %3871 = vdwg.mxu0
        %v3873 = vsel %vm921, %v3793, 0
        %v3876 = vsel %vm921, %v3869, 0
        %3878 = vmatprep.subr.mxu0 0.0
        %3879 = vmatpush1.msra.mxu0 %v2628
        %3880 = vmatprep.subr.mxu0 0.0
        %3881 = vmatpush1.msra.mxu0 0.0
        %3882 = vmatprep.subr.mxu0 0.0
        %3883 = vmatpush1.msra.mxu0 0.0
        %3884 = vmatprep.subr.mxu0 0.0
        %3885 = vmatpush1.msra.mxu0 0.0
        %3886 = vmatprep.subr.mxu0 0.0
        %3887 = vmatpush1.msra.mxu0 0.0
        %3888 = vmatprep.subr.mxu0 0.0
        %3889 = vmatpush1.msra.mxu0 0.0
        %3890 = vmatprep.subr.mxu0 0.0
        %3891 = vmatpush1.msra.mxu0 0.0
        %3892 = vmatprep.subr.mxu0 0.0
        %3893 = vmatpush1.msra.mxu0 0.0
        %3894 = vmatprep.subr.mxu0 0.0
        %3895 = vmatpush1.msra.mxu0 0.0
        %3896 = vmatprep.subr.mxu0 0.0
        %3897 = vmatpush1.msra.mxu0 0.0
        %3898 = vmatprep.subr.mxu0 0.0
        %3899 = vmatpush1.msra.mxu0 0.0
        %3900 = vmatprep.subr.mxu0 0.0
        %3901 = vmatpush1.msra.mxu0 0.0
        %3902 = vmatprep.subr.mxu0 0.0
        %3903 = vmatpush1.msra.mxu0 0.0
        %3904 = vmatprep.subr.mxu0 0.0
        %3905 = vmatpush1.msra.mxu0 0.0
        %3906 = vmatprep.subr.mxu0 0.0
        %3907 = vmatpush1.msra.mxu0 0.0
        %3908 = vmatprep.subr.mxu0 0.0
        %3909 = vmatpush1.msra.mxu0 0.0
        %3910 = vmatprep.subr.mxu0 0.0
        %3911 = vmatpush1.msra.mxu0 0.0
        %3912 = vmatprep.subr.mxu0 0.0
        %3913 = vmatpush1.msra.mxu0 0.0
        %3914 = vmatprep.subr.mxu0 0.0
        %3915 = vmatpush1.msra.mxu0 0.0
        %3916 = vmatprep.subr.mxu0 0.0
        %3917 = vmatpush1.msra.mxu0 0.0
        %3918 = vmatprep.subr.mxu0 0.0
        %3919 = vmatpush1.msra.mxu0 0.0
        %3920 = vmatprep.subr.mxu0 0.0
        %3921 = vmatpush1.msra.mxu0 0.0
        %3922 = vmatprep.subr.mxu0 0.0
        %3923 = vmatpush1.msra.mxu0 0.0
        %3924 = vmatprep.subr.mxu0 0.0
        %3925 = vmatpush1.msra.mxu0 0.0
        %3926 = vmatprep.subr.mxu0 0.0
        %3927 = vmatpush1.msra.mxu0 0.0
        %3928 = vmatprep.subr.mxu0 0.0
        %3929 = vmatpush1.msra.mxu0 0.0
        %3930 = vmatprep.subr.mxu0 0.0
        %3931 = vmatpush1.msra.mxu0 0.0
        %3932 = vmatprep.subr.mxu0 0.0
        %3933 = vmatpush1.msra.mxu0 0.0
        %3934 = vmatprep.subr.mxu0 0.0
        %3935 = vmatpush1.msra.mxu0 0.0
        %3936 = vmatprep.subr.mxu0 0.0
        %3937 = vmatpush1.msra.mxu0 0.0
        %3938 = vmatprep.subr.mxu0 0.0
        %3939 = vmatpush1.msra.mxu0 0.0
        %3940 = vmatprep.subr.mxu0 0.0
        %3941 = vmatpush1.msra.mxu0 0.0
        %3942 = vmatprep.mubr.f32.mxu0 0.0
        %3943 = vmatmul.mubr.f32.gmra.mrb[0].mxu0 %v3873
        %v3944 = vpop.f32.mrb[0].mxu0
        %v3945 = vadd.f32 0.0, %v3944
        %v3946 = vpop.f32.mrb[0].mxu0
        %3947 = vmatprep.mubr.f32.mxu0 0.0
        %3948 = vmatmul.mubr.f32.gmra.mrb[0].mxu0 %v3876
        %v3949 = vpop.f32.mrb[0].mxu0
        %v3950 = vadd.f32 0.0, %v3949
        %v3951 = vpop.f32.mrb[0].mxu0
        %3952 = vdwg.mxu0
        %v3953 = vadd.f32 %v3534, %v3945
        %v3954 = vadd.f32 %v3539, %v3950
        %3955 = vrot.lane.b32.xlu0 %v2718, 104
        %v3956 = vpop.permute.xlu0 %3955
        %3957 = vrot.lane.b32.xlu0 %v2710, 72
        %v3958 = vpop.permute.xlu0 %3957
        %v3959 = vsel %vm921, %v3956, 0
        %v3961 = vsel %vm921, %v3958, 0
        %3963 = vmatprep.subr.mxu0 0.0
        %3964 = vmatpush1.xpose.msra.mxu0 %v3961
        %3965 = vmatprep.subr.mxu0 0.0
        %3966 = vmatpush1.xpose.msra.mxu0 0.0
        %3967 = vmatprep.subr.mxu0 0.0
        %3968 = vmatpush1.xpose.msra.mxu0 0.0
        %3969 = vmatprep.subr.mxu0 0.0
        %3970 = vmatpush1.xpose.msra.mxu0 0.0
        %3971 = vmatprep.subr.mxu0 0.0
        %3972 = vmatpush1.xpose.msra.mxu0 0.0
        %3973 = vmatprep.subr.mxu0 0.0
        %3974 = vmatpush1.xpose.msra.mxu0 0.0
        %3975 = vmatprep.subr.mxu0 0.0
        %3976 = vmatpush1.xpose.msra.mxu0 0.0
        %3977 = vmatprep.subr.mxu0 0.0
        %3978 = vmatpush1.xpose.msra.mxu0 0.0
        %3979 = vmatprep.subr.mxu0 0.0
        %3980 = vmatpush1.xpose.msra.mxu0 0.0
        %3981 = vmatprep.subr.mxu0 0.0
        %3982 = vmatpush1.xpose.msra.mxu0 0.0
        %3983 = vmatprep.subr.mxu0 0.0
        %3984 = vmatpush1.xpose.msra.mxu0 0.0
        %3985 = vmatprep.subr.mxu0 0.0
        %3986 = vmatpush1.xpose.msra.mxu0 0.0
        %3987 = vmatprep.subr.mxu0 0.0
        %3988 = vmatpush1.xpose.msra.mxu0 0.0
        %3989 = vmatprep.subr.mxu0 0.0
        %3990 = vmatpush1.xpose.msra.mxu0 0.0
        %3991 = vmatprep.subr.mxu0 0.0
        %3992 = vmatpush1.xpose.msra.mxu0 0.0
        %3993 = vmatprep.subr.mxu0 0.0
        %3994 = vmatpush1.xpose.msra.mxu0 0.0
        %3995 = vmatprep.subr.mxu0 0.0
        %3996 = vmatpush1.xpose.msra.mxu0 0.0
        %3997 = vmatprep.subr.mxu0 0.0
        %3998 = vmatpush1.xpose.msra.mxu0 0.0
        %3999 = vmatprep.subr.mxu0 0.0
        %4000 = vmatpush1.xpose.msra.mxu0 0.0
        %4001 = vmatprep.subr.mxu0 0.0
        %4002 = vmatpush1.xpose.msra.mxu0 0.0
        %4003 = vmatprep.subr.mxu0 0.0
        %4004 = vmatpush1.xpose.msra.mxu0 0.0
        %4005 = vmatprep.subr.mxu0 0.0
        %4006 = vmatpush1.xpose.msra.mxu0 0.0
        %4007 = vmatprep.subr.mxu0 0.0
        %4008 = vmatpush1.xpose.msra.mxu0 0.0
        %4009 = vmatprep.subr.mxu0 0.0
        %4010 = vmatpush1.xpose.msra.mxu0 0.0
        %4011 = vmatprep.subr.mxu0 0.0
        %4012 = vmatpush1.xpose.msra.mxu0 0.0
        %4013 = vmatprep.subr.mxu0 0.0
        %4014 = vmatpush1.xpose.msra.mxu0 0.0
        %4015 = vmatprep.subr.mxu0 0.0
        %4016 = vmatpush1.xpose.msra.mxu0 0.0
        %4017 = vmatprep.subr.mxu0 0.0
        %4018 = vmatpush1.xpose.msra.mxu0 0.0
        %4019 = vmatprep.subr.mxu0 0.0
        %4020 = vmatpush1.xpose.msra.mxu0 0.0
        %4021 = vmatprep.subr.mxu0 0.0
        %4022 = vmatpush1.xpose.msra.mxu0 0.0
        %4023 = vmatprep.subr.mxu0 0.0
        %4024 = vmatpush1.xpose.msra.mxu0 0.0
        %4025 = vmatprep.subr.mxu0 0.0
        %4026 = vmatpush1.xpose.msra.mxu0 0.0
        %4027 = vmatprep.mubr.f32.mxu0 0.0
        %4028 = vmatmul.mubr.f32.gmra.mrb[0].mxu0 %v3959
        %v4029 = vpop.f32.mrb[0].mxu0
        %v4030 = vadd.f32 0.0, %v4029
        %v4031 = vpop.f32.mrb[0].mxu0
        %4032 = vdwg.mxu0
        %4033 = vrot.lane.b32.xlu0 %v2719, 104
        %v4034 = vpop.permute.xlu0 %4033
        %4035 = vrot.lane.b32.xlu0 %v2715, 72
        %v4036 = vpop.permute.xlu0 %4035
        %v4037 = vsel %vm921, %v4034, 0
        %v4039 = vsel %vm921, %v4036, 0
        %4041 = vmatprep.subr.mxu0 0.0
        %4042 = vmatpush1.xpose.msra.mxu0 %v4039
        %4043 = vmatprep.subr.mxu0 0.0
        %4044 = vmatpush1.xpose.msra.mxu0 0.0
        %4045 = vmatprep.subr.mxu0 0.0
        %4046 = vmatpush1.xpose.msra.mxu0 0.0
        %4047 = vmatprep.subr.mxu0 0.0
        %4048 = vmatpush1.xpose.msra.mxu0 0.0
        %4049 = vmatprep.subr.mxu0 0.0
        %4050 = vmatpush1.xpose.msra.mxu0 0.0
        %4051 = vmatprep.subr.mxu0 0.0
        %4052 = vmatpush1.xpose.msra.mxu0 0.0
        %4053 = vmatprep.subr.mxu0 0.0
        %4054 = vmatpush1.xpose.msra.mxu0 0.0
        %4055 = vmatprep.subr.mxu0 0.0
        %4056 = vmatpush1.xpose.msra.mxu0 0.0
        %4057 = vmatprep.subr.mxu0 0.0
        %4058 = vmatpush1.xpose.msra.mxu0 0.0
        %4059 = vmatprep.subr.mxu0 0.0
        %4060 = vmatpush1.xpose.msra.mxu0 0.0
        %4061 = vmatprep.subr.mxu0 0.0
        %4062 = vmatpush1.xpose.msra.mxu0 0.0
        %4063 = vmatprep.subr.mxu0 0.0
        %4064 = vmatpush1.xpose.msra.mxu0 0.0
        %4065 = vmatprep.subr.mxu0 0.0
        %4066 = vmatpush1.xpose.msra.mxu0 0.0
        %4067 = vmatprep.subr.mxu0 0.0
        %4068 = vmatpush1.xpose.msra.mxu0 0.0
        %4069 = vmatprep.subr.mxu0 0.0
        %4070 = vmatpush1.xpose.msra.mxu0 0.0
        %4071 = vmatprep.subr.mxu0 0.0
        %4072 = vmatpush1.xpose.msra.mxu0 0.0
        %4073 = vmatprep.subr.mxu0 0.0
        %4074 = vmatpush1.xpose.msra.mxu0 0.0
        %4075 = vmatprep.subr.mxu0 0.0
        %4076 = vmatpush1.xpose.msra.mxu0 0.0
        %4077 = vmatprep.subr.mxu0 0.0
        %4078 = vmatpush1.xpose.msra.mxu0 0.0
        %4079 = vmatprep.subr.mxu0 0.0
        %4080 = vmatpush1.xpose.msra.mxu0 0.0
        %4081 = vmatprep.subr.mxu0 0.0
        %4082 = vmatpush1.xpose.msra.mxu0 0.0
        %4083 = vmatprep.subr.mxu0 0.0
        %4084 = vmatpush1.xpose.msra.mxu0 0.0
        %4085 = vmatprep.subr.mxu0 0.0
        %4086 = vmatpush1.xpose.msra.mxu0 0.0
        %4087 = vmatprep.subr.mxu0 0.0
        %4088 = vmatpush1.xpose.msra.mxu0 0.0
        %4089 = vmatprep.subr.mxu0 0.0
        %4090 = vmatpush1.xpose.msra.mxu0 0.0
        %4091 = vmatprep.subr.mxu0 0.0
        %4092 = vmatpush1.xpose.msra.mxu0 0.0
        %4093 = vmatprep.subr.mxu0 0.0
        %4094 = vmatpush1.xpose.msra.mxu0 0.0
        %4095 = vmatprep.subr.mxu0 0.0
        %4096 = vmatpush1.xpose.msra.mxu0 0.0
        %4097 = vmatprep.subr.mxu0 0.0
        %4098 = vmatpush1.xpose.msra.mxu0 0.0
        %4099 = vmatprep.subr.mxu0 0.0
        %4100 = vmatpush1.xpose.msra.mxu0 0.0
        %4101 = vmatprep.subr.mxu0 0.0
        %4102 = vmatpush1.xpose.msra.mxu0 0.0
        %4103 = vmatprep.subr.mxu0 0.0
        %4104 = vmatpush1.xpose.msra.mxu0 0.0
        %4105 = vmatprep.mubr.f32.mxu0 0.0
        %4106 = vmatmul.mubr.f32.gmra.mrb[0].mxu0 %v4037
        %v4107 = vpop.f32.mrb[0].mxu0
        %v4108 = vadd.f32 0.0, %v4107
        %v4109 = vpop.f32.mrb[0].mxu0
        %4110 = vdwg.mxu0
        %v4111 = vsel %vm921, %v4030, -inf
        %4112 = vmax.xlane.f32.xlu0 %v4111
        %v4113 = vpop.xlane.xlu0 %4112
        %v4114 = vsel %vm921, %v4108, -inf
        %4115 = vmax.xlane.f32.xlu0 %v4114
        %v4116 = vpop.xlane.xlu0 %4115
        %v4117 = vsub.f32 %v4030, %v4113
        %v4118 = vsub.f32 %v4108, %v4116
        %v4119 = vmul.f32 %v4117, 1.442695
        %v4120 = vpow.pop %v4119
        %v4121 = vmul.f32 %v4118, 1.442695
        %v4122 = vpow.pop %v4121
        %v4123 = vsel %vm921, %v4120, 0.0
        %4124 = vadd.xlane.f32.xlu0 %v4123
        %v4125 = vpop.xlane.xlu0 %4124
        %v4126 = vsel %vm921, %v4122, 0.0
        %4127 = vadd.xlane.f32.xlu0 %v4126
        %v4128 = vpop.xlane.xlu0 %4127
        %v4129 = vrcp.pop %v4125
        %v4130 = vrcp.pop %v4128
        %v4131 = vmul.f32 %v4120, %v4129
        %v4132 = vmul.f32 %v4122, %v4130
        %4133 = vrot.lane.b32.xlu0 %v2710, 40
        %v4134 = vpop.permute.xlu0 %4133
        %v4137 = vsel %vm921, %v4131, 0
        %4139 = vmatprep.subr.mxu0 0.0
        %4140 = vmatpush1.msra.mxu0 %v4134
        %4141 = vmatprep.subr.mxu0 0.0
        %4142 = vmatpush1.msra.mxu0 0.0
        %4143 = vmatprep.subr.mxu0 0.0
        %4144 = vmatpush1.msra.mxu0 0.0
        %4145 = vmatprep.subr.mxu0 0.0
        %4146 = vmatpush1.msra.mxu0 0.0
        %4147 = vmatprep.subr.mxu0 0.0
        %4148 = vmatpush1.msra.mxu0 0.0
        %4149 = vmatprep.subr.mxu0 0.0
        %4150 = vmatpush1.msra.mxu0 0.0
        %4151 = vmatprep.subr.mxu0 0.0
        %4152 = vmatpush1.msra.mxu0 0.0
        %4153 = vmatprep.subr.mxu0 0.0
        %4154 = vmatpush1.msra.mxu0 0.0
        %4155 = vmatprep.subr.mxu0 0.0
        %4156 = vmatpush1.msra.mxu0 0.0
        %4157 = vmatprep.subr.mxu0 0.0
        %4158 = vmatpush1.msra.mxu0 0.0
        %4159 = vmatprep.subr.mxu0 0.0
        %4160 = vmatpush1.msra.mxu0 0.0
        %4161 = vmatprep.subr.mxu0 0.0
        %4162 = vmatpush1.msra.mxu0 0.0
        %4163 = vmatprep.subr.mxu0 0.0
        %4164 = vmatpush1.msra.mxu0 0.0
        %4165 = vmatprep.subr.mxu0 0.0
        %4166 = vmatpush1.msra.mxu0 0.0
        %4167 = vmatprep.subr.mxu0 0.0
        %4168 = vmatpush1.msra.mxu0 0.0
        %4169 = vmatprep.subr.mxu0 0.0
        %4170 = vmatpush1.msra.mxu0 0.0
        %4171 = vmatprep.subr.mxu0 0.0
        %4172 = vmatpush1.msra.mxu0 0.0
        %4173 = vmatprep.subr.mxu0 0.0
        %4174 = vmatpush1.msra.mxu0 0.0
        %4175 = vmatprep.subr.mxu0 0.0
        %4176 = vmatpush1.msra.mxu0 0.0
        %4177 = vmatprep.subr.mxu0 0.0
        %4178 = vmatpush1.msra.mxu0 0.0
        %4179 = vmatprep.subr.mxu0 0.0
        %4180 = vmatpush1.msra.mxu0 0.0
        %4181 = vmatprep.subr.mxu0 0.0
        %4182 = vmatpush1.msra.mxu0 0.0
        %4183 = vmatprep.subr.mxu0 0.0
        %4184 = vmatpush1.msra.mxu0 0.0
        %4185 = vmatprep.subr.mxu0 0.0
        %4186 = vmatpush1.msra.mxu0 0.0
        %4187 = vmatprep.subr.mxu0 0.0
        %4188 = vmatpush1.msra.mxu0 0.0
        %4189 = vmatprep.subr.mxu0 0.0
        %4190 = vmatpush1.msra.mxu0 0.0
        %4191 = vmatprep.subr.mxu0 0.0
        %4192 = vmatpush1.msra.mxu0 0.0
        %4193 = vmatprep.subr.mxu0 0.0
        %4194 = vmatpush1.msra.mxu0 0.0
        %4195 = vmatprep.subr.mxu0 0.0
        %4196 = vmatpush1.msra.mxu0 0.0
        %4197 = vmatprep.subr.mxu0 0.0
        %4198 = vmatpush1.msra.mxu0 0.0
        %4199 = vmatprep.subr.mxu0 0.0
        %4200 = vmatpush1.msra.mxu0 0.0
        %4201 = vmatprep.subr.mxu0 0.0
        %4202 = vmatpush1.msra.mxu0 0.0
        %4203 = vmatprep.mubr.f32.mxu0 0.0
        %4204 = vmatmul.mubr.f32.gmra.mrb[0].mxu0 %v4137
        %v4205 = vpop.f32.mrb[0].mxu0
        %v4206 = vadd.f32 0.0, %v4205
        %v4207 = vpop.f32.mrb[0].mxu0
        %4208 = vdwg.mxu0
        %4209 = vrot.lane.b32.xlu0 %v2715, 40
        %v4210 = vpop.permute.xlu0 %4209
        %v4213 = vsel %vm921, %v4132, 0
        %4215 = vmatprep.subr.mxu0 0.0
        %4216 = vmatpush1.msra.mxu0 %v4210
        %4217 = vmatprep.subr.mxu0 0.0
        %4218 = vmatpush1.msra.mxu0 0.0
        %4219 = vmatprep.subr.mxu0 0.0
        %4220 = vmatpush1.msra.mxu0 0.0
        %4221 = vmatprep.subr.mxu0 0.0
        %4222 = vmatpush1.msra.mxu0 0.0
        %4223 = vmatprep.subr.mxu0 0.0
        %4224 = vmatpush1.msra.mxu0 0.0
        %4225 = vmatprep.subr.mxu0 0.0
        %4226 = vmatpush1.msra.mxu0 0.0
        %4227 = vmatprep.subr.mxu0 0.0
        %4228 = vmatpush1.msra.mxu0 0.0
        %4229 = vmatprep.subr.mxu0 0.0
        %4230 = vmatpush1.msra.mxu0 0.0
        %4231 = vmatprep.subr.mxu0 0.0
        %4232 = vmatpush1.msra.mxu0 0.0
        %4233 = vmatprep.subr.mxu0 0.0
        %4234 = vmatpush1.msra.mxu0 0.0
        %4235 = vmatprep.subr.mxu0 0.0
        %4236 = vmatpush1.msra.mxu0 0.0
        %4237 = vmatprep.subr.mxu0 0.0
        %4238 = vmatpush1.msra.mxu0 0.0
        %4239 = vmatprep.subr.mxu0 0.0
        %4240 = vmatpush1.msra.mxu0 0.0
        %4241 = vmatprep.subr.mxu0 0.0
        %4242 = vmatpush1.msra.mxu0 0.0
        %4243 = vmatprep.subr.mxu0 0.0
        %4244 = vmatpush1.msra.mxu0 0.0
        %4245 = vmatprep.subr.mxu0 0.0
        %4246 = vmatpush1.msra.mxu0 0.0
        %4247 = vmatprep.subr.mxu0 0.0
        %4248 = vmatpush1.msra.mxu0 0.0
        %4249 = vmatprep.subr.mxu0 0.0
        %4250 = vmatpush1.msra.mxu0 0.0
        %4251 = vmatprep.subr.mxu0 0.0
        %4252 = vmatpush1.msra.mxu0 0.0
        %4253 = vmatprep.subr.mxu0 0.0
        %4254 = vmatpush1.msra.mxu0 0.0
        %4255 = vmatprep.subr.mxu0 0.0
        %4256 = vmatpush1.msra.mxu0 0.0
        %4257 = vmatprep.subr.mxu0 0.0
        %4258 = vmatpush1.msra.mxu0 0.0
        %4259 = vmatprep.subr.mxu0 0.0
        %4260 = vmatpush1.msra.mxu0 0.0
        %4261 = vmatprep.subr.mxu0 0.0
        %4262 = vmatpush1.msra.mxu0 0.0
        %4263 = vmatprep.subr.mxu0 0.0
        %4264 = vmatpush1.msra.mxu0 0.0
        %4265 = vmatprep.subr.mxu0 0.0
        %4266 = vmatpush1.msra.mxu0 0.0
        %4267 = vmatprep.subr.mxu0 0.0
        %4268 = vmatpush1.msra.mxu0 0.0
        %4269 = vmatprep.subr.mxu0 0.0
        %4270 = vmatpush1.msra.mxu0 0.0
        %4271 = vmatprep.subr.mxu0 0.0
        %4272 = vmatpush1.msra.mxu0 0.0
        %4273 = vmatprep.subr.mxu0 0.0
        %4274 = vmatpush1.msra.mxu0 0.0
        %4275 = vmatprep.subr.mxu0 0.0
        %4276 = vmatpush1.msra.mxu0 0.0
        %4277 = vmatprep.subr.mxu0 0.0
        %4278 = vmatpush1.msra.mxu0 0.0
        %4279 = vmatprep.mubr.f32.mxu0 0.0
        %4280 = vmatmul.mubr.f32.gmra.mrb[0].mxu0 %v4213
        %v4281 = vpop.f32.mrb[0].mxu0
        %v4282 = vadd.f32 0.0, %v4281
        %v4283 = vpop.f32.mrb[0].mxu0
        %4284 = vdwg.mxu0
        %v4286 = vsel %vm921, %v4206, 0
        %v4289 = vsel %vm921, %v4282, 0
        %4291 = vmatprep.subr.mxu0 0.0
        %4292 = vmatpush1.msra.mxu0 %v2629
        %4293 = vmatprep.subr.mxu0 0.0
        %4294 = vmatpush1.msra.mxu0 0.0
        %4295 = vmatprep.subr.mxu0 0.0
        %4296 = vmatpush1.msra.mxu0 0.0
        %4297 = vmatprep.subr.mxu0 0.0
        %4298 = vmatpush1.msra.mxu0 0.0
        %4299 = vmatprep.subr.mxu0 0.0
        %4300 = vmatpush1.msra.mxu0 0.0
        %4301 = vmatprep.subr.mxu0 0.0
        %4302 = vmatpush1.msra.mxu0 0.0
        %4303 = vmatprep.subr.mxu0 0.0
        %4304 = vmatpush1.msra.mxu0 0.0
        %4305 = vmatprep.subr.mxu0 0.0
        %4306 = vmatpush1.msra.mxu0 0.0
        %4307 = vmatprep.subr.mxu0 0.0
        %4308 = vmatpush1.msra.mxu0 0.0
        %4309 = vmatprep.subr.mxu0 0.0
        %4310 = vmatpush1.msra.mxu0 0.0
        %4311 = vmatprep.subr.mxu0 0.0
        %4312 = vmatpush1.msra.mxu0 0.0
        %4313 = vmatprep.subr.mxu0 0.0
        %4314 = vmatpush1.msra.mxu0 0.0
        %4315 = vmatprep.subr.mxu0 0.0
        %4316 = vmatpush1.msra.mxu0 0.0
        %4317 = vmatprep.subr.mxu0 0.0
        %4318 = vmatpush1.msra.mxu0 0.0
        %4319 = vmatprep.subr.mxu0 0.0
        %4320 = vmatpush1.msra.mxu0 0.0
        %4321 = vmatprep.subr.mxu0 0.0
        %4322 = vmatpush1.msra.mxu0 0.0
        %4323 = vmatprep.subr.mxu0 0.0
        %4324 = vmatpush1.msra.mxu0 0.0
        %4325 = vmatprep.subr.mxu0 0.0
        %4326 = vmatpush1.msra.mxu0 0.0
        %4327 = vmatprep.subr.mxu0 0.0
        %4328 = vmatpush1.msra.mxu0 0.0
        %4329 = vmatprep.subr.mxu0 0.0
        %4330 = vmatpush1.msra.mxu0 0.0
        %4331 = vmatprep.subr.mxu0 0.0
        %4332 = vmatpush1.msra.mxu0 0.0
        %4333 = vmatprep.subr.mxu0 0.0
        %4334 = vmatpush1.msra.mxu0 0.0
        %4335 = vmatprep.subr.mxu0 0.0
        %4336 = vmatpush1.msra.mxu0 0.0
        %4337 = vmatprep.subr.mxu0 0.0
        %4338 = vmatpush1.msra.mxu0 0.0
        %4339 = vmatprep.subr.mxu0 0.0
        %4340 = vmatpush1.msra.mxu0 0.0
        %4341 = vmatprep.subr.mxu0 0.0
        %4342 = vmatpush1.msra.mxu0 0.0
        %4343 = vmatprep.subr.mxu0 0.0
        %4344 = vmatpush1.msra.mxu0 0.0
        %4345 = vmatprep.subr.mxu0 0.0
        %4346 = vmatpush1.msra.mxu0 0.0
        %4347 = vmatprep.subr.mxu0 0.0
        %4348 = vmatpush1.msra.mxu0 0.0
        %4349 = vmatprep.subr.mxu0 0.0
        %4350 = vmatpush1.msra.mxu0 0.0
        %4351 = vmatprep.subr.mxu0 0.0
        %4352 = vmatpush1.msra.mxu0 0.0
        %4353 = vmatprep.subr.mxu0 0.0
        %4354 = vmatpush1.msra.mxu0 0.0
        %4355 = vmatprep.mubr.f32.mxu0 0.0
        %4356 = vmatmul.mubr.f32.gmra.mrb[0].mxu0 %v4286
        %v4357 = vpop.f32.mrb[0].mxu0
        %v4358 = vadd.f32 0.0, %v4357
        %v4359 = vpop.f32.mrb[0].mxu0
        %4360 = vmatprep.mubr.f32.mxu0 0.0
        %4361 = vmatmul.mubr.f32.gmra.mrb[0].mxu0 %v4289
        %v4362 = vpop.f32.mrb[0].mxu0
        %v4363 = vadd.f32 0.0, %v4362
        %v4364 = vpop.f32.mrb[0].mxu0
        %4365 = vdwg.mxu0
        %v4366 = vadd.f32 %v3953, %v4358
        %v4367 = vadd.f32 %v3954, %v4363
        %v4369 = vlaneseq
        %v4370 = vshrl.u32 %v4369, 7
        %v4371 = vsub.s32 0, %v4370
        %v4372 = vrot.slane %v2630, %v4371
        %v4374 = vadd.f32 %v4366, %v4372
        %v4375 = vadd.f32 %v4367, %v4372
        %v4376 = vadd.f32 %v2575, %v4374
        %v4377 = vadd.f32 %v2576, %v4375
        %v4378 = vld [vmem:[#allocation17] sm:$0x1]
        %v4379 = vld [vmem:[#allocation19] sm:$0x1]
        %v4380 = vsel %vm775, %v4376, 0.0
        %4381 = vadd.xlane.f32.xlu0 %v4380
        %v4382 = vpop.xlane.xlu0 %4381
        %v4383 = vsel %vm775, %v4377, 0.0
        %4384 = vadd.xlane.f32.xlu0 %v4383
        %v4385 = vpop.xlane.xlu0 %4384
        %v4386 = vmul.f32 %v4382, %v782
        %v4387 = vmul.f32 %v4385, %v782
        %v4388 = vsub.f32 %v4376, %v4386
        %v4389 = vsub.f32 %v4377, %v4387
        %v4390 = vmul.f32 %v4388, %v4388
        %v4391 = vmul.f32 %v4389, %v4389
        %v4392 = vsel %vm775, %v4390, 0.0
        %4393 = vadd.xlane.f32.xlu0 %v4392
        %v4394 = vpop.xlane.xlu0 %4393
        %v4395 = vsel %vm775, %v4391, 0.0
        %4396 = vadd.xlane.f32.xlu0 %v4395
        %v4397 = vpop.xlane.xlu0 %4396
        %v4398 = vmul.f32 %v4394, %v782
        %v4399 = vmul.f32 %v4397, %v782
        %v4400 = vadd.f32 %v4398, 1e-05
        %v4401 = vadd.f32 %v4399, 1e-05
        %v4402 = vrsqrt.pop %v4400
        %v4403 = vrsqrt.pop %v4401
        %v4404 = vmul.f32 %v4388, %v4402
        %v4405 = vmul.f32 %v4389, %v4403
        %v4407 = vlaneseq
        %v4408 = vshrl.u32 %v4407, 7
        %v4409 = vsub.s32 0, %v4408
        %v4410 = vrot.slane %v4378, %v4409
        %v4412 = vmul.f32 %v4404, %v4410
        %v4413 = vmul.f32 %v4405, %v4410
        %v4415 = vlaneseq
        %v4416 = vshrl.u32 %v4415, 7
        %v4417 = vsub.s32 0, %v4416
        %v4418 = vrot.slane %v4379, %v4417
        %v4420 = vadd.f32 %v4412, %v4418
        %v4421 = vadd.f32 %v4413, %v4418
        %v4422 = vld [vmem:[#allocation20] sm:$0xff]
        %v4423 = vld [vmem:[#allocation20 + $0x8] sm:$0xff]
        %v4424 = vld [vmem:[#allocation20 + $0x10] sm:$0xff]
        %v4425 = vld [vmem:[#allocation20 + $0x18] sm:$0xff]
        %v4426 = vld [vmem:[#allocation22] sm:$0x1]
        %v4428 = vlaneseq
        %v4429 = vshrl.u32 %v4428, 7
        %v4430 = vsub.s32 0, %v4429
        %v4431 = vrot.slane %v4426, %v4430
        %v4434 = vsel %vm775, %v4420, 0
        %v4437 = vsel %vm775, %v4421, 0
        %4439 = vmatprep.subr.mxu0 0.0
        %4440 = vmatpush1.msra.mxu0 %v4422
        %4441 = vmatprep.subr.mxu0 0.0
        %4442 = vmatpush1.msra.mxu0 %v4423
        %4443 = vmatprep.subr.mxu0 0.0
        %4444 = vmatpush1.msra.mxu0 %v4424
        %4445 = vmatprep.subr.mxu0 0.0
        %4446 = vmatpush1.msra.mxu0 %v4425
        %4447 = vmatprep.subr.mxu0 0.0
        %4448 = vmatpush1.msra.mxu0 0.0
        %4449 = vmatprep.subr.mxu0 0.0
        %4450 = vmatpush1.msra.mxu0 0.0
        %4451 = vmatprep.subr.mxu0 0.0
        %4452 = vmatpush1.msra.mxu0 0.0
        %4453 = vmatprep.subr.mxu0 0.0
        %4454 = vmatpush1.msra.mxu0 0.0
        %4455 = vmatprep.subr.mxu0 0.0
        %4456 = vmatpush1.msra.mxu0 0.0
        %4457 = vmatprep.subr.mxu0 0.0
        %4458 = vmatpush1.msra.mxu0 0.0
        %4459 = vmatprep.subr.mxu0 0.0
        %4460 = vmatpush1.msra.mxu0 0.0
        %4461 = vmatprep.subr.mxu0 0.0
        %4462 = vmatpush1.msra.mxu0 0.0
        %4463 = vmatprep.subr.mxu0 0.0
        %4464 = vmatpush1.msra.mxu0 0.0
        %4465 = vmatprep.subr.mxu0 0.0
        %4466 = vmatpush1.msra.mxu0 0.0
        %4467 = vmatprep.subr.mxu0 0.0
        %4468 = vmatpush1.msra.mxu0 0.0
        %4469 = vmatprep.subr.mxu0 0.0
        %4470 = vmatpush1.msra.mxu0 0.0
        %4471 = vmatprep.subr.mxu0 0.0
        %4472 = vmatpush1.msra.mxu0 0.0
        %4473 = vmatprep.subr.mxu0 0.0
        %4474 = vmatpush1.msra.mxu0 0.0
        %4475 = vmatprep.subr.mxu0 0.0
        %4476 = vmatpush1.msra.mxu0 0.0
        %4477 = vmatprep.subr.mxu0 0.0
        %4478 = vmatpush1.msra.mxu0 0.0
        %4479 = vmatprep.subr.mxu0 0.0
        %4480 = vmatpush1.msra.mxu0 0.0
        %4481 = vmatprep.subr.mxu0 0.0
        %4482 = vmatpush1.msra.mxu0 0.0
        %4483 = vmatprep.subr.mxu0 0.0
        %4484 = vmatpush1.msra.mxu0 0.0
        %4485 = vmatprep.subr.mxu0 0.0
        %4486 = vmatpush1.msra.mxu0 0.0
        %4487 = vmatprep.subr.mxu0 0.0
        %4488 = vmatpush1.msra.mxu0 0.0
        %4489 = vmatprep.subr.mxu0 0.0
        %4490 = vmatpush1.msra.mxu0 0.0
        %4491 = vmatprep.subr.mxu0 0.0
        %4492 = vmatpush1.msra.mxu0 0.0
        %4493 = vmatprep.subr.mxu0 0.0
        %4494 = vmatpush1.msra.mxu0 0.0
        %4495 = vmatprep.subr.mxu0 0.0
        %4496 = vmatpush1.msra.mxu0 0.0
        %4497 = vmatprep.subr.mxu0 0.0
        %4498 = vmatpush1.msra.mxu0 0.0
        %4499 = vmatprep.subr.mxu0 0.0
        %4500 = vmatpush1.msra.mxu0 0.0
        %4501 = vmatprep.subr.mxu0 0.0
        %4502 = vmatpush1.msra.mxu0 0.0
        %4503 = vmatprep.mubr.f32.mxu0 0.0
        %4504 = vmatmul.mubr.f32.gmra.mrb[0].mxu0 %v4434
        %v4505 = vpop.f32.mrb[0].mxu0
        %v4506 = vadd.f32 %v4431, %v4505
        %v4507 = vpop.f32.mrb[0].mxu0
        %4508 = vmatprep.mubr.f32.mxu0 0.0
        %4509 = vmatmul.mubr.f32.gmra.mrb[0].mxu0 %v4437
        %v4510 = vpop.f32.mrb[0].mxu0
        %v4511 = vadd.f32 %v4431, %v4510
        %v4512 = vpop.f32.mrb[0].mxu0
        %4513 = vdwg.mxu0
        %v4514 = vmax.f32 %v4506, 0.0
        %v4515 = vmax.f32 %v4511, 0.0
        %v4516 = vld [vmem:[%s17] sm:$0xff]
        %v4517 = vld [vmem:[%s17 + $0x8] sm:$0xff]
        %v4518 = vld [vmem:[%s17 + $0x10] sm:$0xff]
        %v4519 = vld [vmem:[%s17 + $0x18] sm:$0xff]
        %v4520 = vld [vmem:[%s17 + $0x20] sm:$0xff]
        %v4521 = vld [vmem:[%s17 + $0x28] sm:$0xff]
        %v4522 = vld [vmem:[%s17 + $0x30] sm:$0xff]
        %v4523 = vld [vmem:[%s17 + $0x38] sm:$0xff]
        %v4524 = vld [vmem:[%s18] sm:$0x1]
        %v4526 = vlaneseq
        %v4527 = vshrl.u32 %v4526, 7
        %v4528 = vsub.s32 0, %v4527
        %v4529 = vrot.slane %v4524, %v4528
        %vm4531 = vcmask 523264
        %v4533 = vsel %vm4531, %v4514, 0
        %v4536 = vsel %vm4531, %v4515, 0
        %4538 = vmatprep.subr.mxu0 0.0
        %4539 = vmatpush1.msra.mxu0 %v4516
        %4540 = vmatprep.subr.mxu0 0.0
        %4541 = vmatpush1.msra.mxu0 %v4517
        %4542 = vmatprep.subr.mxu0 0.0
        %4543 = vmatpush1.msra.mxu0 %v4518
        %4544 = vmatprep.subr.mxu0 0.0
        %4545 = vmatpush1.msra.mxu0 %v4519
        %4546 = vmatprep.subr.mxu0 0.0
        %4547 = vmatpush1.msra.mxu0 %v4520
        %4548 = vmatprep.subr.mxu0 0.0
        %4549 = vmatpush1.msra.mxu0 %v4521
        %4550 = vmatprep.subr.mxu0 0.0
        %4551 = vmatpush1.msra.mxu0 %v4522
        %4552 = vmatprep.subr.mxu0 0.0
        %4553 = vmatpush1.msra.mxu0 %v4523
        %4554 = vmatprep.subr.mxu0 0.0
        %4555 = vmatpush1.msra.mxu0 0.0
        %4556 = vmatprep.subr.mxu0 0.0
        %4557 = vmatpush1.msra.mxu0 0.0
        %4558 = vmatprep.subr.mxu0 0.0
        %4559 = vmatpush1.msra.mxu0 0.0
        %4560 = vmatprep.subr.mxu0 0.0
        %4561 = vmatpush1.msra.mxu0 0.0
        %4562 = vmatprep.subr.mxu0 0.0
        %4563 = vmatpush1.msra.mxu0 0.0
        %4564 = vmatprep.subr.mxu0 0.0
        %4565 = vmatpush1.msra.mxu0 0.0
        %4566 = vmatprep.subr.mxu0 0.0
        %4567 = vmatpush1.msra.mxu0 0.0
        %4568 = vmatprep.subr.mxu0 0.0
        %4569 = vmatpush1.msra.mxu0 0.0
        %4570 = vmatprep.subr.mxu0 0.0
        %4571 = vmatpush1.msra.mxu0 0.0
        %4572 = vmatprep.subr.mxu0 0.0
        %4573 = vmatpush1.msra.mxu0 0.0
        %4574 = vmatprep.subr.mxu0 0.0
        %4575 = vmatpush1.msra.mxu0 0.0
        %4576 = vmatprep.subr.mxu0 0.0
        %4577 = vmatpush1.msra.mxu0 0.0
        %4578 = vmatprep.subr.mxu0 0.0
        %4579 = vmatpush1.msra.mxu0 0.0
        %4580 = vmatprep.subr.mxu0 0.0
        %4581 = vmatpush1.msra.mxu0 0.0
        %4582 = vmatprep.subr.mxu0 0.0
        %4583 = vmatpush1.msra.mxu0 0.0
        %4584 = vmatprep.subr.mxu0 0.0
        %4585 = vmatpush1.msra.mxu0 0.0
        %4586 = vmatprep.subr.mxu0 0.0
        %4587 = vmatpush1.msra.mxu0 0.0
        %4588 = vmatprep.subr.mxu0 0.0
        %4589 = vmatpush1.msra.mxu0 0.0
        %4590 = vmatprep.subr.mxu0 0.0
        %4591 = vmatpush1.msra.mxu0 0.0
        %4592 = vmatprep.subr.mxu0 0.0
        %4593 = vmatpush1.msra.mxu0 0.0
        %4594 = vmatprep.subr.mxu0 0.0
        %4595 = vmatpush1.msra.mxu0 0.0
        %4596 = vmatprep.subr.mxu0 0.0
        %4597 = vmatpush1.msra.mxu0 0.0
        %4598 = vmatprep.subr.mxu0 0.0
        %4599 = vmatpush1.msra.mxu0 0.0
        %4600 = vmatprep.subr.mxu0 0.0
        %4601 = vmatpush1.msra.mxu0 0.0
        %4602 = vmatprep.mubr.f32.mxu0 0.0
        %4603 = vmatmul.mubr.f32.gmra.mrb[0].mxu0 %v4533
        %v4604 = vpop.f32.mrb[0].mxu0
        %v4605 = vadd.f32 %v4529, %v4604
        %v4606 = vpop.f32.mrb[0].mxu0
        %4607 = vmatprep.mubr.f32.mxu0 0.0
        %4608 = vmatmul.mubr.f32.gmra.mrb[0].mxu0 %v4536
        %v4609 = vpop.f32.mrb[0].mxu0
        %v4610 = vadd.f32 %v4529, %v4609
        %v4611 = vpop.f32.mrb[0].mxu0
        %4612 = vdwg.mxu0
        %v4613 = vadd.f32 %v4376, %v4605
        %v4614 = vadd.f32 %v4377, %v4610
        %4615 = vst.msk [vmem:[%s763] sm:$0xff] %vm775, %v4613
        %4616 = vst.msk [vmem:[%s763 + $0x8] sm:$0xff] %vm775, %v4614
        %s4617 = sand.u32 %s452, 1
        %s4618 = scalar_lea.sflag [#allocation4], %s4617
        %s4619 = sand.u32 %s452, 1
        %s4620 = smul.addr %s4619, 16
        %s4621 = scalar_lea.vmem [#allocation23], %s4620
        // Predicated region
        $region149: #{tpu_custom_call.1} parent=95 // pred_check
          %p4622 = pneg %p462
        $region150: #{tpu_custom_call.1} parent=95 // pred_check_branch
          %4624 = sbr.rel (%p4622) target = $region152
        $region151: #{tpu_custom_call.1} parent=95 // pred_region
          %s4625 = smul.u32 2, %s40
          %s4627 = ssub.s32 256, 256
          %4628 = vsyncadd %s4618, %s4627
          %s4629 = smul.addr %s4625, 128
          %s4630 = scalar_lea.hbm %s19, %s4629
          %s4631 = sshll.u32 %s4621, 4
          %s4632 = int_to_ptr.vmem [resolvable:$true] %s4631
          %4637 = dma.vmem_to_hbm [thread:$0]  %s4632, 256, %s4630, %s4618, 128, 128, 8
        $region152: #{tpu_custom_call.1} parent=95 // pred_fallthru
          _
      $region96: #{tpu_custom_call.1} parent=5 // pred_fallthru
        _
      %p4638 = scmp.le.s32.totalorder 2, %s35
      // Predicated region
      $region153: #{tpu_custom_call.1} parent=5 // pred_check
        %p4639 = pneg %p4638
      $region154: #{tpu_custom_call.1} parent=5 // pred_check_branch
        %4641 = sbr.rel (%p4639) target = $region156
      $region155: #{tpu_custom_call.1} parent=5 // pred_region
        %s4642 = ssub.s32 %s35, 2
        // Predicated region
        $region157: #{tpu_custom_call.1} parent=155 // pred_check
          %p4643 = pneg %p468
        $region158: #{tpu_custom_call.1} parent=155 // pred_check_branch
          %4645 = sbr.rel (%p4643) target = $region160
        $region159: #{tpu_custom_call.1} parent=155 // pred_region
          %s4646 = sand.u32 %s453, 1
          %s4647 = scalar_lea.sflag [#allocation4], %s4646
          %s4648 = sand.u32 %s453, 1
          %s4649 = smul.addr %s4648, 16
          %s4650 = scalar_lea.vmem [#allocation23], %s4649
          %4651 = dma.done %s4647, 256
        $region160: #{tpu_custom_call.1} parent=155 // pred_fallthru
          _
      $region156: #{tpu_custom_call.1} parent=5 // pred_fallthru
        _
    $region6: #{tpu_custom_call.1} parent=1 // loop_footer
      %s39 = sadd.s32 1, %s35
    $region7: #{tpu_custom_call.1} parent=1 // loop_footer_branch
      %34 = sbr.rel target = $region3
    $region8: #{tpu_custom_call.1} parent=1 // loop_exit
      _
    %4652 = vsyncpa [#allocation3], 1
    %s4653 = scalar_lea.sflag [#allocation3], 1
    %4654 = vsyncpa %s4653, 1
    %4655 = vsyncpa [#allocation6], 1
    %4656 = vsyncpa [#allocation9], 1
    %4657 = vsyncpa [#allocation12], 1
    %4658 = vsyncpa [#allocation15], 1
    %4659 = vsyncpa [#allocation18], 1
    %4660 = vsyncpa [#allocation21], 1
    %4661 = vsyncpa [#allocation4], 1
    %s4662 = scalar_lea.sflag [#allocation4], 1
    %4663 = vsyncpa %s4662, 1

</llo_original>
